<compile_context>
chip_gen: v7x
topology: tpu7x:2x2x1
jax: 0.10.0
libtpu: 0.0.40
codegen_flags: <defaults>
</compile_context>

<pallas_src>
import functools

import numpy as np
import jax
import jax.numpy as jnp
from jax import lax
from jax.experimental import pallas as pl
from jax.experimental.pallas import tpu as pltpu


def _round_up(x, m):
    return ((x + m - 1) // m) * m


def _make_fused_lstm_kernel(n_layers, t_blk, b_pad, h_pad):
    """Fused multi-layer LSTM over one time block, emitting only final-h.

    Positional refs:
      max_len_ref                     (1,)                     int32 SMEM (scalar prefetch)
      x_ref                           (T_BLK*B_pad, E_pad)     bf16
      senlen_ref                      (B_pad, 1)               int32 (resident)
      layer 0:   wih (E_pad, 4H) bf16 | whh (H_pad, 4H) bf16 | b (1, 4H) f32
      layer l>0: wcat (2*H_pad, 4H) bf16 | b (1, 4H) f32
      out_ref                         (B_pad, H_pad)           f32 (resident accumulator)
      h_all_ref                       (B_pad, n_layers*H_pad)  bf16 scratch (carried h, layer-adjacent)
      c_ref                           (n_layers, B_pad, H_pad) f32 scratch (carried c)
      gx_ref                          (T_BLK*B_pad, 4*H_pad)   f32 scratch (hoisted layer-0 gates)
    """
    n_w = 3 + 2 * (n_layers - 1)

    def kernel(*refs):
        max_len_ref = refs[0]
        x_ref = refs[1]
        senlen_ref = refs[2]
        w_refs = refs[3:3 + n_w]
        out_ref = refs[3 + n_w]
        h_all_ref, c_ref, gx_ref = refs[4 + n_w:]

        tb = pl.program_id(0)

        @pl.when(tb == 0)
        def _():
            h_all_ref[...] = jnp.zeros(h_all_ref.shape, jnp.bfloat16)
            c_ref[...] = jnp.zeros(c_ref.shape, jnp.float32)
            out_ref[...] = jnp.zeros(out_ref.shape, jnp.float32)

        # Skip time blocks that start past the longest sequence.
        @pl.when(tb * t_blk < max_len_ref[0])
        def _():
            wih0, whh0, b0 = w_refs[0], w_refs[1], w_refs[2]

            # Hoisted layer-0 input projection + bias for the whole block:
            # one big, fully parallel MXU matmul off the serial path
            # (bf16 operands, f32 accumulation).
            gx_ref[...] = (
                jnp.dot(x_ref[...], wih0[...], preferred_element_type=jnp.float32)
                + b0[...]
            )

            sen_len = senlen_ref[...]          # (B_pad, 1) int32; padded rows are 0
            t_base = tb * t_blk

            def gates_to_state(gates, c):
                # PyTorch gate order i, f, g, o; each gate a whole 128-lane tile.
                i_g = jax.nn.sigmoid(gates[:, 0 * h_pad:1 * h_pad])
                f_g = jax.nn.sigmoid(gates[:, 1 * h_pad:2 * h_pad])
                g_g = jnp.tanh(gates[:, 2 * h_pad:3 * h_pad])
                o_g = jax.nn.sigmoid(gates[:, 3 * h_pad:4 * h_pad])
                c_new = f_g * c + i_g * g_g
                h_new = o_g * jnp.tanh(c_new)   # f32
                return h_new, c_new

            def step(t, carry):
                row = pl.multiple_of(t * b_pad, b_pad)

                # ---- layer 0: gates = gx[t] + h0(t-1) @ W_hh0 ----
                # (Explicit MXU weight-register staging of W_hh via
                #  pltpu.matmul_push_rhs would remove the per-step restage;
                #  left out to keep the kernel on well-trodden lowering paths.)
                h0 = h_all_ref[:, 0:h_pad]                               # bf16
                gates0 = gx_ref[pl.ds(row, b_pad), :] + jnp.dot(
                    h0, whh0[...], preferred_element_type=jnp.float32)
                h_new, c_new = gates_to_state(gates0, c_ref[0])
                c_ref[0] = c_new
                h_all_ref[:, 0:h_pad] = h_new.astype(jnp.bfloat16)

                # ---- layers > 0: fused [h_{l-1}(t) ; h_l(t-1)] @ [W_ih; W_hh]
                # K = 2*H_pad fills the 256-deep MXU (v6e/v7x).  The layer-
                # adjacent column layout makes the fused LHS one contiguous
                # static slice.  All per-step matmuls sit in one unrolled body
                # so layer-l work overlaps layer-(l-1) work of the next step.
                for l in range(1, n_layers):
                    wcat = w_refs[3 + 2 * (l - 1)]
                    bl = w_refs[4 + 2 * (l - 1)]
                    xh = h_all_ref[:, (l - 1) * h_pad:(l + 1) * h_pad]   # bf16
                    gates = jnp.dot(xh, wcat[...],
                                    preferred_element_type=jnp.float32) + bl[...]
                    h_new, c_new = gates_to_state(gates, c_ref[l])
                    c_ref[l] = c_new
                    h_all_ref[:, l * h_pad:(l + 1) * h_pad] = h_new.astype(jnp.bfloat16)

                # ---- in-kernel selection of each sequence's final output
                # (replaces the full (seq, B, H) output + XLA gather). Off the
                # recurrence's critical path.
                is_last = sen_len == (t_base + t + 1)                    # (B_pad, 1)
                out_ref[...] = jnp.where(is_last, h_new, out_ref[...])
                return carry

            # Full unroll gives the scheduler cross-step/cross-layer
            # visibility; drop to unroll=4-8 if bundle dumps show vreg spills
            # at larger h_pad.
            lax.fori_loop(0, t_blk, step, 0, unroll=True)

    return kernel


def _fused_lstm_pallas(max_len, x2d, sen_col, layer_weights, *, t_blk, b_pad, h_pad, n_tb):
    """x2d: (seq_pad*B_pad, E_pad) bf16, row = t*B_pad + b. Returns (B_pad, H_pad) final h."""
    n_layers = len(layer_weights)
    e_pad = x2d.shape[1]
    rows = t_blk * b_pad

    # NOTE(v7x): at realistic hidden sizes, add pipeline_mode=pl.Buffered(1) to
    # the constant-index weight specs (halves resident-weight VMEM), consider a
    # bf16 gx scratch, and re-derive t_blk against the 64 MiB VMEM; also a
    # leading "parallel" batch-tile axis would use both TensorCores.  All
    # irrelevant at these toy sizes, so kept simple/robust here.
    in_specs = [
        pl.BlockSpec((rows, e_pad), lambda tb, ml: (tb, 0)),   # time block of x
        pl.BlockSpec((b_pad, 1), lambda tb, ml: (0, 0)),       # sen_len column (resident)
    ]
    flat_w = []
    for lw in layer_weights:
        for w in lw:
            in_specs.append(pl.BlockSpec(w.shape, lambda tb, ml: (0, 0)))  # resident weights
            flat_w.append(w)

    kernel = _make_fused_lstm_kernel(n_layers, t_blk, b_pad, h_pad)

    return pl.pallas_call(
        kernel,
        out_shape=jax.ShapeDtypeStruct((b_pad, h_pad), jnp.float32),
        grid_spec=pltpu.PrefetchScalarGridSpec(
            num_scalar_prefetch=1,                 # max(sen_len): skip dead time blocks
            grid=(n_tb,),
            in_specs=in_specs,
            out_specs=pl.BlockSpec((b_pad, h_pad), lambda tb, ml: (0, 0)),
            scratch_shapes=[
                pltpu.VMEM((b_pad, n_layers * h_pad), jnp.bfloat16),  # carried h (layer-adjacent)
                pltpu.VMEM((n_layers, b_pad, h_pad), jnp.float32),    # carried c
                pltpu.VMEM((rows, 4 * h_pad), jnp.float32),           # hoisted layer-0 gates
            ],
        ),
        compiler_params=pltpu.CompilerParams(
            dimension_semantics=("arbitrary",),    # time recurrence is sequential
            vmem_limit_bytes=32 * 1024 * 1024,
        ),
    )(max_len, x2d, sen_col, *flat_w)


def _encoder1_forward(emb_pad, layer_weights, src, sen_len, *, hid_dim, t_blk_max=16):
    seq_len, batch = src.shape
    h_pad = layer_weights[0][1].shape[0]           # whh0: (H_pad, 4*H_pad)
    e_pad = emb_pad.shape[1]

    # bf16 LHS packs 16 sublanes per vreg: round real batches > 8 to 16 (v5e
    # pack); keep 8 for tiny batches to avoid doubling f32 gate-math vregs.
    b_pad = _round_up(batch, 8) if batch <= 8 else _round_up(batch, 16)
    t_blk = min(seq_len, t_blk_max)
    seq_pad = _round_up(seq_len, t_blk)
    n_tb = seq_pad // t_blk

    # Embedding lookup (glue), pad to sublane/lane-dense shapes, cast matmul
    # operand to bf16 (accumulation stays f32 in-kernel).
    embedded = jnp.take(emb_pad, src, axis=0)                       # (seq, batch, E_pad) f32
    embedded = jnp.pad(embedded,
                       ((0, seq_pad - seq_len), (0, b_pad - batch), (0, 0)))
    x2d = embedded.astype(jnp.bfloat16).reshape(seq_pad * b_pad, e_pad)

    sen_len = sen_len.astype(jnp.int32)
    sen_col = jnp.zeros((b_pad, 1), jnp.int32).at[:batch, 0].set(sen_len)
    max_len = jnp.max(sen_len)[None]                                # (1,) int32

    out = _fused_lstm_pallas(max_len, x2d, sen_col, layer_weights,
                             t_blk=t_blk, b_pad=b_pad, h_pad=h_pad, n_tb=n_tb)
    # ot = cat_i outputs[sen_len[i]-1, i, :]  (final h selected in-kernel)
    return out[:batch, :hid_dim].reshape(-1)


class Encoder1Pallas:
    """JAX/Pallas mirror of Encoder1 (inference semantics)."""

    def __init__(self, vocab_size, emb_dim, hid_dim, n_layers, key):
        self.emb_dim = emb_dim
        self.hid_dim = hid_dim
        self.n_layers = n_layers

        e_pad = _round_up(emb_dim, 128)
        h_pad = _round_up(hid_dim, 128)

        keys = jax.random.split(key, 1 + 4 * n_layers)
        # Stand-in for the pretrained word2vec table (Tembedding_weights).
        emb = jax.random.normal(keys[0], (vocab_size, emb_dim), jnp.float32) * 0.1
        self.embedding = emb                                        # unpadded (reference)
        self.emb_pad = jnp.pad(emb, ((0, 0), (0, e_pad - emb_dim)))

        self.params = []          # unpadded PyTorch-layout params (reference / parity)
        self.layer_weights = []   # padded, transposed, bias-folded kernel weights
        k = 1.0 / np.sqrt(hid_dim)
        for l in range(n_layers):
            in_dim = emb_dim if l == 0 else hid_dim
            kw = keys[1 + 4 * l:1 + 4 * (l + 1)]
            w_ih = jax.random.uniform(kw[0], (4 * hid_dim, in_dim), jnp.float32, -k, k)
            w_hh = jax.random.uniform(kw[1], (4 * hid_dim, hid_dim), jnp.float32, -k, k)
            b_ih = jax.random.uniform(kw[2], (4 * hid_dim,), jnp.float32, -k, k)
            b_hh = jax.random.uniform(kw[3], (4 * hid_dim,), jnp.float32, -k, k)
            self.params.append((w_ih, w_hh, b_ih, b_hh))

            # Host-side prep ONCE: transpose, per-gate zero-pad to lane-dense
            # H_pad columns (padded hidden lanes provably stay exactly zero),
            # fold b_ih + b_hh, cast MXU operands to bf16.  Layers > 0 also
            # stack [W_ih ; W_hh] so the per-step matmul runs with K = 2*H_pad.
            wih_t = np.asarray(w_ih).T                 # [in_dim, 4*hid]
            whh_t = np.asarray(w_hh).T                 # [hid,    4*hid]
            b_sum = np.asarray(b_ih) + np.asarray(b_hh)

            def pad_gates(w, rows_pad):
                out = np.zeros((rows_pad, 4 * h_pad), np.float32)
                for g in range(4):
                    out[:w.shape[0], g * h_pad:g * h_pad + hid_dim] = \
                        w[:, g * hid_dim:(g + 1) * hid_dim]
                return out

            b_p = np.zeros((1, 4 * h_pad), np.float32)
            for g in range(4):
                b_p[0, g * h_pad:g * h_pad + hid_dim] = b_sum[g * hid_dim:(g + 1) * hid_dim]

            if l == 0:
                self.layer_weights.append((
                    jnp.asarray(pad_gates(wih_t, e_pad), jnp.bfloat16),
                    jnp.asarray(pad_gates(whh_t, h_pad), jnp.bfloat16),
                    jnp.asarray(b_p, jnp.float32)))
            else:
                wcat_p = np.zeros((2 * h_pad, 4 * h_pad), np.float32)
                wcat_p[:h_pad] = pad_gates(wih_t, h_pad)     # input-from-previous-layer rows
                wcat_p[h_pad:] = pad_gates(whh_t, h_pad)     # own recurrent rows
                self.layer_weights.append((jnp.asarray(wcat_p, jnp.bfloat16),
                                           jnp.asarray(b_p, jnp.float32)))

        self._fwd = jax.jit(functools.partial(_encoder1_forward, hid_dim=hid_dim))

    def forward(self, src, sen_len):
        """src: [seq_len, batch] int32; sen_len: [batch] int32.
        Returns ot: [batch * hid_dim] float32."""
        return self._fwd(self.emb_pad, tuple(self.layer_weights), src, sen_len)


def _lstm_layer_ref(x, w_ih, w_hh, b_ih, b_hh):
    """Pure-JAX f32 reference (lax.scan) for correctness checking."""
    seq_len, batch, _ = x.shape
    hid = w_hh.shape[1]

    def step(carry, x_t):
        h, c = carry
        gates = x_t @ w_ih.T + b_ih + h @ w_hh.T + b_hh
        i_g = jax.nn.sigmoid(gates[:, 0 * hid:1 * hid])
        f_g = jax.nn.sigmoid(gates[:, 1 * hid:2 * hid])
        g_g = jnp.tanh(gates[:, 2 * hid:3 * hid])
        o_g = jax.nn.sigmoid(gates[:, 3 * hid:4 * hid])
        c_new = f_g * c + i_g * g_g
        h_new = o_g * jnp.tanh(c_new)
        return (h_new, c_new), h_new

    h0 = jnp.zeros((batch, hid), jnp.float32)
    c0 = jnp.zeros((batch, hid), jnp.float32)
    _, outs = jax.lax.scan(step, (h0, c0), x)
    return outs


if __name__ == "__main__":
    SEQ_LEN, BATCH = 8, 2
    VOCAB, EMB_DIM, HID_DIM, N_LAYERS = 50, 32, 32, 2

    key = jax.random.PRNGKey(0)
    k_model, k_src = jax.random.split(key)

    enc = Encoder1Pallas(VOCAB, EMB_DIM, HID_DIM, N_LAYERS, k_model)

    src = jax.random.randint(k_src, (SEQ_LEN, BATCH), 0, VOCAB, jnp.int32)
    sen_len = jnp.array([SEQ_LEN, SEQ_LEN - 3], jnp.int32)

    ot = enc.forward(src, sen_len)
    ot = jax.block_until_ready(ot)
    assert ot.shape == (BATCH * HID_DIM,), ot.shape

    # Cross-check the fused Pallas LSTM stack against a pure-JAX f32 scan
    # reference. Kernel uses bf16 matmul operands -> loosened tolerance.
    x_ref = jnp.take(enc.embedding, src, axis=0)
    for (w_ih, w_hh, b_ih, b_hh) in enc.params:
        x_ref = _lstm_layer_ref(x_ref, w_ih, w_hh, b_ih, b_hh)
    ot_ref = x_ref[sen_len - 1, jnp.arange(BATCH), :].reshape(-1)
    np.testing.assert_allclose(np.asarray(ot), np.asarray(ot_ref),
                               rtol=2e-2, atol=2e-2)

    print("KERNEL_OK")
</pallas_src>

<mosaic_0001>
module attributes {stable_mosaic.version = 11 : i64} {
  func.func @kernel(%arg0: i32, %arg1: memref<1xi32, #tpu.memory_space<smem>>, %arg2: memref<64x128xbf16, #tpu.memory_space<vmem>>, %arg3: memref<8x1xi32, #tpu.memory_space<vmem>>, %arg4: memref<128x512xbf16, #tpu.memory_space<vmem>>, %arg5: memref<128x512xbf16, #tpu.memory_space<vmem>>, %arg6: memref<1x512xf32, #tpu.memory_space<vmem>>, %arg7: memref<256x512xbf16, #tpu.memory_space<vmem>>, %arg8: memref<1x512xf32, #tpu.memory_space<vmem>>, %arg9: memref<8x128xf32, #tpu.memory_space<vmem>>, %arg10: memref<8x256xbf16, #tpu.memory_space<vmem>>, %arg11: memref<2x8x128xf32, #tpu.memory_space<vmem>>, %arg12: memref<64x512xf32, #tpu.memory_space<vmem>>) attributes {dimension_semantics = [#tpu.dimension_semantics<arbitrary>], iteration_bounds = array<i64: 1>, scalar_prefetch = 1 : i64, scratch_operands = 3 : i64, tpu.core_type = #tpu.core_type<tc>, window_params = [{transform_indices = @transform_0, window_bounds = array<i64: 64, 128>}, {pipeline_mode = #tpu.pipeline_mode<synchronous>, transform_indices = @transform_1, window_bounds = array<i64: 8, 1>}, {pipeline_mode = #tpu.pipeline_mode<synchronous>, transform_indices = @transform_2, window_bounds = array<i64: 128, 512>}, {pipeline_mode = #tpu.pipeline_mode<synchronous>, transform_indices = @transform_3, window_bounds = array<i64: 128, 512>}, {pipeline_mode = #tpu.pipeline_mode<synchronous>, transform_indices = @transform_4, window_bounds = array<i64: 1, 512>}, {pipeline_mode = #tpu.pipeline_mode<synchronous>, transform_indices = @transform_5, window_bounds = array<i64: 256, 512>}, {pipeline_mode = #tpu.pipeline_mode<synchronous>, transform_indices = @transform_6, window_bounds = array<i64: 1, 512>}, {pipeline_mode = #tpu.pipeline_mode<synchronous>, transform_indices = @transform_7, window_bounds = array<i64: 8, 128>}]} {
    %c0_i32 = arith.constant 0 : i32
    %0 = arith.cmpi eq, %arg0, %c0_i32 : i32
    %1 = arith.extui %0 : i1 to i32
    %c0_i32_0 = arith.constant 0 : i32
    %2 = arith.cmpi ne, %1, %c0_i32_0 : i32
    scf.if %2 {
      %cst = arith.constant 0.000000e+00 : bf16
      %8 = vector.broadcast %cst : bf16 to vector<8x256xbf16>
      %c0_2 = arith.constant 0 : index
      %c0_3 = arith.constant 0 : index
      %9 = vector.load %arg10[%c0_2, %c0_3] : memref<8x256xbf16, #tpu.memory_space<vmem>>, vector<8x256xbf16>
      tpu.vector_store %arg10[%c0_2, %c0_3], %8 {strides = array<i32>} : memref<8x256xbf16, #tpu.memory_space<vmem>>, vector<8x256xbf16>,
      %cst_4 = arith.constant 0.000000e+00 : f32
      %10 = vector.broadcast %cst_4 : f32 to vector<2x8x128xf32>
      %c0_5 = arith.constant 0 : index
      %c0_6 = arith.constant 0 : index
      %c0_7 = arith.constant 0 : index
      %11 = vector.load %arg11[%c0_5, %c0_6, %c0_7] : memref<2x8x128xf32, #tpu.memory_space<vmem>>, vector<2x8x128xf32>
      tpu.vector_store %arg11[%c0_5, %c0_6, %c0_7], %10 {strides = array<i32>} : memref<2x8x128xf32, #tpu.memory_space<vmem>>, vector<2x8x128xf32>,
      %cst_8 = arith.constant 0.000000e+00 : f32
      %12 = vector.broadcast %cst_8 : f32 to vector<8x128xf32>
      %c0_9 = arith.constant 0 : index
      %c0_10 = arith.constant 0 : index
      %13 = vector.load %arg9[%c0_9, %c0_10] : memref<8x128xf32, #tpu.memory_space<vmem>>, vector<8x128xf32>
      tpu.vector_store %arg9[%c0_9, %c0_10], %12 {strides = array<i32>} : memref<8x128xf32, #tpu.memory_space<vmem>>, vector<8x128xf32>,
    } else {
    }
    %c8_i32 = arith.constant 8 : i32
    %3 = arith.muli %arg0, %c8_i32 : i32
    %c0 = arith.constant 0 : index
    %4 = memref.load %arg1[%c0] : memref<1xi32, #tpu.memory_space<smem>>
    %5 = arith.cmpi slt, %3, %4 : i32
    %6 = arith.extui %5 : i1 to i32
    %c0_i32_1 = arith.constant 0 : i32
    %7 = arith.cmpi ne, %6, %c0_i32_1 : i32
    scf.if %7 {
      %c0_2 = arith.constant 0 : index
      %c0_3 = arith.constant 0 : index
      %8 = vector.load %arg2[%c0_2, %c0_3] : memref<64x128xbf16, #tpu.memory_space<vmem>>, vector<64x128xbf16>
      %c0_4 = arith.constant 0 : index
      %c0_5 = arith.constant 0 : index
      %9 = vector.load %arg4[%c0_4, %c0_5] : memref<128x512xbf16, #tpu.memory_space<vmem>>, vector<128x512xbf16>
      %cst = arith.constant dense<0.000000e+00> : vector<64x512xf32>
      %10 = tpu.matmul %8, %9, %cst {dimension_numbers = #tpu.dot_dimension_numbers<[1], [0], [0], [1], [0, 0, 1, 1], [], []>} : vector<64x128xbf16>, vector<128x512xbf16>, vector<64x512xf32> -> vector<64x512xf32>
      %c0_6 = arith.constant 0 : index
      %c0_7 = arith.constant 0 : index
      %11 = vector.load %arg6[%c0_6, %c0_7] : memref<1x512xf32, #tpu.memory_space<vmem>>, vector<1x512xf32>
      %12 = vector.broadcast %11 : vector<1x512xf32> to vector<64x512xf32>
      %13 = arith.addf %10, %12 : vector<64x512xf32>
      %c0_8 = arith.constant 0 : index
      %c0_9 = arith.constant 0 : index
      %14 = vector.load %arg12[%c0_8, %c0_9] : memref<64x512xf32, #tpu.memory_space<vmem>>, vector<64x512xf32>
      tpu.vector_store %arg12[%c0_8, %c0_9], %13 {strides = array<i32>} : memref<64x512xf32, #tpu.memory_space<vmem>>, vector<64x512xf32>,
      %c0_10 = arith.constant 0 : index
      %c0_11 = arith.constant 0 : index
      %15 = vector.load %arg3[%c0_10, %c0_11] : memref<8x1xi32, #tpu.memory_space<vmem>>, vector<8x1xi32>
      %c8_i32_12 = arith.constant 8 : i32
      %16 = arith.muli %arg0, %c8_i32_12 : i32
      %c0_i32_13 = arith.constant 0 : i32
      %c8_i32_14 = arith.constant 8 : i32
      %17 = arith.muli %c0_i32_13, %c8_i32_14 : i32
      %18 = tpu.assume_multiple %17, 8 : i32
      %c0_15 = arith.constant 0 : index
      %c0_16 = arith.constant 0 : index
      %19 = vector.load %arg10[%c0_15, %c0_16] : memref<8x256xbf16, #tpu.memory_space<vmem>>, vector<8x128xbf16>
      %20 = arith.index_cast %18 : i32 to index
      %c0_17 = arith.constant 0 : index
      %21 = vector.load %arg12[%20, %c0_17] : memref<64x512xf32, #tpu.memory_space<vmem>>, vector<8x512xf32>
      %c0_18 = arith.constant 0 : index
      %c0_19 = arith.constant 0 : index
      %22 = vector.load %arg5[%c0_18, %c0_19] : memref<128x512xbf16, #tpu.memory_space<vmem>>, vector<128x512xbf16>
      %cst_20 = arith.constant dense<0.000000e+00> : vector<8x512xf32>
      %23 = tpu.matmul %19, %22, %cst_20 {dimension_numbers = #tpu.dot_dimension_numbers<[1], [0], [0], [1], [0, 0, 1, 1], [], []>} : vector<8x128xbf16>, vector<128x512xbf16>, vector<8x512xf32> -> vector<8x512xf32>
      %24 = arith.addf %21, %23 : vector<8x512xf32>
      %c0_21 = arith.constant 0 : index
      %c0_22 = arith.constant 0 : index
      %c0_23 = arith.constant 0 : index
      %25 = vector.load %arg11[%c0_21, %c0_22, %c0_23] : memref<2x8x128xf32, #tpu.memory_space<vmem>>, vector<1x8x128xf32>
      %26 = vector.shape_cast %25 : vector<1x8x128xf32> to vector<8x128xf32>
      %27 = vector.extract_strided_slice %24 {offsets = [0, 0], sizes = [8, 128], strides = [1, 1]} : vector<8x512xf32> to vector<8x128xf32>
      %28 = arith.negf %27 : vector<8x128xf32>
      %29 = math.exp %28 : vector<8x128xf32>
      %cst_24 = arith.constant 1.000000e+00 : f32
      %30 = vector.broadcast %cst_24 : f32 to vector<8x128xf32>
      %31 = arith.addf %30, %29 : vector<8x128xf32>
      %32 = arith.divf %30, %31 : vector<8x128xf32>
      %33 = vector.extract_strided_slice %24 {offsets = [0, 128], sizes = [8, 128], strides = [1, 1]} : vector<8x512xf32> to vector<8x128xf32>
      %34 = arith.negf %33 : vector<8x128xf32>
      %35 = math.exp %34 : vector<8x128xf32>
      %cst_25 = arith.constant 1.000000e+00 : f32
      %36 = vector.broadcast %cst_25 : f32 to vector<8x128xf32>
      %37 = arith.addf %36, %35 : vector<8x128xf32>
      %38 = arith.divf %36, %37 : vector<8x128xf32>
      %39 = vector.extract_strided_slice %24 {offsets = [0, 256], sizes = [8, 128], strides = [1, 1]} : vector<8x512xf32> to vector<8x128xf32>
      %40 = math.tanh %39 : vector<8x128xf32>
      %41 = vector.extract_strided_slice %24 {offsets = [0, 384], sizes = [8, 128], strides = [1, 1]} : vector<8x512xf32> to vector<8x128xf32>
      %42 = arith.negf %41 : vector<8x128xf32>
      %43 = math.exp %42 : vector<8x128xf32>
      %cst_26 = arith.constant 1.000000e+00 : f32
      %44 = vector.broadcast %cst_26 : f32 to vector<8x128xf32>
      %45 = arith.addf %44, %43 : vector<8x128xf32>
      %46 = arith.divf %44, %45 : vector<8x128xf32>
      %47 = arith.mulf %38, %26 : vector<8x128xf32>
      %48 = arith.mulf %32, %40 : vector<8x128xf32>
      %49 = arith.addf %47, %48 : vector<8x128xf32>
      %50 = math.tanh %49 : vector<8x128xf32>
      %51 = arith.mulf %46, %50 : vector<8x128xf32>
      %c0_27 = arith.constant 0 : index
      %c0_28 = arith.constant 0 : index
      %c0_29 = arith.constant 0 : index
      %52 = vector.load %arg11[%c0_27, %c0_28, %c0_29] : memref<2x8x128xf32, #tpu.memory_space<vmem>>, vector<1x8x128xf32>
      %53 = vector.shape_cast %52 : vector<1x8x128xf32> to vector<8x128xf32>
      %54 = vector.shape_cast %49 : vector<8x128xf32> to vector<1x8x128xf32>
      tpu.vector_store %arg11[%c0_27, %c0_28, %c0_29], %54 {strides = array<i32>} : memref<2x8x128xf32, #tpu.memory_space<vmem>>, vector<1x8x128xf32>,
      %55 = arith.truncf %51 : vector<8x128xf32> to vector<8x128xbf16>
      %c0_30 = arith.constant 0 : index
      %c0_31 = arith.constant 0 : index
      %56 = vector.load %arg10[%c0_30, %c0_31] : memref<8x256xbf16, #tpu.memory_space<vmem>>, vector<8x128xbf16>
      tpu.vector_store %arg10[%c0_30, %c0_31], %55 {strides = array<i32>} : memref<8x256xbf16, #tpu.memory_space<vmem>>, vector<8x128xbf16>,
      %c0_32 = arith.constant 0 : index
      %c0_33 = arith.constant 0 : index
      %57 = vector.load %arg10[%c0_32, %c0_33] : memref<8x256xbf16, #tpu.memory_space<vmem>>, vector<8x256xbf16>
      %c0_34 = arith.constant 0 : index
      %c0_35 = arith.constant 0 : index
      %58 = vector.load %arg7[%c0_34, %c0_35] : memref<256x512xbf16, #tpu.memory_space<vmem>>, vector<256x512xbf16>
      %cst_36 = arith.constant dense<0.000000e+00> : vector<8x512xf32>
      %59 = tpu.matmul %57, %58, %cst_36 {dimension_numbers = #tpu.dot_dimension_numbers<[1], [0], [0], [1], [0, 0, 1, 1], [], []>} : vector<8x256xbf16>, vector<256x512xbf16>, vector<8x512xf32> -> vector<8x512xf32>
      %c0_37 = arith.constant 0 : index
      %c0_38 = arith.constant 0 : index
      %60 = vector.load %arg8[%c0_37, %c0_38] : memref<1x512xf32, #tpu.memory_space<vmem>>, vector<1x512xf32>
      %61 = vector.broadcast %60 : vector<1x512xf32> to vector<8x512xf32>
      %62 = arith.addf %59, %61 : vector<8x512xf32>
      %c1 = arith.constant 1 : index
      %c0_39 = arith.constant 0 : index
      %c0_40 = arith.constant 0 : index
      %63 = vector.load %arg11[%c1, %c0_39, %c0_40] : memref<2x8x128xf32, #tpu.memory_space<vmem>>, vector<1x8x128xf32>
      %64 = vector.shape_cast %63 : vector<1x8x128xf32> to vector<8x128xf32>
      %65 = vector.extract_strided_slice %62 {offsets = [0, 0], sizes = [8, 128], strides = [1, 1]} : vector<8x512xf32> to vector<8x128xf32>
      %66 = arith.negf %65 : vector<8x128xf32>
      %67 = math.exp %66 : vector<8x128xf32>
      %cst_41 = arith.constant 1.000000e+00 : f32
      %68 = vector.broadcast %cst_41 : f32 to vector<8x128xf32>
      %69 = arith.addf %68, %67 : vector<8x128xf32>
      %70 = arith.divf %68, %69 : vector<8x128xf32>
      %71 = vector.extract_strided_slice %62 {offsets = [0, 128], sizes = [8, 128], strides = [1, 1]} : vector<8x512xf32> to vector<8x128xf32>
      %72 = arith.negf %71 : vector<8x128xf32>
      %73 = math.exp %72 : vector<8x128xf32>
      %cst_42 = arith.constant 1.000000e+00 : f32
      %74 = vector.broadcast %cst_42 : f32 to vector<8x128xf32>
      %75 = arith.addf %74, %73 : vector<8x128xf32>
      %76 = arith.divf %74, %75 : vector<8x128xf32>
      %77 = vector.extract_strided_slice %62 {offsets = [0, 256], sizes = [8, 128], strides = [1, 1]} : vector<8x512xf32> to vector<8x128xf32>
      %78 = math.tanh %77 : vector<8x128xf32>
      %79 = vector.extract_strided_slice %62 {offsets = [0, 384], sizes = [8, 128], strides = [1, 1]} : vector<8x512xf32> to vector<8x128xf32>
      %80 = arith.negf %79 : vector<8x128xf32>
      %81 = math.exp %80 : vector<8x128xf32>
      %cst_43 = arith.constant 1.000000e+00 : f32
      %82 = vector.broadcast %cst_43 : f32 to vector<8x128xf32>
      %83 = arith.addf %82, %81 : vector<8x128xf32>
      %84 = arith.divf %82, %83 : vector<8x128xf32>
      %85 = arith.mulf %76, %64 : vector<8x128xf32>
      %86 = arith.mulf %70, %78 : vector<8x128xf32>
      %87 = arith.addf %85, %86 : vector<8x128xf32>
      %88 = math.tanh %87 : vector<8x128xf32>
      %89 = arith.mulf %84, %88 : vector<8x128xf32>
      %c1_44 = arith.constant 1 : index
      %c0_45 = arith.constant 0 : index
      %c0_46 = arith.constant 0 : index
      %90 = vector.load %arg11[%c1_44, %c0_45, %c0_46] : memref<2x8x128xf32, #tpu.memory_space<vmem>>, vector<1x8x128xf32>
      %91 = vector.shape_cast %90 : vector<1x8x128xf32> to vector<8x128xf32>
      %92 = vector.shape_cast %87 : vector<8x128xf32> to vector<1x8x128xf32>
      tpu.vector_store %arg11[%c1_44, %c0_45, %c0_46], %92 {strides = array<i32>} : memref<2x8x128xf32, #tpu.memory_space<vmem>>, vector<1x8x128xf32>,
      %93 = arith.truncf %89 : vector<8x128xf32> to vector<8x128xbf16>
      %c0_47 = arith.constant 0 : index
      %c128 = arith.constant 128 : index
      %94 = vector.load %arg10[%c0_47, %c128] : memref<8x256xbf16, #tpu.memory_space<vmem>>, vector<8x128xbf16>
      tpu.vector_store %arg10[%c0_47, %c128], %93 {strides = array<i32>} : memref<8x256xbf16, #tpu.memory_space<vmem>>, vector<8x128xbf16>,
      %95 = arith.addi %16, %c0_i32_13 : i32
      %c1_i32 = arith.constant 1 : i32
      %96 = arith.addi %95, %c1_i32 : i32
      %97 = vector.broadcast %96 : i32 to vector<8x1xi32>
      %98 = arith.cmpi eq, %15, %97 : vector<8x1xi32>
      %c0_48 = arith.constant 0 : index
      %c0_49 = arith.constant 0 : index
      %99 = vector.load %arg9[%c0_48, %c0_49] : memref<8x128xf32, #tpu.memory_space<vmem>>, vector<8x128xf32>
      %100 = vector.shape_cast %98 : vector<8x1xi1> to vector<8x1xi1>
      %101 = vector.broadcast %100 : vector<8x1xi1> to vector<8x128xi1>
      %102 = arith.select %101, %89, %99 : vector<8x128xi1>, vector<8x128xf32>
      %c0_50 = arith.constant 0 : index
      %c0_51 = arith.constant 0 : index
      %103 = vector.load %arg9[%c0_50, %c0_51] : memref<8x128xf32, #tpu.memory_space<vmem>>, vector<8x128xf32>
      tpu.vector_store %arg9[%c0_50, %c0_51], %102 {strides = array<i32>} : memref<8x128xf32, #tpu.memory_space<vmem>>, vector<8x128xf32>,
      %c1_i32_52 = arith.constant 1 : i32
      %c8_i32_53 = arith.constant 8 : i32
      %104 = arith.muli %c1_i32_52, %c8_i32_53 : i32
      %105 = tpu.assume_multiple %104, 8 : i32
      %c0_54 = arith.constant 0 : index
      %c0_55 = arith.constant 0 : index
      %106 = vector.load %arg10[%c0_54, %c0_55] : memref<8x256xbf16, #tpu.memory_space<vmem>>, vector<8x128xbf16>
      %107 = arith.index_cast %105 : i32 to index
      %c0_56 = arith.constant 0 : index
      %108 = vector.load %arg12[%107, %c0_56] : memref<64x512xf32, #tpu.memory_space<vmem>>, vector<8x512xf32>
      %c0_57 = arith.constant 0 : index
      %c0_58 = arith.constant 0 : index
      %109 = vector.load %arg5[%c0_57, %c0_58] : memref<128x512xbf16, #tpu.memory_space<vmem>>, vector<128x512xbf16>
      %cst_59 = arith.constant dense<0.000000e+00> : vector<8x512xf32>
      %110 = tpu.matmul %106, %109, %cst_59 {dimension_numbers = #tpu.dot_dimension_numbers<[1], [0], [0], [1], [0, 0, 1, 1], [], []>} : vector<8x128xbf16>, vector<128x512xbf16>, vector<8x512xf32> -> vector<8x512xf32>
      %111 = arith.addf %108, %110 : vector<8x512xf32>
      %c0_60 = arith.constant 0 : index
      %c0_61 = arith.constant 0 : index
      %c0_62 = arith.constant 0 : index
      %112 = vector.load %arg11[%c0_60, %c0_61, %c0_62] : memref<2x8x128xf32, #tpu.memory_space<vmem>>, vector<1x8x128xf32>
      %113 = vector.shape_cast %112 : vector<1x8x128xf32> to vector<8x128xf32>
      %114 = vector.extract_strided_slice %111 {offsets = [0, 0], sizes = [8, 128], strides = [1, 1]} : vector<8x512xf32> to vector<8x128xf32>
      %115 = arith.negf %114 : vector<8x128xf32>
      %116 = math.exp %115 : vector<8x128xf32>
      %cst_63 = arith.constant 1.000000e+00 : f32
      %117 = vector.broadcast %cst_63 : f32 to vector<8x128xf32>
      %118 = arith.addf %117, %116 : vector<8x128xf32>
      %119 = arith.divf %117, %118 : vector<8x128xf32>
      %120 = vector.extract_strided_slice %111 {offsets = [0, 128], sizes = [8, 128], strides = [1, 1]} : vector<8x512xf32> to vector<8x128xf32>
      %121 = arith.negf %120 : vector<8x128xf32>
      %122 = math.exp %121 : vector<8x128xf32>
      %cst_64 = arith.constant 1.000000e+00 : f32
      %123 = vector.broadcast %cst_64 : f32 to vector<8x128xf32>
      %124 = arith.addf %123, %122 : vector<8x128xf32>
      %125 = arith.divf %123, %124 : vector<8x128xf32>
      %126 = vector.extract_strided_slice %111 {offsets = [0, 256], sizes = [8, 128], strides = [1, 1]} : vector<8x512xf32> to vector<8x128xf32>
      %127 = math.tanh %126 : vector<8x128xf32>
      %128 = vector.extract_strided_slice %111 {offsets = [0, 384], sizes = [8, 128], strides = [1, 1]} : vector<8x512xf32> to vector<8x128xf32>
      %129 = arith.negf %128 : vector<8x128xf32>
      %130 = math.exp %129 : vector<8x128xf32>
      %cst_65 = arith.constant 1.000000e+00 : f32
      %131 = vector.broadcast %cst_65 : f32 to vector<8x128xf32>
      %132 = arith.addf %131, %130 : vector<8x128xf32>
      %133 = arith.divf %131, %132 : vector<8x128xf32>
      %134 = arith.mulf %125, %113 : vector<8x128xf32>
      %135 = arith.mulf %119, %127 : vector<8x128xf32>
      %136 = arith.addf %134, %135 : vector<8x128xf32>
      %137 = math.tanh %136 : vector<8x128xf32>
      %138 = arith.mulf %133, %137 : vector<8x128xf32>
      %c0_66 = arith.constant 0 : index
      %c0_67 = arith.constant 0 : index
      %c0_68 = arith.constant 0 : index
      %139 = vector.load %arg11[%c0_66, %c0_67, %c0_68] : memref<2x8x128xf32, #tpu.memory_space<vmem>>, vector<1x8x128xf32>
      %140 = vector.shape_cast %139 : vector<1x8x128xf32> to vector<8x128xf32>
      %141 = vector.shape_cast %136 : vector<8x128xf32> to vector<1x8x128xf32>
      tpu.vector_store %arg11[%c0_66, %c0_67, %c0_68], %141 {strides = array<i32>} : memref<2x8x128xf32, #tpu.memory_space<vmem>>, vector<1x8x128xf32>,
      %142 = arith.truncf %138 : vector<8x128xf32> to vector<8x128xbf16>
      %c0_69 = arith.constant 0 : index
      %c0_70 = arith.constant 0 : index
      %143 = vector.load %arg10[%c0_69, %c0_70] : memref<8x256xbf16, #tpu.memory_space<vmem>>, vector<8x128xbf16>
      tpu.vector_store %arg10[%c0_69, %c0_70], %142 {strides = array<i32>} : memref<8x256xbf16, #tpu.memory_space<vmem>>, vector<8x128xbf16>,
      %c0_71 = arith.constant 0 : index
      %c0_72 = arith.constant 0 : index
      %144 = vector.load %arg10[%c0_71, %c0_72] : memref<8x256xbf16, #tpu.memory_space<vmem>>, vector<8x256xbf16>
      %c0_73 = arith.constant 0 : index
      %c0_74 = arith.constant 0 : index
      %145 = vector.load %arg7[%c0_73, %c0_74] : memref<256x512xbf16, #tpu.memory_space<vmem>>, vector<256x512xbf16>
      %cst_75 = arith.constant dense<0.000000e+00> : vector<8x512xf32>
      %146 = tpu.matmul %144, %145, %cst_75 {dimension_numbers = #tpu.dot_dimension_numbers<[1], [0], [0], [1], [0, 0, 1, 1], [], []>} : vector<8x256xbf16>, vector<256x512xbf16>, vector<8x512xf32> -> vector<8x512xf32>
      %c0_76 = arith.constant 0 : index
      %c0_77 = arith.constant 0 : index
      %147 = vector.load %arg8[%c0_76, %c0_77] : memref<1x512xf32, #tpu.memory_space<vmem>>, vector<1x512xf32>
      %148 = vector.broadcast %147 : vector<1x512xf32> to vector<8x512xf32>
      %149 = arith.addf %146, %148 : vector<8x512xf32>
      %c1_78 = arith.constant 1 : index
      %c0_79 = arith.constant 0 : index
      %c0_80 = arith.constant 0 : index
      %150 = vector.load %arg11[%c1_78, %c0_79, %c0_80] : memref<2x8x128xf32, #tpu.memory_space<vmem>>, vector<1x8x128xf32>
      %151 = vector.shape_cast %150 : vector<1x8x128xf32> to vector<8x128xf32>
      %152 = vector.extract_strided_slice %149 {offsets = [0, 0], sizes = [8, 128], strides = [1, 1]} : vector<8x512xf32> to vector<8x128xf32>
      %153 = arith.negf %152 : vector<8x128xf32>
      %154 = math.exp %153 : vector<8x128xf32>
      %cst_81 = arith.constant 1.000000e+00 : f32
      %155 = vector.broadcast %cst_81 : f32 to vector<8x128xf32>
      %156 = arith.addf %155, %154 : vector<8x128xf32>
      %157 = arith.divf %155, %156 : vector<8x128xf32>
      %158 = vector.extract_strided_slice %149 {offsets = [0, 128], sizes = [8, 128], strides = [1, 1]} : vector<8x512xf32> to vector<8x128xf32>
      %159 = arith.negf %158 : vector<8x128xf32>
      %160 = math.exp %159 : vector<8x128xf32>
      %cst_82 = arith.constant 1.000000e+00 : f32
      %161 = vector.broadcast %cst_82 : f32 to vector<8x128xf32>
      %162 = arith.addf %161, %160 : vector<8x128xf32>
      %163 = arith.divf %161, %162 : vector<8x128xf32>
      %164 = vector.extract_strided_slice %149 {offsets = [0, 256], sizes = [8, 128], strides = [1, 1]} : vector<8x512xf32> to vector<8x128xf32>
      %165 = math.tanh %164 : vector<8x128xf32>
      %166 = vector.extract_strided_slice %149 {offsets = [0, 384], sizes = [8, 128], strides = [1, 1]} : vector<8x512xf32> to vector<8x128xf32>
      %167 = arith.negf %166 : vector<8x128xf32>
      %168 = math.exp %167 : vector<8x128xf32>
      %cst_83 = arith.constant 1.000000e+00 : f32
      %169 = vector.broadcast %cst_83 : f32 to vector<8x128xf32>
      %170 = arith.addf %169, %168 : vector<8x128xf32>
      %171 = arith.divf %169, %170 : vector<8x128xf32>
      %172 = arith.mulf %163, %151 : vector<8x128xf32>
      %173 = arith.mulf %157, %165 : vector<8x128xf32>
      %174 = arith.addf %172, %173 : vector<8x128xf32>
      %175 = math.tanh %174 : vector<8x128xf32>
      %176 = arith.mulf %171, %175 : vector<8x128xf32>
      %c1_84 = arith.constant 1 : index
      %c0_85 = arith.constant 0 : index
      %c0_86 = arith.constant 0 : index
      %177 = vector.load %arg11[%c1_84, %c0_85, %c0_86] : memref<2x8x128xf32, #tpu.memory_space<vmem>>, vector<1x8x128xf32>
      %178 = vector.shape_cast %177 : vector<1x8x128xf32> to vector<8x128xf32>
      %179 = vector.shape_cast %174 : vector<8x128xf32> to vector<1x8x128xf32>
      tpu.vector_store %arg11[%c1_84, %c0_85, %c0_86], %179 {strides = array<i32>} : memref<2x8x128xf32, #tpu.memory_space<vmem>>, vector<1x8x128xf32>,
      %180 = arith.truncf %176 : vector<8x128xf32> to vector<8x128xbf16>
      %c0_87 = arith.constant 0 : index
      %c128_88 = arith.constant 128 : index
      %181 = vector.load %arg10[%c0_87, %c128_88] : memref<8x256xbf16, #tpu.memory_space<vmem>>, vector<8x128xbf16>
      tpu.vector_store %arg10[%c0_87, %c128_88], %180 {strides = array<i32>} : memref<8x256xbf16, #tpu.memory_space<vmem>>, vector<8x128xbf16>,
      %182 = arith.addi %16, %c1_i32_52 : i32
      %c1_i32_89 = arith.constant 1 : i32
      %183 = arith.addi %182, %c1_i32_89 : i32
      %184 = vector.broadcast %183 : i32 to vector<8x1xi32>
      %185 = arith.cmpi eq, %15, %184 : vector<8x1xi32>
      %c0_90 = arith.constant 0 : index
      %c0_91 = arith.constant 0 : index
      %186 = vector.load %arg9[%c0_90, %c0_91] : memref<8x128xf32, #tpu.memory_space<vmem>>, vector<8x128xf32>
      %187 = vector.shape_cast %185 : vector<8x1xi1> to vector<8x1xi1>
      %188 = vector.broadcast %187 : vector<8x1xi1> to vector<8x128xi1>
      %189 = arith.select %188, %176, %186 : vector<8x128xi1>, vector<8x128xf32>
      %c0_92 = arith.constant 0 : index
      %c0_93 = arith.constant 0 : index
      %190 = vector.load %arg9[%c0_92, %c0_93] : memref<8x128xf32, #tpu.memory_space<vmem>>, vector<8x128xf32>
      tpu.vector_store %arg9[%c0_92, %c0_93], %189 {strides = array<i32>} : memref<8x128xf32, #tpu.memory_space<vmem>>, vector<8x128xf32>,
      %c2_i32 = arith.constant 2 : i32
      %c8_i32_94 = arith.constant 8 : i32
      %191 = arith.muli %c2_i32, %c8_i32_94 : i32
      %192 = tpu.assume_multiple %191, 8 : i32
      %c0_95 = arith.constant 0 : index
      %c0_96 = arith.constant 0 : index
      %193 = vector.load %arg10[%c0_95, %c0_96] : memref<8x256xbf16, #tpu.memory_space<vmem>>, vector<8x128xbf16>
      %194 = arith.index_cast %192 : i32 to index
      %c0_97 = arith.constant 0 : index
      %195 = vector.load %arg12[%194, %c0_97] : memref<64x512xf32, #tpu.memory_space<vmem>>, vector<8x512xf32>
      %c0_98 = arith.constant 0 : index
      %c0_99 = arith.constant 0 : index
      %196 = vector.load %arg5[%c0_98, %c0_99] : memref<128x512xbf16, #tpu.memory_space<vmem>>, vector<128x512xbf16>
      %cst_100 = arith.constant dense<0.000000e+00> : vector<8x512xf32>
      %197 = tpu.matmul %193, %196, %cst_100 {dimension_numbers = #tpu.dot_dimension_numbers<[1], [0], [0], [1], [0, 0, 1, 1], [], []>} : vector<8x128xbf16>, vector<128x512xbf16>, vector<8x512xf32> -> vector<8x512xf32>
      %198 = arith.addf %195, %197 : vector<8x512xf32>
      %c0_101 = arith.constant 0 : index
      %c0_102 = arith.constant 0 : index
      %c0_103 = arith.constant 0 : index
      %199 = vector.load %arg11[%c0_101, %c0_102, %c0_103] : memref<2x8x128xf32, #tpu.memory_space<vmem>>, vector<1x8x128xf32>
      %200 = vector.shape_cast %199 : vector<1x8x128xf32> to vector<8x128xf32>
      %201 = vector.extract_strided_slice %198 {offsets = [0, 0], sizes = [8, 128], strides = [1, 1]} : vector<8x512xf32> to vector<8x128xf32>
      %202 = arith.negf %201 : vector<8x128xf32>
      %203 = math.exp %202 : vector<8x128xf32>
      %cst_104 = arith.constant 1.000000e+00 : f32
      %204 = vector.broadcast %cst_104 : f32 to vector<8x128xf32>
      %205 = arith.addf %204, %203 : vector<8x128xf32>
      %206 = arith.divf %204, %205 : vector<8x128xf32>
      %207 = vector.extract_strided_slice %198 {offsets = [0, 128], sizes = [8, 128], strides = [1, 1]} : vector<8x512xf32> to vector<8x128xf32>
      %208 = arith.negf %207 : vector<8x128xf32>
      %209 = math.exp %208 : vector<8x128xf32>
      %cst_105 = arith.constant 1.000000e+00 : f32
      %210 = vector.broadcast %cst_105 : f32 to vector<8x128xf32>
      %211 = arith.addf %210, %209 : vector<8x128xf32>
      %212 = arith.divf %210, %211 : vector<8x128xf32>
      %213 = vector.extract_strided_slice %198 {offsets = [0, 256], sizes = [8, 128], strides = [1, 1]} : vector<8x512xf32> to vector<8x128xf32>
      %214 = math.tanh %213 : vector<8x128xf32>
      %215 = vector.extract_strided_slice %198 {offsets = [0, 384], sizes = [8, 128], strides = [1, 1]} : vector<8x512xf32> to vector<8x128xf32>
      %216 = arith.negf %215 : vector<8x128xf32>
      %217 = math.exp %216 : vector<8x128xf32>
      %cst_106 = arith.constant 1.000000e+00 : f32
      %218 = vector.broadcast %cst_106 : f32 to vector<8x128xf32>
      %219 = arith.addf %218, %217 : vector<8x128xf32>
      %220 = arith.divf %218, %219 : vector<8x128xf32>
      %221 = arith.mulf %212, %200 : vector<8x128xf32>
      %222 = arith.mulf %206, %214 : vector<8x128xf32>
      %223 = arith.addf %221, %222 : vector<8x128xf32>
      %224 = math.tanh %223 : vector<8x128xf32>
      %225 = arith.mulf %220, %224 : vector<8x128xf32>
      %c0_107 = arith.constant 0 : index
      %c0_108 = arith.constant 0 : index
      %c0_109 = arith.constant 0 : index
      %226 = vector.load %arg11[%c0_107, %c0_108, %c0_109] : memref<2x8x128xf32, #tpu.memory_space<vmem>>, vector<1x8x128xf32>
      %227 = vector.shape_cast %226 : vector<1x8x128xf32> to vector<8x128xf32>
      %228 = vector.shape_cast %223 : vector<8x128xf32> to vector<1x8x128xf32>
      tpu.vector_store %arg11[%c0_107, %c0_108, %c0_109], %228 {strides = array<i32>} : memref<2x8x128xf32, #tpu.memory_space<vmem>>, vector<1x8x128xf32>,
      %229 = arith.truncf %225 : vector<8x128xf32> to vector<8x128xbf16>
      %c0_110 = arith.constant 0 : index
      %c0_111 = arith.constant 0 : index
      %230 = vector.load %arg10[%c0_110, %c0_111] : memref<8x256xbf16, #tpu.memory_space<vmem>>, vector<8x128xbf16>
      tpu.vector_store %arg10[%c0_110, %c0_111], %229 {strides = array<i32>} : memref<8x256xbf16, #tpu.memory_space<vmem>>, vector<8x128xbf16>,
      %c0_112 = arith.constant 0 : index
      %c0_113 = arith.constant 0 : index
      %231 = vector.load %arg10[%c0_112, %c0_113] : memref<8x256xbf16, #tpu.memory_space<vmem>>, vector<8x256xbf16>
      %c0_114 = arith.constant 0 : index
      %c0_115 = arith.constant 0 : index
      %232 = vector.load %arg7[%c0_114, %c0_115] : memref<256x512xbf16, #tpu.memory_space<vmem>>, vector<256x512xbf16>
      %cst_116 = arith.constant dense<0.000000e+00> : vector<8x512xf32>
      %233 = tpu.matmul %231, %232, %cst_116 {dimension_numbers = #tpu.dot_dimension_numbers<[1], [0], [0], [1], [0, 0, 1, 1], [], []>} : vector<8x256xbf16>, vector<256x512xbf16>, vector<8x512xf32> -> vector<8x512xf32>
      %c0_117 = arith.constant 0 : index
      %c0_118 = arith.constant 0 : index
      %234 = vector.load %arg8[%c0_117, %c0_118] : memref<1x512xf32, #tpu.memory_space<vmem>>, vector<1x512xf32>
      %235 = vector.broadcast %234 : vector<1x512xf32> to vector<8x512xf32>
      %236 = arith.addf %233, %235 : vector<8x512xf32>
      %c1_119 = arith.constant 1 : index
      %c0_120 = arith.constant 0 : index
      %c0_121 = arith.constant 0 : index
      %237 = vector.load %arg11[%c1_119, %c0_120, %c0_121] : memref<2x8x128xf32, #tpu.memory_space<vmem>>, vector<1x8x128xf32>
      %238 = vector.shape_cast %237 : vector<1x8x128xf32> to vector<8x128xf32>
      %239 = vector.extract_strided_slice %236 {offsets = [0, 0], sizes = [8, 128], strides = [1, 1]} : vector<8x512xf32> to vector<8x128xf32>
      %240 = arith.negf %239 : vector<8x128xf32>
      %241 = math.exp %240 : vector<8x128xf32>
      %cst_122 = arith.constant 1.000000e+00 : f32
      %242 = vector.broadcast %cst_122 : f32 to vector<8x128xf32>
      %243 = arith.addf %242, %241 : vector<8x128xf32>
      %244 = arith.divf %242, %243 : vector<8x128xf32>
      %245 = vector.extract_strided_slice %236 {offsets = [0, 128], sizes = [8, 128], strides = [1, 1]} : vector<8x512xf32> to vector<8x128xf32>
      %246 = arith.negf %245 : vector<8x128xf32>
      %247 = math.exp %246 : vector<8x128xf32>
      %cst_123 = arith.constant 1.000000e+00 : f32
      %248 = vector.broadcast %cst_123 : f32 to vector<8x128xf32>
      %249 = arith.addf %248, %247 : vector<8x128xf32>
      %250 = arith.divf %248, %249 : vector<8x128xf32>
      %251 = vector.extract_strided_slice %236 {offsets = [0, 256], sizes = [8, 128], strides = [1, 1]} : vector<8x512xf32> to vector<8x128xf32>
      %252 = math.tanh %251 : vector<8x128xf32>
      %253 = vector.extract_strided_slice %236 {offsets = [0, 384], sizes = [8, 128], strides = [1, 1]} : vector<8x512xf32> to vector<8x128xf32>
      %254 = arith.negf %253 : vector<8x128xf32>
      %255 = math.exp %254 : vector<8x128xf32>
      %cst_124 = arith.constant 1.000000e+00 : f32
      %256 = vector.broadcast %cst_124 : f32 to vector<8x128xf32>
      %257 = arith.addf %256, %255 : vector<8x128xf32>
      %258 = arith.divf %256, %257 : vector<8x128xf32>
      %259 = arith.mulf %250, %238 : vector<8x128xf32>
      %260 = arith.mulf %244, %252 : vector<8x128xf32>
      %261 = arith.addf %259, %260 : vector<8x128xf32>
      %262 = math.tanh %261 : vector<8x128xf32>
      %263 = arith.mulf %258, %262 : vector<8x128xf32>
      %c1_125 = arith.constant 1 : index
      %c0_126 = arith.constant 0 : index
      %c0_127 = arith.constant 0 : index
      %264 = vector.load %arg11[%c1_125, %c0_126, %c0_127] : memref<2x8x128xf32, #tpu.memory_space<vmem>>, vector<1x8x128xf32>
      %265 = vector.shape_cast %264 : vector<1x8x128xf32> to vector<8x128xf32>
      %266 = vector.shape_cast %261 : vector<8x128xf32> to vector<1x8x128xf32>
      tpu.vector_store %arg11[%c1_125, %c0_126, %c0_127], %266 {strides = array<i32>} : memref<2x8x128xf32, #tpu.memory_space<vmem>>, vector<1x8x128xf32>,
      %267 = arith.truncf %263 : vector<8x128xf32> to vector<8x128xbf16>
      %c0_128 = arith.constant 0 : index
      %c128_129 = arith.constant 128 : index
      %268 = vector.load %arg10[%c0_128, %c128_129] : memref<8x256xbf16, #tpu.memory_space<vmem>>, vector<8x128xbf16>
      tpu.vector_store %arg10[%c0_128, %c128_129], %267 {strides = array<i32>} : memref<8x256xbf16, #tpu.memory_space<vmem>>, vector<8x128xbf16>,
      %269 = arith.addi %16, %c2_i32 : i32
      %c1_i32_130 = arith.constant 1 : i32
      %270 = arith.addi %269, %c1_i32_130 : i32
      %271 = vector.broadcast %270 : i32 to vector<8x1xi32>
      %272 = arith.cmpi eq, %15, %271 : vector<8x1xi32>
      %c0_131 = arith.constant 0 : index
      %c0_132 = arith.constant 0 : index
      %273 = vector.load %arg9[%c0_131, %c0_132] : memref<8x128xf32, #tpu.memory_space<vmem>>, vector<8x128xf32>
      %274 = vector.shape_cast %272 : vector<8x1xi1> to vector<8x1xi1>
      %275 = vector.broadcast %274 : vector<8x1xi1> to vector<8x128xi1>
      %276 = arith.select %275, %263, %273 : vector<8x128xi1>, vector<8x128xf32>
      %c0_133 = arith.constant 0 : index
      %c0_134 = arith.constant 0 : index
      %277 = vector.load %arg9[%c0_133, %c0_134] : memref<8x128xf32, #tpu.memory_space<vmem>>, vector<8x128xf32>
      tpu.vector_store %arg9[%c0_133, %c0_134], %276 {strides = array<i32>} : memref<8x128xf32, #tpu.memory_space<vmem>>, vector<8x128xf32>,
      %c3_i32 = arith.constant 3 : i32
      %c8_i32_135 = arith.constant 8 : i32
      %278 = arith.muli %c3_i32, %c8_i32_135 : i32
      %279 = tpu.assume_multiple %278, 8 : i32
      %c0_136 = arith.constant 0 : index
      %c0_137 = arith.constant 0 : index
      %280 = vector.load %arg10[%c0_136, %c0_137] : memref<8x256xbf16, #tpu.memory_space<vmem>>, vector<8x128xbf16>
      %281 = arith.index_cast %279 : i32 to index
      %c0_138 = arith.constant 0 : index
      %282 = vector.load %arg12[%281, %c0_138] : memref<64x512xf32, #tpu.memory_space<vmem>>, vector<8x512xf32>
      %c0_139 = arith.constant 0 : index
      %c0_140 = arith.constant 0 : index
      %283 = vector.load %arg5[%c0_139, %c0_140] : memref<128x512xbf16, #tpu.memory_space<vmem>>, vector<128x512xbf16>
      %cst_141 = arith.constant dense<0.000000e+00> : vector<8x512xf32>
      %284 = tpu.matmul %280, %283, %cst_141 {dimension_numbers = #tpu.dot_dimension_numbers<[1], [0], [0], [1], [0, 0, 1, 1], [], []>} : vector<8x128xbf16>, vector<128x512xbf16>, vector<8x512xf32> -> vector<8x512xf32>
      %285 = arith.addf %282, %284 : vector<8x512xf32>
      %c0_142 = arith.constant 0 : index
      %c0_143 = arith.constant 0 : index
      %c0_144 = arith.constant 0 : index
      %286 = vector.load %arg11[%c0_142, %c0_143, %c0_144] : memref<2x8x128xf32, #tpu.memory_space<vmem>>, vector<1x8x128xf32>
      %287 = vector.shape_cast %286 : vector<1x8x128xf32> to vector<8x128xf32>
      %288 = vector.extract_strided_slice %285 {offsets = [0, 0], sizes = [8, 128], strides = [1, 1]} : vector<8x512xf32> to vector<8x128xf32>
      %289 = arith.negf %288 : vector<8x128xf32>
      %290 = math.exp %289 : vector<8x128xf32>
      %cst_145 = arith.constant 1.000000e+00 : f32
      %291 = vector.broadcast %cst_145 : f32 to vector<8x128xf32>
      %292 = arith.addf %291, %290 : vector<8x128xf32>
      %293 = arith.divf %291, %292 : vector<8x128xf32>
      %294 = vector.extract_strided_slice %285 {offsets = [0, 128], sizes = [8, 128], strides = [1, 1]} : vector<8x512xf32> to vector<8x128xf32>
      %295 = arith.negf %294 : vector<8x128xf32>
      %296 = math.exp %295 : vector<8x128xf32>
      %cst_146 = arith.constant 1.000000e+00 : f32
      %297 = vector.broadcast %cst_146 : f32 to vector<8x128xf32>
      %298 = arith.addf %297, %296 : vector<8x128xf32>
      %299 = arith.divf %297, %298 : vector<8x128xf32>
      %300 = vector.extract_strided_slice %285 {offsets = [0, 256], sizes = [8, 128], strides = [1, 1]} : vector<8x512xf32> to vector<8x128xf32>
      %301 = math.tanh %300 : vector<8x128xf32>
      %302 = vector.extract_strided_slice %285 {offsets = [0, 384], sizes = [8, 128], strides = [1, 1]} : vector<8x512xf32> to vector<8x128xf32>
      %303 = arith.negf %302 : vector<8x128xf32>
      %304 = math.exp %303 : vector<8x128xf32>
      %cst_147 = arith.constant 1.000000e+00 : f32
      %305 = vector.broadcast %cst_147 : f32 to vector<8x128xf32>
      %306 = arith.addf %305, %304 : vector<8x128xf32>
      %307 = arith.divf %305, %306 : vector<8x128xf32>
      %308 = arith.mulf %299, %287 : vector<8x128xf32>
      %309 = arith.mulf %293, %301 : vector<8x128xf32>
      %310 = arith.addf %308, %309 : vector<8x128xf32>
      %311 = math.tanh %310 : vector<8x128xf32>
      %312 = arith.mulf %307, %311 : vector<8x128xf32>
      %c0_148 = arith.constant 0 : index
      %c0_149 = arith.constant 0 : index
      %c0_150 = arith.constant 0 : index
      %313 = vector.load %arg11[%c0_148, %c0_149, %c0_150] : memref<2x8x128xf32, #tpu.memory_space<vmem>>, vector<1x8x128xf32>
      %314 = vector.shape_cast %313 : vector<1x8x128xf32> to vector<8x128xf32>
      %315 = vector.shape_cast %310 : vector<8x128xf32> to vector<1x8x128xf32>
      tpu.vector_store %arg11[%c0_148, %c0_149, %c0_150], %315 {strides = array<i32>} : memref<2x8x128xf32, #tpu.memory_space<vmem>>, vector<1x8x128xf32>,
      %316 = arith.truncf %312 : vector<8x128xf32> to vector<8x128xbf16>
      %c0_151 = arith.constant 0 : index
      %c0_152 = arith.constant 0 : index
      %317 = vector.load %arg10[%c0_151, %c0_152] : memref<8x256xbf16, #tpu.memory_space<vmem>>, vector<8x128xbf16>
      tpu.vector_store %arg10[%c0_151, %c0_152], %316 {strides = array<i32>} : memref<8x256xbf16, #tpu.memory_space<vmem>>, vector<8x128xbf16>,
      %c0_153 = arith.constant 0 : index
      %c0_154 = arith.constant 0 : index
      %318 = vector.load %arg10[%c0_153, %c0_154] : memref<8x256xbf16, #tpu.memory_space<vmem>>, vector<8x256xbf16>
      %c0_155 = arith.constant 0 : index
      %c0_156 = arith.constant 0 : index
      %319 = vector.load %arg7[%c0_155, %c0_156] : memref<256x512xbf16, #tpu.memory_space<vmem>>, vector<256x512xbf16>
      %cst_157 = arith.constant dense<0.000000e+00> : vector<8x512xf32>
      %320 = tpu.matmul %318, %319, %cst_157 {dimension_numbers = #tpu.dot_dimension_numbers<[1], [0], [0], [1], [0, 0, 1, 1], [], []>} : vector<8x256xbf16>, vector<256x512xbf16>, vector<8x512xf32> -> vector<8x512xf32>
      %c0_158 = arith.constant 0 : index
      %c0_159 = arith.constant 0 : index
      %321 = vector.load %arg8[%c0_158, %c0_159] : memref<1x512xf32, #tpu.memory_space<vmem>>, vector<1x512xf32>
      %322 = vector.broadcast %321 : vector<1x512xf32> to vector<8x512xf32>
      %323 = arith.addf %320, %322 : vector<8x512xf32>
      %c1_160 = arith.constant 1 : index
      %c0_161 = arith.constant 0 : index
      %c0_162 = arith.constant 0 : index
      %324 = vector.load %arg11[%c1_160, %c0_161, %c0_162] : memref<2x8x128xf32, #tpu.memory_space<vmem>>, vector<1x8x128xf32>
      %325 = vector.shape_cast %324 : vector<1x8x128xf32> to vector<8x128xf32>
      %326 = vector.extract_strided_slice %323 {offsets = [0, 0], sizes = [8, 128], strides = [1, 1]} : vector<8x512xf32> to vector<8x128xf32>
      %327 = arith.negf %326 : vector<8x128xf32>
      %328 = math.exp %327 : vector<8x128xf32>
      %cst_163 = arith.constant 1.000000e+00 : f32
      %329 = vector.broadcast %cst_163 : f32 to vector<8x128xf32>
      %330 = arith.addf %329, %328 : vector<8x128xf32>
      %331 = arith.divf %329, %330 : vector<8x128xf32>
      %332 = vector.extract_strided_slice %323 {offsets = [0, 128], sizes = [8, 128], strides = [1, 1]} : vector<8x512xf32> to vector<8x128xf32>
      %333 = arith.negf %332 : vector<8x128xf32>
      %334 = math.exp %333 : vector<8x128xf32>
      %cst_164 = arith.constant 1.000000e+00 : f32
      %335 = vector.broadcast %cst_164 : f32 to vector<8x128xf32>
      %336 = arith.addf %335, %334 : vector<8x128xf32>
      %337 = arith.divf %335, %336 : vector<8x128xf32>
      %338 = vector.extract_strided_slice %323 {offsets = [0, 256], sizes = [8, 128], strides = [1, 1]} : vector<8x512xf32> to vector<8x128xf32>
      %339 = math.tanh %338 : vector<8x128xf32>
      %340 = vector.extract_strided_slice %323 {offsets = [0, 384], sizes = [8, 128], strides = [1, 1]} : vector<8x512xf32> to vector<8x128xf32>
      %341 = arith.negf %340 : vector<8x128xf32>
      %342 = math.exp %341 : vector<8x128xf32>
      %cst_165 = arith.constant 1.000000e+00 : f32
      %343 = vector.broadcast %cst_165 : f32 to vector<8x128xf32>
      %344 = arith.addf %343, %342 : vector<8x128xf32>
      %345 = arith.divf %343, %344 : vector<8x128xf32>
      %346 = arith.mulf %337, %325 : vector<8x128xf32>
      %347 = arith.mulf %331, %339 : vector<8x128xf32>
      %348 = arith.addf %346, %347 : vector<8x128xf32>
      %349 = math.tanh %348 : vector<8x128xf32>
      %350 = arith.mulf %345, %349 : vector<8x128xf32>
      %c1_166 = arith.constant 1 : index
      %c0_167 = arith.constant 0 : index
      %c0_168 = arith.constant 0 : index
      %351 = vector.load %arg11[%c1_166, %c0_167, %c0_168] : memref<2x8x128xf32, #tpu.memory_space<vmem>>, vector<1x8x128xf32>
      %352 = vector.shape_cast %351 : vector<1x8x128xf32> to vector<8x128xf32>
      %353 = vector.shape_cast %348 : vector<8x128xf32> to vector<1x8x128xf32>
      tpu.vector_store %arg11[%c1_166, %c0_167, %c0_168], %353 {strides = array<i32>} : memref<2x8x128xf32, #tpu.memory_space<vmem>>, vector<1x8x128xf32>,
      %354 = arith.truncf %350 : vector<8x128xf32> to vector<8x128xbf16>
      %c0_169 = arith.constant 0 : index
      %c128_170 = arith.constant 128 : index
      %355 = vector.load %arg10[%c0_169, %c128_170] : memref<8x256xbf16, #tpu.memory_space<vmem>>, vector<8x128xbf16>
      tpu.vector_store %arg10[%c0_169, %c128_170], %354 {strides = array<i32>} : memref<8x256xbf16, #tpu.memory_space<vmem>>, vector<8x128xbf16>,
      %356 = arith.addi %16, %c3_i32 : i32
      %c1_i32_171 = arith.constant 1 : i32
      %357 = arith.addi %356, %c1_i32_171 : i32
      %358 = vector.broadcast %357 : i32 to vector<8x1xi32>
      %359 = arith.cmpi eq, %15, %358 : vector<8x1xi32>
      %c0_172 = arith.constant 0 : index
      %c0_173 = arith.constant 0 : index
      %360 = vector.load %arg9[%c0_172, %c0_173] : memref<8x128xf32, #tpu.memory_space<vmem>>, vector<8x128xf32>
      %361 = vector.shape_cast %359 : vector<8x1xi1> to vector<8x1xi1>
      %362 = vector.broadcast %361 : vector<8x1xi1> to vector<8x128xi1>
      %363 = arith.select %362, %350, %360 : vector<8x128xi1>, vector<8x128xf32>
      %c0_174 = arith.constant 0 : index
      %c0_175 = arith.constant 0 : index
      %364 = vector.load %arg9[%c0_174, %c0_175] : memref<8x128xf32, #tpu.memory_space<vmem>>, vector<8x128xf32>
      tpu.vector_store %arg9[%c0_174, %c0_175], %363 {strides = array<i32>} : memref<8x128xf32, #tpu.memory_space<vmem>>, vector<8x128xf32>,
      %c4_i32 = arith.constant 4 : i32
      %c8_i32_176 = arith.constant 8 : i32
      %365 = arith.muli %c4_i32, %c8_i32_176 : i32
      %366 = tpu.assume_multiple %365, 8 : i32
      %c0_177 = arith.constant 0 : index
      %c0_178 = arith.constant 0 : index
      %367 = vector.load %arg10[%c0_177, %c0_178] : memref<8x256xbf16, #tpu.memory_space<vmem>>, vector<8x128xbf16>
      %368 = arith.index_cast %366 : i32 to index
      %c0_179 = arith.constant 0 : index
      %369 = vector.load %arg12[%368, %c0_179] : memref<64x512xf32, #tpu.memory_space<vmem>>, vector<8x512xf32>
      %c0_180 = arith.constant 0 : index
      %c0_181 = arith.constant 0 : index
      %370 = vector.load %arg5[%c0_180, %c0_181] : memref<128x512xbf16, #tpu.memory_space<vmem>>, vector<128x512xbf16>
      %cst_182 = arith.constant dense<0.000000e+00> : vector<8x512xf32>
      %371 = tpu.matmul %367, %370, %cst_182 {dimension_numbers = #tpu.dot_dimension_numbers<[1], [0], [0], [1], [0, 0, 1, 1], [], []>} : vector<8x128xbf16>, vector<128x512xbf16>, vector<8x512xf32> -> vector<8x512xf32>
      %372 = arith.addf %369, %371 : vector<8x512xf32>
      %c0_183 = arith.constant 0 : index
      %c0_184 = arith.constant 0 : index
      %c0_185 = arith.constant 0 : index
      %373 = vector.load %arg11[%c0_183, %c0_184, %c0_185] : memref<2x8x128xf32, #tpu.memory_space<vmem>>, vector<1x8x128xf32>
      %374 = vector.shape_cast %373 : vector<1x8x128xf32> to vector<8x128xf32>
      %375 = vector.extract_strided_slice %372 {offsets = [0, 0], sizes = [8, 128], strides = [1, 1]} : vector<8x512xf32> to vector<8x128xf32>
      %376 = arith.negf %375 : vector<8x128xf32>
      %377 = math.exp %376 : vector<8x128xf32>
      %cst_186 = arith.constant 1.000000e+00 : f32
      %378 = vector.broadcast %cst_186 : f32 to vector<8x128xf32>
      %379 = arith.addf %378, %377 : vector<8x128xf32>
      %380 = arith.divf %378, %379 : vector<8x128xf32>
      %381 = vector.extract_strided_slice %372 {offsets = [0, 128], sizes = [8, 128], strides = [1, 1]} : vector<8x512xf32> to vector<8x128xf32>
      %382 = arith.negf %381 : vector<8x128xf32>
      %383 = math.exp %382 : vector<8x128xf32>
      %cst_187 = arith.constant 1.000000e+00 : f32
      %384 = vector.broadcast %cst_187 : f32 to vector<8x128xf32>
      %385 = arith.addf %384, %383 : vector<8x128xf32>
      %386 = arith.divf %384, %385 : vector<8x128xf32>
      %387 = vector.extract_strided_slice %372 {offsets = [0, 256], sizes = [8, 128], strides = [1, 1]} : vector<8x512xf32> to vector<8x128xf32>
      %388 = math.tanh %387 : vector<8x128xf32>
      %389 = vector.extract_strided_slice %372 {offsets = [0, 384], sizes = [8, 128], strides = [1, 1]} : vector<8x512xf32> to vector<8x128xf32>
      %390 = arith.negf %389 : vector<8x128xf32>
      %391 = math.exp %390 : vector<8x128xf32>
      %cst_188 = arith.constant 1.000000e+00 : f32
      %392 = vector.broadcast %cst_188 : f32 to vector<8x128xf32>
      %393 = arith.addf %392, %391 : vector<8x128xf32>
      %394 = arith.divf %392, %393 : vector<8x128xf32>
      %395 = arith.mulf %386, %374 : vector<8x128xf32>
      %396 = arith.mulf %380, %388 : vector<8x128xf32>
      %397 = arith.addf %395, %396 : vector<8x128xf32>
      %398 = math.tanh %397 : vector<8x128xf32>
      %399 = arith.mulf %394, %398 : vector<8x128xf32>
      %c0_189 = arith.constant 0 : index
      %c0_190 = arith.constant 0 : index
      %c0_191 = arith.constant 0 : index
      %400 = vector.load %arg11[%c0_189, %c0_190, %c0_191] : memref<2x8x128xf32, #tpu.memory_space<vmem>>, vector<1x8x128xf32>
      %401 = vector.shape_cast %400 : vector<1x8x128xf32> to vector<8x128xf32>
      %402 = vector.shape_cast %397 : vector<8x128xf32> to vector<1x8x128xf32>
      tpu.vector_store %arg11[%c0_189, %c0_190, %c0_191], %402 {strides = array<i32>} : memref<2x8x128xf32, #tpu.memory_space<vmem>>, vector<1x8x128xf32>,
      %403 = arith.truncf %399 : vector<8x128xf32> to vector<8x128xbf16>
      %c0_192 = arith.constant 0 : index
      %c0_193 = arith.constant 0 : index
      %404 = vector.load %arg10[%c0_192, %c0_193] : memref<8x256xbf16, #tpu.memory_space<vmem>>, vector<8x128xbf16>
      tpu.vector_store %arg10[%c0_192, %c0_193], %403 {strides = array<i32>} : memref<8x256xbf16, #tpu.memory_space<vmem>>, vector<8x128xbf16>,
      %c0_194 = arith.constant 0 : index
      %c0_195 = arith.constant 0 : index
      %405 = vector.load %arg10[%c0_194, %c0_195] : memref<8x256xbf16, #tpu.memory_space<vmem>>, vector<8x256xbf16>
      %c0_196 = arith.constant 0 : index
      %c0_197 = arith.constant 0 : index
      %406 = vector.load %arg7[%c0_196, %c0_197] : memref<256x512xbf16, #tpu.memory_space<vmem>>, vector<256x512xbf16>
      %cst_198 = arith.constant dense<0.000000e+00> : vector<8x512xf32>
      %407 = tpu.matmul %405, %406, %cst_198 {dimension_numbers = #tpu.dot_dimension_numbers<[1], [0], [0], [1], [0, 0, 1, 1], [], []>} : vector<8x256xbf16>, vector<256x512xbf16>, vector<8x512xf32> -> vector<8x512xf32>
      %c0_199 = arith.constant 0 : index
      %c0_200 = arith.constant 0 : index
      %408 = vector.load %arg8[%c0_199, %c0_200] : memref<1x512xf32, #tpu.memory_space<vmem>>, vector<1x512xf32>
      %409 = vector.broadcast %408 : vector<1x512xf32> to vector<8x512xf32>
      %410 = arith.addf %407, %409 : vector<8x512xf32>
      %c1_201 = arith.constant 1 : index
      %c0_202 = arith.constant 0 : index
      %c0_203 = arith.constant 0 : index
      %411 = vector.load %arg11[%c1_201, %c0_202, %c0_203] : memref<2x8x128xf32, #tpu.memory_space<vmem>>, vector<1x8x128xf32>
      %412 = vector.shape_cast %411 : vector<1x8x128xf32> to vector<8x128xf32>
      %413 = vector.extract_strided_slice %410 {offsets = [0, 0], sizes = [8, 128], strides = [1, 1]} : vector<8x512xf32> to vector<8x128xf32>
      %414 = arith.negf %413 : vector<8x128xf32>
      %415 = math.exp %414 : vector<8x128xf32>
      %cst_204 = arith.constant 1.000000e+00 : f32
      %416 = vector.broadcast %cst_204 : f32 to vector<8x128xf32>
      %417 = arith.addf %416, %415 : vector<8x128xf32>
      %418 = arith.divf %416, %417 : vector<8x128xf32>
      %419 = vector.extract_strided_slice %410 {offsets = [0, 128], sizes = [8, 128], strides = [1, 1]} : vector<8x512xf32> to vector<8x128xf32>
      %420 = arith.negf %419 : vector<8x128xf32>
      %421 = math.exp %420 : vector<8x128xf32>
      %cst_205 = arith.constant 1.000000e+00 : f32
      %422 = vector.broadcast %cst_205 : f32 to vector<8x128xf32>
      %423 = arith.addf %422, %421 : vector<8x128xf32>
      %424 = arith.divf %422, %423 : vector<8x128xf32>
      %425 = vector.extract_strided_slice %410 {offsets = [0, 256], sizes = [8, 128], strides = [1, 1]} : vector<8x512xf32> to vector<8x128xf32>
      %426 = math.tanh %425 : vector<8x128xf32>
      %427 = vector.extract_strided_slice %410 {offsets = [0, 384], sizes = [8, 128], strides = [1, 1]} : vector<8x512xf32> to vector<8x128xf32>
      %428 = arith.negf %427 : vector<8x128xf32>
      %429 = math.exp %428 : vector<8x128xf32>
      %cst_206 = arith.constant 1.000000e+00 : f32
      %430 = vector.broadcast %cst_206 : f32 to vector<8x128xf32>
      %431 = arith.addf %430, %429 : vector<8x128xf32>
      %432 = arith.divf %430, %431 : vector<8x128xf32>
      %433 = arith.mulf %424, %412 : vector<8x128xf32>
      %434 = arith.mulf %418, %426 : vector<8x128xf32>
      %435 = arith.addf %433, %434 : vector<8x128xf32>
      %436 = math.tanh %435 : vector<8x128xf32>
      %437 = arith.mulf %432, %436 : vector<8x128xf32>
      %c1_207 = arith.constant 1 : index
      %c0_208 = arith.constant 0 : index
      %c0_209 = arith.constant 0 : index
      %438 = vector.load %arg11[%c1_207, %c0_208, %c0_209] : memref<2x8x128xf32, #tpu.memory_space<vmem>>, vector<1x8x128xf32>
      %439 = vector.shape_cast %438 : vector<1x8x128xf32> to vector<8x128xf32>
      %440 = vector.shape_cast %435 : vector<8x128xf32> to vector<1x8x128xf32>
      tpu.vector_store %arg11[%c1_207, %c0_208, %c0_209], %440 {strides = array<i32>} : memref<2x8x128xf32, #tpu.memory_space<vmem>>, vector<1x8x128xf32>,
      %441 = arith.truncf %437 : vector<8x128xf32> to vector<8x128xbf16>
      %c0_210 = arith.constant 0 : index
      %c128_211 = arith.constant 128 : index
      %442 = vector.load %arg10[%c0_210, %c128_211] : memref<8x256xbf16, #tpu.memory_space<vmem>>, vector<8x128xbf16>
      tpu.vector_store %arg10[%c0_210, %c128_211], %441 {strides = array<i32>} : memref<8x256xbf16, #tpu.memory_space<vmem>>, vector<8x128xbf16>,
      %443 = arith.addi %16, %c4_i32 : i32
      %c1_i32_212 = arith.constant 1 : i32
      %444 = arith.addi %443, %c1_i32_212 : i32
      %445 = vector.broadcast %444 : i32 to vector<8x1xi32>
      %446 = arith.cmpi eq, %15, %445 : vector<8x1xi32>
      %c0_213 = arith.constant 0 : index
      %c0_214 = arith.constant 0 : index
      %447 = vector.load %arg9[%c0_213, %c0_214] : memref<8x128xf32, #tpu.memory_space<vmem>>, vector<8x128xf32>
      %448 = vector.shape_cast %446 : vector<8x1xi1> to vector<8x1xi1>
      %449 = vector.broadcast %448 : vector<8x1xi1> to vector<8x128xi1>
      %450 = arith.select %449, %437, %447 : vector<8x128xi1>, vector<8x128xf32>
      %c0_215 = arith.constant 0 : index
      %c0_216 = arith.constant 0 : index
      %451 = vector.load %arg9[%c0_215, %c0_216] : memref<8x128xf32, #tpu.memory_space<vmem>>, vector<8x128xf32>
      tpu.vector_store %arg9[%c0_215, %c0_216], %450 {strides = array<i32>} : memref<8x128xf32, #tpu.memory_space<vmem>>, vector<8x128xf32>,
      %c5_i32 = arith.constant 5 : i32
      %c8_i32_217 = arith.constant 8 : i32
      %452 = arith.muli %c5_i32, %c8_i32_217 : i32
      %453 = tpu.assume_multiple %452, 8 : i32
      %c0_218 = arith.constant 0 : index
      %c0_219 = arith.constant 0 : index
      %454 = vector.load %arg10[%c0_218, %c0_219] : memref<8x256xbf16, #tpu.memory_space<vmem>>, vector<8x128xbf16>
      %455 = arith.index_cast %453 : i32 to index
      %c0_220 = arith.constant 0 : index
      %456 = vector.load %arg12[%455, %c0_220] : memref<64x512xf32, #tpu.memory_space<vmem>>, vector<8x512xf32>
      %c0_221 = arith.constant 0 : index
      %c0_222 = arith.constant 0 : index
      %457 = vector.load %arg5[%c0_221, %c0_222] : memref<128x512xbf16, #tpu.memory_space<vmem>>, vector<128x512xbf16>
      %cst_223 = arith.constant dense<0.000000e+00> : vector<8x512xf32>
      %458 = tpu.matmul %454, %457, %cst_223 {dimension_numbers = #tpu.dot_dimension_numbers<[1], [0], [0], [1], [0, 0, 1, 1], [], []>} : vector<8x128xbf16>, vector<128x512xbf16>, vector<8x512xf32> -> vector<8x512xf32>
      %459 = arith.addf %456, %458 : vector<8x512xf32>
      %c0_224 = arith.constant 0 : index
      %c0_225 = arith.constant 0 : index
      %c0_226 = arith.constant 0 : index
      %460 = vector.load %arg11[%c0_224, %c0_225, %c0_226] : memref<2x8x128xf32, #tpu.memory_space<vmem>>, vector<1x8x128xf32>
      %461 = vector.shape_cast %460 : vector<1x8x128xf32> to vector<8x128xf32>
      %462 = vector.extract_strided_slice %459 {offsets = [0, 0], sizes = [8, 128], strides = [1, 1]} : vector<8x512xf32> to vector<8x128xf32>
      %463 = arith.negf %462 : vector<8x128xf32>
      %464 = math.exp %463 : vector<8x128xf32>
      %cst_227 = arith.constant 1.000000e+00 : f32
      %465 = vector.broadcast %cst_227 : f32 to vector<8x128xf32>
      %466 = arith.addf %465, %464 : vector<8x128xf32>
      %467 = arith.divf %465, %466 : vector<8x128xf32>
      %468 = vector.extract_strided_slice %459 {offsets = [0, 128], sizes = [8, 128], strides = [1, 1]} : vector<8x512xf32> to vector<8x128xf32>
      %469 = arith.negf %468 : vector<8x128xf32>
      %470 = math.exp %469 : vector<8x128xf32>
      %cst_228 = arith.constant 1.000000e+00 : f32
      %471 = vector.broadcast %cst_228 : f32 to vector<8x128xf32>
      %472 = arith.addf %471, %470 : vector<8x128xf32>
      %473 = arith.divf %471, %472 : vector<8x128xf32>
      %474 = vector.extract_strided_slice %459 {offsets = [0, 256], sizes = [8, 128], strides = [1, 1]} : vector<8x512xf32> to vector<8x128xf32>
      %475 = math.tanh %474 : vector<8x128xf32>
      %476 = vector.extract_strided_slice %459 {offsets = [0, 384], sizes = [8, 128], strides = [1, 1]} : vector<8x512xf32> to vector<8x128xf32>
      %477 = arith.negf %476 : vector<8x128xf32>
      %478 = math.exp %477 : vector<8x128xf32>
      %cst_229 = arith.constant 1.000000e+00 : f32
      %479 = vector.broadcast %cst_229 : f32 to vector<8x128xf32>
      %480 = arith.addf %479, %478 : vector<8x128xf32>
      %481 = arith.divf %479, %480 : vector<8x128xf32>
      %482 = arith.mulf %473, %461 : vector<8x128xf32>
      %483 = arith.mulf %467, %475 : vector<8x128xf32>
      %484 = arith.addf %482, %483 : vector<8x128xf32>
      %485 = math.tanh %484 : vector<8x128xf32>
      %486 = arith.mulf %481, %485 : vector<8x128xf32>
      %c0_230 = arith.constant 0 : index
      %c0_231 = arith.constant 0 : index
      %c0_232 = arith.constant 0 : index
      %487 = vector.load %arg11[%c0_230, %c0_231, %c0_232] : memref<2x8x128xf32, #tpu.memory_space<vmem>>, vector<1x8x128xf32>
      %488 = vector.shape_cast %487 : vector<1x8x128xf32> to vector<8x128xf32>
      %489 = vector.shape_cast %484 : vector<8x128xf32> to vector<1x8x128xf32>
      tpu.vector_store %arg11[%c0_230, %c0_231, %c0_232], %489 {strides = array<i32>} : memref<2x8x128xf32, #tpu.memory_space<vmem>>, vector<1x8x128xf32>,
      %490 = arith.truncf %486 : vector<8x128xf32> to vector<8x128xbf16>
      %c0_233 = arith.constant 0 : index
      %c0_234 = arith.constant 0 : index
      %491 = vector.load %arg10[%c0_233, %c0_234] : memref<8x256xbf16, #tpu.memory_space<vmem>>, vector<8x128xbf16>
      tpu.vector_store %arg10[%c0_233, %c0_234], %490 {strides = array<i32>} : memref<8x256xbf16, #tpu.memory_space<vmem>>, vector<8x128xbf16>,
      %c0_235 = arith.constant 0 : index
      %c0_236 = arith.constant 0 : index
      %492 = vector.load %arg10[%c0_235, %c0_236] : memref<8x256xbf16, #tpu.memory_space<vmem>>, vector<8x256xbf16>
      %c0_237 = arith.constant 0 : index
      %c0_238 = arith.constant 0 : index
      %493 = vector.load %arg7[%c0_237, %c0_238] : memref<256x512xbf16, #tpu.memory_space<vmem>>, vector<256x512xbf16>
      %cst_239 = arith.constant dense<0.000000e+00> : vector<8x512xf32>
      %494 = tpu.matmul %492, %493, %cst_239 {dimension_numbers = #tpu.dot_dimension_numbers<[1], [0], [0], [1], [0, 0, 1, 1], [], []>} : vector<8x256xbf16>, vector<256x512xbf16>, vector<8x512xf32> -> vector<8x512xf32>
      %c0_240 = arith.constant 0 : index
      %c0_241 = arith.constant 0 : index
      %495 = vector.load %arg8[%c0_240, %c0_241] : memref<1x512xf32, #tpu.memory_space<vmem>>, vector<1x512xf32>
      %496 = vector.broadcast %495 : vector<1x512xf32> to vector<8x512xf32>
      %497 = arith.addf %494, %496 : vector<8x512xf32>
      %c1_242 = arith.constant 1 : index
      %c0_243 = arith.constant 0 : index
      %c0_244 = arith.constant 0 : index
      %498 = vector.load %arg11[%c1_242, %c0_243, %c0_244] : memref<2x8x128xf32, #tpu.memory_space<vmem>>, vector<1x8x128xf32>
      %499 = vector.shape_cast %498 : vector<1x8x128xf32> to vector<8x128xf32>
      %500 = vector.extract_strided_slice %497 {offsets = [0, 0], sizes = [8, 128], strides = [1, 1]} : vector<8x512xf32> to vector<8x128xf32>
      %501 = arith.negf %500 : vector<8x128xf32>
      %502 = math.exp %501 : vector<8x128xf32>
      %cst_245 = arith.constant 1.000000e+00 : f32
      %503 = vector.broadcast %cst_245 : f32 to vector<8x128xf32>
      %504 = arith.addf %503, %502 : vector<8x128xf32>
      %505 = arith.divf %503, %504 : vector<8x128xf32>
      %506 = vector.extract_strided_slice %497 {offsets = [0, 128], sizes = [8, 128], strides = [1, 1]} : vector<8x512xf32> to vector<8x128xf32>
      %507 = arith.negf %506 : vector<8x128xf32>
      %508 = math.exp %507 : vector<8x128xf32>
      %cst_246 = arith.constant 1.000000e+00 : f32
      %509 = vector.broadcast %cst_246 : f32 to vector<8x128xf32>
      %510 = arith.addf %509, %508 : vector<8x128xf32>
      %511 = arith.divf %509, %510 : vector<8x128xf32>
      %512 = vector.extract_strided_slice %497 {offsets = [0, 256], sizes = [8, 128], strides = [1, 1]} : vector<8x512xf32> to vector<8x128xf32>
      %513 = math.tanh %512 : vector<8x128xf32>
      %514 = vector.extract_strided_slice %497 {offsets = [0, 384], sizes = [8, 128], strides = [1, 1]} : vector<8x512xf32> to vector<8x128xf32>
      %515 = arith.negf %514 : vector<8x128xf32>
      %516 = math.exp %515 : vector<8x128xf32>
      %cst_247 = arith.constant 1.000000e+00 : f32
      %517 = vector.broadcast %cst_247 : f32 to vector<8x128xf32>
      %518 = arith.addf %517, %516 : vector<8x128xf32>
      %519 = arith.divf %517, %518 : vector<8x128xf32>
      %520 = arith.mulf %511, %499 : vector<8x128xf32>
      %521 = arith.mulf %505, %513 : vector<8x128xf32>
      %522 = arith.addf %520, %521 : vector<8x128xf32>
      %523 = math.tanh %522 : vector<8x128xf32>
      %524 = arith.mulf %519, %523 : vector<8x128xf32>
      %c1_248 = arith.constant 1 : index
      %c0_249 = arith.constant 0 : index
      %c0_250 = arith.constant 0 : index
      %525 = vector.load %arg11[%c1_248, %c0_249, %c0_250] : memref<2x8x128xf32, #tpu.memory_space<vmem>>, vector<1x8x128xf32>
      %526 = vector.shape_cast %525 : vector<1x8x128xf32> to vector<8x128xf32>
      %527 = vector.shape_cast %522 : vector<8x128xf32> to vector<1x8x128xf32>
      tpu.vector_store %arg11[%c1_248, %c0_249, %c0_250], %527 {strides = array<i32>} : memref<2x8x128xf32, #tpu.memory_space<vmem>>, vector<1x8x128xf32>,
      %528 = arith.truncf %524 : vector<8x128xf32> to vector<8x128xbf16>
      %c0_251 = arith.constant 0 : index
      %c128_252 = arith.constant 128 : index
      %529 = vector.load %arg10[%c0_251, %c128_252] : memref<8x256xbf16, #tpu.memory_space<vmem>>, vector<8x128xbf16>
      tpu.vector_store %arg10[%c0_251, %c128_252], %528 {strides = array<i32>} : memref<8x256xbf16, #tpu.memory_space<vmem>>, vector<8x128xbf16>,
      %530 = arith.addi %16, %c5_i32 : i32
      %c1_i32_253 = arith.constant 1 : i32
      %531 = arith.addi %530, %c1_i32_253 : i32
      %532 = vector.broadcast %531 : i32 to vector<8x1xi32>
      %533 = arith.cmpi eq, %15, %532 : vector<8x1xi32>
      %c0_254 = arith.constant 0 : index
      %c0_255 = arith.constant 0 : index
      %534 = vector.load %arg9[%c0_254, %c0_255] : memref<8x128xf32, #tpu.memory_space<vmem>>, vector<8x128xf32>
      %535 = vector.shape_cast %533 : vector<8x1xi1> to vector<8x1xi1>
      %536 = vector.broadcast %535 : vector<8x1xi1> to vector<8x128xi1>
      %537 = arith.select %536, %524, %534 : vector<8x128xi1>, vector<8x128xf32>
      %c0_256 = arith.constant 0 : index
      %c0_257 = arith.constant 0 : index
      %538 = vector.load %arg9[%c0_256, %c0_257] : memref<8x128xf32, #tpu.memory_space<vmem>>, vector<8x128xf32>
      tpu.vector_store %arg9[%c0_256, %c0_257], %537 {strides = array<i32>} : memref<8x128xf32, #tpu.memory_space<vmem>>, vector<8x128xf32>,
      %c6_i32 = arith.constant 6 : i32
      %c8_i32_258 = arith.constant 8 : i32
      %539 = arith.muli %c6_i32, %c8_i32_258 : i32
      %540 = tpu.assume_multiple %539, 8 : i32
      %c0_259 = arith.constant 0 : index
      %c0_260 = arith.constant 0 : index
      %541 = vector.load %arg10[%c0_259, %c0_260] : memref<8x256xbf16, #tpu.memory_space<vmem>>, vector<8x128xbf16>
      %542 = arith.index_cast %540 : i32 to index
      %c0_261 = arith.constant 0 : index
      %543 = vector.load %arg12[%542, %c0_261] : memref<64x512xf32, #tpu.memory_space<vmem>>, vector<8x512xf32>
      %c0_262 = arith.constant 0 : index
      %c0_263 = arith.constant 0 : index
      %544 = vector.load %arg5[%c0_262, %c0_263] : memref<128x512xbf16, #tpu.memory_space<vmem>>, vector<128x512xbf16>
      %cst_264 = arith.constant dense<0.000000e+00> : vector<8x512xf32>
      %545 = tpu.matmul %541, %544, %cst_264 {dimension_numbers = #tpu.dot_dimension_numbers<[1], [0], [0], [1], [0, 0, 1, 1], [], []>} : vector<8x128xbf16>, vector<128x512xbf16>, vector<8x512xf32> -> vector<8x512xf32>
      %546 = arith.addf %543, %545 : vector<8x512xf32>
      %c0_265 = arith.constant 0 : index
      %c0_266 = arith.constant 0 : index
      %c0_267 = arith.constant 0 : index
      %547 = vector.load %arg11[%c0_265, %c0_266, %c0_267] : memref<2x8x128xf32, #tpu.memory_space<vmem>>, vector<1x8x128xf32>
      %548 = vector.shape_cast %547 : vector<1x8x128xf32> to vector<8x128xf32>
      %549 = vector.extract_strided_slice %546 {offsets = [0, 0], sizes = [8, 128], strides = [1, 1]} : vector<8x512xf32> to vector<8x128xf32>
      %550 = arith.negf %549 : vector<8x128xf32>
      %551 = math.exp %550 : vector<8x128xf32>
      %cst_268 = arith.constant 1.000000e+00 : f32
      %552 = vector.broadcast %cst_268 : f32 to vector<8x128xf32>
      %553 = arith.addf %552, %551 : vector<8x128xf32>
      %554 = arith.divf %552, %553 : vector<8x128xf32>
      %555 = vector.extract_strided_slice %546 {offsets = [0, 128], sizes = [8, 128], strides = [1, 1]} : vector<8x512xf32> to vector<8x128xf32>
      %556 = arith.negf %555 : vector<8x128xf32>
      %557 = math.exp %556 : vector<8x128xf32>
      %cst_269 = arith.constant 1.000000e+00 : f32
      %558 = vector.broadcast %cst_269 : f32 to vector<8x128xf32>
      %559 = arith.addf %558, %557 : vector<8x128xf32>
      %560 = arith.divf %558, %559 : vector<8x128xf32>
      %561 = vector.extract_strided_slice %546 {offsets = [0, 256], sizes = [8, 128], strides = [1, 1]} : vector<8x512xf32> to vector<8x128xf32>
      %562 = math.tanh %561 : vector<8x128xf32>
      %563 = vector.extract_strided_slice %546 {offsets = [0, 384], sizes = [8, 128], strides = [1, 1]} : vector<8x512xf32> to vector<8x128xf32>
      %564 = arith.negf %563 : vector<8x128xf32>
      %565 = math.exp %564 : vector<8x128xf32>
      %cst_270 = arith.constant 1.000000e+00 : f32
      %566 = vector.broadcast %cst_270 : f32 to vector<8x128xf32>
      %567 = arith.addf %566, %565 : vector<8x128xf32>
      %568 = arith.divf %566, %567 : vector<8x128xf32>
      %569 = arith.mulf %560, %548 : vector<8x128xf32>
      %570 = arith.mulf %554, %562 : vector<8x128xf32>
      %571 = arith.addf %569, %570 : vector<8x128xf32>
      %572 = math.tanh %571 : vector<8x128xf32>
      %573 = arith.mulf %568, %572 : vector<8x128xf32>
      %c0_271 = arith.constant 0 : index
      %c0_272 = arith.constant 0 : index
      %c0_273 = arith.constant 0 : index
      %574 = vector.load %arg11[%c0_271, %c0_272, %c0_273] : memref<2x8x128xf32, #tpu.memory_space<vmem>>, vector<1x8x128xf32>
      %575 = vector.shape_cast %574 : vector<1x8x128xf32> to vector<8x128xf32>
      %576 = vector.shape_cast %571 : vector<8x128xf32> to vector<1x8x128xf32>
      tpu.vector_store %arg11[%c0_271, %c0_272, %c0_273], %576 {strides = array<i32>} : memref<2x8x128xf32, #tpu.memory_space<vmem>>, vector<1x8x128xf32>,
      %577 = arith.truncf %573 : vector<8x128xf32> to vector<8x128xbf16>
      %c0_274 = arith.constant 0 : index
      %c0_275 = arith.constant 0 : index
      %578 = vector.load %arg10[%c0_274, %c0_275] : memref<8x256xbf16, #tpu.memory_space<vmem>>, vector<8x128xbf16>
      tpu.vector_store %arg10[%c0_274, %c0_275], %577 {strides = array<i32>} : memref<8x256xbf16, #tpu.memory_space<vmem>>, vector<8x128xbf16>,
      %c0_276 = arith.constant 0 : index
      %c0_277 = arith.constant 0 : index
      %579 = vector.load %arg10[%c0_276, %c0_277] : memref<8x256xbf16, #tpu.memory_space<vmem>>, vector<8x256xbf16>
      %c0_278 = arith.constant 0 : index
      %c0_279 = arith.constant 0 : index
      %580 = vector.load %arg7[%c0_278, %c0_279] : memref<256x512xbf16, #tpu.memory_space<vmem>>, vector<256x512xbf16>
      %cst_280 = arith.constant dense<0.000000e+00> : vector<8x512xf32>
      %581 = tpu.matmul %579, %580, %cst_280 {dimension_numbers = #tpu.dot_dimension_numbers<[1], [0], [0], [1], [0, 0, 1, 1], [], []>} : vector<8x256xbf16>, vector<256x512xbf16>, vector<8x512xf32> -> vector<8x512xf32>
      %c0_281 = arith.constant 0 : index
      %c0_282 = arith.constant 0 : index
      %582 = vector.load %arg8[%c0_281, %c0_282] : memref<1x512xf32, #tpu.memory_space<vmem>>, vector<1x512xf32>
      %583 = vector.broadcast %582 : vector<1x512xf32> to vector<8x512xf32>
      %584 = arith.addf %581, %583 : vector<8x512xf32>
      %c1_283 = arith.constant 1 : index
      %c0_284 = arith.constant 0 : index
      %c0_285 = arith.constant 0 : index
      %585 = vector.load %arg11[%c1_283, %c0_284, %c0_285] : memref<2x8x128xf32, #tpu.memory_space<vmem>>, vector<1x8x128xf32>
      %586 = vector.shape_cast %585 : vector<1x8x128xf32> to vector<8x128xf32>
      %587 = vector.extract_strided_slice %584 {offsets = [0, 0], sizes = [8, 128], strides = [1, 1]} : vector<8x512xf32> to vector<8x128xf32>
      %588 = arith.negf %587 : vector<8x128xf32>
      %589 = math.exp %588 : vector<8x128xf32>
      %cst_286 = arith.constant 1.000000e+00 : f32
      %590 = vector.broadcast %cst_286 : f32 to vector<8x128xf32>
      %591 = arith.addf %590, %589 : vector<8x128xf32>
      %592 = arith.divf %590, %591 : vector<8x128xf32>
      %593 = vector.extract_strided_slice %584 {offsets = [0, 128], sizes = [8, 128], strides = [1, 1]} : vector<8x512xf32> to vector<8x128xf32>
      %594 = arith.negf %593 : vector<8x128xf32>
      %595 = math.exp %594 : vector<8x128xf32>
      %cst_287 = arith.constant 1.000000e+00 : f32
      %596 = vector.broadcast %cst_287 : f32 to vector<8x128xf32>
      %597 = arith.addf %596, %595 : vector<8x128xf32>
      %598 = arith.divf %596, %597 : vector<8x128xf32>
      %599 = vector.extract_strided_slice %584 {offsets = [0, 256], sizes = [8, 128], strides = [1, 1]} : vector<8x512xf32> to vector<8x128xf32>
      %600 = math.tanh %599 : vector<8x128xf32>
      %601 = vector.extract_strided_slice %584 {offsets = [0, 384], sizes = [8, 128], strides = [1, 1]} : vector<8x512xf32> to vector<8x128xf32>
      %602 = arith.negf %601 : vector<8x128xf32>
      %603 = math.exp %602 : vector<8x128xf32>
      %cst_288 = arith.constant 1.000000e+00 : f32
      %604 = vector.broadcast %cst_288 : f32 to vector<8x128xf32>
      %605 = arith.addf %604, %603 : vector<8x128xf32>
      %606 = arith.divf %604, %605 : vector<8x128xf32>
      %607 = arith.mulf %598, %586 : vector<8x128xf32>
      %608 = arith.mulf %592, %600 : vector<8x128xf32>
      %609 = arith.addf %607, %608 : vector<8x128xf32>
      %610 = math.tanh %609 : vector<8x128xf32>
      %611 = arith.mulf %606, %610 : vector<8x128xf32>
      %c1_289 = arith.constant 1 : index
      %c0_290 = arith.constant 0 : index
      %c0_291 = arith.constant 0 : index
      %612 = vector.load %arg11[%c1_289, %c0_290, %c0_291] : memref<2x8x128xf32, #tpu.memory_space<vmem>>, vector<1x8x128xf32>
      %613 = vector.shape_cast %612 : vector<1x8x128xf32> to vector<8x128xf32>
      %614 = vector.shape_cast %609 : vector<8x128xf32> to vector<1x8x128xf32>
      tpu.vector_store %arg11[%c1_289, %c0_290, %c0_291], %614 {strides = array<i32>} : memref<2x8x128xf32, #tpu.memory_space<vmem>>, vector<1x8x128xf32>,
      %615 = arith.truncf %611 : vector<8x128xf32> to vector<8x128xbf16>
      %c0_292 = arith.constant 0 : index
      %c128_293 = arith.constant 128 : index
      %616 = vector.load %arg10[%c0_292, %c128_293] : memref<8x256xbf16, #tpu.memory_space<vmem>>, vector<8x128xbf16>
      tpu.vector_store %arg10[%c0_292, %c128_293], %615 {strides = array<i32>} : memref<8x256xbf16, #tpu.memory_space<vmem>>, vector<8x128xbf16>,
      %617 = arith.addi %16, %c6_i32 : i32
      %c1_i32_294 = arith.constant 1 : i32
      %618 = arith.addi %617, %c1_i32_294 : i32
      %619 = vector.broadcast %618 : i32 to vector<8x1xi32>
      %620 = arith.cmpi eq, %15, %619 : vector<8x1xi32>
      %c0_295 = arith.constant 0 : index
      %c0_296 = arith.constant 0 : index
      %621 = vector.load %arg9[%c0_295, %c0_296] : memref<8x128xf32, #tpu.memory_space<vmem>>, vector<8x128xf32>
      %622 = vector.shape_cast %620 : vector<8x1xi1> to vector<8x1xi1>
      %623 = vector.broadcast %622 : vector<8x1xi1> to vector<8x128xi1>
      %624 = arith.select %623, %611, %621 : vector<8x128xi1>, vector<8x128xf32>
      %c0_297 = arith.constant 0 : index
      %c0_298 = arith.constant 0 : index
      %625 = vector.load %arg9[%c0_297, %c0_298] : memref<8x128xf32, #tpu.memory_space<vmem>>, vector<8x128xf32>
      tpu.vector_store %arg9[%c0_297, %c0_298], %624 {strides = array<i32>} : memref<8x128xf32, #tpu.memory_space<vmem>>, vector<8x128xf32>,
      %c7_i32 = arith.constant 7 : i32
      %c8_i32_299 = arith.constant 8 : i32
      %626 = arith.muli %c7_i32, %c8_i32_299 : i32
      %627 = tpu.assume_multiple %626, 8 : i32
      %c0_300 = arith.constant 0 : index
      %c0_301 = arith.constant 0 : index
      %628 = vector.load %arg10[%c0_300, %c0_301] : memref<8x256xbf16, #tpu.memory_space<vmem>>, vector<8x128xbf16>
      %629 = arith.index_cast %627 : i32 to index
      %c0_302 = arith.constant 0 : index
      %630 = vector.load %arg12[%629, %c0_302] : memref<64x512xf32, #tpu.memory_space<vmem>>, vector<8x512xf32>
      %c0_303 = arith.constant 0 : index
      %c0_304 = arith.constant 0 : index
      %631 = vector.load %arg5[%c0_303, %c0_304] : memref<128x512xbf16, #tpu.memory_space<vmem>>, vector<128x512xbf16>
      %cst_305 = arith.constant dense<0.000000e+00> : vector<8x512xf32>
      %632 = tpu.matmul %628, %631, %cst_305 {dimension_numbers = #tpu.dot_dimension_numbers<[1], [0], [0], [1], [0, 0, 1, 1], [], []>} : vector<8x128xbf16>, vector<128x512xbf16>, vector<8x512xf32> -> vector<8x512xf32>
      %633 = arith.addf %630, %632 : vector<8x512xf32>
      %c0_306 = arith.constant 0 : index
      %c0_307 = arith.constant 0 : index
      %c0_308 = arith.constant 0 : index
      %634 = vector.load %arg11[%c0_306, %c0_307, %c0_308] : memref<2x8x128xf32, #tpu.memory_space<vmem>>, vector<1x8x128xf32>
      %635 = vector.shape_cast %634 : vector<1x8x128xf32> to vector<8x128xf32>
      %636 = vector.extract_strided_slice %633 {offsets = [0, 0], sizes = [8, 128], strides = [1, 1]} : vector<8x512xf32> to vector<8x128xf32>
      %637 = arith.negf %636 : vector<8x128xf32>
      %638 = math.exp %637 : vector<8x128xf32>
      %cst_309 = arith.constant 1.000000e+00 : f32
      %639 = vector.broadcast %cst_309 : f32 to vector<8x128xf32>
      %640 = arith.addf %639, %638 : vector<8x128xf32>
      %641 = arith.divf %639, %640 : vector<8x128xf32>
      %642 = vector.extract_strided_slice %633 {offsets = [0, 128], sizes = [8, 128], strides = [1, 1]} : vector<8x512xf32> to vector<8x128xf32>
      %643 = arith.negf %642 : vector<8x128xf32>
      %644 = math.exp %643 : vector<8x128xf32>
      %cst_310 = arith.constant 1.000000e+00 : f32
      %645 = vector.broadcast %cst_310 : f32 to vector<8x128xf32>
      %646 = arith.addf %645, %644 : vector<8x128xf32>
      %647 = arith.divf %645, %646 : vector<8x128xf32>
      %648 = vector.extract_strided_slice %633 {offsets = [0, 256], sizes = [8, 128], strides = [1, 1]} : vector<8x512xf32> to vector<8x128xf32>
      %649 = math.tanh %648 : vector<8x128xf32>
      %650 = vector.extract_strided_slice %633 {offsets = [0, 384], sizes = [8, 128], strides = [1, 1]} : vector<8x512xf32> to vector<8x128xf32>
      %651 = arith.negf %650 : vector<8x128xf32>
      %652 = math.exp %651 : vector<8x128xf32>
      %cst_311 = arith.constant 1.000000e+00 : f32
      %653 = vector.broadcast %cst_311 : f32 to vector<8x128xf32>
      %654 = arith.addf %653, %652 : vector<8x128xf32>
      %655 = arith.divf %653, %654 : vector<8x128xf32>
      %656 = arith.mulf %647, %635 : vector<8x128xf32>
      %657 = arith.mulf %641, %649 : vector<8x128xf32>
      %658 = arith.addf %656, %657 : vector<8x128xf32>
      %659 = math.tanh %658 : vector<8x128xf32>
      %660 = arith.mulf %655, %659 : vector<8x128xf32>
      %c0_312 = arith.constant 0 : index
      %c0_313 = arith.constant 0 : index
      %c0_314 = arith.constant 0 : index
      %661 = vector.load %arg11[%c0_312, %c0_313, %c0_314] : memref<2x8x128xf32, #tpu.memory_space<vmem>>, vector<1x8x128xf32>
      %662 = vector.shape_cast %661 : vector<1x8x128xf32> to vector<8x128xf32>
      %663 = vector.shape_cast %658 : vector<8x128xf32> to vector<1x8x128xf32>
      tpu.vector_store %arg11[%c0_312, %c0_313, %c0_314], %663 {strides = array<i32>} : memref<2x8x128xf32, #tpu.memory_space<vmem>>, vector<1x8x128xf32>,
      %664 = arith.truncf %660 : vector<8x128xf32> to vector<8x128xbf16>
      %c0_315 = arith.constant 0 : index
      %c0_316 = arith.constant 0 : index
      %665 = vector.load %arg10[%c0_315, %c0_316] : memref<8x256xbf16, #tpu.memory_space<vmem>>, vector<8x128xbf16>
      tpu.vector_store %arg10[%c0_315, %c0_316], %664 {strides = array<i32>} : memref<8x256xbf16, #tpu.memory_space<vmem>>, vector<8x128xbf16>,
      %c0_317 = arith.constant 0 : index
      %c0_318 = arith.constant 0 : index
      %666 = vector.load %arg10[%c0_317, %c0_318] : memref<8x256xbf16, #tpu.memory_space<vmem>>, vector<8x256xbf16>
      %c0_319 = arith.constant 0 : index
      %c0_320 = arith.constant 0 : index
      %667 = vector.load %arg7[%c0_319, %c0_320] : memref<256x512xbf16, #tpu.memory_space<vmem>>, vector<256x512xbf16>
      %cst_321 = arith.constant dense<0.000000e+00> : vector<8x512xf32>
      %668 = tpu.matmul %666, %667, %cst_321 {dimension_numbers = #tpu.dot_dimension_numbers<[1], [0], [0], [1], [0, 0, 1, 1], [], []>} : vector<8x256xbf16>, vector<256x512xbf16>, vector<8x512xf32> -> vector<8x512xf32>
      %c0_322 = arith.constant 0 : index
      %c0_323 = arith.constant 0 : index
      %669 = vector.load %arg8[%c0_322, %c0_323] : memref<1x512xf32, #tpu.memory_space<vmem>>, vector<1x512xf32>
      %670 = vector.broadcast %669 : vector<1x512xf32> to vector<8x512xf32>
      %671 = arith.addf %668, %670 : vector<8x512xf32>
      %c1_324 = arith.constant 1 : index
      %c0_325 = arith.constant 0 : index
      %c0_326 = arith.constant 0 : index
      %672 = vector.load %arg11[%c1_324, %c0_325, %c0_326] : memref<2x8x128xf32, #tpu.memory_space<vmem>>, vector<1x8x128xf32>
      %673 = vector.shape_cast %672 : vector<1x8x128xf32> to vector<8x128xf32>
      %674 = vector.extract_strided_slice %671 {offsets = [0, 0], sizes = [8, 128], strides = [1, 1]} : vector<8x512xf32> to vector<8x128xf32>
      %675 = arith.negf %674 : vector<8x128xf32>
      %676 = math.exp %675 : vector<8x128xf32>
      %cst_327 = arith.constant 1.000000e+00 : f32
      %677 = vector.broadcast %cst_327 : f32 to vector<8x128xf32>
      %678 = arith.addf %677, %676 : vector<8x128xf32>
      %679 = arith.divf %677, %678 : vector<8x128xf32>
      %680 = vector.extract_strided_slice %671 {offsets = [0, 128], sizes = [8, 128], strides = [1, 1]} : vector<8x512xf32> to vector<8x128xf32>
      %681 = arith.negf %680 : vector<8x128xf32>
      %682 = math.exp %681 : vector<8x128xf32>
      %cst_328 = arith.constant 1.000000e+00 : f32
      %683 = vector.broadcast %cst_328 : f32 to vector<8x128xf32>
      %684 = arith.addf %683, %682 : vector<8x128xf32>
      %685 = arith.divf %683, %684 : vector<8x128xf32>
      %686 = vector.extract_strided_slice %671 {offsets = [0, 256], sizes = [8, 128], strides = [1, 1]} : vector<8x512xf32> to vector<8x128xf32>
      %687 = math.tanh %686 : vector<8x128xf32>
      %688 = vector.extract_strided_slice %671 {offsets = [0, 384], sizes = [8, 128], strides = [1, 1]} : vector<8x512xf32> to vector<8x128xf32>
      %689 = arith.negf %688 : vector<8x128xf32>
      %690 = math.exp %689 : vector<8x128xf32>
      %cst_329 = arith.constant 1.000000e+00 : f32
      %691 = vector.broadcast %cst_329 : f32 to vector<8x128xf32>
      %692 = arith.addf %691, %690 : vector<8x128xf32>
      %693 = arith.divf %691, %692 : vector<8x128xf32>
      %694 = arith.mulf %685, %673 : vector<8x128xf32>
      %695 = arith.mulf %679, %687 : vector<8x128xf32>
      %696 = arith.addf %694, %695 : vector<8x128xf32>
      %697 = math.tanh %696 : vector<8x128xf32>
      %698 = arith.mulf %693, %697 : vector<8x128xf32>
      %c1_330 = arith.constant 1 : index
      %c0_331 = arith.constant 0 : index
      %c0_332 = arith.constant 0 : index
      %699 = vector.load %arg11[%c1_330, %c0_331, %c0_332] : memref<2x8x128xf32, #tpu.memory_space<vmem>>, vector<1x8x128xf32>
      %700 = vector.shape_cast %699 : vector<1x8x128xf32> to vector<8x128xf32>
      %701 = vector.shape_cast %696 : vector<8x128xf32> to vector<1x8x128xf32>
      tpu.vector_store %arg11[%c1_330, %c0_331, %c0_332], %701 {strides = array<i32>} : memref<2x8x128xf32, #tpu.memory_space<vmem>>, vector<1x8x128xf32>,
      %702 = arith.truncf %698 : vector<8x128xf32> to vector<8x128xbf16>
      %c0_333 = arith.constant 0 : index
      %c128_334 = arith.constant 128 : index
      %703 = vector.load %arg10[%c0_333, %c128_334] : memref<8x256xbf16, #tpu.memory_space<vmem>>, vector<8x128xbf16>
      tpu.vector_store %arg10[%c0_333, %c128_334], %702 {strides = array<i32>} : memref<8x256xbf16, #tpu.memory_space<vmem>>, vector<8x128xbf16>,
      %704 = arith.addi %16, %c7_i32 : i32
      %c1_i32_335 = arith.constant 1 : i32
      %705 = arith.addi %704, %c1_i32_335 : i32
      %706 = vector.broadcast %705 : i32 to vector<8x1xi32>
      %707 = arith.cmpi eq, %15, %706 : vector<8x1xi32>
      %c0_336 = arith.constant 0 : index
      %c0_337 = arith.constant 0 : index
      %708 = vector.load %arg9[%c0_336, %c0_337] : memref<8x128xf32, #tpu.memory_space<vmem>>, vector<8x128xf32>
      %709 = vector.shape_cast %707 : vector<8x1xi1> to vector<8x1xi1>
      %710 = vector.broadcast %709 : vector<8x1xi1> to vector<8x128xi1>
      %711 = arith.select %710, %698, %708 : vector<8x128xi1>, vector<8x128xf32>
      %c0_338 = arith.constant 0 : index
      %c0_339 = arith.constant 0 : index
      %712 = vector.load %arg9[%c0_338, %c0_339] : memref<8x128xf32, #tpu.memory_space<vmem>>, vector<8x128xf32>
      tpu.vector_store %arg9[%c0_338, %c0_339], %711 {strides = array<i32>} : memref<8x128xf32, #tpu.memory_space<vmem>>, vector<8x128xf32>,
      %c8_i32_340 = arith.constant 8 : i32
    } else {
    }
    return
  }
  func.func @transform_0(%arg0: i32, %arg1: memref<1xi32, #tpu.memory_space<smem>>) -> (i32, i32) {
    %c0_i32 = arith.constant 0 : i32
    %c0_i32_0 = arith.constant 0 : i32
    return %arg0, %c0_i32 : i32, i32
  }
  func.func @transform_1(%arg0: i32, %arg1: memref<1xi32, #tpu.memory_space<smem>>) -> (i32, i32) {
    %c0_i32 = arith.constant 0 : i32
    %c0_i32_0 = arith.constant 0 : i32
    %c0_i32_1 = arith.constant 0 : i32
    return %c0_i32, %c0_i32_0 : i32, i32
  }
  func.func @transform_2(%arg0: i32, %arg1: memref<1xi32, #tpu.memory_space<smem>>) -> (i32, i32) {
    %c0_i32 = arith.constant 0 : i32
    %c0_i32_0 = arith.constant 0 : i32
    %c0_i32_1 = arith.constant 0 : i32
    return %c0_i32, %c0_i32_0 : i32, i32
  }
  func.func @transform_3(%arg0: i32, %arg1: memref<1xi32, #tpu.memory_space<smem>>) -> (i32, i32) {
    %c0_i32 = arith.constant 0 : i32
    %c0_i32_0 = arith.constant 0 : i32
    %c0_i32_1 = arith.constant 0 : i32
    return %c0_i32, %c0_i32_0 : i32, i32
  }
  func.func @transform_4(%arg0: i32, %arg1: memref<1xi32, #tpu.memory_space<smem>>) -> (i32, i32) {
    %c0_i32 = arith.constant 0 : i32
    %c0_i32_0 = arith.constant 0 : i32
    %c0_i32_1 = arith.constant 0 : i32
    return %c0_i32, %c0_i32_0 : i32, i32
  }
  func.func @transform_5(%arg0: i32, %arg1: memref<1xi32, #tpu.memory_space<smem>>) -> (i32, i32) {
    %c0_i32 = arith.constant 0 : i32
    %c0_i32_0 = arith.constant 0 : i32
    %c0_i32_1 = arith.constant 0 : i32
    return %c0_i32, %c0_i32_0 : i32, i32
  }
  func.func @transform_6(%arg0: i32, %arg1: memref<1xi32, #tpu.memory_space<smem>>) -> (i32, i32) {
    %c0_i32 = arith.constant 0 : i32
    %c0_i32_0 = arith.constant 0 : i32
    %c0_i32_1 = arith.constant 0 : i32
    return %c0_i32, %c0_i32_0 : i32, i32
  }
  func.func @transform_7(%arg0: i32, %arg1: memref<1xi32, #tpu.memory_space<smem>>) -> (i32, i32) {
    %c0_i32 = arith.constant 0 : i32
    %c0_i32_0 = arith.constant 0 : i32
    %c0_i32_1 = arith.constant 0 : i32
    return %c0_i32, %c0_i32_0 : i32, i32
  }
}

</mosaic_0001>

<llo_original>
// kernel: _encoder1_forward.1
$region0: #{_encoder1_forward.1}
  #allocation0 [shape = 'u32[]', space=smem, size = 0x4, offset = 0x4, fixed_abs, tag = 'smem constant byte address 0x4 - core index']
  #allocation1 [shape = 'u32[144,128]{1,0:T(1,128)}', space=vmem, size = 0x12000, scoped, tag = 'internal scratch']
  #allocation2 [shape = 'bf16[8,256]{1,0:T(8,128)(2,1)}', space=vmem, size = 0x1000, scoped, tag = 'scratch operand']
  #allocation3 [shape = 'f32[2,8,128]{2,1,0:T(8,128)}', space=vmem, size = 0x2000, scoped, tag = 'scratch operand']
  #allocation4 [shape = 'f32[64,512]{1,0:T(8,128)}', space=vmem, size = 0x20000, scoped, tag = 'scratch operand']
  #allocation5 [shape = 's32[1]{0}', space=sflag, size = 0x4, scoped, tag = 'scoped memory for _encoder1_forward.1']
  #allocation6 [shape = 's32[1]{0:T(128)S(6)}', space=smem, size = 0x200, scoped, tag = 'prefetched SMEM operand 0']
  %s0 = inlined_call_operand.<no memory space> [shape: s32[1], index: 0, kind: input, shape index: {}]
  %s1 = inlined_call_operand.vmem [shape: bf16[64,128], index: 1, kind: input, shape index: {}]
  %s2 = inlined_call_operand.vmem [shape: s32[8,1], index: 2, kind: input, shape index: {}]
  %s3 = inlined_call_operand.hbm [shape: bf16[128,512], index: 3, kind: input, shape index: {}]
  %s4 = inlined_call_operand.hbm [shape: bf16[128,512], index: 4, kind: input, shape index: {}]
  %s5 = inlined_call_operand.vmem [shape: f32[1,512], index: 5, kind: input, shape index: {}]
  %s6 = inlined_call_operand.hbm [shape: bf16[256,512], index: 6, kind: input, shape index: {}]
  %s7 = inlined_call_operand.vmem [shape: f32[1,512], index: 7, kind: input, shape index: {}]
  %s8 = inlined_call_operand.vmem [shape: f32[8,128], index: 8, kind: output, shape index: {}]
  %s9 = sld [smem:[#allocation0]]
  $region58: #{_encoder1_forward.1} parent=0
    _
  %s11 = ssub.s32 1, %s9
  %s12 = scalar_select 0, %s11, %s9
  %13 = sst [smem:[#allocation6]] %s0
  $region1: #{_encoder1_forward.1} parent=0
    #allocation7 [shape = 'u8[131072]{0}', space=vmem, size = 0x20000, scoped, tag = 'input window, operand 3, single buffered']
    #allocation8 [shape = 's32[1]{0}', space=sflag, size = 0x4, scoped, tag = 'scoped memory for _encoder1_forward.1']
    #allocation9 [shape = 'u8[131072]{0}', space=vmem, size = 0x20000, scoped, tag = 'input window, operand 4, single buffered']
    #allocation10 [shape = 's32[1]{0}', space=sflag, size = 0x4, scoped, tag = 'scoped memory for _encoder1_forward.1']
    #allocation11 [shape = 'u8[262144]{0}', space=vmem, size = 0x40000, scoped, tag = 'input window, operand 6, single buffered']
    %14 = vsyncpa [#allocation8], 0
    %15 = vsyncpa [#allocation10], 0
    // Predicated region
    $region2: #{_encoder1_forward.1} parent=1 // pred_check
      _
    $region3: #{_encoder1_forward.1} parent=1 // pred_check_branch
      %17 = sbr.rel (0) target = $region5
    $region4: #{_encoder1_forward.1} parent=1 // pred_region
      _
    $region5: #{_encoder1_forward.1} parent=1 // pred_fallthru
      _
    // Predicated region
    $region6: #{_encoder1_forward.1} parent=1 // pred_check
      _
    $region7: #{_encoder1_forward.1} parent=1 // pred_check_branch
      %19 = sbr.rel (0) target = $region9
    $region8: #{_encoder1_forward.1} parent=1 // pred_region
      _
    $region9: #{_encoder1_forward.1} parent=1 // pred_fallthru
      _
    // Predicated region
    $region10: #{_encoder1_forward.1} parent=1 // pred_check
      _
    $region11: #{_encoder1_forward.1} parent=1 // pred_check_branch
      %21 = sbr.rel (0) target = $region13
    $region12: #{_encoder1_forward.1} parent=1 // pred_region
      %s23 = ssub.s32 4096, 4096
      %24 = vsyncadd [#allocation8], %s23
      %s25 = sshll.u32 [#allocation7], 4
      %s26 = int_to_ptr.vmem [resolvable:$true] %s25
      %31 = dma.hbm_to_vmem [thread:$0]  %s3, 4096, %s26, [#allocation8], 256, 256, 16
    $region13: #{_encoder1_forward.1} parent=1 // pred_fallthru
      _
    // Predicated region
    $region14: #{_encoder1_forward.1} parent=1 // pred_check
      _
    $region15: #{_encoder1_forward.1} parent=1 // pred_check_branch
      %33 = sbr.rel (0) target = $region17
    $region16: #{_encoder1_forward.1} parent=1 // pred_region
      %s35 = ssub.s32 4096, 4096
      %36 = vsyncadd [#allocation10], %s35
      %s37 = sshll.u32 [#allocation9], 4
      %s38 = int_to_ptr.vmem [resolvable:$true] %s37
      %43 = dma.hbm_to_vmem [thread:$0]  %s4, 4096, %s38, [#allocation10], 256, 256, 16
    $region17: #{_encoder1_forward.1} parent=1 // pred_fallthru
      _
    // Predicated region
    $region18: #{_encoder1_forward.1} parent=1 // pred_check
      _
    $region19: #{_encoder1_forward.1} parent=1 // pred_check_branch
      %45 = sbr.rel (0) target = $region21
    $region20: #{_encoder1_forward.1} parent=1 // pred_region
      _
    $region21: #{_encoder1_forward.1} parent=1 // pred_fallthru
      _
    // Predicated region
    $region22: #{_encoder1_forward.1} parent=1 // pred_check
      _
    $region23: #{_encoder1_forward.1} parent=1 // pred_check_branch
      %47 = sbr.rel (0) target = $region25
    $region24: #{_encoder1_forward.1} parent=1 // pred_region
      %s49 = ssub.s32 8192, 8192
      %50 = vsyncadd [#allocation10], %s49
      %s51 = sshll.u32 [#allocation11], 4
      %s52 = int_to_ptr.vmem [resolvable:$true] %s51
      %57 = dma.hbm_to_vmem [thread:$0]  %s6, 8192, %s52, [#allocation10], 256, 256, 16
    $region25: #{_encoder1_forward.1} parent=1 // pred_fallthru
      _
    // Predicated region
    $region26: #{_encoder1_forward.1} parent=1 // pred_check
      _
    $region27: #{_encoder1_forward.1} parent=1 // pred_check_branch
      %59 = sbr.rel (0) target = $region29
    $region28: #{_encoder1_forward.1} parent=1 // pred_region
      _
    $region29: #{_encoder1_forward.1} parent=1 // pred_fallthru
      _
    // Predicated region
    $region30: #{_encoder1_forward.1} parent=1 // pred_check
      _
    $region31: #{_encoder1_forward.1} parent=1 // pred_check_branch
      %61 = sbr.rel (0) target = $region33
    $region32: #{_encoder1_forward.1} parent=1 // pred_region
      %62 = dma.done [#allocation8], 4096
    $region33: #{_encoder1_forward.1} parent=1 // pred_fallthru
      _
    // Predicated region
    $region34: #{_encoder1_forward.1} parent=1 // pred_check
      _
    $region35: #{_encoder1_forward.1} parent=1 // pred_check_branch
      %64 = sbr.rel (0) target = $region37
    $region36: #{_encoder1_forward.1} parent=1 // pred_region
      %65 = dma.done [#allocation10], 4096
    $region37: #{_encoder1_forward.1} parent=1 // pred_fallthru
      _
    // Predicated region
    $region38: #{_encoder1_forward.1} parent=1 // pred_check
      _
    $region39: #{_encoder1_forward.1} parent=1 // pred_check_branch
      %67 = sbr.rel (0) target = $region41
    $region40: #{_encoder1_forward.1} parent=1 // pred_region
      %68 = dma.done [#allocation10], 8192
    $region41: #{_encoder1_forward.1} parent=1 // pred_fallthru
      _
    %p70 = scmp.eq.s32.totalorder 0, 0
    // Predicated region
    $region42: #{_encoder1_forward.1} parent=1 // pred_check
      %p71 = pneg %p70
    $region43: #{_encoder1_forward.1} parent=1 // pred_check_branch
      %73 = sbr.rel (%p71) target = $region45
    $region44: #{_encoder1_forward.1} parent=1 // pred_region
      %74 = vst [vmem:[#allocation2] sm:$0xff] 0
      %75 = vst [vmem:[#allocation3] sm:$0xff] 0.0
      %76 = vst [vmem:[#allocation3 + $0x8] sm:$0xff] 0.0
      %77 = vst [vmem:[%s8] sm:$0xff] 0.0
    $region45: #{_encoder1_forward.1} parent=1 // pred_fallthru
      _
    %s78 = smul.u32 0, 8
    %s79 = sld [smem:[#allocation6]]
    %p80 = scmp.lt.s32.totalorder %s78, %s79
    // Predicated region
    $region46: #{_encoder1_forward.1} parent=1 // pred_check
      %p81 = pneg %p80
    $region47: #{_encoder1_forward.1} parent=1 // pred_check_branch
      %83 = sbr.rel (%p81) target = $region49
    $region48: #{_encoder1_forward.1} parent=1 // pred_region
      %v84 = vld [vmem:[%s1] sm:$0xf]
      %v85 = vld [vmem:[%s1 + $0x4] sm:$0xf]
      %v86 = vld [vmem:[%s1 + $0x8] sm:$0xf]
      %v87 = vld [vmem:[%s1 + $0xc] sm:$0xf]
      %v88 = vld [vmem:[%s1 + $0x10] sm:$0xf]
      %v89 = vld [vmem:[%s1 + $0x14] sm:$0xf]
      %v90 = vld [vmem:[%s1 + $0x18] sm:$0xf]
      %v91 = vld [vmem:[%s1 + $0x1c] sm:$0xf]
      %v92 = vld [vmem:[#allocation7] sm:$0xff]
      %v93 = vld [vmem:[#allocation7 + $0x8] sm:$0xff]
      %v94 = vld [vmem:[#allocation7 + $0x10] sm:$0xff]
      %v95 = vld [vmem:[#allocation7 + $0x18] sm:$0xff]
      %v96 = vld [vmem:[#allocation7 + $0x20] sm:$0xff]
      %v97 = vld [vmem:[#allocation7 + $0x28] sm:$0xff]
      %v98 = vld [vmem:[#allocation7 + $0x30] sm:$0xff]
      %v99 = vld [vmem:[#allocation7 + $0x38] sm:$0xff]
      %v100 = vld [vmem:[#allocation7 + $0x40] sm:$0xff]
      %v101 = vld [vmem:[#allocation7 + $0x48] sm:$0xff]
      %v102 = vld [vmem:[#allocation7 + $0x50] sm:$0xff]
      %v103 = vld [vmem:[#allocation7 + $0x58] sm:$0xff]
      %v104 = vld [vmem:[#allocation7 + $0x60] sm:$0xff]
      %v105 = vld [vmem:[#allocation7 + $0x68] sm:$0xff]
      %v106 = vld [vmem:[#allocation7 + $0x70] sm:$0xff]
      %v107 = vld [vmem:[#allocation7 + $0x78] sm:$0xff]
      %v108 = vld [vmem:[#allocation7 + $0x80] sm:$0xff]
      %v109 = vld [vmem:[#allocation7 + $0x88] sm:$0xff]
      %v110 = vld [vmem:[#allocation7 + $0x90] sm:$0xff]
      %v111 = vld [vmem:[#allocation7 + $0x98] sm:$0xff]
      %v112 = vld [vmem:[#allocation7 + $0xa0] sm:$0xff]
      %v113 = vld [vmem:[#allocation7 + $0xa8] sm:$0xff]
      %v114 = vld [vmem:[#allocation7 + $0xb0] sm:$0xff]
      %v115 = vld [vmem:[#allocation7 + $0xb8] sm:$0xff]
      %v116 = vld [vmem:[#allocation7 + $0xc0] sm:$0xff]
      %v117 = vld [vmem:[#allocation7 + $0xc8] sm:$0xff]
      %v118 = vld [vmem:[#allocation7 + $0xd0] sm:$0xff]
      %v119 = vld [vmem:[#allocation7 + $0xd8] sm:$0xff]
      %v120 = vld [vmem:[#allocation7 + $0xe0] sm:$0xff]
      %v121 = vld [vmem:[#allocation7 + $0xe8] sm:$0xff]
      %v122 = vld [vmem:[#allocation7 + $0xf0] sm:$0xff]
      %v123 = vld [vmem:[#allocation7 + $0xf8] sm:$0xff]
      %v124 = vld [vmem:[%s5] sm:$0xf]
      %v126 = vlaneseq
      %v127 = vshrl.u32 %v126, 7
      %v128 = vsub.s32 0, %v127
      %v129 = vrot.slane %v124, %v128
      %v130 = vlaneseq
      %v131 = vshrl.u32 %v130, 7
      %v132 = vsub.s32 1, %v131
      %v133 = vrot.slane %v124, %v132
      %v134 = vlaneseq
      %v135 = vshrl.u32 %v134, 7
      %v136 = vsub.s32 2, %v135
      %v137 = vrot.slane %v124, %v136
      %v138 = vlaneseq
      %v139 = vshrl.u32 %v138, 7
      %v140 = vsub.s32 3, %v139
      %v141 = vrot.slane %v124, %v140
      %v154 = vunpack.c.l.b16 %v84
      %v155 = vunpack.c.l.b16 %v85
      %v156 = vunpack.c.l.b16 %v86
      %v157 = vunpack.c.l.b16 %v87
      %v158 = vunpack.c.l.b16 %v88
      %v159 = vunpack.c.l.b16 %v89
      %v160 = vunpack.c.l.b16 %v90
      %v161 = vunpack.c.l.b16 %v91
      %v162 = vpack.c.b16 %v155, %v154
      %v163 = vpack.c.b16 %v157, %v156
      %v164 = vpack.c.b16 %v159, %v158
      %v165 = vpack.c.b16 %v161, %v160
      %v202 = vunpack.c.l.b16 %v92
      %v203 = vunpack.c.h.b16 %v92
      %v204 = vunpack.c.l.b16 %v93
      %v205 = vunpack.c.h.b16 %v93
      %v206 = vunpack.c.l.b16 %v94
      %v207 = vunpack.c.h.b16 %v94
      %v208 = vunpack.c.l.b16 %v95
      %v209 = vunpack.c.h.b16 %v95
      %v210 = vunpack.c.l.b16 %v96
      %v211 = vunpack.c.h.b16 %v96
      %v212 = vunpack.c.l.b16 %v97
      %v213 = vunpack.c.h.b16 %v97
      %v214 = vunpack.c.l.b16 %v98
      %v215 = vunpack.c.h.b16 %v98
      %v216 = vunpack.c.l.b16 %v99
      %v217 = vunpack.c.h.b16 %v99
      %v218 = vunpack.c.l.b16 %v100
      %v219 = vunpack.c.h.b16 %v100
      %v220 = vunpack.c.l.b16 %v101
      %v221 = vunpack.c.h.b16 %v101
      %v222 = vunpack.c.l.b16 %v102
      %v223 = vunpack.c.h.b16 %v102
      %v224 = vunpack.c.l.b16 %v103
      %v225 = vunpack.c.h.b16 %v103
      %v226 = vunpack.c.l.b16 %v104
      %v227 = vunpack.c.h.b16 %v104
      %v228 = vunpack.c.l.b16 %v105
      %v229 = vunpack.c.h.b16 %v105
      %v230 = vunpack.c.l.b16 %v106
      %v231 = vunpack.c.h.b16 %v106
      %v232 = vunpack.c.l.b16 %v107
      %v233 = vunpack.c.h.b16 %v107
      %v234 = vunpack.c.l.b16 %v108
      %v235 = vunpack.c.h.b16 %v108
      %v236 = vunpack.c.l.b16 %v109
      %v237 = vunpack.c.h.b16 %v109
      %v238 = vunpack.c.l.b16 %v110
      %v239 = vunpack.c.h.b16 %v110
      %v240 = vunpack.c.l.b16 %v111
      %v241 = vunpack.c.h.b16 %v111
      %v242 = vunpack.c.l.b16 %v112
      %v243 = vunpack.c.h.b16 %v112
      %v244 = vunpack.c.l.b16 %v113
      %v245 = vunpack.c.h.b16 %v113
      %v246 = vunpack.c.l.b16 %v114
      %v247 = vunpack.c.h.b16 %v114
      %v248 = vunpack.c.l.b16 %v115
      %v249 = vunpack.c.h.b16 %v115
      %v250 = vunpack.c.l.b16 %v116
      %v251 = vunpack.c.h.b16 %v116
      %v252 = vunpack.c.l.b16 %v117
      %v253 = vunpack.c.h.b16 %v117
      %v254 = vunpack.c.l.b16 %v118
      %v255 = vunpack.c.h.b16 %v118
      %v256 = vunpack.c.l.b16 %v119
      %v257 = vunpack.c.h.b16 %v119
      %v258 = vunpack.c.l.b16 %v120
      %v259 = vunpack.c.h.b16 %v120
      %v260 = vunpack.c.l.b16 %v121
      %v261 = vunpack.c.h.b16 %v121
      %v262 = vunpack.c.l.b16 %v122
      %v263 = vunpack.c.h.b16 %v122
      %v264 = vunpack.c.l.b16 %v123
      %v265 = vunpack.c.h.b16 %v123
      %v266 = vpack.c.b16 %v206, %v202
      %v267 = vpack.c.b16 %v207, %v203
      %v268 = vpack.c.b16 %v208, %v204
      %v269 = vpack.c.b16 %v209, %v205
      %v270 = vpack.c.b16 %v214, %v210
      %v271 = vpack.c.b16 %v215, %v211
      %v272 = vpack.c.b16 %v216, %v212
      %v273 = vpack.c.b16 %v217, %v213
      %v274 = vpack.c.b16 %v222, %v218
      %v275 = vpack.c.b16 %v223, %v219
      %v276 = vpack.c.b16 %v224, %v220
      %v277 = vpack.c.b16 %v225, %v221
      %v278 = vpack.c.b16 %v230, %v226
      %v279 = vpack.c.b16 %v231, %v227
      %v280 = vpack.c.b16 %v232, %v228
      %v281 = vpack.c.b16 %v233, %v229
      %v282 = vpack.c.b16 %v238, %v234
      %v283 = vpack.c.b16 %v239, %v235
      %v284 = vpack.c.b16 %v240, %v236
      %v285 = vpack.c.b16 %v241, %v237
      %v286 = vpack.c.b16 %v246, %v242
      %v287 = vpack.c.b16 %v247, %v243
      %v288 = vpack.c.b16 %v248, %v244
      %v289 = vpack.c.b16 %v249, %v245
      %v290 = vpack.c.b16 %v254, %v250
      %v291 = vpack.c.b16 %v255, %v251
      %v292 = vpack.c.b16 %v256, %v252
      %v293 = vpack.c.b16 %v257, %v253
      %v294 = vpack.c.b16 %v262, %v258
      %v295 = vpack.c.b16 %v263, %v259
      %v296 = vpack.c.b16 %v264, %v260
      %v297 = vpack.c.b16 %v265, %v261
      %330 = vmatprep.subr.bf16.mxu0 %v267
      %331 = vmatpush1.bf16.msra.mxu0 %v266
      %332 = vmatprep.subr.bf16.mxu0 %v271
      %333 = vmatpush1.bf16.msra.mxu0 %v270
      %334 = vmatprep.subr.bf16.mxu0 %v275
      %335 = vmatpush1.bf16.msra.mxu0 %v274
      %336 = vmatprep.subr.bf16.mxu0 %v279
      %337 = vmatpush1.bf16.msra.mxu0 %v278
      %338 = vmatprep.subr.bf16.mxu0 %v283
      %339 = vmatpush1.bf16.msra.mxu0 %v282
      %340 = vmatprep.subr.bf16.mxu0 %v287
      %341 = vmatpush1.bf16.msra.mxu0 %v286
      %342 = vmatprep.subr.bf16.mxu0 %v291
      %343 = vmatpush1.bf16.msra.mxu0 %v290
      %344 = vmatprep.subr.bf16.mxu0 %v295
      %345 = vmatpush1.bf16.msra.mxu0 %v294
      %346 = vmatprep.subr.bf16.mxu0 0
      %347 = vmatpush1.bf16.msra.mxu0 0
      %348 = vmatprep.subr.bf16.mxu0 0
      %349 = vmatpush1.bf16.msra.mxu0 0
      %350 = vmatprep.subr.bf16.mxu0 0
      %351 = vmatpush1.bf16.msra.mxu0 0
      %352 = vmatprep.subr.bf16.mxu0 0
      %353 = vmatpush1.bf16.msra.mxu0 0
      %354 = vmatprep.subr.bf16.mxu0 0
      %355 = vmatpush1.bf16.msra.mxu0 0
      %356 = vmatprep.subr.bf16.mxu0 0
      %357 = vmatpush1.bf16.msra.mxu0 0
      %358 = vmatprep.subr.bf16.mxu0 0
      %359 = vmatpush1.bf16.msra.mxu0 0
      %360 = vmatprep.subr.bf16.mxu0 0
      %361 = vmatpush1.bf16.msra.mxu0 0
      %362 = vmatprep.mubr.bf16.mxu0 0
      %363 = vmatmul.mubr.bf16.gmra.mrb[0].mxu0 %v162
      %v364 = vpop.f32.mrb[0].mxu0
      %v365 = vadd.f32 %v129, %v364
      %v366 = vpop.f32.mrb[0].mxu0
      %v367 = vadd.f32 %v133, %v366
      %v368 = vpop.f32.mrb[0].mxu0
      %v369 = vadd.f32 %v129, %v368
      %v370 = vpop.f32.mrb[0].mxu0
      %v371 = vadd.f32 %v133, %v370
      %372 = vmatprep.mubr.bf16.mxu0 0
      %373 = vmatmul.mubr.bf16.gmra.mrb[0].mxu0 %v163
      %v374 = vpop.f32.mrb[0].mxu0
      %v375 = vadd.f32 %v129, %v374
      %v376 = vpop.f32.mrb[0].mxu0
      %v377 = vadd.f32 %v133, %v376
      %v378 = vpop.f32.mrb[0].mxu0
      %v379 = vadd.f32 %v129, %v378
      %v380 = vpop.f32.mrb[0].mxu0
      %v381 = vadd.f32 %v133, %v380
      %382 = vmatprep.mubr.bf16.mxu0 0
      %383 = vmatmul.mubr.bf16.gmra.mrb[0].mxu0 %v164
      %v384 = vpop.f32.mrb[0].mxu0
      %v385 = vadd.f32 %v129, %v384
      %v386 = vpop.f32.mrb[0].mxu0
      %v387 = vadd.f32 %v133, %v386
      %v388 = vpop.f32.mrb[0].mxu0
      %v389 = vadd.f32 %v129, %v388
      %v390 = vpop.f32.mrb[0].mxu0
      %v391 = vadd.f32 %v133, %v390
      %392 = vmatprep.mubr.bf16.mxu0 0
      %393 = vmatmul.mubr.bf16.gmra.mrb[0].mxu0 %v165
      %v394 = vpop.f32.mrb[0].mxu0
      %v395 = vadd.f32 %v129, %v394
      %v396 = vpop.f32.mrb[0].mxu0
      %v397 = vadd.f32 %v133, %v396
      %v398 = vpop.f32.mrb[0].mxu0
      %v399 = vadd.f32 %v129, %v398
      %v400 = vpop.f32.mrb[0].mxu0
      %v401 = vadd.f32 %v133, %v400
      %402 = vdwg.mxu0
      %403 = vmatprep.subr.bf16.mxu0 %v269
      %404 = vmatpush1.bf16.msra.mxu0 %v268
      %405 = vmatprep.subr.bf16.mxu0 %v273
      %406 = vmatpush1.bf16.msra.mxu0 %v272
      %407 = vmatprep.subr.bf16.mxu0 %v277
      %408 = vmatpush1.bf16.msra.mxu0 %v276
      %409 = vmatprep.subr.bf16.mxu0 %v281
      %410 = vmatpush1.bf16.msra.mxu0 %v280
      %411 = vmatprep.subr.bf16.mxu0 %v285
      %412 = vmatpush1.bf16.msra.mxu0 %v284
      %413 = vmatprep.subr.bf16.mxu0 %v289
      %414 = vmatpush1.bf16.msra.mxu0 %v288
      %415 = vmatprep.subr.bf16.mxu0 %v293
      %416 = vmatpush1.bf16.msra.mxu0 %v292
      %417 = vmatprep.subr.bf16.mxu0 %v297
      %418 = vmatpush1.bf16.msra.mxu0 %v296
      %419 = vmatprep.subr.bf16.mxu0 0
      %420 = vmatpush1.bf16.msra.mxu0 0
      %421 = vmatprep.subr.bf16.mxu0 0
      %422 = vmatpush1.bf16.msra.mxu0 0
      %423 = vmatprep.subr.bf16.mxu0 0
      %424 = vmatpush1.bf16.msra.mxu0 0
      %425 = vmatprep.subr.bf16.mxu0 0
      %426 = vmatpush1.bf16.msra.mxu0 0
      %427 = vmatprep.subr.bf16.mxu0 0
      %428 = vmatpush1.bf16.msra.mxu0 0
      %429 = vmatprep.subr.bf16.mxu0 0
      %430 = vmatpush1.bf16.msra.mxu0 0
      %431 = vmatprep.subr.bf16.mxu0 0
      %432 = vmatpush1.bf16.msra.mxu0 0
      %433 = vmatprep.subr.bf16.mxu0 0
      %434 = vmatpush1.bf16.msra.mxu0 0
      %435 = vmatprep.mubr.bf16.mxu0 0
      %436 = vmatmul.mubr.bf16.gmra.mrb[0].mxu0 %v162
      %v437 = vpop.f32.mrb[0].mxu0
      %v438 = vadd.f32 %v137, %v437
      %v439 = vpop.f32.mrb[0].mxu0
      %v440 = vadd.f32 %v141, %v439
      %v441 = vpop.f32.mrb[0].mxu0
      %v442 = vadd.f32 %v137, %v441
      %v443 = vpop.f32.mrb[0].mxu0
      %v444 = vadd.f32 %v141, %v443
      %445 = vmatprep.mubr.bf16.mxu0 0
      %446 = vmatmul.mubr.bf16.gmra.mrb[0].mxu0 %v163
      %v447 = vpop.f32.mrb[0].mxu0
      %v448 = vadd.f32 %v137, %v447
      %v449 = vpop.f32.mrb[0].mxu0
      %v450 = vadd.f32 %v141, %v449
      %v451 = vpop.f32.mrb[0].mxu0
      %v452 = vadd.f32 %v137, %v451
      %v453 = vpop.f32.mrb[0].mxu0
      %v454 = vadd.f32 %v141, %v453
      %455 = vmatprep.mubr.bf16.mxu0 0
      %456 = vmatmul.mubr.bf16.gmra.mrb[0].mxu0 %v164
      %v457 = vpop.f32.mrb[0].mxu0
      %v458 = vadd.f32 %v137, %v457
      %v459 = vpop.f32.mrb[0].mxu0
      %v460 = vadd.f32 %v141, %v459
      %v461 = vpop.f32.mrb[0].mxu0
      %v462 = vadd.f32 %v137, %v461
      %v463 = vpop.f32.mrb[0].mxu0
      %v464 = vadd.f32 %v141, %v463
      %465 = vmatprep.mubr.bf16.mxu0 0
      %466 = vmatmul.mubr.bf16.gmra.mrb[0].mxu0 %v165
      %v467 = vpop.f32.mrb[0].mxu0
      %v468 = vadd.f32 %v137, %v467
      %v469 = vpop.f32.mrb[0].mxu0
      %v470 = vadd.f32 %v141, %v469
      %v471 = vpop.f32.mrb[0].mxu0
      %v472 = vadd.f32 %v137, %v471
      %v473 = vpop.f32.mrb[0].mxu0
      %v474 = vadd.f32 %v141, %v473
      %475 = vdwg.mxu0
      %476 = vst [vmem:[#allocation4] sm:$0xff] %v365
      %477 = vst [vmem:[#allocation4 + $0x8] sm:$0xff] %v367
      %478 = vst [vmem:[#allocation4 + $0x10] sm:$0xff] %v438
      %479 = vst [vmem:[#allocation4 + $0x18] sm:$0xff] %v440
      %480 = vst [vmem:[#allocation4 + $0x20] sm:$0xff] %v369
      %481 = vst [vmem:[#allocation4 + $0x28] sm:$0xff] %v371
      %482 = vst [vmem:[#allocation4 + $0x30] sm:$0xff] %v442
      %483 = vst [vmem:[#allocation4 + $0x38] sm:$0xff] %v444
      %484 = vst [vmem:[#allocation4 + $0x40] sm:$0xff] %v375
      %485 = vst [vmem:[#allocation4 + $0x48] sm:$0xff] %v377
      %486 = vst [vmem:[#allocation4 + $0x50] sm:$0xff] %v448
      %487 = vst [vmem:[#allocation4 + $0x58] sm:$0xff] %v450
      %488 = vst [vmem:[#allocation4 + $0x60] sm:$0xff] %v379
      %489 = vst [vmem:[#allocation4 + $0x68] sm:$0xff] %v381
      %490 = vst [vmem:[#allocation4 + $0x70] sm:$0xff] %v452
      %491 = vst [vmem:[#allocation4 + $0x78] sm:$0xff] %v454
      %492 = vst [vmem:[#allocation4 + $0x80] sm:$0xff] %v385
      %493 = vst [vmem:[#allocation4 + $0x88] sm:$0xff] %v387
      %494 = vst [vmem:[#allocation4 + $0x90] sm:$0xff] %v458
      %495 = vst [vmem:[#allocation4 + $0x98] sm:$0xff] %v460
      %496 = vst [vmem:[#allocation4 + $0xa0] sm:$0xff] %v389
      %497 = vst [vmem:[#allocation4 + $0xa8] sm:$0xff] %v391
      %498 = vst [vmem:[#allocation4 + $0xb0] sm:$0xff] %v462
      %499 = vst [vmem:[#allocation4 + $0xb8] sm:$0xff] %v464
      %500 = vst [vmem:[#allocation4 + $0xc0] sm:$0xff] %v395
      %501 = vst [vmem:[#allocation4 + $0xc8] sm:$0xff] %v397
      %502 = vst [vmem:[#allocation4 + $0xd0] sm:$0xff] %v468
      %503 = vst [vmem:[#allocation4 + $0xd8] sm:$0xff] %v470
      %504 = vst [vmem:[#allocation4 + $0xe0] sm:$0xff] %v399
      %505 = vst [vmem:[#allocation4 + $0xe8] sm:$0xff] %v401
      %506 = vst [vmem:[#allocation4 + $0xf0] sm:$0xff] %v472
      %507 = vst [vmem:[#allocation4 + $0xf8] sm:$0xff] %v474
      %v508 = vld [vmem:[%s2] sm:$0xff]
      %v509 = vld [vmem:[#allocation2] sm:$0xf]
      %s510 = smul.u32 0, 4
      %s511 = smul.addr %s510, 8
      %s512 = scalar_lea.vmem [#allocation4], %s511
      %v513 = vld [vmem:[%s512] sm:$0xff]
      %v514 = vld [vmem:[%s512 + $0x8] sm:$0xff]
      %v515 = vld [vmem:[%s512 + $0x10] sm:$0xff]
      %v516 = vld [vmem:[%s512 + $0x18] sm:$0xff]
      %v517 = vld [vmem:[#allocation9] sm:$0xff]
      %v518 = vld [vmem:[#allocation9 + $0x8] sm:$0xff]
      %v519 = vld [vmem:[#allocation9 + $0x10] sm:$0xff]
      %v520 = vld [vmem:[#allocation9 + $0x18] sm:$0xff]
      %v521 = vld [vmem:[#allocation9 + $0x20] sm:$0xff]
      %v522 = vld [vmem:[#allocation9 + $0x28] sm:$0xff]
      %v523 = vld [vmem:[#allocation9 + $0x30] sm:$0xff]
      %v524 = vld [vmem:[#allocation9 + $0x38] sm:$0xff]
      %v525 = vld [vmem:[#allocation9 + $0x40] sm:$0xff]
      %v526 = vld [vmem:[#allocation9 + $0x48] sm:$0xff]
      %v527 = vld [vmem:[#allocation9 + $0x50] sm:$0xff]
      %v528 = vld [vmem:[#allocation9 + $0x58] sm:$0xff]
      %v529 = vld [vmem:[#allocation9 + $0x60] sm:$0xff]
      %v530 = vld [vmem:[#allocation9 + $0x68] sm:$0xff]
      %v531 = vld [vmem:[#allocation9 + $0x70] sm:$0xff]
      %v532 = vld [vmem:[#allocation9 + $0x78] sm:$0xff]
      %v533 = vld [vmem:[#allocation9 + $0x80] sm:$0xff]
      %v534 = vld [vmem:[#allocation9 + $0x88] sm:$0xff]
      %v535 = vld [vmem:[#allocation9 + $0x90] sm:$0xff]
      %v536 = vld [vmem:[#allocation9 + $0x98] sm:$0xff]
      %v537 = vld [vmem:[#allocation9 + $0xa0] sm:$0xff]
      %v538 = vld [vmem:[#allocation9 + $0xa8] sm:$0xff]
      %v539 = vld [vmem:[#allocation9 + $0xb0] sm:$0xff]
      %v540 = vld [vmem:[#allocation9 + $0xb8] sm:$0xff]
      %v541 = vld [vmem:[#allocation9 + $0xc0] sm:$0xff]
      %v542 = vld [vmem:[#allocation9 + $0xc8] sm:$0xff]
      %v543 = vld [vmem:[#allocation9 + $0xd0] sm:$0xff]
      %v544 = vld [vmem:[#allocation9 + $0xd8] sm:$0xff]
      %v545 = vld [vmem:[#allocation9 + $0xe0] sm:$0xff]
      %v546 = vld [vmem:[#allocation9 + $0xe8] sm:$0xff]
      %v547 = vld [vmem:[#allocation9 + $0xf0] sm:$0xff]
      %v548 = vld [vmem:[#allocation9 + $0xf8] sm:$0xff]
      %v581 = vunpack.c.l.b16 %v517
      %v582 = vunpack.c.h.b16 %v517
      %v583 = vunpack.c.l.b16 %v518
      %v584 = vunpack.c.h.b16 %v518
      %v585 = vunpack.c.l.b16 %v519
      %v586 = vunpack.c.h.b16 %v519
      %v587 = vunpack.c.l.b16 %v520
      %v588 = vunpack.c.h.b16 %v520
      %v589 = vunpack.c.l.b16 %v521
      %v590 = vunpack.c.h.b16 %v521
      %v591 = vunpack.c.l.b16 %v522
      %v592 = vunpack.c.h.b16 %v522
      %v593 = vunpack.c.l.b16 %v523
      %v594 = vunpack.c.h.b16 %v523
      %v595 = vunpack.c.l.b16 %v524
      %v596 = vunpack.c.h.b16 %v524
      %v597 = vunpack.c.l.b16 %v525
      %v598 = vunpack.c.h.b16 %v525
      %v599 = vunpack.c.l.b16 %v526
      %v600 = vunpack.c.h.b16 %v526
      %v601 = vunpack.c.l.b16 %v527
      %v602 = vunpack.c.h.b16 %v527
      %v603 = vunpack.c.l.b16 %v528
      %v604 = vunpack.c.h.b16 %v528
      %v605 = vunpack.c.l.b16 %v529
      %v606 = vunpack.c.h.b16 %v529
      %v607 = vunpack.c.l.b16 %v530
      %v608 = vunpack.c.h.b16 %v530
      %v609 = vunpack.c.l.b16 %v531
      %v610 = vunpack.c.h.b16 %v531
      %v611 = vunpack.c.l.b16 %v532
      %v612 = vunpack.c.h.b16 %v532
      %v613 = vunpack.c.l.b16 %v533
      %v614 = vunpack.c.h.b16 %v533
      %v615 = vunpack.c.l.b16 %v534
      %v616 = vunpack.c.h.b16 %v534
      %v617 = vunpack.c.l.b16 %v535
      %v618 = vunpack.c.h.b16 %v535
      %v619 = vunpack.c.l.b16 %v536
      %v620 = vunpack.c.h.b16 %v536
      %v621 = vunpack.c.l.b16 %v537
      %v622 = vunpack.c.h.b16 %v537
      %v623 = vunpack.c.l.b16 %v538
      %v624 = vunpack.c.h.b16 %v538
      %v625 = vunpack.c.l.b16 %v539
      %v626 = vunpack.c.h.b16 %v539
      %v627 = vunpack.c.l.b16 %v540
      %v628 = vunpack.c.h.b16 %v540
      %v629 = vunpack.c.l.b16 %v541
      %v630 = vunpack.c.h.b16 %v541
      %v631 = vunpack.c.l.b16 %v542
      %v632 = vunpack.c.h.b16 %v542
      %v633 = vunpack.c.l.b16 %v543
      %v634 = vunpack.c.h.b16 %v543
      %v635 = vunpack.c.l.b16 %v544
      %v636 = vunpack.c.h.b16 %v544
      %v637 = vunpack.c.l.b16 %v545
      %v638 = vunpack.c.h.b16 %v545
      %v639 = vunpack.c.l.b16 %v546
      %v640 = vunpack.c.h.b16 %v546
      %v641 = vunpack.c.l.b16 %v547
      %v642 = vunpack.c.h.b16 %v547
      %v643 = vunpack.c.l.b16 %v548
      %v644 = vunpack.c.h.b16 %v548
      %v645 = vpack.c.b16 %v585, %v581
      %v646 = vpack.c.b16 %v586, %v582
      %v647 = vpack.c.b16 %v587, %v583
      %v648 = vpack.c.b16 %v588, %v584
      %v649 = vpack.c.b16 %v593, %v589
      %v650 = vpack.c.b16 %v594, %v590
      %v651 = vpack.c.b16 %v595, %v591
      %v652 = vpack.c.b16 %v596, %v592
      %v653 = vpack.c.b16 %v601, %v597
      %v654 = vpack.c.b16 %v602, %v598
      %v655 = vpack.c.b16 %v603, %v599
      %v656 = vpack.c.b16 %v604, %v600
      %v657 = vpack.c.b16 %v609, %v605
      %v658 = vpack.c.b16 %v610, %v606
      %v659 = vpack.c.b16 %v611, %v607
      %v660 = vpack.c.b16 %v612, %v608
      %v661 = vpack.c.b16 %v617, %v613
      %v662 = vpack.c.b16 %v618, %v614
      %v663 = vpack.c.b16 %v619, %v615
      %v664 = vpack.c.b16 %v620, %v616
      %v665 = vpack.c.b16 %v625, %v621
      %v666 = vpack.c.b16 %v626, %v622
      %v667 = vpack.c.b16 %v627, %v623
      %v668 = vpack.c.b16 %v628, %v624
      %v669 = vpack.c.b16 %v633, %v629
      %v670 = vpack.c.b16 %v634, %v630
      %v671 = vpack.c.b16 %v635, %v631
      %v672 = vpack.c.b16 %v636, %v632
      %v673 = vpack.c.b16 %v641, %v637
      %v674 = vpack.c.b16 %v642, %v638
      %v675 = vpack.c.b16 %v643, %v639
      %v676 = vpack.c.b16 %v644, %v640
      %709 = vmatprep.subr.bf16.mxu0 %v646
      %710 = vmatpush1.bf16.msra.mxu0 %v645
      %711 = vmatprep.subr.bf16.mxu0 %v650
      %712 = vmatpush1.bf16.msra.mxu0 %v649
      %713 = vmatprep.subr.bf16.mxu0 %v654
      %714 = vmatpush1.bf16.msra.mxu0 %v653
      %715 = vmatprep.subr.bf16.mxu0 %v658
      %716 = vmatpush1.bf16.msra.mxu0 %v657
      %717 = vmatprep.subr.bf16.mxu0 %v662
      %718 = vmatpush1.bf16.msra.mxu0 %v661
      %719 = vmatprep.subr.bf16.mxu0 %v666
      %720 = vmatpush1.bf16.msra.mxu0 %v665
      %721 = vmatprep.subr.bf16.mxu0 %v670
      %722 = vmatpush1.bf16.msra.mxu0 %v669
      %723 = vmatprep.subr.bf16.mxu0 %v674
      %724 = vmatpush1.bf16.msra.mxu0 %v673
      %725 = vmatprep.subr.bf16.mxu0 0
      %726 = vmatpush1.bf16.msra.mxu0 0
      %727 = vmatprep.subr.bf16.mxu0 0
      %728 = vmatpush1.bf16.msra.mxu0 0
      %729 = vmatprep.subr.bf16.mxu0 0
      %730 = vmatpush1.bf16.msra.mxu0 0
      %731 = vmatprep.subr.bf16.mxu0 0
      %732 = vmatpush1.bf16.msra.mxu0 0
      %733 = vmatprep.subr.bf16.mxu0 0
      %734 = vmatpush1.bf16.msra.mxu0 0
      %735 = vmatprep.subr.bf16.mxu0 0
      %736 = vmatpush1.bf16.msra.mxu0 0
      %737 = vmatprep.subr.bf16.mxu0 0
      %738 = vmatpush1.bf16.msra.mxu0 0
      %739 = vmatprep.subr.bf16.mxu0 0
      %740 = vmatpush1.bf16.msra.mxu0 0
      %741 = vmatprep.mubr.bf16.mxu0 0
      %742 = vmatmul.mubr.bf16.gmra.mrb[0].mxu0 %v509
      %v743 = vpop.f32.mrb[0].mxu0
      %v744 = vadd.f32 0.0, %v743
      %v745 = vpop.f32.mrb[0].mxu0
      %v746 = vadd.f32 0.0, %v745
      %v747 = vpop.f32.mrb[0].mxu0
      %v748 = vpop.f32.mrb[0].mxu0
      %749 = vdwg.mxu0
      %750 = vmatprep.subr.bf16.mxu0 %v648
      %751 = vmatpush1.bf16.msra.mxu0 %v647
      %752 = vmatprep.subr.bf16.mxu0 %v652
      %753 = vmatpush1.bf16.msra.mxu0 %v651
      %754 = vmatprep.subr.bf16.mxu0 %v656
      %755 = vmatpush1.bf16.msra.mxu0 %v655
      %756 = vmatprep.subr.bf16.mxu0 %v660
      %757 = vmatpush1.bf16.msra.mxu0 %v659
      %758 = vmatprep.subr.bf16.mxu0 %v664
      %759 = vmatpush1.bf16.msra.mxu0 %v663
      %760 = vmatprep.subr.bf16.mxu0 %v668
      %761 = vmatpush1.bf16.msra.mxu0 %v667
      %762 = vmatprep.subr.bf16.mxu0 %v672
      %763 = vmatpush1.bf16.msra.mxu0 %v671
      %764 = vmatprep.subr.bf16.mxu0 %v676
      %765 = vmatpush1.bf16.msra.mxu0 %v675
      %766 = vmatprep.subr.bf16.mxu0 0
      %767 = vmatpush1.bf16.msra.mxu0 0
      %768 = vmatprep.subr.bf16.mxu0 0
      %769 = vmatpush1.bf16.msra.mxu0 0
      %770 = vmatprep.subr.bf16.mxu0 0
      %771 = vmatpush1.bf16.msra.mxu0 0
      %772 = vmatprep.subr.bf16.mxu0 0
      %773 = vmatpush1.bf16.msra.mxu0 0
      %774 = vmatprep.subr.bf16.mxu0 0
      %775 = vmatpush1.bf16.msra.mxu0 0
      %776 = vmatprep.subr.bf16.mxu0 0
      %777 = vmatpush1.bf16.msra.mxu0 0
      %778 = vmatprep.subr.bf16.mxu0 0
      %779 = vmatpush1.bf16.msra.mxu0 0
      %780 = vmatprep.subr.bf16.mxu0 0
      %781 = vmatpush1.bf16.msra.mxu0 0
      %782 = vmatprep.mubr.bf16.mxu0 0
      %783 = vmatmul.mubr.bf16.gmra.mrb[0].mxu0 %v509
      %v784 = vpop.f32.mrb[0].mxu0
      %v785 = vadd.f32 0.0, %v784
      %v786 = vpop.f32.mrb[0].mxu0
      %v787 = vadd.f32 0.0, %v786
      %v788 = vpop.f32.mrb[0].mxu0
      %v789 = vpop.f32.mrb[0].mxu0
      %790 = vdwg.mxu0
      %v791 = vadd.f32 %v513, %v744
      %v792 = vadd.f32 %v514, %v746
      %v793 = vadd.f32 %v515, %v785
      %v794 = vadd.f32 %v516, %v787
      %v795 = vld [vmem:[#allocation3] sm:$0xff]
      %v796 = vxor.u32 %v791, 2147483648
      %v797 = vmul.f32 %v796, 1.442695
      %v798 = vpow.pop %v797
      %v799 = vadd.f32 %v798, 1.0
      %v800 = vrcp.pop %v799
      %v801 = vmul.f32 1.0, %v800
      %v802 = vxor.u32 %v792, 2147483648
      %v803 = vmul.f32 %v802, 1.442695
      %v804 = vpow.pop %v803
      %v805 = vadd.f32 %v804, 1.0
      %v806 = vrcp.pop %v805
      %v807 = vmul.f32 1.0, %v806
      %v808 = vtanh.pop %v793
      %v809 = vxor.u32 %v794, 2147483648
      %v810 = vmul.f32 %v809, 1.442695
      %v811 = vpow.pop %v810
      %v812 = vadd.f32 %v811, 1.0
      %v813 = vrcp.pop %v812
      %v814 = vmul.f32 1.0, %v813
      %v815 = vmul.f32 %v807, %v795
      %v816 = vmul.f32 %v801, %v808
      %v817 = vadd.f32 %v815, %v816
      %v818 = vtanh.pop %v817
      %v819 = vmul.f32 %v814, %v818
      %820 = vst [vmem:[#allocation3] sm:$0xff] %v817
      %v821 = vpack.c.bf16 %v819, %v819
      %822 = vst [vmem:[#allocation2] sm:$0xf] %v821
      %v823 = vld [vmem:[#allocation2] sm:$0xff]
      %v824 = vld [vmem:[#allocation11] sm:$0xff]
      %v825 = vld [vmem:[#allocation11 + $0x8] sm:$0xff]
      %v826 = vld [vmem:[#allocation11 + $0x10] sm:$0xff]
      %v827 = vld [vmem:[#allocation11 + $0x18] sm:$0xff]
      %v828 = vld [vmem:[#allocation11 + $0x20] sm:$0xff]
      %v829 = vld [vmem:[#allocation11 + $0x28] sm:$0xff]
      %v830 = vld [vmem:[#allocation11 + $0x30] sm:$0xff]
      %v831 = vld [vmem:[#allocation11 + $0x38] sm:$0xff]
      %v832 = vld [vmem:[#allocation11 + $0x40] sm:$0xff]
      %v833 = vld [vmem:[#allocation11 + $0x48] sm:$0xff]
      %v834 = vld [vmem:[#allocation11 + $0x50] sm:$0xff]
      %v835 = vld [vmem:[#allocation11 + $0x58] sm:$0xff]
      %v836 = vld [vmem:[#allocation11 + $0x60] sm:$0xff]
      %v837 = vld [vmem:[#allocation11 + $0x68] sm:$0xff]
      %v838 = vld [vmem:[#allocation11 + $0x70] sm:$0xff]
      %v839 = vld [vmem:[#allocation11 + $0x78] sm:$0xff]
      %v840 = vld [vmem:[#allocation11 + $0x80] sm:$0xff]
      %v841 = vld [vmem:[#allocation11 + $0x88] sm:$0xff]
      %v842 = vld [vmem:[#allocation11 + $0x90] sm:$0xff]
      %v843 = vld [vmem:[#allocation11 + $0x98] sm:$0xff]
      %v844 = vld [vmem:[#allocation11 + $0xa0] sm:$0xff]
      %v845 = vld [vmem:[#allocation11 + $0xa8] sm:$0xff]
      %v846 = vld [vmem:[#allocation11 + $0xb0] sm:$0xff]
      %v847 = vld [vmem:[#allocation11 + $0xb8] sm:$0xff]
      %v848 = vld [vmem:[#allocation11 + $0xc0] sm:$0xff]
      %v849 = vld [vmem:[#allocation11 + $0xc8] sm:$0xff]
      %v850 = vld [vmem:[#allocation11 + $0xd0] sm:$0xff]
      %v851 = vld [vmem:[#allocation11 + $0xd8] sm:$0xff]
      %v852 = vld [vmem:[#allocation11 + $0xe0] sm:$0xff]
      %v853 = vld [vmem:[#allocation11 + $0xe8] sm:$0xff]
      %v854 = vld [vmem:[#allocation11 + $0xf0] sm:$0xff]
      %v855 = vld [vmem:[#allocation11 + $0xf8] sm:$0xff]
      %v856 = vld [vmem:[#allocation11 + $0x100] sm:$0xff]
      %v857 = vld [vmem:[#allocation11 + $0x108] sm:$0xff]
      %v858 = vld [vmem:[#allocation11 + $0x110] sm:$0xff]
      %v859 = vld [vmem:[#allocation11 + $0x118] sm:$0xff]
      %v860 = vld [vmem:[#allocation11 + $0x120] sm:$0xff]
      %v861 = vld [vmem:[#allocation11 + $0x128] sm:$0xff]
      %v862 = vld [vmem:[#allocation11 + $0x130] sm:$0xff]
      %v863 = vld [vmem:[#allocation11 + $0x138] sm:$0xff]
      %v864 = vld [vmem:[#allocation11 + $0x140] sm:$0xff]
      %v865 = vld [vmem:[#allocation11 + $0x148] sm:$0xff]
      %v866 = vld [vmem:[#allocation11 + $0x150] sm:$0xff]
      %v867 = vld [vmem:[#allocation11 + $0x158] sm:$0xff]
      %v868 = vld [vmem:[#allocation11 + $0x160] sm:$0xff]
      %v869 = vld [vmem:[#allocation11 + $0x168] sm:$0xff]
      %v870 = vld [vmem:[#allocation11 + $0x170] sm:$0xff]
      %v871 = vld [vmem:[#allocation11 + $0x178] sm:$0xff]
      %v872 = vld [vmem:[#allocation11 + $0x180] sm:$0xff]
      %v873 = vld [vmem:[#allocation11 + $0x188] sm:$0xff]
      %v874 = vld [vmem:[#allocation11 + $0x190] sm:$0xff]
      %v875 = vld [vmem:[#allocation11 + $0x198] sm:$0xff]
      %v876 = vld [vmem:[#allocation11 + $0x1a0] sm:$0xff]
      %v877 = vld [vmem:[#allocation11 + $0x1a8] sm:$0xff]
      %v878 = vld [vmem:[#allocation11 + $0x1b0] sm:$0xff]
      %v879 = vld [vmem:[#allocation11 + $0x1b8] sm:$0xff]
      %v880 = vld [vmem:[#allocation11 + $0x1c0] sm:$0xff]
      %v881 = vld [vmem:[#allocation11 + $0x1c8] sm:$0xff]
      %v882 = vld [vmem:[#allocation11 + $0x1d0] sm:$0xff]
      %v883 = vld [vmem:[#allocation11 + $0x1d8] sm:$0xff]
      %v884 = vld [vmem:[#allocation11 + $0x1e0] sm:$0xff]
      %v885 = vld [vmem:[#allocation11 + $0x1e8] sm:$0xff]
      %v886 = vld [vmem:[#allocation11 + $0x1f0] sm:$0xff]
      %v887 = vld [vmem:[#allocation11 + $0x1f8] sm:$0xff]
      %v888 = vld [vmem:[%s7] sm:$0xf]
      %v890 = vlaneseq
      %v891 = vshrl.u32 %v890, 7
      %v892 = vsub.s32 0, %v891
      %v893 = vrot.slane %v888, %v892
      %v894 = vlaneseq
      %v895 = vshrl.u32 %v894, 7
      %v896 = vsub.s32 1, %v895
      %v897 = vrot.slane %v888, %v896
      %v898 = vlaneseq
      %v899 = vshrl.u32 %v898, 7
      %v900 = vsub.s32 2, %v899
      %v901 = vrot.slane %v888, %v900
      %v902 = vlaneseq
      %v903 = vshrl.u32 %v902, 7
      %v904 = vsub.s32 3, %v903
      %v905 = vrot.slane %v888, %v904
      %v911 = vunpack.c.l.b16 %v823
      %v912 = vunpack.c.h.b16 %v823
      %v913 = vpack.c.b16 %v911, %v911
      %v914 = vpack.c.b16 %v912, %v912
      %v981 = vunpack.c.l.b16 %v824
      %v982 = vunpack.c.h.b16 %v824
      %v983 = vunpack.c.l.b16 %v825
      %v984 = vunpack.c.h.b16 %v825
      %v985 = vunpack.c.l.b16 %v826
      %v986 = vunpack.c.h.b16 %v826
      %v987 = vunpack.c.l.b16 %v827
      %v988 = vunpack.c.h.b16 %v827
      %v989 = vunpack.c.l.b16 %v828
      %v990 = vunpack.c.h.b16 %v828
      %v991 = vunpack.c.l.b16 %v829
      %v992 = vunpack.c.h.b16 %v829
      %v993 = vunpack.c.l.b16 %v830
      %v994 = vunpack.c.h.b16 %v830
      %v995 = vunpack.c.l.b16 %v831
      %v996 = vunpack.c.h.b16 %v831
      %v997 = vunpack.c.l.b16 %v832
      %v998 = vunpack.c.h.b16 %v832
      %v999 = vunpack.c.l.b16 %v833
      %v1000 = vunpack.c.h.b16 %v833
      %v1001 = vunpack.c.l.b16 %v834
      %v1002 = vunpack.c.h.b16 %v834
      %v1003 = vunpack.c.l.b16 %v835
      %v1004 = vunpack.c.h.b16 %v835
      %v1005 = vunpack.c.l.b16 %v836
      %v1006 = vunpack.c.h.b16 %v836
      %v1007 = vunpack.c.l.b16 %v837
      %v1008 = vunpack.c.h.b16 %v837
      %v1009 = vunpack.c.l.b16 %v838
      %v1010 = vunpack.c.h.b16 %v838
      %v1011 = vunpack.c.l.b16 %v839
      %v1012 = vunpack.c.h.b16 %v839
      %v1013 = vunpack.c.l.b16 %v840
      %v1014 = vunpack.c.h.b16 %v840
      %v1015 = vunpack.c.l.b16 %v841
      %v1016 = vunpack.c.h.b16 %v841
      %v1017 = vunpack.c.l.b16 %v842
      %v1018 = vunpack.c.h.b16 %v842
      %v1019 = vunpack.c.l.b16 %v843
      %v1020 = vunpack.c.h.b16 %v843
      %v1021 = vunpack.c.l.b16 %v844
      %v1022 = vunpack.c.h.b16 %v844
      %v1023 = vunpack.c.l.b16 %v845
      %v1024 = vunpack.c.h.b16 %v845
      %v1025 = vunpack.c.l.b16 %v846
      %v1026 = vunpack.c.h.b16 %v846
      %v1027 = vunpack.c.l.b16 %v847
      %v1028 = vunpack.c.h.b16 %v847
      %v1029 = vunpack.c.l.b16 %v848
      %v1030 = vunpack.c.h.b16 %v848
      %v1031 = vunpack.c.l.b16 %v849
      %v1032 = vunpack.c.h.b16 %v849
      %v1033 = vunpack.c.l.b16 %v850
      %v1034 = vunpack.c.h.b16 %v850
      %v1035 = vunpack.c.l.b16 %v851
      %v1036 = vunpack.c.h.b16 %v851
      %v1037 = vunpack.c.l.b16 %v852
      %v1038 = vunpack.c.h.b16 %v852
      %v1039 = vunpack.c.l.b16 %v853
      %v1040 = vunpack.c.h.b16 %v853
      %v1041 = vunpack.c.l.b16 %v854
      %v1042 = vunpack.c.h.b16 %v854
      %v1043 = vunpack.c.l.b16 %v855
      %v1044 = vunpack.c.h.b16 %v855
      %v1045 = vunpack.c.l.b16 %v856
      %v1046 = vunpack.c.h.b16 %v856
      %v1047 = vunpack.c.l.b16 %v857
      %v1048 = vunpack.c.h.b16 %v857
      %v1049 = vunpack.c.l.b16 %v858
      %v1050 = vunpack.c.h.b16 %v858
      %v1051 = vunpack.c.l.b16 %v859
      %v1052 = vunpack.c.h.b16 %v859
      %v1053 = vunpack.c.l.b16 %v860
      %v1054 = vunpack.c.h.b16 %v860
      %v1055 = vunpack.c.l.b16 %v861
      %v1056 = vunpack.c.h.b16 %v861
      %v1057 = vunpack.c.l.b16 %v862
      %v1058 = vunpack.c.h.b16 %v862
      %v1059 = vunpack.c.l.b16 %v863
      %v1060 = vunpack.c.h.b16 %v863
      %v1061 = vunpack.c.l.b16 %v864
      %v1062 = vunpack.c.h.b16 %v864
      %v1063 = vunpack.c.l.b16 %v865
      %v1064 = vunpack.c.h.b16 %v865
      %v1065 = vunpack.c.l.b16 %v866
      %v1066 = vunpack.c.h.b16 %v866
      %v1067 = vunpack.c.l.b16 %v867
      %v1068 = vunpack.c.h.b16 %v867
      %v1069 = vunpack.c.l.b16 %v868
      %v1070 = vunpack.c.h.b16 %v868
      %v1071 = vunpack.c.l.b16 %v869
      %v1072 = vunpack.c.h.b16 %v869
      %v1073 = vunpack.c.l.b16 %v870
      %v1074 = vunpack.c.h.b16 %v870
      %v1075 = vunpack.c.l.b16 %v871
      %v1076 = vunpack.c.h.b16 %v871
      %v1077 = vunpack.c.l.b16 %v872
      %v1078 = vunpack.c.h.b16 %v872
      %v1079 = vunpack.c.l.b16 %v873
      %v1080 = vunpack.c.h.b16 %v873
      %v1081 = vunpack.c.l.b16 %v874
      %v1082 = vunpack.c.h.b16 %v874
      %v1083 = vunpack.c.l.b16 %v875
      %v1084 = vunpack.c.h.b16 %v875
      %v1085 = vunpack.c.l.b16 %v876
      %v1086 = vunpack.c.h.b16 %v876
      %v1087 = vunpack.c.l.b16 %v877
      %v1088 = vunpack.c.h.b16 %v877
      %v1089 = vunpack.c.l.b16 %v878
      %v1090 = vunpack.c.h.b16 %v878
      %v1091 = vunpack.c.l.b16 %v879
      %v1092 = vunpack.c.h.b16 %v879
      %v1093 = vunpack.c.l.b16 %v880
      %v1094 = vunpack.c.h.b16 %v880
      %v1095 = vunpack.c.l.b16 %v881
      %v1096 = vunpack.c.h.b16 %v881
      %v1097 = vunpack.c.l.b16 %v882
      %v1098 = vunpack.c.h.b16 %v882
      %v1099 = vunpack.c.l.b16 %v883
      %v1100 = vunpack.c.h.b16 %v883
      %v1101 = vunpack.c.l.b16 %v884
      %v1102 = vunpack.c.h.b16 %v884
      %v1103 = vunpack.c.l.b16 %v885
      %v1104 = vunpack.c.h.b16 %v885
      %v1105 = vunpack.c.l.b16 %v886
      %v1106 = vunpack.c.h.b16 %v886
      %v1107 = vunpack.c.l.b16 %v887
      %v1108 = vunpack.c.h.b16 %v887
      %v1109 = vpack.c.b16 %v985, %v981
      %v1110 = vpack.c.b16 %v986, %v982
      %v1111 = vpack.c.b16 %v987, %v983
      %v1112 = vpack.c.b16 %v988, %v984
      %v1113 = vpack.c.b16 %v993, %v989
      %v1114 = vpack.c.b16 %v994, %v990
      %v1115 = vpack.c.b16 %v995, %v991
      %v1116 = vpack.c.b16 %v996, %v992
      %v1117 = vpack.c.b16 %v1001, %v997
      %v1118 = vpack.c.b16 %v1002, %v998
      %v1119 = vpack.c.b16 %v1003, %v999
      %v1120 = vpack.c.b16 %v1004, %v1000
      %v1121 = vpack.c.b16 %v1009, %v1005
      %v1122 = vpack.c.b16 %v1010, %v1006
      %v1123 = vpack.c.b16 %v1011, %v1007
      %v1124 = vpack.c.b16 %v1012, %v1008
      %v1125 = vpack.c.b16 %v1017, %v1013
      %v1126 = vpack.c.b16 %v1018, %v1014
      %v1127 = vpack.c.b16 %v1019, %v1015
      %v1128 = vpack.c.b16 %v1020, %v1016
      %v1129 = vpack.c.b16 %v1025, %v1021
      %v1130 = vpack.c.b16 %v1026, %v1022
      %v1131 = vpack.c.b16 %v1027, %v1023
      %v1132 = vpack.c.b16 %v1028, %v1024
      %v1133 = vpack.c.b16 %v1033, %v1029
      %v1134 = vpack.c.b16 %v1034, %v1030
      %v1135 = vpack.c.b16 %v1035, %v1031
      %v1136 = vpack.c.b16 %v1036, %v1032
      %v1137 = vpack.c.b16 %v1041, %v1037
      %v1138 = vpack.c.b16 %v1042, %v1038
      %v1139 = vpack.c.b16 %v1043, %v1039
      %v1140 = vpack.c.b16 %v1044, %v1040
      %v1141 = vpack.c.b16 %v1049, %v1045
      %v1142 = vpack.c.b16 %v1050, %v1046
      %v1143 = vpack.c.b16 %v1051, %v1047
      %v1144 = vpack.c.b16 %v1052, %v1048
      %v1145 = vpack.c.b16 %v1057, %v1053
      %v1146 = vpack.c.b16 %v1058, %v1054
      %v1147 = vpack.c.b16 %v1059, %v1055
      %v1148 = vpack.c.b16 %v1060, %v1056
      %v1149 = vpack.c.b16 %v1065, %v1061
      %v1150 = vpack.c.b16 %v1066, %v1062
      %v1151 = vpack.c.b16 %v1067, %v1063
      %v1152 = vpack.c.b16 %v1068, %v1064
      %v1153 = vpack.c.b16 %v1073, %v1069
      %v1154 = vpack.c.b16 %v1074, %v1070
      %v1155 = vpack.c.b16 %v1075, %v1071
      %v1156 = vpack.c.b16 %v1076, %v1072
      %v1157 = vpack.c.b16 %v1081, %v1077
      %v1158 = vpack.c.b16 %v1082, %v1078
      %v1159 = vpack.c.b16 %v1083, %v1079
      %v1160 = vpack.c.b16 %v1084, %v1080
      %v1161 = vpack.c.b16 %v1089, %v1085
      %v1162 = vpack.c.b16 %v1090, %v1086
      %v1163 = vpack.c.b16 %v1091, %v1087
      %v1164 = vpack.c.b16 %v1092, %v1088
      %v1165 = vpack.c.b16 %v1097, %v1093
      %v1166 = vpack.c.b16 %v1098, %v1094
      %v1167 = vpack.c.b16 %v1099, %v1095
      %v1168 = vpack.c.b16 %v1100, %v1096
      %v1169 = vpack.c.b16 %v1105, %v1101
      %v1170 = vpack.c.b16 %v1106, %v1102
      %v1171 = vpack.c.b16 %v1107, %v1103
      %v1172 = vpack.c.b16 %v1108, %v1104
      %1237 = vmatprep.subr.bf16.mxu0 %v1110
      %1238 = vmatpush1.bf16.msra.mxu0 %v1109
      %1239 = vmatprep.subr.bf16.mxu0 %v1114
      %1240 = vmatpush1.bf16.msra.mxu0 %v1113
      %1241 = vmatprep.subr.bf16.mxu0 %v1118
      %1242 = vmatpush1.bf16.msra.mxu0 %v1117
      %1243 = vmatprep.subr.bf16.mxu0 %v1122
      %1244 = vmatpush1.bf16.msra.mxu0 %v1121
      %1245 = vmatprep.subr.bf16.mxu0 %v1126
      %1246 = vmatpush1.bf16.msra.mxu0 %v1125
      %1247 = vmatprep.subr.bf16.mxu0 %v1130
      %1248 = vmatpush1.bf16.msra.mxu0 %v1129
      %1249 = vmatprep.subr.bf16.mxu0 %v1134
      %1250 = vmatpush1.bf16.msra.mxu0 %v1133
      %1251 = vmatprep.subr.bf16.mxu0 %v1138
      %1252 = vmatpush1.bf16.msra.mxu0 %v1137
      %1253 = vmatprep.subr.bf16.mxu0 %v1142
      %1254 = vmatpush1.bf16.msra.mxu0 %v1141
      %1255 = vmatprep.subr.bf16.mxu0 %v1146
      %1256 = vmatpush1.bf16.msra.mxu0 %v1145
      %1257 = vmatprep.subr.bf16.mxu0 %v1150
      %1258 = vmatpush1.bf16.msra.mxu0 %v1149
      %1259 = vmatprep.subr.bf16.mxu0 %v1154
      %1260 = vmatpush1.bf16.msra.mxu0 %v1153
      %1261 = vmatprep.subr.bf16.mxu0 %v1158
      %1262 = vmatpush1.bf16.msra.mxu0 %v1157
      %1263 = vmatprep.subr.bf16.mxu0 %v1162
      %1264 = vmatpush1.bf16.msra.mxu0 %v1161
      %1265 = vmatprep.subr.bf16.mxu0 %v1166
      %1266 = vmatpush1.bf16.msra.mxu0 %v1165
      %1267 = vmatprep.subr.bf16.mxu0 %v1170
      %1268 = vmatpush1.bf16.msra.mxu0 %v1169
      %1269 = vmatprep.mubr.bf16.mxu0 %v914
      %1270 = vmatmul.mubr.bf16.gmra.mrb[0].mxu0 %v913
      %v1271 = vpop.f32.mrb[0].mxu0
      %v1272 = vadd.f32 %v893, %v1271
      %v1273 = vpop.f32.mrb[0].mxu0
      %v1274 = vadd.f32 %v897, %v1273
      %v1275 = vpop.f32.mrb[0].mxu0
      %v1276 = vpop.f32.mrb[0].mxu0
      %1277 = vdwg.mxu0
      %1278 = vmatprep.subr.bf16.mxu0 %v1112
      %1279 = vmatpush1.bf16.msra.mxu0 %v1111
      %1280 = vmatprep.subr.bf16.mxu0 %v1116
      %1281 = vmatpush1.bf16.msra.mxu0 %v1115
      %1282 = vmatprep.subr.bf16.mxu0 %v1120
      %1283 = vmatpush1.bf16.msra.mxu0 %v1119
      %1284 = vmatprep.subr.bf16.mxu0 %v1124
      %1285 = vmatpush1.bf16.msra.mxu0 %v1123
      %1286 = vmatprep.subr.bf16.mxu0 %v1128
      %1287 = vmatpush1.bf16.msra.mxu0 %v1127
      %1288 = vmatprep.subr.bf16.mxu0 %v1132
      %1289 = vmatpush1.bf16.msra.mxu0 %v1131
      %1290 = vmatprep.subr.bf16.mxu0 %v1136
      %1291 = vmatpush1.bf16.msra.mxu0 %v1135
      %1292 = vmatprep.subr.bf16.mxu0 %v1140
      %1293 = vmatpush1.bf16.msra.mxu0 %v1139
      %1294 = vmatprep.subr.bf16.mxu0 %v1144
      %1295 = vmatpush1.bf16.msra.mxu0 %v1143
      %1296 = vmatprep.subr.bf16.mxu0 %v1148
      %1297 = vmatpush1.bf16.msra.mxu0 %v1147
      %1298 = vmatprep.subr.bf16.mxu0 %v1152
      %1299 = vmatpush1.bf16.msra.mxu0 %v1151
      %1300 = vmatprep.subr.bf16.mxu0 %v1156
      %1301 = vmatpush1.bf16.msra.mxu0 %v1155
      %1302 = vmatprep.subr.bf16.mxu0 %v1160
      %1303 = vmatpush1.bf16.msra.mxu0 %v1159
      %1304 = vmatprep.subr.bf16.mxu0 %v1164
      %1305 = vmatpush1.bf16.msra.mxu0 %v1163
      %1306 = vmatprep.subr.bf16.mxu0 %v1168
      %1307 = vmatpush1.bf16.msra.mxu0 %v1167
      %1308 = vmatprep.subr.bf16.mxu0 %v1172
      %1309 = vmatpush1.bf16.msra.mxu0 %v1171
      %1310 = vmatprep.mubr.bf16.mxu0 %v914
      %1311 = vmatmul.mubr.bf16.gmra.mrb[0].mxu0 %v913
      %v1312 = vpop.f32.mrb[0].mxu0
      %v1313 = vadd.f32 %v901, %v1312
      %v1314 = vpop.f32.mrb[0].mxu0
      %v1315 = vadd.f32 %v905, %v1314
      %v1316 = vpop.f32.mrb[0].mxu0
      %v1317 = vpop.f32.mrb[0].mxu0
      %1318 = vdwg.mxu0
      %s1319 = scalar_lea.vmem [#allocation3], 8
      %v1320 = vld [vmem:[%s1319] sm:$0xff]
      %v1321 = vxor.u32 %v1272, 2147483648
      %v1322 = vmul.f32 %v1321, 1.442695
      %v1323 = vpow.pop %v1322
      %v1324 = vadd.f32 %v1323, 1.0
      %v1325 = vrcp.pop %v1324
      %v1326 = vmul.f32 1.0, %v1325
      %v1327 = vxor.u32 %v1274, 2147483648
      %v1328 = vmul.f32 %v1327, 1.442695
      %v1329 = vpow.pop %v1328
      %v1330 = vadd.f32 %v1329, 1.0
      %v1331 = vrcp.pop %v1330
      %v1332 = vmul.f32 1.0, %v1331
      %v1333 = vtanh.pop %v1313
      %v1334 = vxor.u32 %v1315, 2147483648
      %v1335 = vmul.f32 %v1334, 1.442695
      %v1336 = vpow.pop %v1335
      %v1337 = vadd.f32 %v1336, 1.0
      %v1338 = vrcp.pop %v1337
      %v1339 = vmul.f32 1.0, %v1338
      %v1340 = vmul.f32 %v1332, %v1320
      %v1341 = vmul.f32 %v1326, %v1333
      %v1342 = vadd.f32 %v1340, %v1341
      %v1343 = vtanh.pop %v1342
      %v1344 = vmul.f32 %v1339, %v1343
      %1345 = vst [vmem:[%s1319] sm:$0xff] %v1342
      %v1346 = vpack.c.bf16 %v1344, %v1344
      %1347 = vst [vmem:[#allocation2 + $0x4] sm:$0xf] %v1346
      %s1348 = sadd.s32 %s78, 1
      %v1349 = vstv %s1348
      %vm1350 = vcmp.eq.s32.totalorder %v508, %v1349
      %v1351 = vld [vmem:[%s8] sm:$0xff]
      %v1352 = vsel %vm1350, 1, 0
      %1353 = vset.pattern.permute.xlu0 0
      %1354 = vperm.xlu0 %1353, %v1352
      %v1355 = vpop.permute.xlu0 %1354
      %vm1356 = vcmp.eq.s32.totalorder %v1355, 1
      %v1357 = vsel %vm1356, %v1344, %v1351
      %1358 = vst [vmem:[%s8] sm:$0xff] %v1357
      %v1359 = vld [vmem:[#allocation2] sm:$0xf]
      %s1360 = smul.u32 1, 4
      %s1361 = smul.addr %s1360, 8
      %s1362 = scalar_lea.vmem [#allocation4], %s1361
      %v1363 = vld [vmem:[%s1362] sm:$0xff]
      %v1364 = vld [vmem:[%s1362 + $0x8] sm:$0xff]
      %v1365 = vld [vmem:[%s1362 + $0x10] sm:$0xff]
      %v1366 = vld [vmem:[%s1362 + $0x18] sm:$0xff]
      %v1367 = vld [vmem:[#allocation9] sm:$0xff]
      %v1368 = vld [vmem:[#allocation9 + $0x8] sm:$0xff]
      %v1369 = vld [vmem:[#allocation9 + $0x10] sm:$0xff]
      %v1370 = vld [vmem:[#allocation9 + $0x18] sm:$0xff]
      %v1371 = vld [vmem:[#allocation9 + $0x20] sm:$0xff]
      %v1372 = vld [vmem:[#allocation9 + $0x28] sm:$0xff]
      %v1373 = vld [vmem:[#allocation9 + $0x30] sm:$0xff]
      %v1374 = vld [vmem:[#allocation9 + $0x38] sm:$0xff]
      %v1375 = vld [vmem:[#allocation9 + $0x40] sm:$0xff]
      %v1376 = vld [vmem:[#allocation9 + $0x48] sm:$0xff]
      %v1377 = vld [vmem:[#allocation9 + $0x50] sm:$0xff]
      %v1378 = vld [vmem:[#allocation9 + $0x58] sm:$0xff]
      %v1379 = vld [vmem:[#allocation9 + $0x60] sm:$0xff]
      %v1380 = vld [vmem:[#allocation9 + $0x68] sm:$0xff]
      %v1381 = vld [vmem:[#allocation9 + $0x70] sm:$0xff]
      %v1382 = vld [vmem:[#allocation9 + $0x78] sm:$0xff]
      %v1383 = vld [vmem:[#allocation9 + $0x80] sm:$0xff]
      %v1384 = vld [vmem:[#allocation9 + $0x88] sm:$0xff]
      %v1385 = vld [vmem:[#allocation9 + $0x90] sm:$0xff]
      %v1386 = vld [vmem:[#allocation9 + $0x98] sm:$0xff]
      %v1387 = vld [vmem:[#allocation9 + $0xa0] sm:$0xff]
      %v1388 = vld [vmem:[#allocation9 + $0xa8] sm:$0xff]
      %v1389 = vld [vmem:[#allocation9 + $0xb0] sm:$0xff]
      %v1390 = vld [vmem:[#allocation9 + $0xb8] sm:$0xff]
      %v1391 = vld [vmem:[#allocation9 + $0xc0] sm:$0xff]
      %v1392 = vld [vmem:[#allocation9 + $0xc8] sm:$0xff]
      %v1393 = vld [vmem:[#allocation9 + $0xd0] sm:$0xff]
      %v1394 = vld [vmem:[#allocation9 + $0xd8] sm:$0xff]
      %v1395 = vld [vmem:[#allocation9 + $0xe0] sm:$0xff]
      %v1396 = vld [vmem:[#allocation9 + $0xe8] sm:$0xff]
      %v1397 = vld [vmem:[#allocation9 + $0xf0] sm:$0xff]
      %v1398 = vld [vmem:[#allocation9 + $0xf8] sm:$0xff]
      %v1431 = vunpack.c.l.b16 %v1367
      %v1432 = vunpack.c.h.b16 %v1367
      %v1433 = vunpack.c.l.b16 %v1368
      %v1434 = vunpack.c.h.b16 %v1368
      %v1435 = vunpack.c.l.b16 %v1369
      %v1436 = vunpack.c.h.b16 %v1369
      %v1437 = vunpack.c.l.b16 %v1370
      %v1438 = vunpack.c.h.b16 %v1370
      %v1439 = vunpack.c.l.b16 %v1371
      %v1440 = vunpack.c.h.b16 %v1371
      %v1441 = vunpack.c.l.b16 %v1372
      %v1442 = vunpack.c.h.b16 %v1372
      %v1443 = vunpack.c.l.b16 %v1373
      %v1444 = vunpack.c.h.b16 %v1373
      %v1445 = vunpack.c.l.b16 %v1374
      %v1446 = vunpack.c.h.b16 %v1374
      %v1447 = vunpack.c.l.b16 %v1375
      %v1448 = vunpack.c.h.b16 %v1375
      %v1449 = vunpack.c.l.b16 %v1376
      %v1450 = vunpack.c.h.b16 %v1376
      %v1451 = vunpack.c.l.b16 %v1377
      %v1452 = vunpack.c.h.b16 %v1377
      %v1453 = vunpack.c.l.b16 %v1378
      %v1454 = vunpack.c.h.b16 %v1378
      %v1455 = vunpack.c.l.b16 %v1379
      %v1456 = vunpack.c.h.b16 %v1379
      %v1457 = vunpack.c.l.b16 %v1380
      %v1458 = vunpack.c.h.b16 %v1380
      %v1459 = vunpack.c.l.b16 %v1381
      %v1460 = vunpack.c.h.b16 %v1381
      %v1461 = vunpack.c.l.b16 %v1382
      %v1462 = vunpack.c.h.b16 %v1382
      %v1463 = vunpack.c.l.b16 %v1383
      %v1464 = vunpack.c.h.b16 %v1383
      %v1465 = vunpack.c.l.b16 %v1384
      %v1466 = vunpack.c.h.b16 %v1384
      %v1467 = vunpack.c.l.b16 %v1385
      %v1468 = vunpack.c.h.b16 %v1385
      %v1469 = vunpack.c.l.b16 %v1386
      %v1470 = vunpack.c.h.b16 %v1386
      %v1471 = vunpack.c.l.b16 %v1387
      %v1472 = vunpack.c.h.b16 %v1387
      %v1473 = vunpack.c.l.b16 %v1388
      %v1474 = vunpack.c.h.b16 %v1388
      %v1475 = vunpack.c.l.b16 %v1389
      %v1476 = vunpack.c.h.b16 %v1389
      %v1477 = vunpack.c.l.b16 %v1390
      %v1478 = vunpack.c.h.b16 %v1390
      %v1479 = vunpack.c.l.b16 %v1391
      %v1480 = vunpack.c.h.b16 %v1391
      %v1481 = vunpack.c.l.b16 %v1392
      %v1482 = vunpack.c.h.b16 %v1392
      %v1483 = vunpack.c.l.b16 %v1393
      %v1484 = vunpack.c.h.b16 %v1393
      %v1485 = vunpack.c.l.b16 %v1394
      %v1486 = vunpack.c.h.b16 %v1394
      %v1487 = vunpack.c.l.b16 %v1395
      %v1488 = vunpack.c.h.b16 %v1395
      %v1489 = vunpack.c.l.b16 %v1396
      %v1490 = vunpack.c.h.b16 %v1396
      %v1491 = vunpack.c.l.b16 %v1397
      %v1492 = vunpack.c.h.b16 %v1397
      %v1493 = vunpack.c.l.b16 %v1398
      %v1494 = vunpack.c.h.b16 %v1398
      %v1495 = vpack.c.b16 %v1435, %v1431
      %v1496 = vpack.c.b16 %v1436, %v1432
      %v1497 = vpack.c.b16 %v1437, %v1433
      %v1498 = vpack.c.b16 %v1438, %v1434
      %v1499 = vpack.c.b16 %v1443, %v1439
      %v1500 = vpack.c.b16 %v1444, %v1440
      %v1501 = vpack.c.b16 %v1445, %v1441
      %v1502 = vpack.c.b16 %v1446, %v1442
      %v1503 = vpack.c.b16 %v1451, %v1447
      %v1504 = vpack.c.b16 %v1452, %v1448
      %v1505 = vpack.c.b16 %v1453, %v1449
      %v1506 = vpack.c.b16 %v1454, %v1450
      %v1507 = vpack.c.b16 %v1459, %v1455
      %v1508 = vpack.c.b16 %v1460, %v1456
      %v1509 = vpack.c.b16 %v1461, %v1457
      %v1510 = vpack.c.b16 %v1462, %v1458
      %v1511 = vpack.c.b16 %v1467, %v1463
      %v1512 = vpack.c.b16 %v1468, %v1464
      %v1513 = vpack.c.b16 %v1469, %v1465
      %v1514 = vpack.c.b16 %v1470, %v1466
      %v1515 = vpack.c.b16 %v1475, %v1471
      %v1516 = vpack.c.b16 %v1476, %v1472
      %v1517 = vpack.c.b16 %v1477, %v1473
      %v1518 = vpack.c.b16 %v1478, %v1474
      %v1519 = vpack.c.b16 %v1483, %v1479
      %v1520 = vpack.c.b16 %v1484, %v1480
      %v1521 = vpack.c.b16 %v1485, %v1481
      %v1522 = vpack.c.b16 %v1486, %v1482
      %v1523 = vpack.c.b16 %v1491, %v1487
      %v1524 = vpack.c.b16 %v1492, %v1488
      %v1525 = vpack.c.b16 %v1493, %v1489
      %v1526 = vpack.c.b16 %v1494, %v1490
      %1559 = vmatprep.subr.bf16.mxu0 %v1496
      %1560 = vmatpush1.bf16.msra.mxu0 %v1495
      %1561 = vmatprep.subr.bf16.mxu0 %v1500
      %1562 = vmatpush1.bf16.msra.mxu0 %v1499
      %1563 = vmatprep.subr.bf16.mxu0 %v1504
      %1564 = vmatpush1.bf16.msra.mxu0 %v1503
      %1565 = vmatprep.subr.bf16.mxu0 %v1508
      %1566 = vmatpush1.bf16.msra.mxu0 %v1507
      %1567 = vmatprep.subr.bf16.mxu0 %v1512
      %1568 = vmatpush1.bf16.msra.mxu0 %v1511
      %1569 = vmatprep.subr.bf16.mxu0 %v1516
      %1570 = vmatpush1.bf16.msra.mxu0 %v1515
      %1571 = vmatprep.subr.bf16.mxu0 %v1520
      %1572 = vmatpush1.bf16.msra.mxu0 %v1519
      %1573 = vmatprep.subr.bf16.mxu0 %v1524
      %1574 = vmatpush1.bf16.msra.mxu0 %v1523
      %1575 = vmatprep.subr.bf16.mxu0 0
      %1576 = vmatpush1.bf16.msra.mxu0 0
      %1577 = vmatprep.subr.bf16.mxu0 0
      %1578 = vmatpush1.bf16.msra.mxu0 0
      %1579 = vmatprep.subr.bf16.mxu0 0
      %1580 = vmatpush1.bf16.msra.mxu0 0
      %1581 = vmatprep.subr.bf16.mxu0 0
      %1582 = vmatpush1.bf16.msra.mxu0 0
      %1583 = vmatprep.subr.bf16.mxu0 0
      %1584 = vmatpush1.bf16.msra.mxu0 0
      %1585 = vmatprep.subr.bf16.mxu0 0
      %1586 = vmatpush1.bf16.msra.mxu0 0
      %1587 = vmatprep.subr.bf16.mxu0 0
      %1588 = vmatpush1.bf16.msra.mxu0 0
      %1589 = vmatprep.subr.bf16.mxu0 0
      %1590 = vmatpush1.bf16.msra.mxu0 0
      %1591 = vmatprep.mubr.bf16.mxu0 0
      %1592 = vmatmul.mubr.bf16.gmra.mrb[0].mxu0 %v1359
      %v1593 = vpop.f32.mrb[0].mxu0
      %v1594 = vadd.f32 0.0, %v1593
      %v1595 = vpop.f32.mrb[0].mxu0
      %v1596 = vadd.f32 0.0, %v1595
      %v1597 = vpop.f32.mrb[0].mxu0
      %v1598 = vpop.f32.mrb[0].mxu0
      %1599 = vdwg.mxu0
      %1600 = vmatprep.subr.bf16.mxu0 %v1498
      %1601 = vmatpush1.bf16.msra.mxu0 %v1497
      %1602 = vmatprep.subr.bf16.mxu0 %v1502
      %1603 = vmatpush1.bf16.msra.mxu0 %v1501
      %1604 = vmatprep.subr.bf16.mxu0 %v1506
      %1605 = vmatpush1.bf16.msra.mxu0 %v1505
      %1606 = vmatprep.subr.bf16.mxu0 %v1510
      %1607 = vmatpush1.bf16.msra.mxu0 %v1509
      %1608 = vmatprep.subr.bf16.mxu0 %v1514
      %1609 = vmatpush1.bf16.msra.mxu0 %v1513
      %1610 = vmatprep.subr.bf16.mxu0 %v1518
      %1611 = vmatpush1.bf16.msra.mxu0 %v1517
      %1612 = vmatprep.subr.bf16.mxu0 %v1522
      %1613 = vmatpush1.bf16.msra.mxu0 %v1521
      %1614 = vmatprep.subr.bf16.mxu0 %v1526
      %1615 = vmatpush1.bf16.msra.mxu0 %v1525
      %1616 = vmatprep.subr.bf16.mxu0 0
      %1617 = vmatpush1.bf16.msra.mxu0 0
      %1618 = vmatprep.subr.bf16.mxu0 0
      %1619 = vmatpush1.bf16.msra.mxu0 0
      %1620 = vmatprep.subr.bf16.mxu0 0
      %1621 = vmatpush1.bf16.msra.mxu0 0
      %1622 = vmatprep.subr.bf16.mxu0 0
      %1623 = vmatpush1.bf16.msra.mxu0 0
      %1624 = vmatprep.subr.bf16.mxu0 0
      %1625 = vmatpush1.bf16.msra.mxu0 0
      %1626 = vmatprep.subr.bf16.mxu0 0
      %1627 = vmatpush1.bf16.msra.mxu0 0
      %1628 = vmatprep.subr.bf16.mxu0 0
      %1629 = vmatpush1.bf16.msra.mxu0 0
      %1630 = vmatprep.subr.bf16.mxu0 0
      %1631 = vmatpush1.bf16.msra.mxu0 0
      %1632 = vmatprep.mubr.bf16.mxu0 0
      %1633 = vmatmul.mubr.bf16.gmra.mrb[0].mxu0 %v1359
      %v1634 = vpop.f32.mrb[0].mxu0
      %v1635 = vadd.f32 0.0, %v1634
      %v1636 = vpop.f32.mrb[0].mxu0
      %v1637 = vadd.f32 0.0, %v1636
      %v1638 = vpop.f32.mrb[0].mxu0
      %v1639 = vpop.f32.mrb[0].mxu0
      %1640 = vdwg.mxu0
      %v1641 = vadd.f32 %v1363, %v1594
      %v1642 = vadd.f32 %v1364, %v1596
      %v1643 = vadd.f32 %v1365, %v1635
      %v1644 = vadd.f32 %v1366, %v1637
      %v1645 = vld [vmem:[#allocation3] sm:$0xff]
      %v1646 = vxor.u32 %v1641, 2147483648
      %v1647 = vmul.f32 %v1646, 1.442695
      %v1648 = vpow.pop %v1647
      %v1649 = vadd.f32 %v1648, 1.0
      %v1650 = vrcp.pop %v1649
      %v1651 = vmul.f32 1.0, %v1650
      %v1652 = vxor.u32 %v1642, 2147483648
      %v1653 = vmul.f32 %v1652, 1.442695
      %v1654 = vpow.pop %v1653
      %v1655 = vadd.f32 %v1654, 1.0
      %v1656 = vrcp.pop %v1655
      %v1657 = vmul.f32 1.0, %v1656
      %v1658 = vtanh.pop %v1643
      %v1659 = vxor.u32 %v1644, 2147483648
      %v1660 = vmul.f32 %v1659, 1.442695
      %v1661 = vpow.pop %v1660
      %v1662 = vadd.f32 %v1661, 1.0
      %v1663 = vrcp.pop %v1662
      %v1664 = vmul.f32 1.0, %v1663
      %v1665 = vmul.f32 %v1657, %v1645
      %v1666 = vmul.f32 %v1651, %v1658
      %v1667 = vadd.f32 %v1665, %v1666
      %v1668 = vtanh.pop %v1667
      %v1669 = vmul.f32 %v1664, %v1668
      %1670 = vst [vmem:[#allocation3] sm:$0xff] %v1667
      %v1671 = vpack.c.bf16 %v1669, %v1669
      %1672 = vst [vmem:[#allocation2] sm:$0xf] %v1671
      %v1673 = vld [vmem:[#allocation2] sm:$0xff]
      %v1674 = vld [vmem:[#allocation11] sm:$0xff]
      %v1675 = vld [vmem:[#allocation11 + $0x8] sm:$0xff]
      %v1676 = vld [vmem:[#allocation11 + $0x10] sm:$0xff]
      %v1677 = vld [vmem:[#allocation11 + $0x18] sm:$0xff]
      %v1678 = vld [vmem:[#allocation11 + $0x20] sm:$0xff]
      %v1679 = vld [vmem:[#allocation11 + $0x28] sm:$0xff]
      %v1680 = vld [vmem:[#allocation11 + $0x30] sm:$0xff]
      %v1681 = vld [vmem:[#allocation11 + $0x38] sm:$0xff]
      %v1682 = vld [vmem:[#allocation11 + $0x40] sm:$0xff]
      %v1683 = vld [vmem:[#allocation11 + $0x48] sm:$0xff]
      %v1684 = vld [vmem:[#allocation11 + $0x50] sm:$0xff]
      %v1685 = vld [vmem:[#allocation11 + $0x58] sm:$0xff]
      %v1686 = vld [vmem:[#allocation11 + $0x60] sm:$0xff]
      %v1687 = vld [vmem:[#allocation11 + $0x68] sm:$0xff]
      %v1688 = vld [vmem:[#allocation11 + $0x70] sm:$0xff]
      %v1689 = vld [vmem:[#allocation11 + $0x78] sm:$0xff]
      %v1690 = vld [vmem:[#allocation11 + $0x80] sm:$0xff]
      %v1691 = vld [vmem:[#allocation11 + $0x88] sm:$0xff]
      %v1692 = vld [vmem:[#allocation11 + $0x90] sm:$0xff]
      %v1693 = vld [vmem:[#allocation11 + $0x98] sm:$0xff]
      %v1694 = vld [vmem:[#allocation11 + $0xa0] sm:$0xff]
      %v1695 = vld [vmem:[#allocation11 + $0xa8] sm:$0xff]
      %v1696 = vld [vmem:[#allocation11 + $0xb0] sm:$0xff]
      %v1697 = vld [vmem:[#allocation11 + $0xb8] sm:$0xff]
      %v1698 = vld [vmem:[#allocation11 + $0xc0] sm:$0xff]
      %v1699 = vld [vmem:[#allocation11 + $0xc8] sm:$0xff]
      %v1700 = vld [vmem:[#allocation11 + $0xd0] sm:$0xff]
      %v1701 = vld [vmem:[#allocation11 + $0xd8] sm:$0xff]
      %v1702 = vld [vmem:[#allocation11 + $0xe0] sm:$0xff]
      %v1703 = vld [vmem:[#allocation11 + $0xe8] sm:$0xff]
      %v1704 = vld [vmem:[#allocation11 + $0xf0] sm:$0xff]
      %v1705 = vld [vmem:[#allocation11 + $0xf8] sm:$0xff]
      %v1706 = vld [vmem:[#allocation11 + $0x100] sm:$0xff]
      %v1707 = vld [vmem:[#allocation11 + $0x108] sm:$0xff]
      %v1708 = vld [vmem:[#allocation11 + $0x110] sm:$0xff]
      %v1709 = vld [vmem:[#allocation11 + $0x118] sm:$0xff]
      %v1710 = vld [vmem:[#allocation11 + $0x120] sm:$0xff]
      %v1711 = vld [vmem:[#allocation11 + $0x128] sm:$0xff]
      %v1712 = vld [vmem:[#allocation11 + $0x130] sm:$0xff]
      %v1713 = vld [vmem:[#allocation11 + $0x138] sm:$0xff]
      %v1714 = vld [vmem:[#allocation11 + $0x140] sm:$0xff]
      %v1715 = vld [vmem:[#allocation11 + $0x148] sm:$0xff]
      %v1716 = vld [vmem:[#allocation11 + $0x150] sm:$0xff]
      %v1717 = vld [vmem:[#allocation11 + $0x158] sm:$0xff]
      %v1718 = vld [vmem:[#allocation11 + $0x160] sm:$0xff]
      %v1719 = vld [vmem:[#allocation11 + $0x168] sm:$0xff]
      %v1720 = vld [vmem:[#allocation11 + $0x170] sm:$0xff]
      %v1721 = vld [vmem:[#allocation11 + $0x178] sm:$0xff]
      %v1722 = vld [vmem:[#allocation11 + $0x180] sm:$0xff]
      %v1723 = vld [vmem:[#allocation11 + $0x188] sm:$0xff]
      %v1724 = vld [vmem:[#allocation11 + $0x190] sm:$0xff]
      %v1725 = vld [vmem:[#allocation11 + $0x198] sm:$0xff]
      %v1726 = vld [vmem:[#allocation11 + $0x1a0] sm:$0xff]
      %v1727 = vld [vmem:[#allocation11 + $0x1a8] sm:$0xff]
      %v1728 = vld [vmem:[#allocation11 + $0x1b0] sm:$0xff]
      %v1729 = vld [vmem:[#allocation11 + $0x1b8] sm:$0xff]
      %v1730 = vld [vmem:[#allocation11 + $0x1c0] sm:$0xff]
      %v1731 = vld [vmem:[#allocation11 + $0x1c8] sm:$0xff]
      %v1732 = vld [vmem:[#allocation11 + $0x1d0] sm:$0xff]
      %v1733 = vld [vmem:[#allocation11 + $0x1d8] sm:$0xff]
      %v1734 = vld [vmem:[#allocation11 + $0x1e0] sm:$0xff]
      %v1735 = vld [vmem:[#allocation11 + $0x1e8] sm:$0xff]
      %v1736 = vld [vmem:[#allocation11 + $0x1f0] sm:$0xff]
      %v1737 = vld [vmem:[#allocation11 + $0x1f8] sm:$0xff]
      %v1738 = vld [vmem:[%s7] sm:$0xf]
      %v1740 = vlaneseq
      %v1741 = vshrl.u32 %v1740, 7
      %v1742 = vsub.s32 0, %v1741
      %v1743 = vrot.slane %v1738, %v1742
      %v1744 = vlaneseq
      %v1745 = vshrl.u32 %v1744, 7
      %v1746 = vsub.s32 1, %v1745
      %v1747 = vrot.slane %v1738, %v1746
      %v1748 = vlaneseq
      %v1749 = vshrl.u32 %v1748, 7
      %v1750 = vsub.s32 2, %v1749
      %v1751 = vrot.slane %v1738, %v1750
      %v1752 = vlaneseq
      %v1753 = vshrl.u32 %v1752, 7
      %v1754 = vsub.s32 3, %v1753
      %v1755 = vrot.slane %v1738, %v1754
      %v1761 = vunpack.c.l.b16 %v1673
      %v1762 = vunpack.c.h.b16 %v1673
      %v1763 = vpack.c.b16 %v1761, %v1761
      %v1764 = vpack.c.b16 %v1762, %v1762
      %v1831 = vunpack.c.l.b16 %v1674
      %v1832 = vunpack.c.h.b16 %v1674
      %v1833 = vunpack.c.l.b16 %v1675
      %v1834 = vunpack.c.h.b16 %v1675
      %v1835 = vunpack.c.l.b16 %v1676
      %v1836 = vunpack.c.h.b16 %v1676
      %v1837 = vunpack.c.l.b16 %v1677
      %v1838 = vunpack.c.h.b16 %v1677
      %v1839 = vunpack.c.l.b16 %v1678
      %v1840 = vunpack.c.h.b16 %v1678
      %v1841 = vunpack.c.l.b16 %v1679
      %v1842 = vunpack.c.h.b16 %v1679
      %v1843 = vunpack.c.l.b16 %v1680
      %v1844 = vunpack.c.h.b16 %v1680
      %v1845 = vunpack.c.l.b16 %v1681
      %v1846 = vunpack.c.h.b16 %v1681
      %v1847 = vunpack.c.l.b16 %v1682
      %v1848 = vunpack.c.h.b16 %v1682
      %v1849 = vunpack.c.l.b16 %v1683
      %v1850 = vunpack.c.h.b16 %v1683
      %v1851 = vunpack.c.l.b16 %v1684
      %v1852 = vunpack.c.h.b16 %v1684
      %v1853 = vunpack.c.l.b16 %v1685
      %v1854 = vunpack.c.h.b16 %v1685
      %v1855 = vunpack.c.l.b16 %v1686
      %v1856 = vunpack.c.h.b16 %v1686
      %v1857 = vunpack.c.l.b16 %v1687
      %v1858 = vunpack.c.h.b16 %v1687
      %v1859 = vunpack.c.l.b16 %v1688
      %v1860 = vunpack.c.h.b16 %v1688
      %v1861 = vunpack.c.l.b16 %v1689
      %v1862 = vunpack.c.h.b16 %v1689
      %v1863 = vunpack.c.l.b16 %v1690
      %v1864 = vunpack.c.h.b16 %v1690
      %v1865 = vunpack.c.l.b16 %v1691
      %v1866 = vunpack.c.h.b16 %v1691
      %v1867 = vunpack.c.l.b16 %v1692
      %v1868 = vunpack.c.h.b16 %v1692
      %v1869 = vunpack.c.l.b16 %v1693
      %v1870 = vunpack.c.h.b16 %v1693
      %v1871 = vunpack.c.l.b16 %v1694
      %v1872 = vunpack.c.h.b16 %v1694
      %v1873 = vunpack.c.l.b16 %v1695
      %v1874 = vunpack.c.h.b16 %v1695
      %v1875 = vunpack.c.l.b16 %v1696
      %v1876 = vunpack.c.h.b16 %v1696
      %v1877 = vunpack.c.l.b16 %v1697
      %v1878 = vunpack.c.h.b16 %v1697
      %v1879 = vunpack.c.l.b16 %v1698
      %v1880 = vunpack.c.h.b16 %v1698
      %v1881 = vunpack.c.l.b16 %v1699
      %v1882 = vunpack.c.h.b16 %v1699
      %v1883 = vunpack.c.l.b16 %v1700
      %v1884 = vunpack.c.h.b16 %v1700
      %v1885 = vunpack.c.l.b16 %v1701
      %v1886 = vunpack.c.h.b16 %v1701
      %v1887 = vunpack.c.l.b16 %v1702
      %v1888 = vunpack.c.h.b16 %v1702
      %v1889 = vunpack.c.l.b16 %v1703
      %v1890 = vunpack.c.h.b16 %v1703
      %v1891 = vunpack.c.l.b16 %v1704
      %v1892 = vunpack.c.h.b16 %v1704
      %v1893 = vunpack.c.l.b16 %v1705
      %v1894 = vunpack.c.h.b16 %v1705
      %v1895 = vunpack.c.l.b16 %v1706
      %v1896 = vunpack.c.h.b16 %v1706
      %v1897 = vunpack.c.l.b16 %v1707
      %v1898 = vunpack.c.h.b16 %v1707
      %v1899 = vunpack.c.l.b16 %v1708
      %v1900 = vunpack.c.h.b16 %v1708
      %v1901 = vunpack.c.l.b16 %v1709
      %v1902 = vunpack.c.h.b16 %v1709
      %v1903 = vunpack.c.l.b16 %v1710
      %v1904 = vunpack.c.h.b16 %v1710
      %v1905 = vunpack.c.l.b16 %v1711
      %v1906 = vunpack.c.h.b16 %v1711
      %v1907 = vunpack.c.l.b16 %v1712
      %v1908 = vunpack.c.h.b16 %v1712
      %v1909 = vunpack.c.l.b16 %v1713
      %v1910 = vunpack.c.h.b16 %v1713
      %v1911 = vunpack.c.l.b16 %v1714
      %v1912 = vunpack.c.h.b16 %v1714
      %v1913 = vunpack.c.l.b16 %v1715
      %v1914 = vunpack.c.h.b16 %v1715
      %v1915 = vunpack.c.l.b16 %v1716
      %v1916 = vunpack.c.h.b16 %v1716
      %v1917 = vunpack.c.l.b16 %v1717
      %v1918 = vunpack.c.h.b16 %v1717
      %v1919 = vunpack.c.l.b16 %v1718
      %v1920 = vunpack.c.h.b16 %v1718
      %v1921 = vunpack.c.l.b16 %v1719
      %v1922 = vunpack.c.h.b16 %v1719
      %v1923 = vunpack.c.l.b16 %v1720
      %v1924 = vunpack.c.h.b16 %v1720
      %v1925 = vunpack.c.l.b16 %v1721
      %v1926 = vunpack.c.h.b16 %v1721
      %v1927 = vunpack.c.l.b16 %v1722
      %v1928 = vunpack.c.h.b16 %v1722
      %v1929 = vunpack.c.l.b16 %v1723
      %v1930 = vunpack.c.h.b16 %v1723
      %v1931 = vunpack.c.l.b16 %v1724
      %v1932 = vunpack.c.h.b16 %v1724
      %v1933 = vunpack.c.l.b16 %v1725
      %v1934 = vunpack.c.h.b16 %v1725
      %v1935 = vunpack.c.l.b16 %v1726
      %v1936 = vunpack.c.h.b16 %v1726
      %v1937 = vunpack.c.l.b16 %v1727
      %v1938 = vunpack.c.h.b16 %v1727
      %v1939 = vunpack.c.l.b16 %v1728
      %v1940 = vunpack.c.h.b16 %v1728
      %v1941 = vunpack.c.l.b16 %v1729
      %v1942 = vunpack.c.h.b16 %v1729
      %v1943 = vunpack.c.l.b16 %v1730
      %v1944 = vunpack.c.h.b16 %v1730
      %v1945 = vunpack.c.l.b16 %v1731
      %v1946 = vunpack.c.h.b16 %v1731
      %v1947 = vunpack.c.l.b16 %v1732
      %v1948 = vunpack.c.h.b16 %v1732
      %v1949 = vunpack.c.l.b16 %v1733
      %v1950 = vunpack.c.h.b16 %v1733
      %v1951 = vunpack.c.l.b16 %v1734
      %v1952 = vunpack.c.h.b16 %v1734
      %v1953 = vunpack.c.l.b16 %v1735
      %v1954 = vunpack.c.h.b16 %v1735
      %v1955 = vunpack.c.l.b16 %v1736
      %v1956 = vunpack.c.h.b16 %v1736
      %v1957 = vunpack.c.l.b16 %v1737
      %v1958 = vunpack.c.h.b16 %v1737
      %v1959 = vpack.c.b16 %v1835, %v1831
      %v1960 = vpack.c.b16 %v1836, %v1832
      %v1961 = vpack.c.b16 %v1837, %v1833
      %v1962 = vpack.c.b16 %v1838, %v1834
      %v1963 = vpack.c.b16 %v1843, %v1839
      %v1964 = vpack.c.b16 %v1844, %v1840
      %v1965 = vpack.c.b16 %v1845, %v1841
      %v1966 = vpack.c.b16 %v1846, %v1842
      %v1967 = vpack.c.b16 %v1851, %v1847
      %v1968 = vpack.c.b16 %v1852, %v1848
      %v1969 = vpack.c.b16 %v1853, %v1849
      %v1970 = vpack.c.b16 %v1854, %v1850
      %v1971 = vpack.c.b16 %v1859, %v1855
      %v1972 = vpack.c.b16 %v1860, %v1856
      %v1973 = vpack.c.b16 %v1861, %v1857
      %v1974 = vpack.c.b16 %v1862, %v1858
      %v1975 = vpack.c.b16 %v1867, %v1863
      %v1976 = vpack.c.b16 %v1868, %v1864
      %v1977 = vpack.c.b16 %v1869, %v1865
      %v1978 = vpack.c.b16 %v1870, %v1866
      %v1979 = vpack.c.b16 %v1875, %v1871
      %v1980 = vpack.c.b16 %v1876, %v1872
      %v1981 = vpack.c.b16 %v1877, %v1873
      %v1982 = vpack.c.b16 %v1878, %v1874
      %v1983 = vpack.c.b16 %v1883, %v1879
      %v1984 = vpack.c.b16 %v1884, %v1880
      %v1985 = vpack.c.b16 %v1885, %v1881
      %v1986 = vpack.c.b16 %v1886, %v1882
      %v1987 = vpack.c.b16 %v1891, %v1887
      %v1988 = vpack.c.b16 %v1892, %v1888
      %v1989 = vpack.c.b16 %v1893, %v1889
      %v1990 = vpack.c.b16 %v1894, %v1890
      %v1991 = vpack.c.b16 %v1899, %v1895
      %v1992 = vpack.c.b16 %v1900, %v1896
      %v1993 = vpack.c.b16 %v1901, %v1897
      %v1994 = vpack.c.b16 %v1902, %v1898
      %v1995 = vpack.c.b16 %v1907, %v1903
      %v1996 = vpack.c.b16 %v1908, %v1904
      %v1997 = vpack.c.b16 %v1909, %v1905
      %v1998 = vpack.c.b16 %v1910, %v1906
      %v1999 = vpack.c.b16 %v1915, %v1911
      %v2000 = vpack.c.b16 %v1916, %v1912
      %v2001 = vpack.c.b16 %v1917, %v1913
      %v2002 = vpack.c.b16 %v1918, %v1914
      %v2003 = vpack.c.b16 %v1923, %v1919
      %v2004 = vpack.c.b16 %v1924, %v1920
      %v2005 = vpack.c.b16 %v1925, %v1921
      %v2006 = vpack.c.b16 %v1926, %v1922
      %v2007 = vpack.c.b16 %v1931, %v1927
      %v2008 = vpack.c.b16 %v1932, %v1928
      %v2009 = vpack.c.b16 %v1933, %v1929
      %v2010 = vpack.c.b16 %v1934, %v1930
      %v2011 = vpack.c.b16 %v1939, %v1935
      %v2012 = vpack.c.b16 %v1940, %v1936
      %v2013 = vpack.c.b16 %v1941, %v1937
      %v2014 = vpack.c.b16 %v1942, %v1938
      %v2015 = vpack.c.b16 %v1947, %v1943
      %v2016 = vpack.c.b16 %v1948, %v1944
      %v2017 = vpack.c.b16 %v1949, %v1945
      %v2018 = vpack.c.b16 %v1950, %v1946
      %v2019 = vpack.c.b16 %v1955, %v1951
      %v2020 = vpack.c.b16 %v1956, %v1952
      %v2021 = vpack.c.b16 %v1957, %v1953
      %v2022 = vpack.c.b16 %v1958, %v1954
      %2087 = vmatprep.subr.bf16.mxu0 %v1960
      %2088 = vmatpush1.bf16.msra.mxu0 %v1959
      %2089 = vmatprep.subr.bf16.mxu0 %v1964
      %2090 = vmatpush1.bf16.msra.mxu0 %v1963
      %2091 = vmatprep.subr.bf16.mxu0 %v1968
      %2092 = vmatpush1.bf16.msra.mxu0 %v1967
      %2093 = vmatprep.subr.bf16.mxu0 %v1972
      %2094 = vmatpush1.bf16.msra.mxu0 %v1971
      %2095 = vmatprep.subr.bf16.mxu0 %v1976
      %2096 = vmatpush1.bf16.msra.mxu0 %v1975
      %2097 = vmatprep.subr.bf16.mxu0 %v1980
      %2098 = vmatpush1.bf16.msra.mxu0 %v1979
      %2099 = vmatprep.subr.bf16.mxu0 %v1984
      %2100 = vmatpush1.bf16.msra.mxu0 %v1983
      %2101 = vmatprep.subr.bf16.mxu0 %v1988
      %2102 = vmatpush1.bf16.msra.mxu0 %v1987
      %2103 = vmatprep.subr.bf16.mxu0 %v1992
      %2104 = vmatpush1.bf16.msra.mxu0 %v1991
      %2105 = vmatprep.subr.bf16.mxu0 %v1996
      %2106 = vmatpush1.bf16.msra.mxu0 %v1995
      %2107 = vmatprep.subr.bf16.mxu0 %v2000
      %2108 = vmatpush1.bf16.msra.mxu0 %v1999
      %2109 = vmatprep.subr.bf16.mxu0 %v2004
      %2110 = vmatpush1.bf16.msra.mxu0 %v2003
      %2111 = vmatprep.subr.bf16.mxu0 %v2008
      %2112 = vmatpush1.bf16.msra.mxu0 %v2007
      %2113 = vmatprep.subr.bf16.mxu0 %v2012
      %2114 = vmatpush1.bf16.msra.mxu0 %v2011
      %2115 = vmatprep.subr.bf16.mxu0 %v2016
      %2116 = vmatpush1.bf16.msra.mxu0 %v2015
      %2117 = vmatprep.subr.bf16.mxu0 %v2020
      %2118 = vmatpush1.bf16.msra.mxu0 %v2019
      %2119 = vmatprep.mubr.bf16.mxu0 %v1764
      %2120 = vmatmul.mubr.bf16.gmra.mrb[0].mxu0 %v1763
      %v2121 = vpop.f32.mrb[0].mxu0
      %v2122 = vadd.f32 %v1743, %v2121
      %v2123 = vpop.f32.mrb[0].mxu0
      %v2124 = vadd.f32 %v1747, %v2123
      %v2125 = vpop.f32.mrb[0].mxu0
      %v2126 = vpop.f32.mrb[0].mxu0
      %2127 = vdwg.mxu0
      %2128 = vmatprep.subr.bf16.mxu0 %v1962
      %2129 = vmatpush1.bf16.msra.mxu0 %v1961
      %2130 = vmatprep.subr.bf16.mxu0 %v1966
      %2131 = vmatpush1.bf16.msra.mxu0 %v1965
      %2132 = vmatprep.subr.bf16.mxu0 %v1970
      %2133 = vmatpush1.bf16.msra.mxu0 %v1969
      %2134 = vmatprep.subr.bf16.mxu0 %v1974
      %2135 = vmatpush1.bf16.msra.mxu0 %v1973
      %2136 = vmatprep.subr.bf16.mxu0 %v1978
      %2137 = vmatpush1.bf16.msra.mxu0 %v1977
      %2138 = vmatprep.subr.bf16.mxu0 %v1982
      %2139 = vmatpush1.bf16.msra.mxu0 %v1981
      %2140 = vmatprep.subr.bf16.mxu0 %v1986
      %2141 = vmatpush1.bf16.msra.mxu0 %v1985
      %2142 = vmatprep.subr.bf16.mxu0 %v1990
      %2143 = vmatpush1.bf16.msra.mxu0 %v1989
      %2144 = vmatprep.subr.bf16.mxu0 %v1994
      %2145 = vmatpush1.bf16.msra.mxu0 %v1993
      %2146 = vmatprep.subr.bf16.mxu0 %v1998
      %2147 = vmatpush1.bf16.msra.mxu0 %v1997
      %2148 = vmatprep.subr.bf16.mxu0 %v2002
      %2149 = vmatpush1.bf16.msra.mxu0 %v2001
      %2150 = vmatprep.subr.bf16.mxu0 %v2006
      %2151 = vmatpush1.bf16.msra.mxu0 %v2005
      %2152 = vmatprep.subr.bf16.mxu0 %v2010
      %2153 = vmatpush1.bf16.msra.mxu0 %v2009
      %2154 = vmatprep.subr.bf16.mxu0 %v2014
      %2155 = vmatpush1.bf16.msra.mxu0 %v2013
      %2156 = vmatprep.subr.bf16.mxu0 %v2018
      %2157 = vmatpush1.bf16.msra.mxu0 %v2017
      %2158 = vmatprep.subr.bf16.mxu0 %v2022
      %2159 = vmatpush1.bf16.msra.mxu0 %v2021
      %2160 = vmatprep.mubr.bf16.mxu0 %v1764
      %2161 = vmatmul.mubr.bf16.gmra.mrb[0].mxu0 %v1763
      %v2162 = vpop.f32.mrb[0].mxu0
      %v2163 = vadd.f32 %v1751, %v2162
      %v2164 = vpop.f32.mrb[0].mxu0
      %v2165 = vadd.f32 %v1755, %v2164
      %v2166 = vpop.f32.mrb[0].mxu0
      %v2167 = vpop.f32.mrb[0].mxu0
      %2168 = vdwg.mxu0
      %v2169 = vld [vmem:[%s1319] sm:$0xff]
      %v2170 = vxor.u32 %v2122, 2147483648
      %v2171 = vmul.f32 %v2170, 1.442695
      %v2172 = vpow.pop %v2171
      %v2173 = vadd.f32 %v2172, 1.0
      %v2174 = vrcp.pop %v2173
      %v2175 = vmul.f32 1.0, %v2174
      %v2176 = vxor.u32 %v2124, 2147483648
      %v2177 = vmul.f32 %v2176, 1.442695
      %v2178 = vpow.pop %v2177
      %v2179 = vadd.f32 %v2178, 1.0
      %v2180 = vrcp.pop %v2179
      %v2181 = vmul.f32 1.0, %v2180
      %v2182 = vtanh.pop %v2163
      %v2183 = vxor.u32 %v2165, 2147483648
      %v2184 = vmul.f32 %v2183, 1.442695
      %v2185 = vpow.pop %v2184
      %v2186 = vadd.f32 %v2185, 1.0
      %v2187 = vrcp.pop %v2186
      %v2188 = vmul.f32 1.0, %v2187
      %v2189 = vmul.f32 %v2181, %v2169
      %v2190 = vmul.f32 %v2175, %v2182
      %v2191 = vadd.f32 %v2189, %v2190
      %v2192 = vtanh.pop %v2191
      %v2193 = vmul.f32 %v2188, %v2192
      %2194 = vst [vmem:[%s1319] sm:$0xff] %v2191
      %v2195 = vpack.c.bf16 %v2193, %v2193
      %2196 = vst [vmem:[#allocation2 + $0x4] sm:$0xf] %v2195
      %s2197 = sadd.s32 %s78, 2
      %v2198 = vstv %s2197
      %vm2199 = vcmp.eq.s32.totalorder %v508, %v2198
      %v2200 = vld [vmem:[%s8] sm:$0xff]
      %v2201 = vsel %vm2199, 1, 0
      %2202 = vset.pattern.permute.xlu0 0
      %2203 = vperm.xlu0 %2202, %v2201
      %v2204 = vpop.permute.xlu0 %2203
      %vm2205 = vcmp.eq.s32.totalorder %v2204, 1
      %v2206 = vsel %vm2205, %v2193, %v2200
      %2207 = vst [vmem:[%s8] sm:$0xff] %v2206
      %v2208 = vld [vmem:[#allocation2] sm:$0xf]
      %s2209 = smul.u32 2, 4
      %s2210 = smul.addr %s2209, 8
      %s2211 = scalar_lea.vmem [#allocation4], %s2210
      %v2212 = vld [vmem:[%s2211] sm:$0xff]
      %v2213 = vld [vmem:[%s2211 + $0x8] sm:$0xff]
      %v2214 = vld [vmem:[%s2211 + $0x10] sm:$0xff]
      %v2215 = vld [vmem:[%s2211 + $0x18] sm:$0xff]
      %v2216 = vld [vmem:[#allocation9] sm:$0xff]
      %v2217 = vld [vmem:[#allocation9 + $0x8] sm:$0xff]
      %v2218 = vld [vmem:[#allocation9 + $0x10] sm:$0xff]
      %v2219 = vld [vmem:[#allocation9 + $0x18] sm:$0xff]
      %v2220 = vld [vmem:[#allocation9 + $0x20] sm:$0xff]
      %v2221 = vld [vmem:[#allocation9 + $0x28] sm:$0xff]
      %v2222 = vld [vmem:[#allocation9 + $0x30] sm:$0xff]
      %v2223 = vld [vmem:[#allocation9 + $0x38] sm:$0xff]
      %v2224 = vld [vmem:[#allocation9 + $0x40] sm:$0xff]
      %v2225 = vld [vmem:[#allocation9 + $0x48] sm:$0xff]
      %v2226 = vld [vmem:[#allocation9 + $0x50] sm:$0xff]
      %v2227 = vld [vmem:[#allocation9 + $0x58] sm:$0xff]
      %v2228 = vld [vmem:[#allocation9 + $0x60] sm:$0xff]
      %v2229 = vld [vmem:[#allocation9 + $0x68] sm:$0xff]
      %v2230 = vld [vmem:[#allocation9 + $0x70] sm:$0xff]
      %v2231 = vld [vmem:[#allocation9 + $0x78] sm:$0xff]
      %v2232 = vld [vmem:[#allocation9 + $0x80] sm:$0xff]
      %v2233 = vld [vmem:[#allocation9 + $0x88] sm:$0xff]
      %v2234 = vld [vmem:[#allocation9 + $0x90] sm:$0xff]
      %v2235 = vld [vmem:[#allocation9 + $0x98] sm:$0xff]
      %v2236 = vld [vmem:[#allocation9 + $0xa0] sm:$0xff]
      %v2237 = vld [vmem:[#allocation9 + $0xa8] sm:$0xff]
      %v2238 = vld [vmem:[#allocation9 + $0xb0] sm:$0xff]
      %v2239 = vld [vmem:[#allocation9 + $0xb8] sm:$0xff]
      %v2240 = vld [vmem:[#allocation9 + $0xc0] sm:$0xff]
      %v2241 = vld [vmem:[#allocation9 + $0xc8] sm:$0xff]
      %v2242 = vld [vmem:[#allocation9 + $0xd0] sm:$0xff]
      %v2243 = vld [vmem:[#allocation9 + $0xd8] sm:$0xff]
      %v2244 = vld [vmem:[#allocation9 + $0xe0] sm:$0xff]
      %v2245 = vld [vmem:[#allocation9 + $0xe8] sm:$0xff]
      %v2246 = vld [vmem:[#allocation9 + $0xf0] sm:$0xff]
      %v2247 = vld [vmem:[#allocation9 + $0xf8] sm:$0xff]
      %v2280 = vunpack.c.l.b16 %v2216
      %v2281 = vunpack.c.h.b16 %v2216
      %v2282 = vunpack.c.l.b16 %v2217
      %v2283 = vunpack.c.h.b16 %v2217
      %v2284 = vunpack.c.l.b16 %v2218
      %v2285 = vunpack.c.h.b16 %v2218
      %v2286 = vunpack.c.l.b16 %v2219
      %v2287 = vunpack.c.h.b16 %v2219
      %v2288 = vunpack.c.l.b16 %v2220
      %v2289 = vunpack.c.h.b16 %v2220
      %v2290 = vunpack.c.l.b16 %v2221
      %v2291 = vunpack.c.h.b16 %v2221
      %v2292 = vunpack.c.l.b16 %v2222
      %v2293 = vunpack.c.h.b16 %v2222
      %v2294 = vunpack.c.l.b16 %v2223
      %v2295 = vunpack.c.h.b16 %v2223
      %v2296 = vunpack.c.l.b16 %v2224
      %v2297 = vunpack.c.h.b16 %v2224
      %v2298 = vunpack.c.l.b16 %v2225
      %v2299 = vunpack.c.h.b16 %v2225
      %v2300 = vunpack.c.l.b16 %v2226
      %v2301 = vunpack.c.h.b16 %v2226
      %v2302 = vunpack.c.l.b16 %v2227
      %v2303 = vunpack.c.h.b16 %v2227
      %v2304 = vunpack.c.l.b16 %v2228
      %v2305 = vunpack.c.h.b16 %v2228
      %v2306 = vunpack.c.l.b16 %v2229
      %v2307 = vunpack.c.h.b16 %v2229
      %v2308 = vunpack.c.l.b16 %v2230
      %v2309 = vunpack.c.h.b16 %v2230
      %v2310 = vunpack.c.l.b16 %v2231
      %v2311 = vunpack.c.h.b16 %v2231
      %v2312 = vunpack.c.l.b16 %v2232
      %v2313 = vunpack.c.h.b16 %v2232
      %v2314 = vunpack.c.l.b16 %v2233
      %v2315 = vunpack.c.h.b16 %v2233
      %v2316 = vunpack.c.l.b16 %v2234
      %v2317 = vunpack.c.h.b16 %v2234
      %v2318 = vunpack.c.l.b16 %v2235
      %v2319 = vunpack.c.h.b16 %v2235
      %v2320 = vunpack.c.l.b16 %v2236
      %v2321 = vunpack.c.h.b16 %v2236
      %v2322 = vunpack.c.l.b16 %v2237
      %v2323 = vunpack.c.h.b16 %v2237
      %v2324 = vunpack.c.l.b16 %v2238
      %v2325 = vunpack.c.h.b16 %v2238
      %v2326 = vunpack.c.l.b16 %v2239
      %v2327 = vunpack.c.h.b16 %v2239
      %v2328 = vunpack.c.l.b16 %v2240
      %v2329 = vunpack.c.h.b16 %v2240
      %v2330 = vunpack.c.l.b16 %v2241
      %v2331 = vunpack.c.h.b16 %v2241
      %v2332 = vunpack.c.l.b16 %v2242
      %v2333 = vunpack.c.h.b16 %v2242
      %v2334 = vunpack.c.l.b16 %v2243
      %v2335 = vunpack.c.h.b16 %v2243
      %v2336 = vunpack.c.l.b16 %v2244
      %v2337 = vunpack.c.h.b16 %v2244
      %v2338 = vunpack.c.l.b16 %v2245
      %v2339 = vunpack.c.h.b16 %v2245
      %v2340 = vunpack.c.l.b16 %v2246
      %v2341 = vunpack.c.h.b16 %v2246
      %v2342 = vunpack.c.l.b16 %v2247
      %v2343 = vunpack.c.h.b16 %v2247
      %v2344 = vpack.c.b16 %v2284, %v2280
      %v2345 = vpack.c.b16 %v2285, %v2281
      %v2346 = vpack.c.b16 %v2286, %v2282
      %v2347 = vpack.c.b16 %v2287, %v2283
      %v2348 = vpack.c.b16 %v2292, %v2288
      %v2349 = vpack.c.b16 %v2293, %v2289
      %v2350 = vpack.c.b16 %v2294, %v2290
      %v2351 = vpack.c.b16 %v2295, %v2291
      %v2352 = vpack.c.b16 %v2300, %v2296
      %v2353 = vpack.c.b16 %v2301, %v2297
      %v2354 = vpack.c.b16 %v2302, %v2298
      %v2355 = vpack.c.b16 %v2303, %v2299
      %v2356 = vpack.c.b16 %v2308, %v2304
      %v2357 = vpack.c.b16 %v2309, %v2305
      %v2358 = vpack.c.b16 %v2310, %v2306
      %v2359 = vpack.c.b16 %v2311, %v2307
      %v2360 = vpack.c.b16 %v2316, %v2312
      %v2361 = vpack.c.b16 %v2317, %v2313
      %v2362 = vpack.c.b16 %v2318, %v2314
      %v2363 = vpack.c.b16 %v2319, %v2315
      %v2364 = vpack.c.b16 %v2324, %v2320
      %v2365 = vpack.c.b16 %v2325, %v2321
      %v2366 = vpack.c.b16 %v2326, %v2322
      %v2367 = vpack.c.b16 %v2327, %v2323
      %v2368 = vpack.c.b16 %v2332, %v2328
      %v2369 = vpack.c.b16 %v2333, %v2329
      %v2370 = vpack.c.b16 %v2334, %v2330
      %v2371 = vpack.c.b16 %v2335, %v2331
      %v2372 = vpack.c.b16 %v2340, %v2336
      %v2373 = vpack.c.b16 %v2341, %v2337
      %v2374 = vpack.c.b16 %v2342, %v2338
      %v2375 = vpack.c.b16 %v2343, %v2339
      %2408 = vmatprep.subr.bf16.mxu0 %v2345
      %2409 = vmatpush1.bf16.msra.mxu0 %v2344
      %2410 = vmatprep.subr.bf16.mxu0 %v2349
      %2411 = vmatpush1.bf16.msra.mxu0 %v2348
      %2412 = vmatprep.subr.bf16.mxu0 %v2353
      %2413 = vmatpush1.bf16.msra.mxu0 %v2352
      %2414 = vmatprep.subr.bf16.mxu0 %v2357
      %2415 = vmatpush1.bf16.msra.mxu0 %v2356
      %2416 = vmatprep.subr.bf16.mxu0 %v2361
      %2417 = vmatpush1.bf16.msra.mxu0 %v2360
      %2418 = vmatprep.subr.bf16.mxu0 %v2365
      %2419 = vmatpush1.bf16.msra.mxu0 %v2364
      %2420 = vmatprep.subr.bf16.mxu0 %v2369
      %2421 = vmatpush1.bf16.msra.mxu0 %v2368
      %2422 = vmatprep.subr.bf16.mxu0 %v2373
      %2423 = vmatpush1.bf16.msra.mxu0 %v2372
      %2424 = vmatprep.subr.bf16.mxu0 0
      %2425 = vmatpush1.bf16.msra.mxu0 0
      %2426 = vmatprep.subr.bf16.mxu0 0
      %2427 = vmatpush1.bf16.msra.mxu0 0
      %2428 = vmatprep.subr.bf16.mxu0 0
      %2429 = vmatpush1.bf16.msra.mxu0 0
      %2430 = vmatprep.subr.bf16.mxu0 0
      %2431 = vmatpush1.bf16.msra.mxu0 0
      %2432 = vmatprep.subr.bf16.mxu0 0
      %2433 = vmatpush1.bf16.msra.mxu0 0
      %2434 = vmatprep.subr.bf16.mxu0 0
      %2435 = vmatpush1.bf16.msra.mxu0 0
      %2436 = vmatprep.subr.bf16.mxu0 0
      %2437 = vmatpush1.bf16.msra.mxu0 0
      %2438 = vmatprep.subr.bf16.mxu0 0
      %2439 = vmatpush1.bf16.msra.mxu0 0
      %2440 = vmatprep.mubr.bf16.mxu0 0
      %2441 = vmatmul.mubr.bf16.gmra.mrb[0].mxu0 %v2208
      %v2442 = vpop.f32.mrb[0].mxu0
      %v2443 = vadd.f32 0.0, %v2442
      %v2444 = vpop.f32.mrb[0].mxu0
      %v2445 = vadd.f32 0.0, %v2444
      %v2446 = vpop.f32.mrb[0].mxu0
      %v2447 = vpop.f32.mrb[0].mxu0
      %2448 = vdwg.mxu0
      %2449 = vmatprep.subr.bf16.mxu0 %v2347
      %2450 = vmatpush1.bf16.msra.mxu0 %v2346
      %2451 = vmatprep.subr.bf16.mxu0 %v2351
      %2452 = vmatpush1.bf16.msra.mxu0 %v2350
      %2453 = vmatprep.subr.bf16.mxu0 %v2355
      %2454 = vmatpush1.bf16.msra.mxu0 %v2354
      %2455 = vmatprep.subr.bf16.mxu0 %v2359
      %2456 = vmatpush1.bf16.msra.mxu0 %v2358
      %2457 = vmatprep.subr.bf16.mxu0 %v2363
      %2458 = vmatpush1.bf16.msra.mxu0 %v2362
      %2459 = vmatprep.subr.bf16.mxu0 %v2367
      %2460 = vmatpush1.bf16.msra.mxu0 %v2366
      %2461 = vmatprep.subr.bf16.mxu0 %v2371
      %2462 = vmatpush1.bf16.msra.mxu0 %v2370
      %2463 = vmatprep.subr.bf16.mxu0 %v2375
      %2464 = vmatpush1.bf16.msra.mxu0 %v2374
      %2465 = vmatprep.subr.bf16.mxu0 0
      %2466 = vmatpush1.bf16.msra.mxu0 0
      %2467 = vmatprep.subr.bf16.mxu0 0
      %2468 = vmatpush1.bf16.msra.mxu0 0
      %2469 = vmatprep.subr.bf16.mxu0 0
      %2470 = vmatpush1.bf16.msra.mxu0 0
      %2471 = vmatprep.subr.bf16.mxu0 0
      %2472 = vmatpush1.bf16.msra.mxu0 0
      %2473 = vmatprep.subr.bf16.mxu0 0
      %2474 = vmatpush1.bf16.msra.mxu0 0
      %2475 = vmatprep.subr.bf16.mxu0 0
      %2476 = vmatpush1.bf16.msra.mxu0 0
      %2477 = vmatprep.subr.bf16.mxu0 0
      %2478 = vmatpush1.bf16.msra.mxu0 0
      %2479 = vmatprep.subr.bf16.mxu0 0
      %2480 = vmatpush1.bf16.msra.mxu0 0
      %2481 = vmatprep.mubr.bf16.mxu0 0
      %2482 = vmatmul.mubr.bf16.gmra.mrb[0].mxu0 %v2208
      %v2483 = vpop.f32.mrb[0].mxu0
      %v2484 = vadd.f32 0.0, %v2483
      %v2485 = vpop.f32.mrb[0].mxu0
      %v2486 = vadd.f32 0.0, %v2485
      %v2487 = vpop.f32.mrb[0].mxu0
      %v2488 = vpop.f32.mrb[0].mxu0
      %2489 = vdwg.mxu0
      %v2490 = vadd.f32 %v2212, %v2443
      %v2491 = vadd.f32 %v2213, %v2445
      %v2492 = vadd.f32 %v2214, %v2484
      %v2493 = vadd.f32 %v2215, %v2486
      %v2494 = vld [vmem:[#allocation3] sm:$0xff]
      %v2495 = vxor.u32 %v2490, 2147483648
      %v2496 = vmul.f32 %v2495, 1.442695
      %v2497 = vpow.pop %v2496
      %v2498 = vadd.f32 %v2497, 1.0
      %v2499 = vrcp.pop %v2498
      %v2500 = vmul.f32 1.0, %v2499
      %v2501 = vxor.u32 %v2491, 2147483648
      %v2502 = vmul.f32 %v2501, 1.442695
      %v2503 = vpow.pop %v2502
      %v2504 = vadd.f32 %v2503, 1.0
      %v2505 = vrcp.pop %v2504
      %v2506 = vmul.f32 1.0, %v2505
      %v2507 = vtanh.pop %v2492
      %v2508 = vxor.u32 %v2493, 2147483648
      %v2509 = vmul.f32 %v2508, 1.442695
      %v2510 = vpow.pop %v2509
      %v2511 = vadd.f32 %v2510, 1.0
      %v2512 = vrcp.pop %v2511
      %v2513 = vmul.f32 1.0, %v2512
      %v2514 = vmul.f32 %v2506, %v2494
      %v2515 = vmul.f32 %v2500, %v2507
      %v2516 = vadd.f32 %v2514, %v2515
      %v2517 = vtanh.pop %v2516
      %v2518 = vmul.f32 %v2513, %v2517
      %2519 = vst [vmem:[#allocation3] sm:$0xff] %v2516
      %v2520 = vpack.c.bf16 %v2518, %v2518
      %2521 = vst [vmem:[#allocation2] sm:$0xf] %v2520
      %v2522 = vld [vmem:[#allocation2] sm:$0xff]
      %v2523 = vld [vmem:[#allocation11] sm:$0xff]
      %v2524 = vld [vmem:[#allocation11 + $0x8] sm:$0xff]
      %v2525 = vld [vmem:[#allocation11 + $0x10] sm:$0xff]
      %v2526 = vld [vmem:[#allocation11 + $0x18] sm:$0xff]
      %v2527 = vld [vmem:[#allocation11 + $0x20] sm:$0xff]
      %v2528 = vld [vmem:[#allocation11 + $0x28] sm:$0xff]
      %v2529 = vld [vmem:[#allocation11 + $0x30] sm:$0xff]
      %v2530 = vld [vmem:[#allocation11 + $0x38] sm:$0xff]
      %v2531 = vld [vmem:[#allocation11 + $0x40] sm:$0xff]
      %v2532 = vld [vmem:[#allocation11 + $0x48] sm:$0xff]
      %v2533 = vld [vmem:[#allocation11 + $0x50] sm:$0xff]
      %v2534 = vld [vmem:[#allocation11 + $0x58] sm:$0xff]
      %v2535 = vld [vmem:[#allocation11 + $0x60] sm:$0xff]
      %v2536 = vld [vmem:[#allocation11 + $0x68] sm:$0xff]
      %v2537 = vld [vmem:[#allocation11 + $0x70] sm:$0xff]
      %v2538 = vld [vmem:[#allocation11 + $0x78] sm:$0xff]
      %v2539 = vld [vmem:[#allocation11 + $0x80] sm:$0xff]
      %v2540 = vld [vmem:[#allocation11 + $0x88] sm:$0xff]
      %v2541 = vld [vmem:[#allocation11 + $0x90] sm:$0xff]
      %v2542 = vld [vmem:[#allocation11 + $0x98] sm:$0xff]
      %v2543 = vld [vmem:[#allocation11 + $0xa0] sm:$0xff]
      %v2544 = vld [vmem:[#allocation11 + $0xa8] sm:$0xff]
      %v2545 = vld [vmem:[#allocation11 + $0xb0] sm:$0xff]
      %v2546 = vld [vmem:[#allocation11 + $0xb8] sm:$0xff]
      %v2547 = vld [vmem:[#allocation11 + $0xc0] sm:$0xff]
      %v2548 = vld [vmem:[#allocation11 + $0xc8] sm:$0xff]
      %v2549 = vld [vmem:[#allocation11 + $0xd0] sm:$0xff]
      %v2550 = vld [vmem:[#allocation11 + $0xd8] sm:$0xff]
      %v2551 = vld [vmem:[#allocation11 + $0xe0] sm:$0xff]
      %v2552 = vld [vmem:[#allocation11 + $0xe8] sm:$0xff]
      %v2553 = vld [vmem:[#allocation11 + $0xf0] sm:$0xff]
      %v2554 = vld [vmem:[#allocation11 + $0xf8] sm:$0xff]
      %v2555 = vld [vmem:[#allocation11 + $0x100] sm:$0xff]
      %v2556 = vld [vmem:[#allocation11 + $0x108] sm:$0xff]
      %v2557 = vld [vmem:[#allocation11 + $0x110] sm:$0xff]
      %v2558 = vld [vmem:[#allocation11 + $0x118] sm:$0xff]
      %v2559 = vld [vmem:[#allocation11 + $0x120] sm:$0xff]
      %v2560 = vld [vmem:[#allocation11 + $0x128] sm:$0xff]
      %v2561 = vld [vmem:[#allocation11 + $0x130] sm:$0xff]
      %v2562 = vld [vmem:[#allocation11 + $0x138] sm:$0xff]
      %v2563 = vld [vmem:[#allocation11 + $0x140] sm:$0xff]
      %v2564 = vld [vmem:[#allocation11 + $0x148] sm:$0xff]
      %v2565 = vld [vmem:[#allocation11 + $0x150] sm:$0xff]
      %v2566 = vld [vmem:[#allocation11 + $0x158] sm:$0xff]
      %v2567 = vld [vmem:[#allocation11 + $0x160] sm:$0xff]
      %v2568 = vld [vmem:[#allocation11 + $0x168] sm:$0xff]
      %v2569 = vld [vmem:[#allocation11 + $0x170] sm:$0xff]
      %v2570 = vld [vmem:[#allocation11 + $0x178] sm:$0xff]
      %v2571 = vld [vmem:[#allocation11 + $0x180] sm:$0xff]
      %v2572 = vld [vmem:[#allocation11 + $0x188] sm:$0xff]
      %v2573 = vld [vmem:[#allocation11 + $0x190] sm:$0xff]
      %v2574 = vld [vmem:[#allocation11 + $0x198] sm:$0xff]
      %v2575 = vld [vmem:[#allocation11 + $0x1a0] sm:$0xff]
      %v2576 = vld [vmem:[#allocation11 + $0x1a8] sm:$0xff]
      %v2577 = vld [vmem:[#allocation11 + $0x1b0] sm:$0xff]
      %v2578 = vld [vmem:[#allocation11 + $0x1b8] sm:$0xff]
      %v2579 = vld [vmem:[#allocation11 + $0x1c0] sm:$0xff]
      %v2580 = vld [vmem:[#allocation11 + $0x1c8] sm:$0xff]
      %v2581 = vld [vmem:[#allocation11 + $0x1d0] sm:$0xff]
      %v2582 = vld [vmem:[#allocation11 + $0x1d8] sm:$0xff]
      %v2583 = vld [vmem:[#allocation11 + $0x1e0] sm:$0xff]
      %v2584 = vld [vmem:[#allocation11 + $0x1e8] sm:$0xff]
      %v2585 = vld [vmem:[#allocation11 + $0x1f0] sm:$0xff]
      %v2586 = vld [vmem:[#allocation11 + $0x1f8] sm:$0xff]
      %v2587 = vld [vmem:[%s7] sm:$0xf]
      %v2589 = vlaneseq
      %v2590 = vshrl.u32 %v2589, 7
      %v2591 = vsub.s32 0, %v2590
      %v2592 = vrot.slane %v2587, %v2591
      %v2593 = vlaneseq
      %v2594 = vshrl.u32 %v2593, 7
      %v2595 = vsub.s32 1, %v2594
      %v2596 = vrot.slane %v2587, %v2595
      %v2597 = vlaneseq
      %v2598 = vshrl.u32 %v2597, 7
      %v2599 = vsub.s32 2, %v2598
      %v2600 = vrot.slane %v2587, %v2599
      %v2601 = vlaneseq
      %v2602 = vshrl.u32 %v2601, 7
      %v2603 = vsub.s32 3, %v2602
      %v2604 = vrot.slane %v2587, %v2603
      %v2610 = vunpack.c.l.b16 %v2522
      %v2611 = vunpack.c.h.b16 %v2522
      %v2612 = vpack.c.b16 %v2610, %v2610
      %v2613 = vpack.c.b16 %v2611, %v2611
      %v2680 = vunpack.c.l.b16 %v2523
      %v2681 = vunpack.c.h.b16 %v2523
      %v2682 = vunpack.c.l.b16 %v2524
      %v2683 = vunpack.c.h.b16 %v2524
      %v2684 = vunpack.c.l.b16 %v2525
      %v2685 = vunpack.c.h.b16 %v2525
      %v2686 = vunpack.c.l.b16 %v2526
      %v2687 = vunpack.c.h.b16 %v2526
      %v2688 = vunpack.c.l.b16 %v2527
      %v2689 = vunpack.c.h.b16 %v2527
      %v2690 = vunpack.c.l.b16 %v2528
      %v2691 = vunpack.c.h.b16 %v2528
      %v2692 = vunpack.c.l.b16 %v2529
      %v2693 = vunpack.c.h.b16 %v2529
      %v2694 = vunpack.c.l.b16 %v2530
      %v2695 = vunpack.c.h.b16 %v2530
      %v2696 = vunpack.c.l.b16 %v2531
      %v2697 = vunpack.c.h.b16 %v2531
      %v2698 = vunpack.c.l.b16 %v2532
      %v2699 = vunpack.c.h.b16 %v2532
      %v2700 = vunpack.c.l.b16 %v2533
      %v2701 = vunpack.c.h.b16 %v2533
      %v2702 = vunpack.c.l.b16 %v2534
      %v2703 = vunpack.c.h.b16 %v2534
      %v2704 = vunpack.c.l.b16 %v2535
      %v2705 = vunpack.c.h.b16 %v2535
      %v2706 = vunpack.c.l.b16 %v2536
      %v2707 = vunpack.c.h.b16 %v2536
      %v2708 = vunpack.c.l.b16 %v2537
      %v2709 = vunpack.c.h.b16 %v2537
      %v2710 = vunpack.c.l.b16 %v2538
      %v2711 = vunpack.c.h.b16 %v2538
      %v2712 = vunpack.c.l.b16 %v2539
      %v2713 = vunpack.c.h.b16 %v2539
      %v2714 = vunpack.c.l.b16 %v2540
      %v2715 = vunpack.c.h.b16 %v2540
      %v2716 = vunpack.c.l.b16 %v2541
      %v2717 = vunpack.c.h.b16 %v2541
      %v2718 = vunpack.c.l.b16 %v2542
      %v2719 = vunpack.c.h.b16 %v2542
      %v2720 = vunpack.c.l.b16 %v2543
      %v2721 = vunpack.c.h.b16 %v2543
      %v2722 = vunpack.c.l.b16 %v2544
      %v2723 = vunpack.c.h.b16 %v2544
      %v2724 = vunpack.c.l.b16 %v2545
      %v2725 = vunpack.c.h.b16 %v2545
      %v2726 = vunpack.c.l.b16 %v2546
      %v2727 = vunpack.c.h.b16 %v2546
      %v2728 = vunpack.c.l.b16 %v2547
      %v2729 = vunpack.c.h.b16 %v2547
      %v2730 = vunpack.c.l.b16 %v2548
      %v2731 = vunpack.c.h.b16 %v2548
      %v2732 = vunpack.c.l.b16 %v2549
      %v2733 = vunpack.c.h.b16 %v2549
      %v2734 = vunpack.c.l.b16 %v2550
      %v2735 = vunpack.c.h.b16 %v2550
      %v2736 = vunpack.c.l.b16 %v2551
      %v2737 = vunpack.c.h.b16 %v2551
      %v2738 = vunpack.c.l.b16 %v2552
      %v2739 = vunpack.c.h.b16 %v2552
      %v2740 = vunpack.c.l.b16 %v2553
      %v2741 = vunpack.c.h.b16 %v2553
      %v2742 = vunpack.c.l.b16 %v2554
      %v2743 = vunpack.c.h.b16 %v2554
      %v2744 = vunpack.c.l.b16 %v2555
      %v2745 = vunpack.c.h.b16 %v2555
      %v2746 = vunpack.c.l.b16 %v2556
      %v2747 = vunpack.c.h.b16 %v2556
      %v2748 = vunpack.c.l.b16 %v2557
      %v2749 = vunpack.c.h.b16 %v2557
      %v2750 = vunpack.c.l.b16 %v2558
      %v2751 = vunpack.c.h.b16 %v2558
      %v2752 = vunpack.c.l.b16 %v2559
      %v2753 = vunpack.c.h.b16 %v2559
      %v2754 = vunpack.c.l.b16 %v2560
      %v2755 = vunpack.c.h.b16 %v2560
      %v2756 = vunpack.c.l.b16 %v2561
      %v2757 = vunpack.c.h.b16 %v2561
      %v2758 = vunpack.c.l.b16 %v2562
      %v2759 = vunpack.c.h.b16 %v2562
      %v2760 = vunpack.c.l.b16 %v2563
      %v2761 = vunpack.c.h.b16 %v2563
      %v2762 = vunpack.c.l.b16 %v2564
      %v2763 = vunpack.c.h.b16 %v2564
      %v2764 = vunpack.c.l.b16 %v2565
      %v2765 = vunpack.c.h.b16 %v2565
      %v2766 = vunpack.c.l.b16 %v2566
      %v2767 = vunpack.c.h.b16 %v2566
      %v2768 = vunpack.c.l.b16 %v2567
      %v2769 = vunpack.c.h.b16 %v2567
      %v2770 = vunpack.c.l.b16 %v2568
      %v2771 = vunpack.c.h.b16 %v2568
      %v2772 = vunpack.c.l.b16 %v2569
      %v2773 = vunpack.c.h.b16 %v2569
      %v2774 = vunpack.c.l.b16 %v2570
      %v2775 = vunpack.c.h.b16 %v2570
      %v2776 = vunpack.c.l.b16 %v2571
      %v2777 = vunpack.c.h.b16 %v2571
      %v2778 = vunpack.c.l.b16 %v2572
      %v2779 = vunpack.c.h.b16 %v2572
      %v2780 = vunpack.c.l.b16 %v2573
      %v2781 = vunpack.c.h.b16 %v2573
      %v2782 = vunpack.c.l.b16 %v2574
      %v2783 = vunpack.c.h.b16 %v2574
      %v2784 = vunpack.c.l.b16 %v2575
      %v2785 = vunpack.c.h.b16 %v2575
      %v2786 = vunpack.c.l.b16 %v2576
      %v2787 = vunpack.c.h.b16 %v2576
      %v2788 = vunpack.c.l.b16 %v2577
      %v2789 = vunpack.c.h.b16 %v2577
      %v2790 = vunpack.c.l.b16 %v2578
      %v2791 = vunpack.c.h.b16 %v2578
      %v2792 = vunpack.c.l.b16 %v2579
      %v2793 = vunpack.c.h.b16 %v2579
      %v2794 = vunpack.c.l.b16 %v2580
      %v2795 = vunpack.c.h.b16 %v2580
      %v2796 = vunpack.c.l.b16 %v2581
      %v2797 = vunpack.c.h.b16 %v2581
      %v2798 = vunpack.c.l.b16 %v2582
      %v2799 = vunpack.c.h.b16 %v2582
      %v2800 = vunpack.c.l.b16 %v2583
      %v2801 = vunpack.c.h.b16 %v2583
      %v2802 = vunpack.c.l.b16 %v2584
      %v2803 = vunpack.c.h.b16 %v2584
      %v2804 = vunpack.c.l.b16 %v2585
      %v2805 = vunpack.c.h.b16 %v2585
      %v2806 = vunpack.c.l.b16 %v2586
      %v2807 = vunpack.c.h.b16 %v2586
      %v2808 = vpack.c.b16 %v2684, %v2680
      %v2809 = vpack.c.b16 %v2685, %v2681
      %v2810 = vpack.c.b16 %v2686, %v2682
      %v2811 = vpack.c.b16 %v2687, %v2683
      %v2812 = vpack.c.b16 %v2692, %v2688
      %v2813 = vpack.c.b16 %v2693, %v2689
      %v2814 = vpack.c.b16 %v2694, %v2690
      %v2815 = vpack.c.b16 %v2695, %v2691
      %v2816 = vpack.c.b16 %v2700, %v2696
      %v2817 = vpack.c.b16 %v2701, %v2697
      %v2818 = vpack.c.b16 %v2702, %v2698
      %v2819 = vpack.c.b16 %v2703, %v2699
      %v2820 = vpack.c.b16 %v2708, %v2704
      %v2821 = vpack.c.b16 %v2709, %v2705
      %v2822 = vpack.c.b16 %v2710, %v2706
      %v2823 = vpack.c.b16 %v2711, %v2707
      %v2824 = vpack.c.b16 %v2716, %v2712
      %v2825 = vpack.c.b16 %v2717, %v2713
      %v2826 = vpack.c.b16 %v2718, %v2714
      %v2827 = vpack.c.b16 %v2719, %v2715
      %v2828 = vpack.c.b16 %v2724, %v2720
      %v2829 = vpack.c.b16 %v2725, %v2721
      %v2830 = vpack.c.b16 %v2726, %v2722
      %v2831 = vpack.c.b16 %v2727, %v2723
      %v2832 = vpack.c.b16 %v2732, %v2728
      %v2833 = vpack.c.b16 %v2733, %v2729
      %v2834 = vpack.c.b16 %v2734, %v2730
      %v2835 = vpack.c.b16 %v2735, %v2731
      %v2836 = vpack.c.b16 %v2740, %v2736
      %v2837 = vpack.c.b16 %v2741, %v2737
      %v2838 = vpack.c.b16 %v2742, %v2738
      %v2839 = vpack.c.b16 %v2743, %v2739
      %v2840 = vpack.c.b16 %v2748, %v2744
      %v2841 = vpack.c.b16 %v2749, %v2745
      %v2842 = vpack.c.b16 %v2750, %v2746
      %v2843 = vpack.c.b16 %v2751, %v2747
      %v2844 = vpack.c.b16 %v2756, %v2752
      %v2845 = vpack.c.b16 %v2757, %v2753
      %v2846 = vpack.c.b16 %v2758, %v2754
      %v2847 = vpack.c.b16 %v2759, %v2755
      %v2848 = vpack.c.b16 %v2764, %v2760
      %v2849 = vpack.c.b16 %v2765, %v2761
      %v2850 = vpack.c.b16 %v2766, %v2762
      %v2851 = vpack.c.b16 %v2767, %v2763
      %v2852 = vpack.c.b16 %v2772, %v2768
      %v2853 = vpack.c.b16 %v2773, %v2769
      %v2854 = vpack.c.b16 %v2774, %v2770
      %v2855 = vpack.c.b16 %v2775, %v2771
      %v2856 = vpack.c.b16 %v2780, %v2776
      %v2857 = vpack.c.b16 %v2781, %v2777
      %v2858 = vpack.c.b16 %v2782, %v2778
      %v2859 = vpack.c.b16 %v2783, %v2779
      %v2860 = vpack.c.b16 %v2788, %v2784
      %v2861 = vpack.c.b16 %v2789, %v2785
      %v2862 = vpack.c.b16 %v2790, %v2786
      %v2863 = vpack.c.b16 %v2791, %v2787
      %v2864 = vpack.c.b16 %v2796, %v2792
      %v2865 = vpack.c.b16 %v2797, %v2793
      %v2866 = vpack.c.b16 %v2798, %v2794
      %v2867 = vpack.c.b16 %v2799, %v2795
      %v2868 = vpack.c.b16 %v2804, %v2800
      %v2869 = vpack.c.b16 %v2805, %v2801
      %v2870 = vpack.c.b16 %v2806, %v2802
      %v2871 = vpack.c.b16 %v2807, %v2803
      %2936 = vmatprep.subr.bf16.mxu0 %v2809
      %2937 = vmatpush1.bf16.msra.mxu0 %v2808
      %2938 = vmatprep.subr.bf16.mxu0 %v2813
      %2939 = vmatpush1.bf16.msra.mxu0 %v2812
      %2940 = vmatprep.subr.bf16.mxu0 %v2817
      %2941 = vmatpush1.bf16.msra.mxu0 %v2816
      %2942 = vmatprep.subr.bf16.mxu0 %v2821
      %2943 = vmatpush1.bf16.msra.mxu0 %v2820
      %2944 = vmatprep.subr.bf16.mxu0 %v2825
      %2945 = vmatpush1.bf16.msra.mxu0 %v2824
      %2946 = vmatprep.subr.bf16.mxu0 %v2829
      %2947 = vmatpush1.bf16.msra.mxu0 %v2828
      %2948 = vmatprep.subr.bf16.mxu0 %v2833
      %2949 = vmatpush1.bf16.msra.mxu0 %v2832
      %2950 = vmatprep.subr.bf16.mxu0 %v2837
      %2951 = vmatpush1.bf16.msra.mxu0 %v2836
      %2952 = vmatprep.subr.bf16.mxu0 %v2841
      %2953 = vmatpush1.bf16.msra.mxu0 %v2840
      %2954 = vmatprep.subr.bf16.mxu0 %v2845
      %2955 = vmatpush1.bf16.msra.mxu0 %v2844
      %2956 = vmatprep.subr.bf16.mxu0 %v2849
      %2957 = vmatpush1.bf16.msra.mxu0 %v2848
      %2958 = vmatprep.subr.bf16.mxu0 %v2853
      %2959 = vmatpush1.bf16.msra.mxu0 %v2852
      %2960 = vmatprep.subr.bf16.mxu0 %v2857
      %2961 = vmatpush1.bf16.msra.mxu0 %v2856
      %2962 = vmatprep.subr.bf16.mxu0 %v2861
      %2963 = vmatpush1.bf16.msra.mxu0 %v2860
      %2964 = vmatprep.subr.bf16.mxu0 %v2865
      %2965 = vmatpush1.bf16.msra.mxu0 %v2864
      %2966 = vmatprep.subr.bf16.mxu0 %v2869
      %2967 = vmatpush1.bf16.msra.mxu0 %v2868
      %2968 = vmatprep.mubr.bf16.mxu0 %v2613
      %2969 = vmatmul.mubr.bf16.gmra.mrb[0].mxu0 %v2612
      %v2970 = vpop.f32.mrb[0].mxu0
      %v2971 = vadd.f32 %v2592, %v2970
      %v2972 = vpop.f32.mrb[0].mxu0
      %v2973 = vadd.f32 %v2596, %v2972
      %v2974 = vpop.f32.mrb[0].mxu0
      %v2975 = vpop.f32.mrb[0].mxu0
      %2976 = vdwg.mxu0
      %2977 = vmatprep.subr.bf16.mxu0 %v2811
      %2978 = vmatpush1.bf16.msra.mxu0 %v2810
      %2979 = vmatprep.subr.bf16.mxu0 %v2815
      %2980 = vmatpush1.bf16.msra.mxu0 %v2814
      %2981 = vmatprep.subr.bf16.mxu0 %v2819
      %2982 = vmatpush1.bf16.msra.mxu0 %v2818
      %2983 = vmatprep.subr.bf16.mxu0 %v2823
      %2984 = vmatpush1.bf16.msra.mxu0 %v2822
      %2985 = vmatprep.subr.bf16.mxu0 %v2827
      %2986 = vmatpush1.bf16.msra.mxu0 %v2826
      %2987 = vmatprep.subr.bf16.mxu0 %v2831
      %2988 = vmatpush1.bf16.msra.mxu0 %v2830
      %2989 = vmatprep.subr.bf16.mxu0 %v2835
      %2990 = vmatpush1.bf16.msra.mxu0 %v2834
      %2991 = vmatprep.subr.bf16.mxu0 %v2839
      %2992 = vmatpush1.bf16.msra.mxu0 %v2838
      %2993 = vmatprep.subr.bf16.mxu0 %v2843
      %2994 = vmatpush1.bf16.msra.mxu0 %v2842
      %2995 = vmatprep.subr.bf16.mxu0 %v2847
      %2996 = vmatpush1.bf16.msra.mxu0 %v2846
      %2997 = vmatprep.subr.bf16.mxu0 %v2851
      %2998 = vmatpush1.bf16.msra.mxu0 %v2850
      %2999 = vmatprep.subr.bf16.mxu0 %v2855
      %3000 = vmatpush1.bf16.msra.mxu0 %v2854
      %3001 = vmatprep.subr.bf16.mxu0 %v2859
      %3002 = vmatpush1.bf16.msra.mxu0 %v2858
      %3003 = vmatprep.subr.bf16.mxu0 %v2863
      %3004 = vmatpush1.bf16.msra.mxu0 %v2862
      %3005 = vmatprep.subr.bf16.mxu0 %v2867
      %3006 = vmatpush1.bf16.msra.mxu0 %v2866
      %3007 = vmatprep.subr.bf16.mxu0 %v2871
      %3008 = vmatpush1.bf16.msra.mxu0 %v2870
      %3009 = vmatprep.mubr.bf16.mxu0 %v2613
      %3010 = vmatmul.mubr.bf16.gmra.mrb[0].mxu0 %v2612
      %v3011 = vpop.f32.mrb[0].mxu0
      %v3012 = vadd.f32 %v2600, %v3011
      %v3013 = vpop.f32.mrb[0].mxu0
      %v3014 = vadd.f32 %v2604, %v3013
      %v3015 = vpop.f32.mrb[0].mxu0
      %v3016 = vpop.f32.mrb[0].mxu0
      %3017 = vdwg.mxu0
      %v3018 = vld [vmem:[%s1319] sm:$0xff]
      %v3019 = vxor.u32 %v2971, 2147483648
      %v3020 = vmul.f32 %v3019, 1.442695
      %v3021 = vpow.pop %v3020
      %v3022 = vadd.f32 %v3021, 1.0
      %v3023 = vrcp.pop %v3022
      %v3024 = vmul.f32 1.0, %v3023
      %v3025 = vxor.u32 %v2973, 2147483648
      %v3026 = vmul.f32 %v3025, 1.442695
      %v3027 = vpow.pop %v3026
      %v3028 = vadd.f32 %v3027, 1.0
      %v3029 = vrcp.pop %v3028
      %v3030 = vmul.f32 1.0, %v3029
      %v3031 = vtanh.pop %v3012
      %v3032 = vxor.u32 %v3014, 2147483648
      %v3033 = vmul.f32 %v3032, 1.442695
      %v3034 = vpow.pop %v3033
      %v3035 = vadd.f32 %v3034, 1.0
      %v3036 = vrcp.pop %v3035
      %v3037 = vmul.f32 1.0, %v3036
      %v3038 = vmul.f32 %v3030, %v3018
      %v3039 = vmul.f32 %v3024, %v3031
      %v3040 = vadd.f32 %v3038, %v3039
      %v3041 = vtanh.pop %v3040
      %v3042 = vmul.f32 %v3037, %v3041
      %3043 = vst [vmem:[%s1319] sm:$0xff] %v3040
      %v3044 = vpack.c.bf16 %v3042, %v3042
      %3045 = vst [vmem:[#allocation2 + $0x4] sm:$0xf] %v3044
      %s3046 = sadd.s32 %s78, 3
      %v3047 = vstv %s3046
      %vm3048 = vcmp.eq.s32.totalorder %v508, %v3047
      %v3049 = vld [vmem:[%s8] sm:$0xff]
      %v3050 = vsel %vm3048, 1, 0
      %3051 = vset.pattern.permute.xlu0 0
      %3052 = vperm.xlu0 %3051, %v3050
      %v3053 = vpop.permute.xlu0 %3052
      %vm3054 = vcmp.eq.s32.totalorder %v3053, 1
      %v3055 = vsel %vm3054, %v3042, %v3049
      %3056 = vst [vmem:[%s8] sm:$0xff] %v3055
      %v3057 = vld [vmem:[#allocation2] sm:$0xf]
      %s3058 = smul.u32 3, 4
      %s3059 = smul.addr %s3058, 8
      %s3060 = scalar_lea.vmem [#allocation4], %s3059
      %v3061 = vld [vmem:[%s3060] sm:$0xff]
      %v3062 = vld [vmem:[%s3060 + $0x8] sm:$0xff]
      %v3063 = vld [vmem:[%s3060 + $0x10] sm:$0xff]
      %v3064 = vld [vmem:[%s3060 + $0x18] sm:$0xff]
      %v3065 = vld [vmem:[#allocation9] sm:$0xff]
      %v3066 = vld [vmem:[#allocation9 + $0x8] sm:$0xff]
      %v3067 = vld [vmem:[#allocation9 + $0x10] sm:$0xff]
      %v3068 = vld [vmem:[#allocation9 + $0x18] sm:$0xff]
      %v3069 = vld [vmem:[#allocation9 + $0x20] sm:$0xff]
      %v3070 = vld [vmem:[#allocation9 + $0x28] sm:$0xff]
      %v3071 = vld [vmem:[#allocation9 + $0x30] sm:$0xff]
      %v3072 = vld [vmem:[#allocation9 + $0x38] sm:$0xff]
      %v3073 = vld [vmem:[#allocation9 + $0x40] sm:$0xff]
      %v3074 = vld [vmem:[#allocation9 + $0x48] sm:$0xff]
      %v3075 = vld [vmem:[#allocation9 + $0x50] sm:$0xff]
      %v3076 = vld [vmem:[#allocation9 + $0x58] sm:$0xff]
      %v3077 = vld [vmem:[#allocation9 + $0x60] sm:$0xff]
      %v3078 = vld [vmem:[#allocation9 + $0x68] sm:$0xff]
      %v3079 = vld [vmem:[#allocation9 + $0x70] sm:$0xff]
      %v3080 = vld [vmem:[#allocation9 + $0x78] sm:$0xff]
      %v3081 = vld [vmem:[#allocation9 + $0x80] sm:$0xff]
      %v3082 = vld [vmem:[#allocation9 + $0x88] sm:$0xff]
      %v3083 = vld [vmem:[#allocation9 + $0x90] sm:$0xff]
      %v3084 = vld [vmem:[#allocation9 + $0x98] sm:$0xff]
      %v3085 = vld [vmem:[#allocation9 + $0xa0] sm:$0xff]
      %v3086 = vld [vmem:[#allocation9 + $0xa8] sm:$0xff]
      %v3087 = vld [vmem:[#allocation9 + $0xb0] sm:$0xff]
      %v3088 = vld [vmem:[#allocation9 + $0xb8] sm:$0xff]
      %v3089 = vld [vmem:[#allocation9 + $0xc0] sm:$0xff]
      %v3090 = vld [vmem:[#allocation9 + $0xc8] sm:$0xff]
      %v3091 = vld [vmem:[#allocation9 + $0xd0] sm:$0xff]
      %v3092 = vld [vmem:[#allocation9 + $0xd8] sm:$0xff]
      %v3093 = vld [vmem:[#allocation9 + $0xe0] sm:$0xff]
      %v3094 = vld [vmem:[#allocation9 + $0xe8] sm:$0xff]
      %v3095 = vld [vmem:[#allocation9 + $0xf0] sm:$0xff]
      %v3096 = vld [vmem:[#allocation9 + $0xf8] sm:$0xff]
      %v3129 = vunpack.c.l.b16 %v3065
      %v3130 = vunpack.c.h.b16 %v3065
      %v3131 = vunpack.c.l.b16 %v3066
      %v3132 = vunpack.c.h.b16 %v3066
      %v3133 = vunpack.c.l.b16 %v3067
      %v3134 = vunpack.c.h.b16 %v3067
      %v3135 = vunpack.c.l.b16 %v3068
      %v3136 = vunpack.c.h.b16 %v3068
      %v3137 = vunpack.c.l.b16 %v3069
      %v3138 = vunpack.c.h.b16 %v3069
      %v3139 = vunpack.c.l.b16 %v3070
      %v3140 = vunpack.c.h.b16 %v3070
      %v3141 = vunpack.c.l.b16 %v3071
      %v3142 = vunpack.c.h.b16 %v3071
      %v3143 = vunpack.c.l.b16 %v3072
      %v3144 = vunpack.c.h.b16 %v3072
      %v3145 = vunpack.c.l.b16 %v3073
      %v3146 = vunpack.c.h.b16 %v3073
      %v3147 = vunpack.c.l.b16 %v3074
      %v3148 = vunpack.c.h.b16 %v3074
      %v3149 = vunpack.c.l.b16 %v3075
      %v3150 = vunpack.c.h.b16 %v3075
      %v3151 = vunpack.c.l.b16 %v3076
      %v3152 = vunpack.c.h.b16 %v3076
      %v3153 = vunpack.c.l.b16 %v3077
      %v3154 = vunpack.c.h.b16 %v3077
      %v3155 = vunpack.c.l.b16 %v3078
      %v3156 = vunpack.c.h.b16 %v3078
      %v3157 = vunpack.c.l.b16 %v3079
      %v3158 = vunpack.c.h.b16 %v3079
      %v3159 = vunpack.c.l.b16 %v3080
      %v3160 = vunpack.c.h.b16 %v3080
      %v3161 = vunpack.c.l.b16 %v3081
      %v3162 = vunpack.c.h.b16 %v3081
      %v3163 = vunpack.c.l.b16 %v3082
      %v3164 = vunpack.c.h.b16 %v3082
      %v3165 = vunpack.c.l.b16 %v3083
      %v3166 = vunpack.c.h.b16 %v3083
      %v3167 = vunpack.c.l.b16 %v3084
      %v3168 = vunpack.c.h.b16 %v3084
      %v3169 = vunpack.c.l.b16 %v3085
      %v3170 = vunpack.c.h.b16 %v3085
      %v3171 = vunpack.c.l.b16 %v3086
      %v3172 = vunpack.c.h.b16 %v3086
      %v3173 = vunpack.c.l.b16 %v3087
      %v3174 = vunpack.c.h.b16 %v3087
      %v3175 = vunpack.c.l.b16 %v3088
      %v3176 = vunpack.c.h.b16 %v3088
      %v3177 = vunpack.c.l.b16 %v3089
      %v3178 = vunpack.c.h.b16 %v3089
      %v3179 = vunpack.c.l.b16 %v3090
      %v3180 = vunpack.c.h.b16 %v3090
      %v3181 = vunpack.c.l.b16 %v3091
      %v3182 = vunpack.c.h.b16 %v3091
      %v3183 = vunpack.c.l.b16 %v3092
      %v3184 = vunpack.c.h.b16 %v3092
      %v3185 = vunpack.c.l.b16 %v3093
      %v3186 = vunpack.c.h.b16 %v3093
      %v3187 = vunpack.c.l.b16 %v3094
      %v3188 = vunpack.c.h.b16 %v3094
      %v3189 = vunpack.c.l.b16 %v3095
      %v3190 = vunpack.c.h.b16 %v3095
      %v3191 = vunpack.c.l.b16 %v3096
      %v3192 = vunpack.c.h.b16 %v3096
      %v3193 = vpack.c.b16 %v3133, %v3129
      %v3194 = vpack.c.b16 %v3134, %v3130
      %v3195 = vpack.c.b16 %v3135, %v3131
      %v3196 = vpack.c.b16 %v3136, %v3132
      %v3197 = vpack.c.b16 %v3141, %v3137
      %v3198 = vpack.c.b16 %v3142, %v3138
      %v3199 = vpack.c.b16 %v3143, %v3139
      %v3200 = vpack.c.b16 %v3144, %v3140
      %v3201 = vpack.c.b16 %v3149, %v3145
      %v3202 = vpack.c.b16 %v3150, %v3146
      %v3203 = vpack.c.b16 %v3151, %v3147
      %v3204 = vpack.c.b16 %v3152, %v3148
      %v3205 = vpack.c.b16 %v3157, %v3153
      %v3206 = vpack.c.b16 %v3158, %v3154
      %v3207 = vpack.c.b16 %v3159, %v3155
      %v3208 = vpack.c.b16 %v3160, %v3156
      %v3209 = vpack.c.b16 %v3165, %v3161
      %v3210 = vpack.c.b16 %v3166, %v3162
      %v3211 = vpack.c.b16 %v3167, %v3163
      %v3212 = vpack.c.b16 %v3168, %v3164
      %v3213 = vpack.c.b16 %v3173, %v3169
      %v3214 = vpack.c.b16 %v3174, %v3170
      %v3215 = vpack.c.b16 %v3175, %v3171
      %v3216 = vpack.c.b16 %v3176, %v3172
      %v3217 = vpack.c.b16 %v3181, %v3177
      %v3218 = vpack.c.b16 %v3182, %v3178
      %v3219 = vpack.c.b16 %v3183, %v3179
      %v3220 = vpack.c.b16 %v3184, %v3180
      %v3221 = vpack.c.b16 %v3189, %v3185
      %v3222 = vpack.c.b16 %v3190, %v3186
      %v3223 = vpack.c.b16 %v3191, %v3187
      %v3224 = vpack.c.b16 %v3192, %v3188
      %3257 = vmatprep.subr.bf16.mxu0 %v3194
      %3258 = vmatpush1.bf16.msra.mxu0 %v3193
      %3259 = vmatprep.subr.bf16.mxu0 %v3198
      %3260 = vmatpush1.bf16.msra.mxu0 %v3197
      %3261 = vmatprep.subr.bf16.mxu0 %v3202
      %3262 = vmatpush1.bf16.msra.mxu0 %v3201
      %3263 = vmatprep.subr.bf16.mxu0 %v3206
      %3264 = vmatpush1.bf16.msra.mxu0 %v3205
      %3265 = vmatprep.subr.bf16.mxu0 %v3210
      %3266 = vmatpush1.bf16.msra.mxu0 %v3209
      %3267 = vmatprep.subr.bf16.mxu0 %v3214
      %3268 = vmatpush1.bf16.msra.mxu0 %v3213
      %3269 = vmatprep.subr.bf16.mxu0 %v3218
      %3270 = vmatpush1.bf16.msra.mxu0 %v3217
      %3271 = vmatprep.subr.bf16.mxu0 %v3222
      %3272 = vmatpush1.bf16.msra.mxu0 %v3221
      %3273 = vmatprep.subr.bf16.mxu0 0
      %3274 = vmatpush1.bf16.msra.mxu0 0
      %3275 = vmatprep.subr.bf16.mxu0 0
      %3276 = vmatpush1.bf16.msra.mxu0 0
      %3277 = vmatprep.subr.bf16.mxu0 0
      %3278 = vmatpush1.bf16.msra.mxu0 0
      %3279 = vmatprep.subr.bf16.mxu0 0
      %3280 = vmatpush1.bf16.msra.mxu0 0
      %3281 = vmatprep.subr.bf16.mxu0 0
      %3282 = vmatpush1.bf16.msra.mxu0 0
      %3283 = vmatprep.subr.bf16.mxu0 0
      %3284 = vmatpush1.bf16.msra.mxu0 0
      %3285 = vmatprep.subr.bf16.mxu0 0
      %3286 = vmatpush1.bf16.msra.mxu0 0
      %3287 = vmatprep.subr.bf16.mxu0 0
      %3288 = vmatpush1.bf16.msra.mxu0 0
      %3289 = vmatprep.mubr.bf16.mxu0 0
      %3290 = vmatmul.mubr.bf16.gmra.mrb[0].mxu0 %v3057
      %v3291 = vpop.f32.mrb[0].mxu0
      %v3292 = vadd.f32 0.0, %v3291
      %v3293 = vpop.f32.mrb[0].mxu0
      %v3294 = vadd.f32 0.0, %v3293
      %v3295 = vpop.f32.mrb[0].mxu0
      %v3296 = vpop.f32.mrb[0].mxu0
      %3297 = vdwg.mxu0
      %3298 = vmatprep.subr.bf16.mxu0 %v3196
      %3299 = vmatpush1.bf16.msra.mxu0 %v3195
      %3300 = vmatprep.subr.bf16.mxu0 %v3200
      %3301 = vmatpush1.bf16.msra.mxu0 %v3199
      %3302 = vmatprep.subr.bf16.mxu0 %v3204
      %3303 = vmatpush1.bf16.msra.mxu0 %v3203
      %3304 = vmatprep.subr.bf16.mxu0 %v3208
      %3305 = vmatpush1.bf16.msra.mxu0 %v3207
      %3306 = vmatprep.subr.bf16.mxu0 %v3212
      %3307 = vmatpush1.bf16.msra.mxu0 %v3211
      %3308 = vmatprep.subr.bf16.mxu0 %v3216
      %3309 = vmatpush1.bf16.msra.mxu0 %v3215
      %3310 = vmatprep.subr.bf16.mxu0 %v3220
      %3311 = vmatpush1.bf16.msra.mxu0 %v3219
      %3312 = vmatprep.subr.bf16.mxu0 %v3224
      %3313 = vmatpush1.bf16.msra.mxu0 %v3223
      %3314 = vmatprep.subr.bf16.mxu0 0
      %3315 = vmatpush1.bf16.msra.mxu0 0
      %3316 = vmatprep.subr.bf16.mxu0 0
      %3317 = vmatpush1.bf16.msra.mxu0 0
      %3318 = vmatprep.subr.bf16.mxu0 0
      %3319 = vmatpush1.bf16.msra.mxu0 0
      %3320 = vmatprep.subr.bf16.mxu0 0
      %3321 = vmatpush1.bf16.msra.mxu0 0
      %3322 = vmatprep.subr.bf16.mxu0 0
      %3323 = vmatpush1.bf16.msra.mxu0 0
      %3324 = vmatprep.subr.bf16.mxu0 0
      %3325 = vmatpush1.bf16.msra.mxu0 0
      %3326 = vmatprep.subr.bf16.mxu0 0
      %3327 = vmatpush1.bf16.msra.mxu0 0
      %3328 = vmatprep.subr.bf16.mxu0 0
      %3329 = vmatpush1.bf16.msra.mxu0 0
      %3330 = vmatprep.mubr.bf16.mxu0 0
      %3331 = vmatmul.mubr.bf16.gmra.mrb[0].mxu0 %v3057
      %v3332 = vpop.f32.mrb[0].mxu0
      %v3333 = vadd.f32 0.0, %v3332
      %v3334 = vpop.f32.mrb[0].mxu0
      %v3335 = vadd.f32 0.0, %v3334
      %v3336 = vpop.f32.mrb[0].mxu0
      %v3337 = vpop.f32.mrb[0].mxu0
      %3338 = vdwg.mxu0
      %v3339 = vadd.f32 %v3061, %v3292
      %v3340 = vadd.f32 %v3062, %v3294
      %v3341 = vadd.f32 %v3063, %v3333
      %v3342 = vadd.f32 %v3064, %v3335
      %v3343 = vld [vmem:[#allocation3] sm:$0xff]
      %v3344 = vxor.u32 %v3339, 2147483648
      %v3345 = vmul.f32 %v3344, 1.442695
      %v3346 = vpow.pop %v3345
      %v3347 = vadd.f32 %v3346, 1.0
      %v3348 = vrcp.pop %v3347
      %v3349 = vmul.f32 1.0, %v3348
      %v3350 = vxor.u32 %v3340, 2147483648
      %v3351 = vmul.f32 %v3350, 1.442695
      %v3352 = vpow.pop %v3351
      %v3353 = vadd.f32 %v3352, 1.0
      %v3354 = vrcp.pop %v3353
      %v3355 = vmul.f32 1.0, %v3354
      %v3356 = vtanh.pop %v3341
      %v3357 = vxor.u32 %v3342, 2147483648
      %v3358 = vmul.f32 %v3357, 1.442695
      %v3359 = vpow.pop %v3358
      %v3360 = vadd.f32 %v3359, 1.0
      %v3361 = vrcp.pop %v3360
      %v3362 = vmul.f32 1.0, %v3361
      %v3363 = vmul.f32 %v3355, %v3343
      %v3364 = vmul.f32 %v3349, %v3356
      %v3365 = vadd.f32 %v3363, %v3364
      %v3366 = vtanh.pop %v3365
      %v3367 = vmul.f32 %v3362, %v3366
      %3368 = vst [vmem:[#allocation3] sm:$0xff] %v3365
      %v3369 = vpack.c.bf16 %v3367, %v3367
      %3370 = vst [vmem:[#allocation2] sm:$0xf] %v3369
      %v3371 = vld [vmem:[#allocation2] sm:$0xff]
      %v3372 = vld [vmem:[#allocation11] sm:$0xff]
      %v3373 = vld [vmem:[#allocation11 + $0x8] sm:$0xff]
      %v3374 = vld [vmem:[#allocation11 + $0x10] sm:$0xff]
      %v3375 = vld [vmem:[#allocation11 + $0x18] sm:$0xff]
      %v3376 = vld [vmem:[#allocation11 + $0x20] sm:$0xff]
      %v3377 = vld [vmem:[#allocation11 + $0x28] sm:$0xff]
      %v3378 = vld [vmem:[#allocation11 + $0x30] sm:$0xff]
      %v3379 = vld [vmem:[#allocation11 + $0x38] sm:$0xff]
      %v3380 = vld [vmem:[#allocation11 + $0x40] sm:$0xff]
      %v3381 = vld [vmem:[#allocation11 + $0x48] sm:$0xff]
      %v3382 = vld [vmem:[#allocation11 + $0x50] sm:$0xff]
      %v3383 = vld [vmem:[#allocation11 + $0x58] sm:$0xff]
      %v3384 = vld [vmem:[#allocation11 + $0x60] sm:$0xff]
      %v3385 = vld [vmem:[#allocation11 + $0x68] sm:$0xff]
      %v3386 = vld [vmem:[#allocation11 + $0x70] sm:$0xff]
      %v3387 = vld [vmem:[#allocation11 + $0x78] sm:$0xff]
      %v3388 = vld [vmem:[#allocation11 + $0x80] sm:$0xff]
      %v3389 = vld [vmem:[#allocation11 + $0x88] sm:$0xff]
      %v3390 = vld [vmem:[#allocation11 + $0x90] sm:$0xff]
      %v3391 = vld [vmem:[#allocation11 + $0x98] sm:$0xff]
      %v3392 = vld [vmem:[#allocation11 + $0xa0] sm:$0xff]
      %v3393 = vld [vmem:[#allocation11 + $0xa8] sm:$0xff]
      %v3394 = vld [vmem:[#allocation11 + $0xb0] sm:$0xff]
      %v3395 = vld [vmem:[#allocation11 + $0xb8] sm:$0xff]
      %v3396 = vld [vmem:[#allocation11 + $0xc0] sm:$0xff]
      %v3397 = vld [vmem:[#allocation11 + $0xc8] sm:$0xff]
      %v3398 = vld [vmem:[#allocation11 + $0xd0] sm:$0xff]
      %v3399 = vld [vmem:[#allocation11 + $0xd8] sm:$0xff]
      %v3400 = vld [vmem:[#allocation11 + $0xe0] sm:$0xff]
      %v3401 = vld [vmem:[#allocation11 + $0xe8] sm:$0xff]
      %v3402 = vld [vmem:[#allocation11 + $0xf0] sm:$0xff]
      %v3403 = vld [vmem:[#allocation11 + $0xf8] sm:$0xff]
      %v3404 = vld [vmem:[#allocation11 + $0x100] sm:$0xff]
      %v3405 = vld [vmem:[#allocation11 + $0x108] sm:$0xff]
      %v3406 = vld [vmem:[#allocation11 + $0x110] sm:$0xff]
      %v3407 = vld [vmem:[#allocation11 + $0x118] sm:$0xff]
      %v3408 = vld [vmem:[#allocation11 + $0x120] sm:$0xff]
      %v3409 = vld [vmem:[#allocation11 + $0x128] sm:$0xff]
      %v3410 = vld [vmem:[#allocation11 + $0x130] sm:$0xff]
      %v3411 = vld [vmem:[#allocation11 + $0x138] sm:$0xff]
      %v3412 = vld [vmem:[#allocation11 + $0x140] sm:$0xff]
      %v3413 = vld [vmem:[#allocation11 + $0x148] sm:$0xff]
      %v3414 = vld [vmem:[#allocation11 + $0x150] sm:$0xff]
      %v3415 = vld [vmem:[#allocation11 + $0x158] sm:$0xff]
      %v3416 = vld [vmem:[#allocation11 + $0x160] sm:$0xff]
      %v3417 = vld [vmem:[#allocation11 + $0x168] sm:$0xff]
      %v3418 = vld [vmem:[#allocation11 + $0x170] sm:$0xff]
      %v3419 = vld [vmem:[#allocation11 + $0x178] sm:$0xff]
      %v3420 = vld [vmem:[#allocation11 + $0x180] sm:$0xff]
      %v3421 = vld [vmem:[#allocation11 + $0x188] sm:$0xff]
      %v3422 = vld [vmem:[#allocation11 + $0x190] sm:$0xff]
      %v3423 = vld [vmem:[#allocation11 + $0x198] sm:$0xff]
      %v3424 = vld [vmem:[#allocation11 + $0x1a0] sm:$0xff]
      %v3425 = vld [vmem:[#allocation11 + $0x1a8] sm:$0xff]
      %v3426 = vld [vmem:[#allocation11 + $0x1b0] sm:$0xff]
      %v3427 = vld [vmem:[#allocation11 + $0x1b8] sm:$0xff]
      %v3428 = vld [vmem:[#allocation11 + $0x1c0] sm:$0xff]
      %v3429 = vld [vmem:[#allocation11 + $0x1c8] sm:$0xff]
      %v3430 = vld [vmem:[#allocation11 + $0x1d0] sm:$0xff]
      %v3431 = vld [vmem:[#allocation11 + $0x1d8] sm:$0xff]
      %v3432 = vld [vmem:[#allocation11 + $0x1e0] sm:$0xff]
      %v3433 = vld [vmem:[#allocation11 + $0x1e8] sm:$0xff]
      %v3434 = vld [vmem:[#allocation11 + $0x1f0] sm:$0xff]
      %v3435 = vld [vmem:[#allocation11 + $0x1f8] sm:$0xff]
      %v3436 = vld [vmem:[%s7] sm:$0xf]
      %v3438 = vlaneseq
      %v3439 = vshrl.u32 %v3438, 7
      %v3440 = vsub.s32 0, %v3439
      %v3441 = vrot.slane %v3436, %v3440
      %v3442 = vlaneseq
      %v3443 = vshrl.u32 %v3442, 7
      %v3444 = vsub.s32 1, %v3443
      %v3445 = vrot.slane %v3436, %v3444
      %v3446 = vlaneseq
      %v3447 = vshrl.u32 %v3446, 7
      %v3448 = vsub.s32 2, %v3447
      %v3449 = vrot.slane %v3436, %v3448
      %v3450 = vlaneseq
      %v3451 = vshrl.u32 %v3450, 7
      %v3452 = vsub.s32 3, %v3451
      %v3453 = vrot.slane %v3436, %v3452
      %v3459 = vunpack.c.l.b16 %v3371
      %v3460 = vunpack.c.h.b16 %v3371
      %v3461 = vpack.c.b16 %v3459, %v3459
      %v3462 = vpack.c.b16 %v3460, %v3460
      %v3529 = vunpack.c.l.b16 %v3372
      %v3530 = vunpack.c.h.b16 %v3372
      %v3531 = vunpack.c.l.b16 %v3373
      %v3532 = vunpack.c.h.b16 %v3373
      %v3533 = vunpack.c.l.b16 %v3374
      %v3534 = vunpack.c.h.b16 %v3374
      %v3535 = vunpack.c.l.b16 %v3375
      %v3536 = vunpack.c.h.b16 %v3375
      %v3537 = vunpack.c.l.b16 %v3376
      %v3538 = vunpack.c.h.b16 %v3376
      %v3539 = vunpack.c.l.b16 %v3377
      %v3540 = vunpack.c.h.b16 %v3377
      %v3541 = vunpack.c.l.b16 %v3378
      %v3542 = vunpack.c.h.b16 %v3378
      %v3543 = vunpack.c.l.b16 %v3379
      %v3544 = vunpack.c.h.b16 %v3379
      %v3545 = vunpack.c.l.b16 %v3380
      %v3546 = vunpack.c.h.b16 %v3380
      %v3547 = vunpack.c.l.b16 %v3381
      %v3548 = vunpack.c.h.b16 %v3381
      %v3549 = vunpack.c.l.b16 %v3382
      %v3550 = vunpack.c.h.b16 %v3382
      %v3551 = vunpack.c.l.b16 %v3383
      %v3552 = vunpack.c.h.b16 %v3383
      %v3553 = vunpack.c.l.b16 %v3384
      %v3554 = vunpack.c.h.b16 %v3384
      %v3555 = vunpack.c.l.b16 %v3385
      %v3556 = vunpack.c.h.b16 %v3385
      %v3557 = vunpack.c.l.b16 %v3386
      %v3558 = vunpack.c.h.b16 %v3386
      %v3559 = vunpack.c.l.b16 %v3387
      %v3560 = vunpack.c.h.b16 %v3387
      %v3561 = vunpack.c.l.b16 %v3388
      %v3562 = vunpack.c.h.b16 %v3388
      %v3563 = vunpack.c.l.b16 %v3389
      %v3564 = vunpack.c.h.b16 %v3389
      %v3565 = vunpack.c.l.b16 %v3390
      %v3566 = vunpack.c.h.b16 %v3390
      %v3567 = vunpack.c.l.b16 %v3391
      %v3568 = vunpack.c.h.b16 %v3391
      %v3569 = vunpack.c.l.b16 %v3392
      %v3570 = vunpack.c.h.b16 %v3392
      %v3571 = vunpack.c.l.b16 %v3393
      %v3572 = vunpack.c.h.b16 %v3393
      %v3573 = vunpack.c.l.b16 %v3394
      %v3574 = vunpack.c.h.b16 %v3394
      %v3575 = vunpack.c.l.b16 %v3395
      %v3576 = vunpack.c.h.b16 %v3395
      %v3577 = vunpack.c.l.b16 %v3396
      %v3578 = vunpack.c.h.b16 %v3396
      %v3579 = vunpack.c.l.b16 %v3397
      %v3580 = vunpack.c.h.b16 %v3397
      %v3581 = vunpack.c.l.b16 %v3398
      %v3582 = vunpack.c.h.b16 %v3398
      %v3583 = vunpack.c.l.b16 %v3399
      %v3584 = vunpack.c.h.b16 %v3399
      %v3585 = vunpack.c.l.b16 %v3400
      %v3586 = vunpack.c.h.b16 %v3400
      %v3587 = vunpack.c.l.b16 %v3401
      %v3588 = vunpack.c.h.b16 %v3401
      %v3589 = vunpack.c.l.b16 %v3402
      %v3590 = vunpack.c.h.b16 %v3402
      %v3591 = vunpack.c.l.b16 %v3403
      %v3592 = vunpack.c.h.b16 %v3403
      %v3593 = vunpack.c.l.b16 %v3404
      %v3594 = vunpack.c.h.b16 %v3404
      %v3595 = vunpack.c.l.b16 %v3405
      %v3596 = vunpack.c.h.b16 %v3405
      %v3597 = vunpack.c.l.b16 %v3406
      %v3598 = vunpack.c.h.b16 %v3406
      %v3599 = vunpack.c.l.b16 %v3407
      %v3600 = vunpack.c.h.b16 %v3407
      %v3601 = vunpack.c.l.b16 %v3408
      %v3602 = vunpack.c.h.b16 %v3408
      %v3603 = vunpack.c.l.b16 %v3409
      %v3604 = vunpack.c.h.b16 %v3409
      %v3605 = vunpack.c.l.b16 %v3410
      %v3606 = vunpack.c.h.b16 %v3410
      %v3607 = vunpack.c.l.b16 %v3411
      %v3608 = vunpack.c.h.b16 %v3411
      %v3609 = vunpack.c.l.b16 %v3412
      %v3610 = vunpack.c.h.b16 %v3412
      %v3611 = vunpack.c.l.b16 %v3413
      %v3612 = vunpack.c.h.b16 %v3413
      %v3613 = vunpack.c.l.b16 %v3414
      %v3614 = vunpack.c.h.b16 %v3414
      %v3615 = vunpack.c.l.b16 %v3415
      %v3616 = vunpack.c.h.b16 %v3415
      %v3617 = vunpack.c.l.b16 %v3416
      %v3618 = vunpack.c.h.b16 %v3416
      %v3619 = vunpack.c.l.b16 %v3417
      %v3620 = vunpack.c.h.b16 %v3417
      %v3621 = vunpack.c.l.b16 %v3418
      %v3622 = vunpack.c.h.b16 %v3418
      %v3623 = vunpack.c.l.b16 %v3419
      %v3624 = vunpack.c.h.b16 %v3419
      %v3625 = vunpack.c.l.b16 %v3420
      %v3626 = vunpack.c.h.b16 %v3420
      %v3627 = vunpack.c.l.b16 %v3421
      %v3628 = vunpack.c.h.b16 %v3421
      %v3629 = vunpack.c.l.b16 %v3422
      %v3630 = vunpack.c.h.b16 %v3422
      %v3631 = vunpack.c.l.b16 %v3423
      %v3632 = vunpack.c.h.b16 %v3423
      %v3633 = vunpack.c.l.b16 %v3424
      %v3634 = vunpack.c.h.b16 %v3424
      %v3635 = vunpack.c.l.b16 %v3425
      %v3636 = vunpack.c.h.b16 %v3425
      %v3637 = vunpack.c.l.b16 %v3426
      %v3638 = vunpack.c.h.b16 %v3426
      %v3639 = vunpack.c.l.b16 %v3427
      %v3640 = vunpack.c.h.b16 %v3427
      %v3641 = vunpack.c.l.b16 %v3428
      %v3642 = vunpack.c.h.b16 %v3428
      %v3643 = vunpack.c.l.b16 %v3429
      %v3644 = vunpack.c.h.b16 %v3429
      %v3645 = vunpack.c.l.b16 %v3430
      %v3646 = vunpack.c.h.b16 %v3430
      %v3647 = vunpack.c.l.b16 %v3431
      %v3648 = vunpack.c.h.b16 %v3431
      %v3649 = vunpack.c.l.b16 %v3432
      %v3650 = vunpack.c.h.b16 %v3432
      %v3651 = vunpack.c.l.b16 %v3433
      %v3652 = vunpack.c.h.b16 %v3433
      %v3653 = vunpack.c.l.b16 %v3434
      %v3654 = vunpack.c.h.b16 %v3434
      %v3655 = vunpack.c.l.b16 %v3435
      %v3656 = vunpack.c.h.b16 %v3435
      %v3657 = vpack.c.b16 %v3533, %v3529
      %v3658 = vpack.c.b16 %v3534, %v3530
      %v3659 = vpack.c.b16 %v3535, %v3531
      %v3660 = vpack.c.b16 %v3536, %v3532
      %v3661 = vpack.c.b16 %v3541, %v3537
      %v3662 = vpack.c.b16 %v3542, %v3538
      %v3663 = vpack.c.b16 %v3543, %v3539
      %v3664 = vpack.c.b16 %v3544, %v3540
      %v3665 = vpack.c.b16 %v3549, %v3545
      %v3666 = vpack.c.b16 %v3550, %v3546
      %v3667 = vpack.c.b16 %v3551, %v3547
      %v3668 = vpack.c.b16 %v3552, %v3548
      %v3669 = vpack.c.b16 %v3557, %v3553
      %v3670 = vpack.c.b16 %v3558, %v3554
      %v3671 = vpack.c.b16 %v3559, %v3555
      %v3672 = vpack.c.b16 %v3560, %v3556
      %v3673 = vpack.c.b16 %v3565, %v3561
      %v3674 = vpack.c.b16 %v3566, %v3562
      %v3675 = vpack.c.b16 %v3567, %v3563
      %v3676 = vpack.c.b16 %v3568, %v3564
      %v3677 = vpack.c.b16 %v3573, %v3569
      %v3678 = vpack.c.b16 %v3574, %v3570
      %v3679 = vpack.c.b16 %v3575, %v3571
      %v3680 = vpack.c.b16 %v3576, %v3572
      %v3681 = vpack.c.b16 %v3581, %v3577
      %v3682 = vpack.c.b16 %v3582, %v3578
      %v3683 = vpack.c.b16 %v3583, %v3579
      %v3684 = vpack.c.b16 %v3584, %v3580
      %v3685 = vpack.c.b16 %v3589, %v3585
      %v3686 = vpack.c.b16 %v3590, %v3586
      %v3687 = vpack.c.b16 %v3591, %v3587
      %v3688 = vpack.c.b16 %v3592, %v3588
      %v3689 = vpack.c.b16 %v3597, %v3593
      %v3690 = vpack.c.b16 %v3598, %v3594
      %v3691 = vpack.c.b16 %v3599, %v3595
      %v3692 = vpack.c.b16 %v3600, %v3596
      %v3693 = vpack.c.b16 %v3605, %v3601
      %v3694 = vpack.c.b16 %v3606, %v3602
      %v3695 = vpack.c.b16 %v3607, %v3603
      %v3696 = vpack.c.b16 %v3608, %v3604
      %v3697 = vpack.c.b16 %v3613, %v3609
      %v3698 = vpack.c.b16 %v3614, %v3610
      %v3699 = vpack.c.b16 %v3615, %v3611
      %v3700 = vpack.c.b16 %v3616, %v3612
      %v3701 = vpack.c.b16 %v3621, %v3617
      %v3702 = vpack.c.b16 %v3622, %v3618
      %v3703 = vpack.c.b16 %v3623, %v3619
      %v3704 = vpack.c.b16 %v3624, %v3620
      %v3705 = vpack.c.b16 %v3629, %v3625
      %v3706 = vpack.c.b16 %v3630, %v3626
      %v3707 = vpack.c.b16 %v3631, %v3627
      %v3708 = vpack.c.b16 %v3632, %v3628
      %v3709 = vpack.c.b16 %v3637, %v3633
      %v3710 = vpack.c.b16 %v3638, %v3634
      %v3711 = vpack.c.b16 %v3639, %v3635
      %v3712 = vpack.c.b16 %v3640, %v3636
      %v3713 = vpack.c.b16 %v3645, %v3641
      %v3714 = vpack.c.b16 %v3646, %v3642
      %v3715 = vpack.c.b16 %v3647, %v3643
      %v3716 = vpack.c.b16 %v3648, %v3644
      %v3717 = vpack.c.b16 %v3653, %v3649
      %v3718 = vpack.c.b16 %v3654, %v3650
      %v3719 = vpack.c.b16 %v3655, %v3651
      %v3720 = vpack.c.b16 %v3656, %v3652
      %3785 = vmatprep.subr.bf16.mxu0 %v3658
      %3786 = vmatpush1.bf16.msra.mxu0 %v3657
      %3787 = vmatprep.subr.bf16.mxu0 %v3662
      %3788 = vmatpush1.bf16.msra.mxu0 %v3661
      %3789 = vmatprep.subr.bf16.mxu0 %v3666
      %3790 = vmatpush1.bf16.msra.mxu0 %v3665
      %3791 = vmatprep.subr.bf16.mxu0 %v3670
      %3792 = vmatpush1.bf16.msra.mxu0 %v3669
      %3793 = vmatprep.subr.bf16.mxu0 %v3674
      %3794 = vmatpush1.bf16.msra.mxu0 %v3673
      %3795 = vmatprep.subr.bf16.mxu0 %v3678
      %3796 = vmatpush1.bf16.msra.mxu0 %v3677
      %3797 = vmatprep.subr.bf16.mxu0 %v3682
      %3798 = vmatpush1.bf16.msra.mxu0 %v3681
      %3799 = vmatprep.subr.bf16.mxu0 %v3686
      %3800 = vmatpush1.bf16.msra.mxu0 %v3685
      %3801 = vmatprep.subr.bf16.mxu0 %v3690
      %3802 = vmatpush1.bf16.msra.mxu0 %v3689
      %3803 = vmatprep.subr.bf16.mxu0 %v3694
      %3804 = vmatpush1.bf16.msra.mxu0 %v3693
      %3805 = vmatprep.subr.bf16.mxu0 %v3698
      %3806 = vmatpush1.bf16.msra.mxu0 %v3697
      %3807 = vmatprep.subr.bf16.mxu0 %v3702
      %3808 = vmatpush1.bf16.msra.mxu0 %v3701
      %3809 = vmatprep.subr.bf16.mxu0 %v3706
      %3810 = vmatpush1.bf16.msra.mxu0 %v3705
      %3811 = vmatprep.subr.bf16.mxu0 %v3710
      %3812 = vmatpush1.bf16.msra.mxu0 %v3709
      %3813 = vmatprep.subr.bf16.mxu0 %v3714
      %3814 = vmatpush1.bf16.msra.mxu0 %v3713
      %3815 = vmatprep.subr.bf16.mxu0 %v3718
      %3816 = vmatpush1.bf16.msra.mxu0 %v3717
      %3817 = vmatprep.mubr.bf16.mxu0 %v3462
      %3818 = vmatmul.mubr.bf16.gmra.mrb[0].mxu0 %v3461
      %v3819 = vpop.f32.mrb[0].mxu0
      %v3820 = vadd.f32 %v3441, %v3819
      %v3821 = vpop.f32.mrb[0].mxu0
      %v3822 = vadd.f32 %v3445, %v3821
      %v3823 = vpop.f32.mrb[0].mxu0
      %v3824 = vpop.f32.mrb[0].mxu0
      %3825 = vdwg.mxu0
      %3826 = vmatprep.subr.bf16.mxu0 %v3660
      %3827 = vmatpush1.bf16.msra.mxu0 %v3659
      %3828 = vmatprep.subr.bf16.mxu0 %v3664
      %3829 = vmatpush1.bf16.msra.mxu0 %v3663
      %3830 = vmatprep.subr.bf16.mxu0 %v3668
      %3831 = vmatpush1.bf16.msra.mxu0 %v3667
      %3832 = vmatprep.subr.bf16.mxu0 %v3672
      %3833 = vmatpush1.bf16.msra.mxu0 %v3671
      %3834 = vmatprep.subr.bf16.mxu0 %v3676
      %3835 = vmatpush1.bf16.msra.mxu0 %v3675
      %3836 = vmatprep.subr.bf16.mxu0 %v3680
      %3837 = vmatpush1.bf16.msra.mxu0 %v3679
      %3838 = vmatprep.subr.bf16.mxu0 %v3684
      %3839 = vmatpush1.bf16.msra.mxu0 %v3683
      %3840 = vmatprep.subr.bf16.mxu0 %v3688
      %3841 = vmatpush1.bf16.msra.mxu0 %v3687
      %3842 = vmatprep.subr.bf16.mxu0 %v3692
      %3843 = vmatpush1.bf16.msra.mxu0 %v3691
      %3844 = vmatprep.subr.bf16.mxu0 %v3696
      %3845 = vmatpush1.bf16.msra.mxu0 %v3695
      %3846 = vmatprep.subr.bf16.mxu0 %v3700
      %3847 = vmatpush1.bf16.msra.mxu0 %v3699
      %3848 = vmatprep.subr.bf16.mxu0 %v3704
      %3849 = vmatpush1.bf16.msra.mxu0 %v3703
      %3850 = vmatprep.subr.bf16.mxu0 %v3708
      %3851 = vmatpush1.bf16.msra.mxu0 %v3707
      %3852 = vmatprep.subr.bf16.mxu0 %v3712
      %3853 = vmatpush1.bf16.msra.mxu0 %v3711
      %3854 = vmatprep.subr.bf16.mxu0 %v3716
      %3855 = vmatpush1.bf16.msra.mxu0 %v3715
      %3856 = vmatprep.subr.bf16.mxu0 %v3720
      %3857 = vmatpush1.bf16.msra.mxu0 %v3719
      %3858 = vmatprep.mubr.bf16.mxu0 %v3462
      %3859 = vmatmul.mubr.bf16.gmra.mrb[0].mxu0 %v3461
      %v3860 = vpop.f32.mrb[0].mxu0
      %v3861 = vadd.f32 %v3449, %v3860
      %v3862 = vpop.f32.mrb[0].mxu0
      %v3863 = vadd.f32 %v3453, %v3862
      %v3864 = vpop.f32.mrb[0].mxu0
      %v3865 = vpop.f32.mrb[0].mxu0
      %3866 = vdwg.mxu0
      %v3867 = vld [vmem:[%s1319] sm:$0xff]
      %v3868 = vxor.u32 %v3820, 2147483648
      %v3869 = vmul.f32 %v3868, 1.442695
      %v3870 = vpow.pop %v3869
      %v3871 = vadd.f32 %v3870, 1.0
      %v3872 = vrcp.pop %v3871
      %v3873 = vmul.f32 1.0, %v3872
      %v3874 = vxor.u32 %v3822, 2147483648
      %v3875 = vmul.f32 %v3874, 1.442695
      %v3876 = vpow.pop %v3875
      %v3877 = vadd.f32 %v3876, 1.0
      %v3878 = vrcp.pop %v3877
      %v3879 = vmul.f32 1.0, %v3878
      %v3880 = vtanh.pop %v3861
      %v3881 = vxor.u32 %v3863, 2147483648
      %v3882 = vmul.f32 %v3881, 1.442695
      %v3883 = vpow.pop %v3882
      %v3884 = vadd.f32 %v3883, 1.0
      %v3885 = vrcp.pop %v3884
      %v3886 = vmul.f32 1.0, %v3885
      %v3887 = vmul.f32 %v3879, %v3867
      %v3888 = vmul.f32 %v3873, %v3880
      %v3889 = vadd.f32 %v3887, %v3888
      %v3890 = vtanh.pop %v3889
      %v3891 = vmul.f32 %v3886, %v3890
      %3892 = vst [vmem:[%s1319] sm:$0xff] %v3889
      %v3893 = vpack.c.bf16 %v3891, %v3891
      %3894 = vst [vmem:[#allocation2 + $0x4] sm:$0xf] %v3893
      %s3895 = sadd.s32 %s78, 4
      %v3896 = vstv %s3895
      %vm3897 = vcmp.eq.s32.totalorder %v508, %v3896
      %v3898 = vld [vmem:[%s8] sm:$0xff]
      %v3899 = vsel %vm3897, 1, 0
      %3900 = vset.pattern.permute.xlu0 0
      %3901 = vperm.xlu0 %3900, %v3899
      %v3902 = vpop.permute.xlu0 %3901
      %vm3903 = vcmp.eq.s32.totalorder %v3902, 1
      %v3904 = vsel %vm3903, %v3891, %v3898
      %3905 = vst [vmem:[%s8] sm:$0xff] %v3904
      %v3906 = vld [vmem:[#allocation2] sm:$0xf]
      %s3907 = smul.u32 4, 4
      %s3908 = smul.addr %s3907, 8
      %s3909 = scalar_lea.vmem [#allocation4], %s3908
      %v3910 = vld [vmem:[%s3909] sm:$0xff]
      %v3911 = vld [vmem:[%s3909 + $0x8] sm:$0xff]
      %v3912 = vld [vmem:[%s3909 + $0x10] sm:$0xff]
      %v3913 = vld [vmem:[%s3909 + $0x18] sm:$0xff]
      %v3914 = vld [vmem:[#allocation9] sm:$0xff]
      %v3915 = vld [vmem:[#allocation9 + $0x8] sm:$0xff]
      %v3916 = vld [vmem:[#allocation9 + $0x10] sm:$0xff]
      %v3917 = vld [vmem:[#allocation9 + $0x18] sm:$0xff]
      %v3918 = vld [vmem:[#allocation9 + $0x20] sm:$0xff]
      %v3919 = vld [vmem:[#allocation9 + $0x28] sm:$0xff]
      %v3920 = vld [vmem:[#allocation9 + $0x30] sm:$0xff]
      %v3921 = vld [vmem:[#allocation9 + $0x38] sm:$0xff]
      %v3922 = vld [vmem:[#allocation9 + $0x40] sm:$0xff]
      %v3923 = vld [vmem:[#allocation9 + $0x48] sm:$0xff]
      %v3924 = vld [vmem:[#allocation9 + $0x50] sm:$0xff]
      %v3925 = vld [vmem:[#allocation9 + $0x58] sm:$0xff]
      %v3926 = vld [vmem:[#allocation9 + $0x60] sm:$0xff]
      %v3927 = vld [vmem:[#allocation9 + $0x68] sm:$0xff]
      %v3928 = vld [vmem:[#allocation9 + $0x70] sm:$0xff]
      %v3929 = vld [vmem:[#allocation9 + $0x78] sm:$0xff]
      %v3930 = vld [vmem:[#allocation9 + $0x80] sm:$0xff]
      %v3931 = vld [vmem:[#allocation9 + $0x88] sm:$0xff]
      %v3932 = vld [vmem:[#allocation9 + $0x90] sm:$0xff]
      %v3933 = vld [vmem:[#allocation9 + $0x98] sm:$0xff]
      %v3934 = vld [vmem:[#allocation9 + $0xa0] sm:$0xff]
      %v3935 = vld [vmem:[#allocation9 + $0xa8] sm:$0xff]
      %v3936 = vld [vmem:[#allocation9 + $0xb0] sm:$0xff]
      %v3937 = vld [vmem:[#allocation9 + $0xb8] sm:$0xff]
      %v3938 = vld [vmem:[#allocation9 + $0xc0] sm:$0xff]
      %v3939 = vld [vmem:[#allocation9 + $0xc8] sm:$0xff]
      %v3940 = vld [vmem:[#allocation9 + $0xd0] sm:$0xff]
      %v3941 = vld [vmem:[#allocation9 + $0xd8] sm:$0xff]
      %v3942 = vld [vmem:[#allocation9 + $0xe0] sm:$0xff]
      %v3943 = vld [vmem:[#allocation9 + $0xe8] sm:$0xff]
      %v3944 = vld [vmem:[#allocation9 + $0xf0] sm:$0xff]
      %v3945 = vld [vmem:[#allocation9 + $0xf8] sm:$0xff]
      %v3978 = vunpack.c.l.b16 %v3914
      %v3979 = vunpack.c.h.b16 %v3914
      %v3980 = vunpack.c.l.b16 %v3915
      %v3981 = vunpack.c.h.b16 %v3915
      %v3982 = vunpack.c.l.b16 %v3916
      %v3983 = vunpack.c.h.b16 %v3916
      %v3984 = vunpack.c.l.b16 %v3917
      %v3985 = vunpack.c.h.b16 %v3917
      %v3986 = vunpack.c.l.b16 %v3918
      %v3987 = vunpack.c.h.b16 %v3918
      %v3988 = vunpack.c.l.b16 %v3919
      %v3989 = vunpack.c.h.b16 %v3919
      %v3990 = vunpack.c.l.b16 %v3920
      %v3991 = vunpack.c.h.b16 %v3920
      %v3992 = vunpack.c.l.b16 %v3921
      %v3993 = vunpack.c.h.b16 %v3921
      %v3994 = vunpack.c.l.b16 %v3922
      %v3995 = vunpack.c.h.b16 %v3922
      %v3996 = vunpack.c.l.b16 %v3923
      %v3997 = vunpack.c.h.b16 %v3923
      %v3998 = vunpack.c.l.b16 %v3924
      %v3999 = vunpack.c.h.b16 %v3924
      %v4000 = vunpack.c.l.b16 %v3925
      %v4001 = vunpack.c.h.b16 %v3925
      %v4002 = vunpack.c.l.b16 %v3926
      %v4003 = vunpack.c.h.b16 %v3926
      %v4004 = vunpack.c.l.b16 %v3927
      %v4005 = vunpack.c.h.b16 %v3927
      %v4006 = vunpack.c.l.b16 %v3928
      %v4007 = vunpack.c.h.b16 %v3928
      %v4008 = vunpack.c.l.b16 %v3929
      %v4009 = vunpack.c.h.b16 %v3929
      %v4010 = vunpack.c.l.b16 %v3930
      %v4011 = vunpack.c.h.b16 %v3930
      %v4012 = vunpack.c.l.b16 %v3931
      %v4013 = vunpack.c.h.b16 %v3931
      %v4014 = vunpack.c.l.b16 %v3932
      %v4015 = vunpack.c.h.b16 %v3932
      %v4016 = vunpack.c.l.b16 %v3933
      %v4017 = vunpack.c.h.b16 %v3933
      %v4018 = vunpack.c.l.b16 %v3934
      %v4019 = vunpack.c.h.b16 %v3934
      %v4020 = vunpack.c.l.b16 %v3935
      %v4021 = vunpack.c.h.b16 %v3935
      %v4022 = vunpack.c.l.b16 %v3936
      %v4023 = vunpack.c.h.b16 %v3936
      %v4024 = vunpack.c.l.b16 %v3937
      %v4025 = vunpack.c.h.b16 %v3937
      %v4026 = vunpack.c.l.b16 %v3938
      %v4027 = vunpack.c.h.b16 %v3938
      %v4028 = vunpack.c.l.b16 %v3939
      %v4029 = vunpack.c.h.b16 %v3939
      %v4030 = vunpack.c.l.b16 %v3940
      %v4031 = vunpack.c.h.b16 %v3940
      %v4032 = vunpack.c.l.b16 %v3941
      %v4033 = vunpack.c.h.b16 %v3941
      %v4034 = vunpack.c.l.b16 %v3942
      %v4035 = vunpack.c.h.b16 %v3942
      %v4036 = vunpack.c.l.b16 %v3943
      %v4037 = vunpack.c.h.b16 %v3943
      %v4038 = vunpack.c.l.b16 %v3944
      %v4039 = vunpack.c.h.b16 %v3944
      %v4040 = vunpack.c.l.b16 %v3945
      %v4041 = vunpack.c.h.b16 %v3945
      %v4042 = vpack.c.b16 %v3982, %v3978
      %v4043 = vpack.c.b16 %v3983, %v3979
      %v4044 = vpack.c.b16 %v3984, %v3980
      %v4045 = vpack.c.b16 %v3985, %v3981
      %v4046 = vpack.c.b16 %v3990, %v3986
      %v4047 = vpack.c.b16 %v3991, %v3987
      %v4048 = vpack.c.b16 %v3992, %v3988
      %v4049 = vpack.c.b16 %v3993, %v3989
      %v4050 = vpack.c.b16 %v3998, %v3994
      %v4051 = vpack.c.b16 %v3999, %v3995
      %v4052 = vpack.c.b16 %v4000, %v3996
      %v4053 = vpack.c.b16 %v4001, %v3997
      %v4054 = vpack.c.b16 %v4006, %v4002
      %v4055 = vpack.c.b16 %v4007, %v4003
      %v4056 = vpack.c.b16 %v4008, %v4004
      %v4057 = vpack.c.b16 %v4009, %v4005
      %v4058 = vpack.c.b16 %v4014, %v4010
      %v4059 = vpack.c.b16 %v4015, %v4011
      %v4060 = vpack.c.b16 %v4016, %v4012
      %v4061 = vpack.c.b16 %v4017, %v4013
      %v4062 = vpack.c.b16 %v4022, %v4018
      %v4063 = vpack.c.b16 %v4023, %v4019
      %v4064 = vpack.c.b16 %v4024, %v4020
      %v4065 = vpack.c.b16 %v4025, %v4021
      %v4066 = vpack.c.b16 %v4030, %v4026
      %v4067 = vpack.c.b16 %v4031, %v4027
      %v4068 = vpack.c.b16 %v4032, %v4028
      %v4069 = vpack.c.b16 %v4033, %v4029
      %v4070 = vpack.c.b16 %v4038, %v4034
      %v4071 = vpack.c.b16 %v4039, %v4035
      %v4072 = vpack.c.b16 %v4040, %v4036
      %v4073 = vpack.c.b16 %v4041, %v4037
      %4106 = vmatprep.subr.bf16.mxu0 %v4043
      %4107 = vmatpush1.bf16.msra.mxu0 %v4042
      %4108 = vmatprep.subr.bf16.mxu0 %v4047
      %4109 = vmatpush1.bf16.msra.mxu0 %v4046
      %4110 = vmatprep.subr.bf16.mxu0 %v4051
      %4111 = vmatpush1.bf16.msra.mxu0 %v4050
      %4112 = vmatprep.subr.bf16.mxu0 %v4055
      %4113 = vmatpush1.bf16.msra.mxu0 %v4054
      %4114 = vmatprep.subr.bf16.mxu0 %v4059
      %4115 = vmatpush1.bf16.msra.mxu0 %v4058
      %4116 = vmatprep.subr.bf16.mxu0 %v4063
      %4117 = vmatpush1.bf16.msra.mxu0 %v4062
      %4118 = vmatprep.subr.bf16.mxu0 %v4067
      %4119 = vmatpush1.bf16.msra.mxu0 %v4066
      %4120 = vmatprep.subr.bf16.mxu0 %v4071
      %4121 = vmatpush1.bf16.msra.mxu0 %v4070
      %4122 = vmatprep.subr.bf16.mxu0 0
      %4123 = vmatpush1.bf16.msra.mxu0 0
      %4124 = vmatprep.subr.bf16.mxu0 0
      %4125 = vmatpush1.bf16.msra.mxu0 0
      %4126 = vmatprep.subr.bf16.mxu0 0
      %4127 = vmatpush1.bf16.msra.mxu0 0
      %4128 = vmatprep.subr.bf16.mxu0 0
      %4129 = vmatpush1.bf16.msra.mxu0 0
      %4130 = vmatprep.subr.bf16.mxu0 0
      %4131 = vmatpush1.bf16.msra.mxu0 0
      %4132 = vmatprep.subr.bf16.mxu0 0
      %4133 = vmatpush1.bf16.msra.mxu0 0
      %4134 = vmatprep.subr.bf16.mxu0 0
      %4135 = vmatpush1.bf16.msra.mxu0 0
      %4136 = vmatprep.subr.bf16.mxu0 0
      %4137 = vmatpush1.bf16.msra.mxu0 0
      %4138 = vmatprep.mubr.bf16.mxu0 0
      %4139 = vmatmul.mubr.bf16.gmra.mrb[0].mxu0 %v3906
      %v4140 = vpop.f32.mrb[0].mxu0
      %v4141 = vadd.f32 0.0, %v4140
      %v4142 = vpop.f32.mrb[0].mxu0
      %v4143 = vadd.f32 0.0, %v4142
      %v4144 = vpop.f32.mrb[0].mxu0
      %v4145 = vpop.f32.mrb[0].mxu0
      %4146 = vdwg.mxu0
      %4147 = vmatprep.subr.bf16.mxu0 %v4045
      %4148 = vmatpush1.bf16.msra.mxu0 %v4044
      %4149 = vmatprep.subr.bf16.mxu0 %v4049
      %4150 = vmatpush1.bf16.msra.mxu0 %v4048
      %4151 = vmatprep.subr.bf16.mxu0 %v4053
      %4152 = vmatpush1.bf16.msra.mxu0 %v4052
      %4153 = vmatprep.subr.bf16.mxu0 %v4057
      %4154 = vmatpush1.bf16.msra.mxu0 %v4056
      %4155 = vmatprep.subr.bf16.mxu0 %v4061
      %4156 = vmatpush1.bf16.msra.mxu0 %v4060
      %4157 = vmatprep.subr.bf16.mxu0 %v4065
      %4158 = vmatpush1.bf16.msra.mxu0 %v4064
      %4159 = vmatprep.subr.bf16.mxu0 %v4069
      %4160 = vmatpush1.bf16.msra.mxu0 %v4068
      %4161 = vmatprep.subr.bf16.mxu0 %v4073
      %4162 = vmatpush1.bf16.msra.mxu0 %v4072
      %4163 = vmatprep.subr.bf16.mxu0 0
      %4164 = vmatpush1.bf16.msra.mxu0 0
      %4165 = vmatprep.subr.bf16.mxu0 0
      %4166 = vmatpush1.bf16.msra.mxu0 0
      %4167 = vmatprep.subr.bf16.mxu0 0
      %4168 = vmatpush1.bf16.msra.mxu0 0
      %4169 = vmatprep.subr.bf16.mxu0 0
      %4170 = vmatpush1.bf16.msra.mxu0 0
      %4171 = vmatprep.subr.bf16.mxu0 0
      %4172 = vmatpush1.bf16.msra.mxu0 0
      %4173 = vmatprep.subr.bf16.mxu0 0
      %4174 = vmatpush1.bf16.msra.mxu0 0
      %4175 = vmatprep.subr.bf16.mxu0 0
      %4176 = vmatpush1.bf16.msra.mxu0 0
      %4177 = vmatprep.subr.bf16.mxu0 0
      %4178 = vmatpush1.bf16.msra.mxu0 0
      %4179 = vmatprep.mubr.bf16.mxu0 0
      %4180 = vmatmul.mubr.bf16.gmra.mrb[0].mxu0 %v3906
      %v4181 = vpop.f32.mrb[0].mxu0
      %v4182 = vadd.f32 0.0, %v4181
      %v4183 = vpop.f32.mrb[0].mxu0
      %v4184 = vadd.f32 0.0, %v4183
      %v4185 = vpop.f32.mrb[0].mxu0
      %v4186 = vpop.f32.mrb[0].mxu0
      %4187 = vdwg.mxu0
      %v4188 = vadd.f32 %v3910, %v4141
      %v4189 = vadd.f32 %v3911, %v4143
      %v4190 = vadd.f32 %v3912, %v4182
      %v4191 = vadd.f32 %v3913, %v4184
      %v4192 = vld [vmem:[#allocation3] sm:$0xff]
      %v4193 = vxor.u32 %v4188, 2147483648
      %v4194 = vmul.f32 %v4193, 1.442695
      %v4195 = vpow.pop %v4194
      %v4196 = vadd.f32 %v4195, 1.0
      %v4197 = vrcp.pop %v4196
      %v4198 = vmul.f32 1.0, %v4197
      %v4199 = vxor.u32 %v4189, 2147483648
      %v4200 = vmul.f32 %v4199, 1.442695
      %v4201 = vpow.pop %v4200
      %v4202 = vadd.f32 %v4201, 1.0
      %v4203 = vrcp.pop %v4202
      %v4204 = vmul.f32 1.0, %v4203
      %v4205 = vtanh.pop %v4190
      %v4206 = vxor.u32 %v4191, 2147483648
      %v4207 = vmul.f32 %v4206, 1.442695
      %v4208 = vpow.pop %v4207
      %v4209 = vadd.f32 %v4208, 1.0
      %v4210 = vrcp.pop %v4209
      %v4211 = vmul.f32 1.0, %v4210
      %v4212 = vmul.f32 %v4204, %v4192
      %v4213 = vmul.f32 %v4198, %v4205
      %v4214 = vadd.f32 %v4212, %v4213
      %v4215 = vtanh.pop %v4214
      %v4216 = vmul.f32 %v4211, %v4215
      %4217 = vst [vmem:[#allocation3] sm:$0xff] %v4214
      %v4218 = vpack.c.bf16 %v4216, %v4216
      %4219 = vst [vmem:[#allocation2] sm:$0xf] %v4218
      %v4220 = vld [vmem:[#allocation2] sm:$0xff]
      %v4221 = vld [vmem:[#allocation11] sm:$0xff]
      %v4222 = vld [vmem:[#allocation11 + $0x8] sm:$0xff]
      %v4223 = vld [vmem:[#allocation11 + $0x10] sm:$0xff]
      %v4224 = vld [vmem:[#allocation11 + $0x18] sm:$0xff]
      %v4225 = vld [vmem:[#allocation11 + $0x20] sm:$0xff]
      %v4226 = vld [vmem:[#allocation11 + $0x28] sm:$0xff]
      %v4227 = vld [vmem:[#allocation11 + $0x30] sm:$0xff]
      %v4228 = vld [vmem:[#allocation11 + $0x38] sm:$0xff]
      %v4229 = vld [vmem:[#allocation11 + $0x40] sm:$0xff]
      %v4230 = vld [vmem:[#allocation11 + $0x48] sm:$0xff]
      %v4231 = vld [vmem:[#allocation11 + $0x50] sm:$0xff]
      %v4232 = vld [vmem:[#allocation11 + $0x58] sm:$0xff]
      %v4233 = vld [vmem:[#allocation11 + $0x60] sm:$0xff]
      %v4234 = vld [vmem:[#allocation11 + $0x68] sm:$0xff]
      %v4235 = vld [vmem:[#allocation11 + $0x70] sm:$0xff]
      %v4236 = vld [vmem:[#allocation11 + $0x78] sm:$0xff]
      %v4237 = vld [vmem:[#allocation11 + $0x80] sm:$0xff]
      %v4238 = vld [vmem:[#allocation11 + $0x88] sm:$0xff]
      %v4239 = vld [vmem:[#allocation11 + $0x90] sm:$0xff]
      %v4240 = vld [vmem:[#allocation11 + $0x98] sm:$0xff]
      %v4241 = vld [vmem:[#allocation11 + $0xa0] sm:$0xff]
      %v4242 = vld [vmem:[#allocation11 + $0xa8] sm:$0xff]
      %v4243 = vld [vmem:[#allocation11 + $0xb0] sm:$0xff]
      %v4244 = vld [vmem:[#allocation11 + $0xb8] sm:$0xff]
      %v4245 = vld [vmem:[#allocation11 + $0xc0] sm:$0xff]
      %v4246 = vld [vmem:[#allocation11 + $0xc8] sm:$0xff]
      %v4247 = vld [vmem:[#allocation11 + $0xd0] sm:$0xff]
      %v4248 = vld [vmem:[#allocation11 + $0xd8] sm:$0xff]
      %v4249 = vld [vmem:[#allocation11 + $0xe0] sm:$0xff]
      %v4250 = vld [vmem:[#allocation11 + $0xe8] sm:$0xff]
      %v4251 = vld [vmem:[#allocation11 + $0xf0] sm:$0xff]
      %v4252 = vld [vmem:[#allocation11 + $0xf8] sm:$0xff]
      %v4253 = vld [vmem:[#allocation11 + $0x100] sm:$0xff]
      %v4254 = vld [vmem:[#allocation11 + $0x108] sm:$0xff]
      %v4255 = vld [vmem:[#allocation11 + $0x110] sm:$0xff]
      %v4256 = vld [vmem:[#allocation11 + $0x118] sm:$0xff]
      %v4257 = vld [vmem:[#allocation11 + $0x120] sm:$0xff]
      %v4258 = vld [vmem:[#allocation11 + $0x128] sm:$0xff]
      %v4259 = vld [vmem:[#allocation11 + $0x130] sm:$0xff]
      %v4260 = vld [vmem:[#allocation11 + $0x138] sm:$0xff]
      %v4261 = vld [vmem:[#allocation11 + $0x140] sm:$0xff]
      %v4262 = vld [vmem:[#allocation11 + $0x148] sm:$0xff]
      %v4263 = vld [vmem:[#allocation11 + $0x150] sm:$0xff]
      %v4264 = vld [vmem:[#allocation11 + $0x158] sm:$0xff]
      %v4265 = vld [vmem:[#allocation11 + $0x160] sm:$0xff]
      %v4266 = vld [vmem:[#allocation11 + $0x168] sm:$0xff]
      %v4267 = vld [vmem:[#allocation11 + $0x170] sm:$0xff]
      %v4268 = vld [vmem:[#allocation11 + $0x178] sm:$0xff]
      %v4269 = vld [vmem:[#allocation11 + $0x180] sm:$0xff]
      %v4270 = vld [vmem:[#allocation11 + $0x188] sm:$0xff]
      %v4271 = vld [vmem:[#allocation11 + $0x190] sm:$0xff]
      %v4272 = vld [vmem:[#allocation11 + $0x198] sm:$0xff]
      %v4273 = vld [vmem:[#allocation11 + $0x1a0] sm:$0xff]
      %v4274 = vld [vmem:[#allocation11 + $0x1a8] sm:$0xff]
      %v4275 = vld [vmem:[#allocation11 + $0x1b0] sm:$0xff]
      %v4276 = vld [vmem:[#allocation11 + $0x1b8] sm:$0xff]
      %v4277 = vld [vmem:[#allocation11 + $0x1c0] sm:$0xff]
      %v4278 = vld [vmem:[#allocation11 + $0x1c8] sm:$0xff]
      %v4279 = vld [vmem:[#allocation11 + $0x1d0] sm:$0xff]
      %v4280 = vld [vmem:[#allocation11 + $0x1d8] sm:$0xff]
      %v4281 = vld [vmem:[#allocation11 + $0x1e0] sm:$0xff]
      %v4282 = vld [vmem:[#allocation11 + $0x1e8] sm:$0xff]
      %v4283 = vld [vmem:[#allocation11 + $0x1f0] sm:$0xff]
      %v4284 = vld [vmem:[#allocation11 + $0x1f8] sm:$0xff]
      %v4285 = vld [vmem:[%s7] sm:$0xf]
      %v4287 = vlaneseq
      %v4288 = vshrl.u32 %v4287, 7
      %v4289 = vsub.s32 0, %v4288
      %v4290 = vrot.slane %v4285, %v4289
      %v4291 = vlaneseq
      %v4292 = vshrl.u32 %v4291, 7
      %v4293 = vsub.s32 1, %v4292
      %v4294 = vrot.slane %v4285, %v4293
      %v4295 = vlaneseq
      %v4296 = vshrl.u32 %v4295, 7
      %v4297 = vsub.s32 2, %v4296
      %v4298 = vrot.slane %v4285, %v4297
      %v4299 = vlaneseq
      %v4300 = vshrl.u32 %v4299, 7
      %v4301 = vsub.s32 3, %v4300
      %v4302 = vrot.slane %v4285, %v4301
      %v4308 = vunpack.c.l.b16 %v4220
      %v4309 = vunpack.c.h.b16 %v4220
      %v4310 = vpack.c.b16 %v4308, %v4308
      %v4311 = vpack.c.b16 %v4309, %v4309
      %v4378 = vunpack.c.l.b16 %v4221
      %v4379 = vunpack.c.h.b16 %v4221
      %v4380 = vunpack.c.l.b16 %v4222
      %v4381 = vunpack.c.h.b16 %v4222
      %v4382 = vunpack.c.l.b16 %v4223
      %v4383 = vunpack.c.h.b16 %v4223
      %v4384 = vunpack.c.l.b16 %v4224
      %v4385 = vunpack.c.h.b16 %v4224
      %v4386 = vunpack.c.l.b16 %v4225
      %v4387 = vunpack.c.h.b16 %v4225
      %v4388 = vunpack.c.l.b16 %v4226
      %v4389 = vunpack.c.h.b16 %v4226
      %v4390 = vunpack.c.l.b16 %v4227
      %v4391 = vunpack.c.h.b16 %v4227
      %v4392 = vunpack.c.l.b16 %v4228
      %v4393 = vunpack.c.h.b16 %v4228
      %v4394 = vunpack.c.l.b16 %v4229
      %v4395 = vunpack.c.h.b16 %v4229
      %v4396 = vunpack.c.l.b16 %v4230
      %v4397 = vunpack.c.h.b16 %v4230
      %v4398 = vunpack.c.l.b16 %v4231
      %v4399 = vunpack.c.h.b16 %v4231
      %v4400 = vunpack.c.l.b16 %v4232
      %v4401 = vunpack.c.h.b16 %v4232
      %v4402 = vunpack.c.l.b16 %v4233
      %v4403 = vunpack.c.h.b16 %v4233
      %v4404 = vunpack.c.l.b16 %v4234
      %v4405 = vunpack.c.h.b16 %v4234
      %v4406 = vunpack.c.l.b16 %v4235
      %v4407 = vunpack.c.h.b16 %v4235
      %v4408 = vunpack.c.l.b16 %v4236
      %v4409 = vunpack.c.h.b16 %v4236
      %v4410 = vunpack.c.l.b16 %v4237
      %v4411 = vunpack.c.h.b16 %v4237
      %v4412 = vunpack.c.l.b16 %v4238
      %v4413 = vunpack.c.h.b16 %v4238
      %v4414 = vunpack.c.l.b16 %v4239
      %v4415 = vunpack.c.h.b16 %v4239
      %v4416 = vunpack.c.l.b16 %v4240
      %v4417 = vunpack.c.h.b16 %v4240
      %v4418 = vunpack.c.l.b16 %v4241
      %v4419 = vunpack.c.h.b16 %v4241
      %v4420 = vunpack.c.l.b16 %v4242
      %v4421 = vunpack.c.h.b16 %v4242
      %v4422 = vunpack.c.l.b16 %v4243
      %v4423 = vunpack.c.h.b16 %v4243
      %v4424 = vunpack.c.l.b16 %v4244
      %v4425 = vunpack.c.h.b16 %v4244
      %v4426 = vunpack.c.l.b16 %v4245
      %v4427 = vunpack.c.h.b16 %v4245
      %v4428 = vunpack.c.l.b16 %v4246
      %v4429 = vunpack.c.h.b16 %v4246
      %v4430 = vunpack.c.l.b16 %v4247
      %v4431 = vunpack.c.h.b16 %v4247
      %v4432 = vunpack.c.l.b16 %v4248
      %v4433 = vunpack.c.h.b16 %v4248
      %v4434 = vunpack.c.l.b16 %v4249
      %v4435 = vunpack.c.h.b16 %v4249
      %v4436 = vunpack.c.l.b16 %v4250
      %v4437 = vunpack.c.h.b16 %v4250
      %v4438 = vunpack.c.l.b16 %v4251
      %v4439 = vunpack.c.h.b16 %v4251
      %v4440 = vunpack.c.l.b16 %v4252
      %v4441 = vunpack.c.h.b16 %v4252
      %v4442 = vunpack.c.l.b16 %v4253
      %v4443 = vunpack.c.h.b16 %v4253
      %v4444 = vunpack.c.l.b16 %v4254
      %v4445 = vunpack.c.h.b16 %v4254
      %v4446 = vunpack.c.l.b16 %v4255
      %v4447 = vunpack.c.h.b16 %v4255
      %v4448 = vunpack.c.l.b16 %v4256
      %v4449 = vunpack.c.h.b16 %v4256
      %v4450 = vunpack.c.l.b16 %v4257
      %v4451 = vunpack.c.h.b16 %v4257
      %v4452 = vunpack.c.l.b16 %v4258
      %v4453 = vunpack.c.h.b16 %v4258
      %v4454 = vunpack.c.l.b16 %v4259
      %v4455 = vunpack.c.h.b16 %v4259
      %v4456 = vunpack.c.l.b16 %v4260
      %v4457 = vunpack.c.h.b16 %v4260
      %v4458 = vunpack.c.l.b16 %v4261
      %v4459 = vunpack.c.h.b16 %v4261
      %v4460 = vunpack.c.l.b16 %v4262
      %v4461 = vunpack.c.h.b16 %v4262
      %v4462 = vunpack.c.l.b16 %v4263
      %v4463 = vunpack.c.h.b16 %v4263
      %v4464 = vunpack.c.l.b16 %v4264
      %v4465 = vunpack.c.h.b16 %v4264
      %v4466 = vunpack.c.l.b16 %v4265
      %v4467 = vunpack.c.h.b16 %v4265
      %v4468 = vunpack.c.l.b16 %v4266
      %v4469 = vunpack.c.h.b16 %v4266
      %v4470 = vunpack.c.l.b16 %v4267
      %v4471 = vunpack.c.h.b16 %v4267
      %v4472 = vunpack.c.l.b16 %v4268
      %v4473 = vunpack.c.h.b16 %v4268
      %v4474 = vunpack.c.l.b16 %v4269
      %v4475 = vunpack.c.h.b16 %v4269
      %v4476 = vunpack.c.l.b16 %v4270
      %v4477 = vunpack.c.h.b16 %v4270
      %v4478 = vunpack.c.l.b16 %v4271
      %v4479 = vunpack.c.h.b16 %v4271
      %v4480 = vunpack.c.l.b16 %v4272
      %v4481 = vunpack.c.h.b16 %v4272
      %v4482 = vunpack.c.l.b16 %v4273
      %v4483 = vunpack.c.h.b16 %v4273
      %v4484 = vunpack.c.l.b16 %v4274
      %v4485 = vunpack.c.h.b16 %v4274
      %v4486 = vunpack.c.l.b16 %v4275
      %v4487 = vunpack.c.h.b16 %v4275
      %v4488 = vunpack.c.l.b16 %v4276
      %v4489 = vunpack.c.h.b16 %v4276
      %v4490 = vunpack.c.l.b16 %v4277
      %v4491 = vunpack.c.h.b16 %v4277
      %v4492 = vunpack.c.l.b16 %v4278
      %v4493 = vunpack.c.h.b16 %v4278
      %v4494 = vunpack.c.l.b16 %v4279
      %v4495 = vunpack.c.h.b16 %v4279
      %v4496 = vunpack.c.l.b16 %v4280
      %v4497 = vunpack.c.h.b16 %v4280
      %v4498 = vunpack.c.l.b16 %v4281
      %v4499 = vunpack.c.h.b16 %v4281
      %v4500 = vunpack.c.l.b16 %v4282
      %v4501 = vunpack.c.h.b16 %v4282
      %v4502 = vunpack.c.l.b16 %v4283
      %v4503 = vunpack.c.h.b16 %v4283
      %v4504 = vunpack.c.l.b16 %v4284
      %v4505 = vunpack.c.h.b16 %v4284
      %v4506 = vpack.c.b16 %v4382, %v4378
      %v4507 = vpack.c.b16 %v4383, %v4379
      %v4508 = vpack.c.b16 %v4384, %v4380
      %v4509 = vpack.c.b16 %v4385, %v4381
      %v4510 = vpack.c.b16 %v4390, %v4386
      %v4511 = vpack.c.b16 %v4391, %v4387
      %v4512 = vpack.c.b16 %v4392, %v4388
      %v4513 = vpack.c.b16 %v4393, %v4389
      %v4514 = vpack.c.b16 %v4398, %v4394
      %v4515 = vpack.c.b16 %v4399, %v4395
      %v4516 = vpack.c.b16 %v4400, %v4396
      %v4517 = vpack.c.b16 %v4401, %v4397
      %v4518 = vpack.c.b16 %v4406, %v4402
      %v4519 = vpack.c.b16 %v4407, %v4403
      %v4520 = vpack.c.b16 %v4408, %v4404
      %v4521 = vpack.c.b16 %v4409, %v4405
      %v4522 = vpack.c.b16 %v4414, %v4410
      %v4523 = vpack.c.b16 %v4415, %v4411
      %v4524 = vpack.c.b16 %v4416, %v4412
      %v4525 = vpack.c.b16 %v4417, %v4413
      %v4526 = vpack.c.b16 %v4422, %v4418
      %v4527 = vpack.c.b16 %v4423, %v4419
      %v4528 = vpack.c.b16 %v4424, %v4420
      %v4529 = vpack.c.b16 %v4425, %v4421
      %v4530 = vpack.c.b16 %v4430, %v4426
      %v4531 = vpack.c.b16 %v4431, %v4427
      %v4532 = vpack.c.b16 %v4432, %v4428
      %v4533 = vpack.c.b16 %v4433, %v4429
      %v4534 = vpack.c.b16 %v4438, %v4434
      %v4535 = vpack.c.b16 %v4439, %v4435
      %v4536 = vpack.c.b16 %v4440, %v4436
      %v4537 = vpack.c.b16 %v4441, %v4437
      %v4538 = vpack.c.b16 %v4446, %v4442
      %v4539 = vpack.c.b16 %v4447, %v4443
      %v4540 = vpack.c.b16 %v4448, %v4444
      %v4541 = vpack.c.b16 %v4449, %v4445
      %v4542 = vpack.c.b16 %v4454, %v4450
      %v4543 = vpack.c.b16 %v4455, %v4451
      %v4544 = vpack.c.b16 %v4456, %v4452
      %v4545 = vpack.c.b16 %v4457, %v4453
      %v4546 = vpack.c.b16 %v4462, %v4458
      %v4547 = vpack.c.b16 %v4463, %v4459
      %v4548 = vpack.c.b16 %v4464, %v4460
      %v4549 = vpack.c.b16 %v4465, %v4461
      %v4550 = vpack.c.b16 %v4470, %v4466
      %v4551 = vpack.c.b16 %v4471, %v4467
      %v4552 = vpack.c.b16 %v4472, %v4468
      %v4553 = vpack.c.b16 %v4473, %v4469
      %v4554 = vpack.c.b16 %v4478, %v4474
      %v4555 = vpack.c.b16 %v4479, %v4475
      %v4556 = vpack.c.b16 %v4480, %v4476
      %v4557 = vpack.c.b16 %v4481, %v4477
      %v4558 = vpack.c.b16 %v4486, %v4482
      %v4559 = vpack.c.b16 %v4487, %v4483
      %v4560 = vpack.c.b16 %v4488, %v4484
      %v4561 = vpack.c.b16 %v4489, %v4485
      %v4562 = vpack.c.b16 %v4494, %v4490
      %v4563 = vpack.c.b16 %v4495, %v4491
      %v4564 = vpack.c.b16 %v4496, %v4492
      %v4565 = vpack.c.b16 %v4497, %v4493
      %v4566 = vpack.c.b16 %v4502, %v4498
      %v4567 = vpack.c.b16 %v4503, %v4499
      %v4568 = vpack.c.b16 %v4504, %v4500
      %v4569 = vpack.c.b16 %v4505, %v4501
      %4634 = vmatprep.subr.bf16.mxu0 %v4507
      %4635 = vmatpush1.bf16.msra.mxu0 %v4506
      %4636 = vmatprep.subr.bf16.mxu0 %v4511
      %4637 = vmatpush1.bf16.msra.mxu0 %v4510
      %4638 = vmatprep.subr.bf16.mxu0 %v4515
      %4639 = vmatpush1.bf16.msra.mxu0 %v4514
      %4640 = vmatprep.subr.bf16.mxu0 %v4519
      %4641 = vmatpush1.bf16.msra.mxu0 %v4518
      %4642 = vmatprep.subr.bf16.mxu0 %v4523
      %4643 = vmatpush1.bf16.msra.mxu0 %v4522
      %4644 = vmatprep.subr.bf16.mxu0 %v4527
      %4645 = vmatpush1.bf16.msra.mxu0 %v4526
      %4646 = vmatprep.subr.bf16.mxu0 %v4531
      %4647 = vmatpush1.bf16.msra.mxu0 %v4530
      %4648 = vmatprep.subr.bf16.mxu0 %v4535
      %4649 = vmatpush1.bf16.msra.mxu0 %v4534
      %4650 = vmatprep.subr.bf16.mxu0 %v4539
      %4651 = vmatpush1.bf16.msra.mxu0 %v4538
      %4652 = vmatprep.subr.bf16.mxu0 %v4543
      %4653 = vmatpush1.bf16.msra.mxu0 %v4542
      %4654 = vmatprep.subr.bf16.mxu0 %v4547
      %4655 = vmatpush1.bf16.msra.mxu0 %v4546
      %4656 = vmatprep.subr.bf16.mxu0 %v4551
      %4657 = vmatpush1.bf16.msra.mxu0 %v4550
      %4658 = vmatprep.subr.bf16.mxu0 %v4555
      %4659 = vmatpush1.bf16.msra.mxu0 %v4554
      %4660 = vmatprep.subr.bf16.mxu0 %v4559
      %4661 = vmatpush1.bf16.msra.mxu0 %v4558
      %4662 = vmatprep.subr.bf16.mxu0 %v4563
      %4663 = vmatpush1.bf16.msra.mxu0 %v4562
      %4664 = vmatprep.subr.bf16.mxu0 %v4567
      %4665 = vmatpush1.bf16.msra.mxu0 %v4566
      %4666 = vmatprep.mubr.bf16.mxu0 %v4311
      %4667 = vmatmul.mubr.bf16.gmra.mrb[0].mxu0 %v4310
      %v4668 = vpop.f32.mrb[0].mxu0
      %v4669 = vadd.f32 %v4290, %v4668
      %v4670 = vpop.f32.mrb[0].mxu0
      %v4671 = vadd.f32 %v4294, %v4670
      %v4672 = vpop.f32.mrb[0].mxu0
      %v4673 = vpop.f32.mrb[0].mxu0
      %4674 = vdwg.mxu0
      %4675 = vmatprep.subr.bf16.mxu0 %v4509
      %4676 = vmatpush1.bf16.msra.mxu0 %v4508
      %4677 = vmatprep.subr.bf16.mxu0 %v4513
      %4678 = vmatpush1.bf16.msra.mxu0 %v4512
      %4679 = vmatprep.subr.bf16.mxu0 %v4517
      %4680 = vmatpush1.bf16.msra.mxu0 %v4516
      %4681 = vmatprep.subr.bf16.mxu0 %v4521
      %4682 = vmatpush1.bf16.msra.mxu0 %v4520
      %4683 = vmatprep.subr.bf16.mxu0 %v4525
      %4684 = vmatpush1.bf16.msra.mxu0 %v4524
      %4685 = vmatprep.subr.bf16.mxu0 %v4529
      %4686 = vmatpush1.bf16.msra.mxu0 %v4528
      %4687 = vmatprep.subr.bf16.mxu0 %v4533
      %4688 = vmatpush1.bf16.msra.mxu0 %v4532
      %4689 = vmatprep.subr.bf16.mxu0 %v4537
      %4690 = vmatpush1.bf16.msra.mxu0 %v4536
      %4691 = vmatprep.subr.bf16.mxu0 %v4541
      %4692 = vmatpush1.bf16.msra.mxu0 %v4540
      %4693 = vmatprep.subr.bf16.mxu0 %v4545
      %4694 = vmatpush1.bf16.msra.mxu0 %v4544
      %4695 = vmatprep.subr.bf16.mxu0 %v4549
      %4696 = vmatpush1.bf16.msra.mxu0 %v4548
      %4697 = vmatprep.subr.bf16.mxu0 %v4553
      %4698 = vmatpush1.bf16.msra.mxu0 %v4552
      %4699 = vmatprep.subr.bf16.mxu0 %v4557
      %4700 = vmatpush1.bf16.msra.mxu0 %v4556
      %4701 = vmatprep.subr.bf16.mxu0 %v4561
      %4702 = vmatpush1.bf16.msra.mxu0 %v4560
      %4703 = vmatprep.subr.bf16.mxu0 %v4565
      %4704 = vmatpush1.bf16.msra.mxu0 %v4564
      %4705 = vmatprep.subr.bf16.mxu0 %v4569
      %4706 = vmatpush1.bf16.msra.mxu0 %v4568
      %4707 = vmatprep.mubr.bf16.mxu0 %v4311
      %4708 = vmatmul.mubr.bf16.gmra.mrb[0].mxu0 %v4310
      %v4709 = vpop.f32.mrb[0].mxu0
      %v4710 = vadd.f32 %v4298, %v4709
      %v4711 = vpop.f32.mrb[0].mxu0
      %v4712 = vadd.f32 %v4302, %v4711
      %v4713 = vpop.f32.mrb[0].mxu0
      %v4714 = vpop.f32.mrb[0].mxu0
      %4715 = vdwg.mxu0
      %v4716 = vld [vmem:[%s1319] sm:$0xff]
      %v4717 = vxor.u32 %v4669, 2147483648
      %v4718 = vmul.f32 %v4717, 1.442695
      %v4719 = vpow.pop %v4718
      %v4720 = vadd.f32 %v4719, 1.0
      %v4721 = vrcp.pop %v4720
      %v4722 = vmul.f32 1.0, %v4721
      %v4723 = vxor.u32 %v4671, 2147483648
      %v4724 = vmul.f32 %v4723, 1.442695
      %v4725 = vpow.pop %v4724
      %v4726 = vadd.f32 %v4725, 1.0
      %v4727 = vrcp.pop %v4726
      %v4728 = vmul.f32 1.0, %v4727
      %v4729 = vtanh.pop %v4710
      %v4730 = vxor.u32 %v4712, 2147483648
      %v4731 = vmul.f32 %v4730, 1.442695
      %v4732 = vpow.pop %v4731
      %v4733 = vadd.f32 %v4732, 1.0
      %v4734 = vrcp.pop %v4733
      %v4735 = vmul.f32 1.0, %v4734
      %v4736 = vmul.f32 %v4728, %v4716
      %v4737 = vmul.f32 %v4722, %v4729
      %v4738 = vadd.f32 %v4736, %v4737
      %v4739 = vtanh.pop %v4738
      %v4740 = vmul.f32 %v4735, %v4739
      %4741 = vst [vmem:[%s1319] sm:$0xff] %v4738
      %v4742 = vpack.c.bf16 %v4740, %v4740
      %4743 = vst [vmem:[#allocation2 + $0x4] sm:$0xf] %v4742
      %s4744 = sadd.s32 %s78, 5
      %v4745 = vstv %s4744
      %vm4746 = vcmp.eq.s32.totalorder %v508, %v4745
      %v4747 = vld [vmem:[%s8] sm:$0xff]
      %v4748 = vsel %vm4746, 1, 0
      %4749 = vset.pattern.permute.xlu0 0
      %4750 = vperm.xlu0 %4749, %v4748
      %v4751 = vpop.permute.xlu0 %4750
      %vm4752 = vcmp.eq.s32.totalorder %v4751, 1
      %v4753 = vsel %vm4752, %v4740, %v4747
      %4754 = vst [vmem:[%s8] sm:$0xff] %v4753
      %v4755 = vld [vmem:[#allocation2] sm:$0xf]
      %s4756 = smul.u32 5, 4
      %s4757 = smul.addr %s4756, 8
      %s4758 = scalar_lea.vmem [#allocation4], %s4757
      %v4759 = vld [vmem:[%s4758] sm:$0xff]
      %v4760 = vld [vmem:[%s4758 + $0x8] sm:$0xff]
      %v4761 = vld [vmem:[%s4758 + $0x10] sm:$0xff]
      %v4762 = vld [vmem:[%s4758 + $0x18] sm:$0xff]
      %v4763 = vld [vmem:[#allocation9] sm:$0xff]
      %v4764 = vld [vmem:[#allocation9 + $0x8] sm:$0xff]
      %v4765 = vld [vmem:[#allocation9 + $0x10] sm:$0xff]
      %v4766 = vld [vmem:[#allocation9 + $0x18] sm:$0xff]
      %v4767 = vld [vmem:[#allocation9 + $0x20] sm:$0xff]
      %v4768 = vld [vmem:[#allocation9 + $0x28] sm:$0xff]
      %v4769 = vld [vmem:[#allocation9 + $0x30] sm:$0xff]
      %v4770 = vld [vmem:[#allocation9 + $0x38] sm:$0xff]
      %v4771 = vld [vmem:[#allocation9 + $0x40] sm:$0xff]
      %v4772 = vld [vmem:[#allocation9 + $0x48] sm:$0xff]
      %v4773 = vld [vmem:[#allocation9 + $0x50] sm:$0xff]
      %v4774 = vld [vmem:[#allocation9 + $0x58] sm:$0xff]
      %v4775 = vld [vmem:[#allocation9 + $0x60] sm:$0xff]
      %v4776 = vld [vmem:[#allocation9 + $0x68] sm:$0xff]
      %v4777 = vld [vmem:[#allocation9 + $0x70] sm:$0xff]
      %v4778 = vld [vmem:[#allocation9 + $0x78] sm:$0xff]
      %v4779 = vld [vmem:[#allocation9 + $0x80] sm:$0xff]
      %v4780 = vld [vmem:[#allocation9 + $0x88] sm:$0xff]
      %v4781 = vld [vmem:[#allocation9 + $0x90] sm:$0xff]
      %v4782 = vld [vmem:[#allocation9 + $0x98] sm:$0xff]
      %v4783 = vld [vmem:[#allocation9 + $0xa0] sm:$0xff]
      %v4784 = vld [vmem:[#allocation9 + $0xa8] sm:$0xff]
      %v4785 = vld [vmem:[#allocation9 + $0xb0] sm:$0xff]
      %v4786 = vld [vmem:[#allocation9 + $0xb8] sm:$0xff]
      %v4787 = vld [vmem:[#allocation9 + $0xc0] sm:$0xff]
      %v4788 = vld [vmem:[#allocation9 + $0xc8] sm:$0xff]
      %v4789 = vld [vmem:[#allocation9 + $0xd0] sm:$0xff]
      %v4790 = vld [vmem:[#allocation9 + $0xd8] sm:$0xff]
      %v4791 = vld [vmem:[#allocation9 + $0xe0] sm:$0xff]
      %v4792 = vld [vmem:[#allocation9 + $0xe8] sm:$0xff]
      %v4793 = vld [vmem:[#allocation9 + $0xf0] sm:$0xff]
      %v4794 = vld [vmem:[#allocation9 + $0xf8] sm:$0xff]
      %v4827 = vunpack.c.l.b16 %v4763
      %v4828 = vunpack.c.h.b16 %v4763
      %v4829 = vunpack.c.l.b16 %v4764
      %v4830 = vunpack.c.h.b16 %v4764
      %v4831 = vunpack.c.l.b16 %v4765
      %v4832 = vunpack.c.h.b16 %v4765
      %v4833 = vunpack.c.l.b16 %v4766
      %v4834 = vunpack.c.h.b16 %v4766
      %v4835 = vunpack.c.l.b16 %v4767
      %v4836 = vunpack.c.h.b16 %v4767
      %v4837 = vunpack.c.l.b16 %v4768
      %v4838 = vunpack.c.h.b16 %v4768
      %v4839 = vunpack.c.l.b16 %v4769
      %v4840 = vunpack.c.h.b16 %v4769
      %v4841 = vunpack.c.l.b16 %v4770
      %v4842 = vunpack.c.h.b16 %v4770
      %v4843 = vunpack.c.l.b16 %v4771
      %v4844 = vunpack.c.h.b16 %v4771
      %v4845 = vunpack.c.l.b16 %v4772
      %v4846 = vunpack.c.h.b16 %v4772
      %v4847 = vunpack.c.l.b16 %v4773
      %v4848 = vunpack.c.h.b16 %v4773
      %v4849 = vunpack.c.l.b16 %v4774
      %v4850 = vunpack.c.h.b16 %v4774
      %v4851 = vunpack.c.l.b16 %v4775
      %v4852 = vunpack.c.h.b16 %v4775
      %v4853 = vunpack.c.l.b16 %v4776
      %v4854 = vunpack.c.h.b16 %v4776
      %v4855 = vunpack.c.l.b16 %v4777
      %v4856 = vunpack.c.h.b16 %v4777
      %v4857 = vunpack.c.l.b16 %v4778
      %v4858 = vunpack.c.h.b16 %v4778
      %v4859 = vunpack.c.l.b16 %v4779
      %v4860 = vunpack.c.h.b16 %v4779
      %v4861 = vunpack.c.l.b16 %v4780
      %v4862 = vunpack.c.h.b16 %v4780
      %v4863 = vunpack.c.l.b16 %v4781
      %v4864 = vunpack.c.h.b16 %v4781
      %v4865 = vunpack.c.l.b16 %v4782
      %v4866 = vunpack.c.h.b16 %v4782
      %v4867 = vunpack.c.l.b16 %v4783
      %v4868 = vunpack.c.h.b16 %v4783
      %v4869 = vunpack.c.l.b16 %v4784
      %v4870 = vunpack.c.h.b16 %v4784
      %v4871 = vunpack.c.l.b16 %v4785
      %v4872 = vunpack.c.h.b16 %v4785
      %v4873 = vunpack.c.l.b16 %v4786
      %v4874 = vunpack.c.h.b16 %v4786
      %v4875 = vunpack.c.l.b16 %v4787
      %v4876 = vunpack.c.h.b16 %v4787
      %v4877 = vunpack.c.l.b16 %v4788
      %v4878 = vunpack.c.h.b16 %v4788
      %v4879 = vunpack.c.l.b16 %v4789
      %v4880 = vunpack.c.h.b16 %v4789
      %v4881 = vunpack.c.l.b16 %v4790
      %v4882 = vunpack.c.h.b16 %v4790
      %v4883 = vunpack.c.l.b16 %v4791
      %v4884 = vunpack.c.h.b16 %v4791
      %v4885 = vunpack.c.l.b16 %v4792
      %v4886 = vunpack.c.h.b16 %v4792
      %v4887 = vunpack.c.l.b16 %v4793
      %v4888 = vunpack.c.h.b16 %v4793
      %v4889 = vunpack.c.l.b16 %v4794
      %v4890 = vunpack.c.h.b16 %v4794
      %v4891 = vpack.c.b16 %v4831, %v4827
      %v4892 = vpack.c.b16 %v4832, %v4828
      %v4893 = vpack.c.b16 %v4833, %v4829
      %v4894 = vpack.c.b16 %v4834, %v4830
      %v4895 = vpack.c.b16 %v4839, %v4835
      %v4896 = vpack.c.b16 %v4840, %v4836
      %v4897 = vpack.c.b16 %v4841, %v4837
      %v4898 = vpack.c.b16 %v4842, %v4838
      %v4899 = vpack.c.b16 %v4847, %v4843
      %v4900 = vpack.c.b16 %v4848, %v4844
      %v4901 = vpack.c.b16 %v4849, %v4845
      %v4902 = vpack.c.b16 %v4850, %v4846
      %v4903 = vpack.c.b16 %v4855, %v4851
      %v4904 = vpack.c.b16 %v4856, %v4852
      %v4905 = vpack.c.b16 %v4857, %v4853
      %v4906 = vpack.c.b16 %v4858, %v4854
      %v4907 = vpack.c.b16 %v4863, %v4859
      %v4908 = vpack.c.b16 %v4864, %v4860
      %v4909 = vpack.c.b16 %v4865, %v4861
      %v4910 = vpack.c.b16 %v4866, %v4862
      %v4911 = vpack.c.b16 %v4871, %v4867
      %v4912 = vpack.c.b16 %v4872, %v4868
      %v4913 = vpack.c.b16 %v4873, %v4869
      %v4914 = vpack.c.b16 %v4874, %v4870
      %v4915 = vpack.c.b16 %v4879, %v4875
      %v4916 = vpack.c.b16 %v4880, %v4876
      %v4917 = vpack.c.b16 %v4881, %v4877
      %v4918 = vpack.c.b16 %v4882, %v4878
      %v4919 = vpack.c.b16 %v4887, %v4883
      %v4920 = vpack.c.b16 %v4888, %v4884
      %v4921 = vpack.c.b16 %v4889, %v4885
      %v4922 = vpack.c.b16 %v4890, %v4886
      %4955 = vmatprep.subr.bf16.mxu0 %v4892
      %4956 = vmatpush1.bf16.msra.mxu0 %v4891
      %4957 = vmatprep.subr.bf16.mxu0 %v4896
      %4958 = vmatpush1.bf16.msra.mxu0 %v4895
      %4959 = vmatprep.subr.bf16.mxu0 %v4900
      %4960 = vmatpush1.bf16.msra.mxu0 %v4899
      %4961 = vmatprep.subr.bf16.mxu0 %v4904
      %4962 = vmatpush1.bf16.msra.mxu0 %v4903
      %4963 = vmatprep.subr.bf16.mxu0 %v4908
      %4964 = vmatpush1.bf16.msra.mxu0 %v4907
      %4965 = vmatprep.subr.bf16.mxu0 %v4912
      %4966 = vmatpush1.bf16.msra.mxu0 %v4911
      %4967 = vmatprep.subr.bf16.mxu0 %v4916
      %4968 = vmatpush1.bf16.msra.mxu0 %v4915
      %4969 = vmatprep.subr.bf16.mxu0 %v4920
      %4970 = vmatpush1.bf16.msra.mxu0 %v4919
      %4971 = vmatprep.subr.bf16.mxu0 0
      %4972 = vmatpush1.bf16.msra.mxu0 0
      %4973 = vmatprep.subr.bf16.mxu0 0
      %4974 = vmatpush1.bf16.msra.mxu0 0
      %4975 = vmatprep.subr.bf16.mxu0 0
      %4976 = vmatpush1.bf16.msra.mxu0 0
      %4977 = vmatprep.subr.bf16.mxu0 0
      %4978 = vmatpush1.bf16.msra.mxu0 0
      %4979 = vmatprep.subr.bf16.mxu0 0
      %4980 = vmatpush1.bf16.msra.mxu0 0
      %4981 = vmatprep.subr.bf16.mxu0 0
      %4982 = vmatpush1.bf16.msra.mxu0 0
      %4983 = vmatprep.subr.bf16.mxu0 0
      %4984 = vmatpush1.bf16.msra.mxu0 0
      %4985 = vmatprep.subr.bf16.mxu0 0
      %4986 = vmatpush1.bf16.msra.mxu0 0
      %4987 = vmatprep.mubr.bf16.mxu0 0
      %4988 = vmatmul.mubr.bf16.gmra.mrb[0].mxu0 %v4755
      %v4989 = vpop.f32.mrb[0].mxu0
      %v4990 = vadd.f32 0.0, %v4989
      %v4991 = vpop.f32.mrb[0].mxu0
      %v4992 = vadd.f32 0.0, %v4991
      %v4993 = vpop.f32.mrb[0].mxu0
      %v4994 = vpop.f32.mrb[0].mxu0
      %4995 = vdwg.mxu0
      %4996 = vmatprep.subr.bf16.mxu0 %v4894
      %4997 = vmatpush1.bf16.msra.mxu0 %v4893
      %4998 = vmatprep.subr.bf16.mxu0 %v4898
      %4999 = vmatpush1.bf16.msra.mxu0 %v4897
      %5000 = vmatprep.subr.bf16.mxu0 %v4902
      %5001 = vmatpush1.bf16.msra.mxu0 %v4901
      %5002 = vmatprep.subr.bf16.mxu0 %v4906
      %5003 = vmatpush1.bf16.msra.mxu0 %v4905
      %5004 = vmatprep.subr.bf16.mxu0 %v4910
      %5005 = vmatpush1.bf16.msra.mxu0 %v4909
      %5006 = vmatprep.subr.bf16.mxu0 %v4914
      %5007 = vmatpush1.bf16.msra.mxu0 %v4913
      %5008 = vmatprep.subr.bf16.mxu0 %v4918
      %5009 = vmatpush1.bf16.msra.mxu0 %v4917
      %5010 = vmatprep.subr.bf16.mxu0 %v4922
      %5011 = vmatpush1.bf16.msra.mxu0 %v4921
      %5012 = vmatprep.subr.bf16.mxu0 0
      %5013 = vmatpush1.bf16.msra.mxu0 0
      %5014 = vmatprep.subr.bf16.mxu0 0
      %5015 = vmatpush1.bf16.msra.mxu0 0
      %5016 = vmatprep.subr.bf16.mxu0 0
      %5017 = vmatpush1.bf16.msra.mxu0 0
      %5018 = vmatprep.subr.bf16.mxu0 0
      %5019 = vmatpush1.bf16.msra.mxu0 0
      %5020 = vmatprep.subr.bf16.mxu0 0
      %5021 = vmatpush1.bf16.msra.mxu0 0
      %5022 = vmatprep.subr.bf16.mxu0 0
      %5023 = vmatpush1.bf16.msra.mxu0 0
      %5024 = vmatprep.subr.bf16.mxu0 0
      %5025 = vmatpush1.bf16.msra.mxu0 0
      %5026 = vmatprep.subr.bf16.mxu0 0
      %5027 = vmatpush1.bf16.msra.mxu0 0
      %5028 = vmatprep.mubr.bf16.mxu0 0
      %5029 = vmatmul.mubr.bf16.gmra.mrb[0].mxu0 %v4755
      %v5030 = vpop.f32.mrb[0].mxu0
      %v5031 = vadd.f32 0.0, %v5030
      %v5032 = vpop.f32.mrb[0].mxu0
      %v5033 = vadd.f32 0.0, %v5032
      %v5034 = vpop.f32.mrb[0].mxu0
      %v5035 = vpop.f32.mrb[0].mxu0
      %5036 = vdwg.mxu0
      %v5037 = vadd.f32 %v4759, %v4990
      %v5038 = vadd.f32 %v4760, %v4992
      %v5039 = vadd.f32 %v4761, %v5031
      %v5040 = vadd.f32 %v4762, %v5033
      %v5041 = vld [vmem:[#allocation3] sm:$0xff]
      %v5042 = vxor.u32 %v5037, 2147483648
      %v5043 = vmul.f32 %v5042, 1.442695
      %v5044 = vpow.pop %v5043
      %v5045 = vadd.f32 %v5044, 1.0
      %v5046 = vrcp.pop %v5045
      %v5047 = vmul.f32 1.0, %v5046
      %v5048 = vxor.u32 %v5038, 2147483648
      %v5049 = vmul.f32 %v5048, 1.442695
      %v5050 = vpow.pop %v5049
      %v5051 = vadd.f32 %v5050, 1.0
      %v5052 = vrcp.pop %v5051
      %v5053 = vmul.f32 1.0, %v5052
      %v5054 = vtanh.pop %v5039
      %v5055 = vxor.u32 %v5040, 2147483648
      %v5056 = vmul.f32 %v5055, 1.442695
      %v5057 = vpow.pop %v5056
      %v5058 = vadd.f32 %v5057, 1.0
      %v5059 = vrcp.pop %v5058
      %v5060 = vmul.f32 1.0, %v5059
      %v5061 = vmul.f32 %v5053, %v5041
      %v5062 = vmul.f32 %v5047, %v5054
      %v5063 = vadd.f32 %v5061, %v5062
      %v5064 = vtanh.pop %v5063
      %v5065 = vmul.f32 %v5060, %v5064
      %5066 = vst [vmem:[#allocation3] sm:$0xff] %v5063
      %v5067 = vpack.c.bf16 %v5065, %v5065
      %5068 = vst [vmem:[#allocation2] sm:$0xf] %v5067
      %v5069 = vld [vmem:[#allocation2] sm:$0xff]
      %v5070 = vld [vmem:[#allocation11] sm:$0xff]
      %v5071 = vld [vmem:[#allocation11 + $0x8] sm:$0xff]
      %v5072 = vld [vmem:[#allocation11 + $0x10] sm:$0xff]
      %v5073 = vld [vmem:[#allocation11 + $0x18] sm:$0xff]
      %v5074 = vld [vmem:[#allocation11 + $0x20] sm:$0xff]
      %v5075 = vld [vmem:[#allocation11 + $0x28] sm:$0xff]
      %v5076 = vld [vmem:[#allocation11 + $0x30] sm:$0xff]
      %v5077 = vld [vmem:[#allocation11 + $0x38] sm:$0xff]
      %v5078 = vld [vmem:[#allocation11 + $0x40] sm:$0xff]
      %v5079 = vld [vmem:[#allocation11 + $0x48] sm:$0xff]
      %v5080 = vld [vmem:[#allocation11 + $0x50] sm:$0xff]
      %v5081 = vld [vmem:[#allocation11 + $0x58] sm:$0xff]
      %v5082 = vld [vmem:[#allocation11 + $0x60] sm:$0xff]
      %v5083 = vld [vmem:[#allocation11 + $0x68] sm:$0xff]
      %v5084 = vld [vmem:[#allocation11 + $0x70] sm:$0xff]
      %v5085 = vld [vmem:[#allocation11 + $0x78] sm:$0xff]
      %v5086 = vld [vmem:[#allocation11 + $0x80] sm:$0xff]
      %v5087 = vld [vmem:[#allocation11 + $0x88] sm:$0xff]
      %v5088 = vld [vmem:[#allocation11 + $0x90] sm:$0xff]
      %v5089 = vld [vmem:[#allocation11 + $0x98] sm:$0xff]
      %v5090 = vld [vmem:[#allocation11 + $0xa0] sm:$0xff]
      %v5091 = vld [vmem:[#allocation11 + $0xa8] sm:$0xff]
      %v5092 = vld [vmem:[#allocation11 + $0xb0] sm:$0xff]
      %v5093 = vld [vmem:[#allocation11 + $0xb8] sm:$0xff]
      %v5094 = vld [vmem:[#allocation11 + $0xc0] sm:$0xff]
      %v5095 = vld [vmem:[#allocation11 + $0xc8] sm:$0xff]
      %v5096 = vld [vmem:[#allocation11 + $0xd0] sm:$0xff]
      %v5097 = vld [vmem:[#allocation11 + $0xd8] sm:$0xff]
      %v5098 = vld [vmem:[#allocation11 + $0xe0] sm:$0xff]
      %v5099 = vld [vmem:[#allocation11 + $0xe8] sm:$0xff]
      %v5100 = vld [vmem:[#allocation11 + $0xf0] sm:$0xff]
      %v5101 = vld [vmem:[#allocation11 + $0xf8] sm:$0xff]
      %v5102 = vld [vmem:[#allocation11 + $0x100] sm:$0xff]
      %v5103 = vld [vmem:[#allocation11 + $0x108] sm:$0xff]
      %v5104 = vld [vmem:[#allocation11 + $0x110] sm:$0xff]
      %v5105 = vld [vmem:[#allocation11 + $0x118] sm:$0xff]
      %v5106 = vld [vmem:[#allocation11 + $0x120] sm:$0xff]
      %v5107 = vld [vmem:[#allocation11 + $0x128] sm:$0xff]
      %v5108 = vld [vmem:[#allocation11 + $0x130] sm:$0xff]
      %v5109 = vld [vmem:[#allocation11 + $0x138] sm:$0xff]
      %v5110 = vld [vmem:[#allocation11 + $0x140] sm:$0xff]
      %v5111 = vld [vmem:[#allocation11 + $0x148] sm:$0xff]
      %v5112 = vld [vmem:[#allocation11 + $0x150] sm:$0xff]
      %v5113 = vld [vmem:[#allocation11 + $0x158] sm:$0xff]
      %v5114 = vld [vmem:[#allocation11 + $0x160] sm:$0xff]
      %v5115 = vld [vmem:[#allocation11 + $0x168] sm:$0xff]
      %v5116 = vld [vmem:[#allocation11 + $0x170] sm:$0xff]
      %v5117 = vld [vmem:[#allocation11 + $0x178] sm:$0xff]
      %v5118 = vld [vmem:[#allocation11 + $0x180] sm:$0xff]
      %v5119 = vld [vmem:[#allocation11 + $0x188] sm:$0xff]
      %v5120 = vld [vmem:[#allocation11 + $0x190] sm:$0xff]
      %v5121 = vld [vmem:[#allocation11 + $0x198] sm:$0xff]
      %v5122 = vld [vmem:[#allocation11 + $0x1a0] sm:$0xff]
      %v5123 = vld [vmem:[#allocation11 + $0x1a8] sm:$0xff]
      %v5124 = vld [vmem:[#allocation11 + $0x1b0] sm:$0xff]
      %v5125 = vld [vmem:[#allocation11 + $0x1b8] sm:$0xff]
      %v5126 = vld [vmem:[#allocation11 + $0x1c0] sm:$0xff]
      %v5127 = vld [vmem:[#allocation11 + $0x1c8] sm:$0xff]
      %v5128 = vld [vmem:[#allocation11 + $0x1d0] sm:$0xff]
      %v5129 = vld [vmem:[#allocation11 + $0x1d8] sm:$0xff]
      %v5130 = vld [vmem:[#allocation11 + $0x1e0] sm:$0xff]
      %v5131 = vld [vmem:[#allocation11 + $0x1e8] sm:$0xff]
      %v5132 = vld [vmem:[#allocation11 + $0x1f0] sm:$0xff]
      %v5133 = vld [vmem:[#allocation11 + $0x1f8] sm:$0xff]
      %v5134 = vld [vmem:[%s7] sm:$0xf]
      %v5136 = vlaneseq
      %v5137 = vshrl.u32 %v5136, 7
      %v5138 = vsub.s32 0, %v5137
      %v5139 = vrot.slane %v5134, %v5138
      %v5140 = vlaneseq
      %v5141 = vshrl.u32 %v5140, 7
      %v5142 = vsub.s32 1, %v5141
      %v5143 = vrot.slane %v5134, %v5142
      %v5144 = vlaneseq
      %v5145 = vshrl.u32 %v5144, 7
      %v5146 = vsub.s32 2, %v5145
      %v5147 = vrot.slane %v5134, %v5146
      %v5148 = vlaneseq
      %v5149 = vshrl.u32 %v5148, 7
      %v5150 = vsub.s32 3, %v5149
      %v5151 = vrot.slane %v5134, %v5150
      %v5157 = vunpack.c.l.b16 %v5069
      %v5158 = vunpack.c.h.b16 %v5069
      %v5159 = vpack.c.b16 %v5157, %v5157
      %v5160 = vpack.c.b16 %v5158, %v5158
      %v5227 = vunpack.c.l.b16 %v5070
      %v5228 = vunpack.c.h.b16 %v5070
      %v5229 = vunpack.c.l.b16 %v5071
      %v5230 = vunpack.c.h.b16 %v5071
      %v5231 = vunpack.c.l.b16 %v5072
      %v5232 = vunpack.c.h.b16 %v5072
      %v5233 = vunpack.c.l.b16 %v5073
      %v5234 = vunpack.c.h.b16 %v5073
      %v5235 = vunpack.c.l.b16 %v5074
      %v5236 = vunpack.c.h.b16 %v5074
      %v5237 = vunpack.c.l.b16 %v5075
      %v5238 = vunpack.c.h.b16 %v5075
      %v5239 = vunpack.c.l.b16 %v5076
      %v5240 = vunpack.c.h.b16 %v5076
      %v5241 = vunpack.c.l.b16 %v5077
      %v5242 = vunpack.c.h.b16 %v5077
      %v5243 = vunpack.c.l.b16 %v5078
      %v5244 = vunpack.c.h.b16 %v5078
      %v5245 = vunpack.c.l.b16 %v5079
      %v5246 = vunpack.c.h.b16 %v5079
      %v5247 = vunpack.c.l.b16 %v5080
      %v5248 = vunpack.c.h.b16 %v5080
      %v5249 = vunpack.c.l.b16 %v5081
      %v5250 = vunpack.c.h.b16 %v5081
      %v5251 = vunpack.c.l.b16 %v5082
      %v5252 = vunpack.c.h.b16 %v5082
      %v5253 = vunpack.c.l.b16 %v5083
      %v5254 = vunpack.c.h.b16 %v5083
      %v5255 = vunpack.c.l.b16 %v5084
      %v5256 = vunpack.c.h.b16 %v5084
      %v5257 = vunpack.c.l.b16 %v5085
      %v5258 = vunpack.c.h.b16 %v5085
      %v5259 = vunpack.c.l.b16 %v5086
      %v5260 = vunpack.c.h.b16 %v5086
      %v5261 = vunpack.c.l.b16 %v5087
      %v5262 = vunpack.c.h.b16 %v5087
      %v5263 = vunpack.c.l.b16 %v5088
      %v5264 = vunpack.c.h.b16 %v5088
      %v5265 = vunpack.c.l.b16 %v5089
      %v5266 = vunpack.c.h.b16 %v5089
      %v5267 = vunpack.c.l.b16 %v5090
      %v5268 = vunpack.c.h.b16 %v5090
      %v5269 = vunpack.c.l.b16 %v5091
      %v5270 = vunpack.c.h.b16 %v5091
      %v5271 = vunpack.c.l.b16 %v5092
      %v5272 = vunpack.c.h.b16 %v5092
      %v5273 = vunpack.c.l.b16 %v5093
      %v5274 = vunpack.c.h.b16 %v5093
      %v5275 = vunpack.c.l.b16 %v5094
      %v5276 = vunpack.c.h.b16 %v5094
      %v5277 = vunpack.c.l.b16 %v5095
      %v5278 = vunpack.c.h.b16 %v5095
      %v5279 = vunpack.c.l.b16 %v5096
      %v5280 = vunpack.c.h.b16 %v5096
      %v5281 = vunpack.c.l.b16 %v5097
      %v5282 = vunpack.c.h.b16 %v5097
      %v5283 = vunpack.c.l.b16 %v5098
      %v5284 = vunpack.c.h.b16 %v5098
      %v5285 = vunpack.c.l.b16 %v5099
      %v5286 = vunpack.c.h.b16 %v5099
      %v5287 = vunpack.c.l.b16 %v5100
      %v5288 = vunpack.c.h.b16 %v5100
      %v5289 = vunpack.c.l.b16 %v5101
      %v5290 = vunpack.c.h.b16 %v5101
      %v5291 = vunpack.c.l.b16 %v5102
      %v5292 = vunpack.c.h.b16 %v5102
      %v5293 = vunpack.c.l.b16 %v5103
      %v5294 = vunpack.c.h.b16 %v5103
      %v5295 = vunpack.c.l.b16 %v5104
      %v5296 = vunpack.c.h.b16 %v5104
      %v5297 = vunpack.c.l.b16 %v5105
      %v5298 = vunpack.c.h.b16 %v5105
      %v5299 = vunpack.c.l.b16 %v5106
      %v5300 = vunpack.c.h.b16 %v5106
      %v5301 = vunpack.c.l.b16 %v5107
      %v5302 = vunpack.c.h.b16 %v5107
      %v5303 = vunpack.c.l.b16 %v5108
      %v5304 = vunpack.c.h.b16 %v5108
      %v5305 = vunpack.c.l.b16 %v5109
      %v5306 = vunpack.c.h.b16 %v5109
      %v5307 = vunpack.c.l.b16 %v5110
      %v5308 = vunpack.c.h.b16 %v5110
      %v5309 = vunpack.c.l.b16 %v5111
      %v5310 = vunpack.c.h.b16 %v5111
      %v5311 = vunpack.c.l.b16 %v5112
      %v5312 = vunpack.c.h.b16 %v5112
      %v5313 = vunpack.c.l.b16 %v5113
      %v5314 = vunpack.c.h.b16 %v5113
      %v5315 = vunpack.c.l.b16 %v5114
      %v5316 = vunpack.c.h.b16 %v5114
      %v5317 = vunpack.c.l.b16 %v5115
      %v5318 = vunpack.c.h.b16 %v5115
      %v5319 = vunpack.c.l.b16 %v5116
      %v5320 = vunpack.c.h.b16 %v5116
      %v5321 = vunpack.c.l.b16 %v5117
      %v5322 = vunpack.c.h.b16 %v5117
      %v5323 = vunpack.c.l.b16 %v5118
      %v5324 = vunpack.c.h.b16 %v5118
      %v5325 = vunpack.c.l.b16 %v5119
      %v5326 = vunpack.c.h.b16 %v5119
      %v5327 = vunpack.c.l.b16 %v5120
      %v5328 = vunpack.c.h.b16 %v5120
      %v5329 = vunpack.c.l.b16 %v5121
      %v5330 = vunpack.c.h.b16 %v5121
      %v5331 = vunpack.c.l.b16 %v5122
      %v5332 = vunpack.c.h.b16 %v5122
      %v5333 = vunpack.c.l.b16 %v5123
      %v5334 = vunpack.c.h.b16 %v5123
      %v5335 = vunpack.c.l.b16 %v5124
      %v5336 = vunpack.c.h.b16 %v5124
      %v5337 = vunpack.c.l.b16 %v5125
      %v5338 = vunpack.c.h.b16 %v5125
      %v5339 = vunpack.c.l.b16 %v5126
      %v5340 = vunpack.c.h.b16 %v5126
      %v5341 = vunpack.c.l.b16 %v5127
      %v5342 = vunpack.c.h.b16 %v5127
      %v5343 = vunpack.c.l.b16 %v5128
      %v5344 = vunpack.c.h.b16 %v5128
      %v5345 = vunpack.c.l.b16 %v5129
      %v5346 = vunpack.c.h.b16 %v5129
      %v5347 = vunpack.c.l.b16 %v5130
      %v5348 = vunpack.c.h.b16 %v5130
      %v5349 = vunpack.c.l.b16 %v5131
      %v5350 = vunpack.c.h.b16 %v5131
      %v5351 = vunpack.c.l.b16 %v5132
      %v5352 = vunpack.c.h.b16 %v5132
      %v5353 = vunpack.c.l.b16 %v5133
      %v5354 = vunpack.c.h.b16 %v5133
      %v5355 = vpack.c.b16 %v5231, %v5227
      %v5356 = vpack.c.b16 %v5232, %v5228
      %v5357 = vpack.c.b16 %v5233, %v5229
      %v5358 = vpack.c.b16 %v5234, %v5230
      %v5359 = vpack.c.b16 %v5239, %v5235
      %v5360 = vpack.c.b16 %v5240, %v5236
      %v5361 = vpack.c.b16 %v5241, %v5237
      %v5362 = vpack.c.b16 %v5242, %v5238
      %v5363 = vpack.c.b16 %v5247, %v5243
      %v5364 = vpack.c.b16 %v5248, %v5244
      %v5365 = vpack.c.b16 %v5249, %v5245
      %v5366 = vpack.c.b16 %v5250, %v5246
      %v5367 = vpack.c.b16 %v5255, %v5251
      %v5368 = vpack.c.b16 %v5256, %v5252
      %v5369 = vpack.c.b16 %v5257, %v5253
      %v5370 = vpack.c.b16 %v5258, %v5254
      %v5371 = vpack.c.b16 %v5263, %v5259
      %v5372 = vpack.c.b16 %v5264, %v5260
      %v5373 = vpack.c.b16 %v5265, %v5261
      %v5374 = vpack.c.b16 %v5266, %v5262
      %v5375 = vpack.c.b16 %v5271, %v5267
      %v5376 = vpack.c.b16 %v5272, %v5268
      %v5377 = vpack.c.b16 %v5273, %v5269
      %v5378 = vpack.c.b16 %v5274, %v5270
      %v5379 = vpack.c.b16 %v5279, %v5275
      %v5380 = vpack.c.b16 %v5280, %v5276
      %v5381 = vpack.c.b16 %v5281, %v5277
      %v5382 = vpack.c.b16 %v5282, %v5278
      %v5383 = vpack.c.b16 %v5287, %v5283
      %v5384 = vpack.c.b16 %v5288, %v5284
      %v5385 = vpack.c.b16 %v5289, %v5285
      %v5386 = vpack.c.b16 %v5290, %v5286
      %v5387 = vpack.c.b16 %v5295, %v5291
      %v5388 = vpack.c.b16 %v5296, %v5292
      %v5389 = vpack.c.b16 %v5297, %v5293
      %v5390 = vpack.c.b16 %v5298, %v5294
      %v5391 = vpack.c.b16 %v5303, %v5299
      %v5392 = vpack.c.b16 %v5304, %v5300
      %v5393 = vpack.c.b16 %v5305, %v5301
      %v5394 = vpack.c.b16 %v5306, %v5302
      %v5395 = vpack.c.b16 %v5311, %v5307
      %v5396 = vpack.c.b16 %v5312, %v5308
      %v5397 = vpack.c.b16 %v5313, %v5309
      %v5398 = vpack.c.b16 %v5314, %v5310
      %v5399 = vpack.c.b16 %v5319, %v5315
      %v5400 = vpack.c.b16 %v5320, %v5316
      %v5401 = vpack.c.b16 %v5321, %v5317
      %v5402 = vpack.c.b16 %v5322, %v5318
      %v5403 = vpack.c.b16 %v5327, %v5323
      %v5404 = vpack.c.b16 %v5328, %v5324
      %v5405 = vpack.c.b16 %v5329, %v5325
      %v5406 = vpack.c.b16 %v5330, %v5326
      %v5407 = vpack.c.b16 %v5335, %v5331
      %v5408 = vpack.c.b16 %v5336, %v5332
      %v5409 = vpack.c.b16 %v5337, %v5333
      %v5410 = vpack.c.b16 %v5338, %v5334
      %v5411 = vpack.c.b16 %v5343, %v5339
      %v5412 = vpack.c.b16 %v5344, %v5340
      %v5413 = vpack.c.b16 %v5345, %v5341
      %v5414 = vpack.c.b16 %v5346, %v5342
      %v5415 = vpack.c.b16 %v5351, %v5347
      %v5416 = vpack.c.b16 %v5352, %v5348
      %v5417 = vpack.c.b16 %v5353, %v5349
      %v5418 = vpack.c.b16 %v5354, %v5350
      %5483 = vmatprep.subr.bf16.mxu0 %v5356
      %5484 = vmatpush1.bf16.msra.mxu0 %v5355
      %5485 = vmatprep.subr.bf16.mxu0 %v5360
      %5486 = vmatpush1.bf16.msra.mxu0 %v5359
      %5487 = vmatprep.subr.bf16.mxu0 %v5364
      %5488 = vmatpush1.bf16.msra.mxu0 %v5363
      %5489 = vmatprep.subr.bf16.mxu0 %v5368
      %5490 = vmatpush1.bf16.msra.mxu0 %v5367
      %5491 = vmatprep.subr.bf16.mxu0 %v5372
      %5492 = vmatpush1.bf16.msra.mxu0 %v5371
      %5493 = vmatprep.subr.bf16.mxu0 %v5376
      %5494 = vmatpush1.bf16.msra.mxu0 %v5375
      %5495 = vmatprep.subr.bf16.mxu0 %v5380
      %5496 = vmatpush1.bf16.msra.mxu0 %v5379
      %5497 = vmatprep.subr.bf16.mxu0 %v5384
      %5498 = vmatpush1.bf16.msra.mxu0 %v5383
      %5499 = vmatprep.subr.bf16.mxu0 %v5388
      %5500 = vmatpush1.bf16.msra.mxu0 %v5387
      %5501 = vmatprep.subr.bf16.mxu0 %v5392
      %5502 = vmatpush1.bf16.msra.mxu0 %v5391
      %5503 = vmatprep.subr.bf16.mxu0 %v5396
      %5504 = vmatpush1.bf16.msra.mxu0 %v5395
      %5505 = vmatprep.subr.bf16.mxu0 %v5400
      %5506 = vmatpush1.bf16.msra.mxu0 %v5399
      %5507 = vmatprep.subr.bf16.mxu0 %v5404
      %5508 = vmatpush1.bf16.msra.mxu0 %v5403
      %5509 = vmatprep.subr.bf16.mxu0 %v5408
      %5510 = vmatpush1.bf16.msra.mxu0 %v5407
      %5511 = vmatprep.subr.bf16.mxu0 %v5412
      %5512 = vmatpush1.bf16.msra.mxu0 %v5411
      %5513 = vmatprep.subr.bf16.mxu0 %v5416
      %5514 = vmatpush1.bf16.msra.mxu0 %v5415
      %5515 = vmatprep.mubr.bf16.mxu0 %v5160
      %5516 = vmatmul.mubr.bf16.gmra.mrb[0].mxu0 %v5159
      %v5517 = vpop.f32.mrb[0].mxu0
      %v5518 = vadd.f32 %v5139, %v5517
      %v5519 = vpop.f32.mrb[0].mxu0
      %v5520 = vadd.f32 %v5143, %v5519
      %v5521 = vpop.f32.mrb[0].mxu0
      %v5522 = vpop.f32.mrb[0].mxu0
      %5523 = vdwg.mxu0
      %5524 = vmatprep.subr.bf16.mxu0 %v5358
      %5525 = vmatpush1.bf16.msra.mxu0 %v5357
      %5526 = vmatprep.subr.bf16.mxu0 %v5362
      %5527 = vmatpush1.bf16.msra.mxu0 %v5361
      %5528 = vmatprep.subr.bf16.mxu0 %v5366
      %5529 = vmatpush1.bf16.msra.mxu0 %v5365
      %5530 = vmatprep.subr.bf16.mxu0 %v5370
      %5531 = vmatpush1.bf16.msra.mxu0 %v5369
      %5532 = vmatprep.subr.bf16.mxu0 %v5374
      %5533 = vmatpush1.bf16.msra.mxu0 %v5373
      %5534 = vmatprep.subr.bf16.mxu0 %v5378
      %5535 = vmatpush1.bf16.msra.mxu0 %v5377
      %5536 = vmatprep.subr.bf16.mxu0 %v5382
      %5537 = vmatpush1.bf16.msra.mxu0 %v5381
      %5538 = vmatprep.subr.bf16.mxu0 %v5386
      %5539 = vmatpush1.bf16.msra.mxu0 %v5385
      %5540 = vmatprep.subr.bf16.mxu0 %v5390
      %5541 = vmatpush1.bf16.msra.mxu0 %v5389
      %5542 = vmatprep.subr.bf16.mxu0 %v5394
      %5543 = vmatpush1.bf16.msra.mxu0 %v5393
      %5544 = vmatprep.subr.bf16.mxu0 %v5398
      %5545 = vmatpush1.bf16.msra.mxu0 %v5397
      %5546 = vmatprep.subr.bf16.mxu0 %v5402
      %5547 = vmatpush1.bf16.msra.mxu0 %v5401
      %5548 = vmatprep.subr.bf16.mxu0 %v5406
      %5549 = vmatpush1.bf16.msra.mxu0 %v5405
      %5550 = vmatprep.subr.bf16.mxu0 %v5410
      %5551 = vmatpush1.bf16.msra.mxu0 %v5409
      %5552 = vmatprep.subr.bf16.mxu0 %v5414
      %5553 = vmatpush1.bf16.msra.mxu0 %v5413
      %5554 = vmatprep.subr.bf16.mxu0 %v5418
      %5555 = vmatpush1.bf16.msra.mxu0 %v5417
      %5556 = vmatprep.mubr.bf16.mxu0 %v5160
      %5557 = vmatmul.mubr.bf16.gmra.mrb[0].mxu0 %v5159
      %v5558 = vpop.f32.mrb[0].mxu0
      %v5559 = vadd.f32 %v5147, %v5558
      %v5560 = vpop.f32.mrb[0].mxu0
      %v5561 = vadd.f32 %v5151, %v5560
      %v5562 = vpop.f32.mrb[0].mxu0
      %v5563 = vpop.f32.mrb[0].mxu0
      %5564 = vdwg.mxu0
      %v5565 = vld [vmem:[%s1319] sm:$0xff]
      %v5566 = vxor.u32 %v5518, 2147483648
      %v5567 = vmul.f32 %v5566, 1.442695
      %v5568 = vpow.pop %v5567
      %v5569 = vadd.f32 %v5568, 1.0
      %v5570 = vrcp.pop %v5569
      %v5571 = vmul.f32 1.0, %v5570
      %v5572 = vxor.u32 %v5520, 2147483648
      %v5573 = vmul.f32 %v5572, 1.442695
      %v5574 = vpow.pop %v5573
      %v5575 = vadd.f32 %v5574, 1.0
      %v5576 = vrcp.pop %v5575
      %v5577 = vmul.f32 1.0, %v5576
      %v5578 = vtanh.pop %v5559
      %v5579 = vxor.u32 %v5561, 2147483648
      %v5580 = vmul.f32 %v5579, 1.442695
      %v5581 = vpow.pop %v5580
      %v5582 = vadd.f32 %v5581, 1.0
      %v5583 = vrcp.pop %v5582
      %v5584 = vmul.f32 1.0, %v5583
      %v5585 = vmul.f32 %v5577, %v5565
      %v5586 = vmul.f32 %v5571, %v5578
      %v5587 = vadd.f32 %v5585, %v5586
      %v5588 = vtanh.pop %v5587
      %v5589 = vmul.f32 %v5584, %v5588
      %5590 = vst [vmem:[%s1319] sm:$0xff] %v5587
      %v5591 = vpack.c.bf16 %v5589, %v5589
      %5592 = vst [vmem:[#allocation2 + $0x4] sm:$0xf] %v5591
      %s5593 = sadd.s32 %s78, 6
      %v5594 = vstv %s5593
      %vm5595 = vcmp.eq.s32.totalorder %v508, %v5594
      %v5596 = vld [vmem:[%s8] sm:$0xff]
      %v5597 = vsel %vm5595, 1, 0
      %5598 = vset.pattern.permute.xlu0 0
      %5599 = vperm.xlu0 %5598, %v5597
      %v5600 = vpop.permute.xlu0 %5599
      %vm5601 = vcmp.eq.s32.totalorder %v5600, 1
      %v5602 = vsel %vm5601, %v5589, %v5596
      %5603 = vst [vmem:[%s8] sm:$0xff] %v5602
      %v5604 = vld [vmem:[#allocation2] sm:$0xf]
      %s5605 = smul.u32 6, 4
      %s5606 = smul.addr %s5605, 8
      %s5607 = scalar_lea.vmem [#allocation4], %s5606
      %v5608 = vld [vmem:[%s5607] sm:$0xff]
      %v5609 = vld [vmem:[%s5607 + $0x8] sm:$0xff]
      %v5610 = vld [vmem:[%s5607 + $0x10] sm:$0xff]
      %v5611 = vld [vmem:[%s5607 + $0x18] sm:$0xff]
      %v5612 = vld [vmem:[#allocation9] sm:$0xff]
      %v5613 = vld [vmem:[#allocation9 + $0x8] sm:$0xff]
      %v5614 = vld [vmem:[#allocation9 + $0x10] sm:$0xff]
      %v5615 = vld [vmem:[#allocation9 + $0x18] sm:$0xff]
      %v5616 = vld [vmem:[#allocation9 + $0x20] sm:$0xff]
      %v5617 = vld [vmem:[#allocation9 + $0x28] sm:$0xff]
      %v5618 = vld [vmem:[#allocation9 + $0x30] sm:$0xff]
      %v5619 = vld [vmem:[#allocation9 + $0x38] sm:$0xff]
      %v5620 = vld [vmem:[#allocation9 + $0x40] sm:$0xff]
      %v5621 = vld [vmem:[#allocation9 + $0x48] sm:$0xff]
      %v5622 = vld [vmem:[#allocation9 + $0x50] sm:$0xff]
      %v5623 = vld [vmem:[#allocation9 + $0x58] sm:$0xff]
      %v5624 = vld [vmem:[#allocation9 + $0x60] sm:$0xff]
      %v5625 = vld [vmem:[#allocation9 + $0x68] sm:$0xff]
      %v5626 = vld [vmem:[#allocation9 + $0x70] sm:$0xff]
      %v5627 = vld [vmem:[#allocation9 + $0x78] sm:$0xff]
      %v5628 = vld [vmem:[#allocation9 + $0x80] sm:$0xff]
      %v5629 = vld [vmem:[#allocation9 + $0x88] sm:$0xff]
      %v5630 = vld [vmem:[#allocation9 + $0x90] sm:$0xff]
      %v5631 = vld [vmem:[#allocation9 + $0x98] sm:$0xff]
      %v5632 = vld [vmem:[#allocation9 + $0xa0] sm:$0xff]
      %v5633 = vld [vmem:[#allocation9 + $0xa8] sm:$0xff]
      %v5634 = vld [vmem:[#allocation9 + $0xb0] sm:$0xff]
      %v5635 = vld [vmem:[#allocation9 + $0xb8] sm:$0xff]
      %v5636 = vld [vmem:[#allocation9 + $0xc0] sm:$0xff]
      %v5637 = vld [vmem:[#allocation9 + $0xc8] sm:$0xff]
      %v5638 = vld [vmem:[#allocation9 + $0xd0] sm:$0xff]
      %v5639 = vld [vmem:[#allocation9 + $0xd8] sm:$0xff]
      %v5640 = vld [vmem:[#allocation9 + $0xe0] sm:$0xff]
      %v5641 = vld [vmem:[#allocation9 + $0xe8] sm:$0xff]
      %v5642 = vld [vmem:[#allocation9 + $0xf0] sm:$0xff]
      %v5643 = vld [vmem:[#allocation9 + $0xf8] sm:$0xff]
      %v5676 = vunpack.c.l.b16 %v5612
      %v5677 = vunpack.c.h.b16 %v5612
      %v5678 = vunpack.c.l.b16 %v5613
      %v5679 = vunpack.c.h.b16 %v5613
      %v5680 = vunpack.c.l.b16 %v5614
      %v5681 = vunpack.c.h.b16 %v5614
      %v5682 = vunpack.c.l.b16 %v5615
      %v5683 = vunpack.c.h.b16 %v5615
      %v5684 = vunpack.c.l.b16 %v5616
      %v5685 = vunpack.c.h.b16 %v5616
      %v5686 = vunpack.c.l.b16 %v5617
      %v5687 = vunpack.c.h.b16 %v5617
      %v5688 = vunpack.c.l.b16 %v5618
      %v5689 = vunpack.c.h.b16 %v5618
      %v5690 = vunpack.c.l.b16 %v5619
      %v5691 = vunpack.c.h.b16 %v5619
      %v5692 = vunpack.c.l.b16 %v5620
      %v5693 = vunpack.c.h.b16 %v5620
      %v5694 = vunpack.c.l.b16 %v5621
      %v5695 = vunpack.c.h.b16 %v5621
      %v5696 = vunpack.c.l.b16 %v5622
      %v5697 = vunpack.c.h.b16 %v5622
      %v5698 = vunpack.c.l.b16 %v5623
      %v5699 = vunpack.c.h.b16 %v5623
      %v5700 = vunpack.c.l.b16 %v5624
      %v5701 = vunpack.c.h.b16 %v5624
      %v5702 = vunpack.c.l.b16 %v5625
      %v5703 = vunpack.c.h.b16 %v5625
      %v5704 = vunpack.c.l.b16 %v5626
      %v5705 = vunpack.c.h.b16 %v5626
      %v5706 = vunpack.c.l.b16 %v5627
      %v5707 = vunpack.c.h.b16 %v5627
      %v5708 = vunpack.c.l.b16 %v5628
      %v5709 = vunpack.c.h.b16 %v5628
      %v5710 = vunpack.c.l.b16 %v5629
      %v5711 = vunpack.c.h.b16 %v5629
      %v5712 = vunpack.c.l.b16 %v5630
      %v5713 = vunpack.c.h.b16 %v5630
      %v5714 = vunpack.c.l.b16 %v5631
      %v5715 = vunpack.c.h.b16 %v5631
      %v5716 = vunpack.c.l.b16 %v5632
      %v5717 = vunpack.c.h.b16 %v5632
      %v5718 = vunpack.c.l.b16 %v5633
      %v5719 = vunpack.c.h.b16 %v5633
      %v5720 = vunpack.c.l.b16 %v5634
      %v5721 = vunpack.c.h.b16 %v5634
      %v5722 = vunpack.c.l.b16 %v5635
      %v5723 = vunpack.c.h.b16 %v5635
      %v5724 = vunpack.c.l.b16 %v5636
      %v5725 = vunpack.c.h.b16 %v5636
      %v5726 = vunpack.c.l.b16 %v5637
      %v5727 = vunpack.c.h.b16 %v5637
      %v5728 = vunpack.c.l.b16 %v5638
      %v5729 = vunpack.c.h.b16 %v5638
      %v5730 = vunpack.c.l.b16 %v5639
      %v5731 = vunpack.c.h.b16 %v5639
      %v5732 = vunpack.c.l.b16 %v5640
      %v5733 = vunpack.c.h.b16 %v5640
      %v5734 = vunpack.c.l.b16 %v5641
      %v5735 = vunpack.c.h.b16 %v5641
      %v5736 = vunpack.c.l.b16 %v5642
      %v5737 = vunpack.c.h.b16 %v5642
      %v5738 = vunpack.c.l.b16 %v5643
      %v5739 = vunpack.c.h.b16 %v5643
      %v5740 = vpack.c.b16 %v5680, %v5676
      %v5741 = vpack.c.b16 %v5681, %v5677
      %v5742 = vpack.c.b16 %v5682, %v5678
      %v5743 = vpack.c.b16 %v5683, %v5679
      %v5744 = vpack.c.b16 %v5688, %v5684
      %v5745 = vpack.c.b16 %v5689, %v5685
      %v5746 = vpack.c.b16 %v5690, %v5686
      %v5747 = vpack.c.b16 %v5691, %v5687
      %v5748 = vpack.c.b16 %v5696, %v5692
      %v5749 = vpack.c.b16 %v5697, %v5693
      %v5750 = vpack.c.b16 %v5698, %v5694
      %v5751 = vpack.c.b16 %v5699, %v5695
      %v5752 = vpack.c.b16 %v5704, %v5700
      %v5753 = vpack.c.b16 %v5705, %v5701
      %v5754 = vpack.c.b16 %v5706, %v5702
      %v5755 = vpack.c.b16 %v5707, %v5703
      %v5756 = vpack.c.b16 %v5712, %v5708
      %v5757 = vpack.c.b16 %v5713, %v5709
      %v5758 = vpack.c.b16 %v5714, %v5710
      %v5759 = vpack.c.b16 %v5715, %v5711
      %v5760 = vpack.c.b16 %v5720, %v5716
      %v5761 = vpack.c.b16 %v5721, %v5717
      %v5762 = vpack.c.b16 %v5722, %v5718
      %v5763 = vpack.c.b16 %v5723, %v5719
      %v5764 = vpack.c.b16 %v5728, %v5724
      %v5765 = vpack.c.b16 %v5729, %v5725
      %v5766 = vpack.c.b16 %v5730, %v5726
      %v5767 = vpack.c.b16 %v5731, %v5727
      %v5768 = vpack.c.b16 %v5736, %v5732
      %v5769 = vpack.c.b16 %v5737, %v5733
      %v5770 = vpack.c.b16 %v5738, %v5734
      %v5771 = vpack.c.b16 %v5739, %v5735
      %5804 = vmatprep.subr.bf16.mxu0 %v5741
      %5805 = vmatpush1.bf16.msra.mxu0 %v5740
      %5806 = vmatprep.subr.bf16.mxu0 %v5745
      %5807 = vmatpush1.bf16.msra.mxu0 %v5744
      %5808 = vmatprep.subr.bf16.mxu0 %v5749
      %5809 = vmatpush1.bf16.msra.mxu0 %v5748
      %5810 = vmatprep.subr.bf16.mxu0 %v5753
      %5811 = vmatpush1.bf16.msra.mxu0 %v5752
      %5812 = vmatprep.subr.bf16.mxu0 %v5757
      %5813 = vmatpush1.bf16.msra.mxu0 %v5756
      %5814 = vmatprep.subr.bf16.mxu0 %v5761
      %5815 = vmatpush1.bf16.msra.mxu0 %v5760
      %5816 = vmatprep.subr.bf16.mxu0 %v5765
      %5817 = vmatpush1.bf16.msra.mxu0 %v5764
      %5818 = vmatprep.subr.bf16.mxu0 %v5769
      %5819 = vmatpush1.bf16.msra.mxu0 %v5768
      %5820 = vmatprep.subr.bf16.mxu0 0
      %5821 = vmatpush1.bf16.msra.mxu0 0
      %5822 = vmatprep.subr.bf16.mxu0 0
      %5823 = vmatpush1.bf16.msra.mxu0 0
      %5824 = vmatprep.subr.bf16.mxu0 0
      %5825 = vmatpush1.bf16.msra.mxu0 0
      %5826 = vmatprep.subr.bf16.mxu0 0
      %5827 = vmatpush1.bf16.msra.mxu0 0
      %5828 = vmatprep.subr.bf16.mxu0 0
      %5829 = vmatpush1.bf16.msra.mxu0 0
      %5830 = vmatprep.subr.bf16.mxu0 0
      %5831 = vmatpush1.bf16.msra.mxu0 0
      %5832 = vmatprep.subr.bf16.mxu0 0
      %5833 = vmatpush1.bf16.msra.mxu0 0
      %5834 = vmatprep.subr.bf16.mxu0 0
      %5835 = vmatpush1.bf16.msra.mxu0 0
      %5836 = vmatprep.mubr.bf16.mxu0 0
      %5837 = vmatmul.mubr.bf16.gmra.mrb[0].mxu0 %v5604
      %v5838 = vpop.f32.mrb[0].mxu0
      %v5839 = vadd.f32 0.0, %v5838
      %v5840 = vpop.f32.mrb[0].mxu0
      %v5841 = vadd.f32 0.0, %v5840
      %v5842 = vpop.f32.mrb[0].mxu0
      %v5843 = vpop.f32.mrb[0].mxu0
      %5844 = vdwg.mxu0
      %5845 = vmatprep.subr.bf16.mxu0 %v5743
      %5846 = vmatpush1.bf16.msra.mxu0 %v5742
      %5847 = vmatprep.subr.bf16.mxu0 %v5747
      %5848 = vmatpush1.bf16.msra.mxu0 %v5746
      %5849 = vmatprep.subr.bf16.mxu0 %v5751
      %5850 = vmatpush1.bf16.msra.mxu0 %v5750
      %5851 = vmatprep.subr.bf16.mxu0 %v5755
      %5852 = vmatpush1.bf16.msra.mxu0 %v5754
      %5853 = vmatprep.subr.bf16.mxu0 %v5759
      %5854 = vmatpush1.bf16.msra.mxu0 %v5758
      %5855 = vmatprep.subr.bf16.mxu0 %v5763
      %5856 = vmatpush1.bf16.msra.mxu0 %v5762
      %5857 = vmatprep.subr.bf16.mxu0 %v5767
      %5858 = vmatpush1.bf16.msra.mxu0 %v5766
      %5859 = vmatprep.subr.bf16.mxu0 %v5771
      %5860 = vmatpush1.bf16.msra.mxu0 %v5770
      %5861 = vmatprep.subr.bf16.mxu0 0
      %5862 = vmatpush1.bf16.msra.mxu0 0
      %5863 = vmatprep.subr.bf16.mxu0 0
      %5864 = vmatpush1.bf16.msra.mxu0 0
      %5865 = vmatprep.subr.bf16.mxu0 0
      %5866 = vmatpush1.bf16.msra.mxu0 0
      %5867 = vmatprep.subr.bf16.mxu0 0
      %5868 = vmatpush1.bf16.msra.mxu0 0
      %5869 = vmatprep.subr.bf16.mxu0 0
      %5870 = vmatpush1.bf16.msra.mxu0 0
      %5871 = vmatprep.subr.bf16.mxu0 0
      %5872 = vmatpush1.bf16.msra.mxu0 0
      %5873 = vmatprep.subr.bf16.mxu0 0
      %5874 = vmatpush1.bf16.msra.mxu0 0
      %5875 = vmatprep.subr.bf16.mxu0 0
      %5876 = vmatpush1.bf16.msra.mxu0 0
      %5877 = vmatprep.mubr.bf16.mxu0 0
      %5878 = vmatmul.mubr.bf16.gmra.mrb[0].mxu0 %v5604
      %v5879 = vpop.f32.mrb[0].mxu0
      %v5880 = vadd.f32 0.0, %v5879
      %v5881 = vpop.f32.mrb[0].mxu0
      %v5882 = vadd.f32 0.0, %v5881
      %v5883 = vpop.f32.mrb[0].mxu0
      %v5884 = vpop.f32.mrb[0].mxu0
      %5885 = vdwg.mxu0
      %v5886 = vadd.f32 %v5608, %v5839
      %v5887 = vadd.f32 %v5609, %v5841
      %v5888 = vadd.f32 %v5610, %v5880
      %v5889 = vadd.f32 %v5611, %v5882
      %v5890 = vld [vmem:[#allocation3] sm:$0xff]
      %v5891 = vxor.u32 %v5886, 2147483648
      %v5892 = vmul.f32 %v5891, 1.442695
      %v5893 = vpow.pop %v5892
      %v5894 = vadd.f32 %v5893, 1.0
      %v5895 = vrcp.pop %v5894
      %v5896 = vmul.f32 1.0, %v5895
      %v5897 = vxor.u32 %v5887, 2147483648
      %v5898 = vmul.f32 %v5897, 1.442695
      %v5899 = vpow.pop %v5898
      %v5900 = vadd.f32 %v5899, 1.0
      %v5901 = vrcp.pop %v5900
      %v5902 = vmul.f32 1.0, %v5901
      %v5903 = vtanh.pop %v5888
      %v5904 = vxor.u32 %v5889, 2147483648
      %v5905 = vmul.f32 %v5904, 1.442695
      %v5906 = vpow.pop %v5905
      %v5907 = vadd.f32 %v5906, 1.0
      %v5908 = vrcp.pop %v5907
      %v5909 = vmul.f32 1.0, %v5908
      %v5910 = vmul.f32 %v5902, %v5890
      %v5911 = vmul.f32 %v5896, %v5903
      %v5912 = vadd.f32 %v5910, %v5911
      %v5913 = vtanh.pop %v5912
      %v5914 = vmul.f32 %v5909, %v5913
      %5915 = vst [vmem:[#allocation3] sm:$0xff] %v5912
      %v5916 = vpack.c.bf16 %v5914, %v5914
      %5917 = vst [vmem:[#allocation2] sm:$0xf] %v5916
      %v5918 = vld [vmem:[#allocation2] sm:$0xff]
      %v5919 = vld [vmem:[#allocation11] sm:$0xff]
      %v5920 = vld [vmem:[#allocation11 + $0x8] sm:$0xff]
      %v5921 = vld [vmem:[#allocation11 + $0x10] sm:$0xff]
      %v5922 = vld [vmem:[#allocation11 + $0x18] sm:$0xff]
      %v5923 = vld [vmem:[#allocation11 + $0x20] sm:$0xff]
      %v5924 = vld [vmem:[#allocation11 + $0x28] sm:$0xff]
      %v5925 = vld [vmem:[#allocation11 + $0x30] sm:$0xff]
      %v5926 = vld [vmem:[#allocation11 + $0x38] sm:$0xff]
      %v5927 = vld [vmem:[#allocation11 + $0x40] sm:$0xff]
      %v5928 = vld [vmem:[#allocation11 + $0x48] sm:$0xff]
      %v5929 = vld [vmem:[#allocation11 + $0x50] sm:$0xff]
      %v5930 = vld [vmem:[#allocation11 + $0x58] sm:$0xff]
      %v5931 = vld [vmem:[#allocation11 + $0x60] sm:$0xff]
      %v5932 = vld [vmem:[#allocation11 + $0x68] sm:$0xff]
      %v5933 = vld [vmem:[#allocation11 + $0x70] sm:$0xff]
      %v5934 = vld [vmem:[#allocation11 + $0x78] sm:$0xff]
      %v5935 = vld [vmem:[#allocation11 + $0x80] sm:$0xff]
      %v5936 = vld [vmem:[#allocation11 + $0x88] sm:$0xff]
      %v5937 = vld [vmem:[#allocation11 + $0x90] sm:$0xff]
      %v5938 = vld [vmem:[#allocation11 + $0x98] sm:$0xff]
      %v5939 = vld [vmem:[#allocation11 + $0xa0] sm:$0xff]
      %v5940 = vld [vmem:[#allocation11 + $0xa8] sm:$0xff]
      %v5941 = vld [vmem:[#allocation11 + $0xb0] sm:$0xff]
      %v5942 = vld [vmem:[#allocation11 + $0xb8] sm:$0xff]
      %v5943 = vld [vmem:[#allocation11 + $0xc0] sm:$0xff]
      %v5944 = vld [vmem:[#allocation11 + $0xc8] sm:$0xff]
      %v5945 = vld [vmem:[#allocation11 + $0xd0] sm:$0xff]
      %v5946 = vld [vmem:[#allocation11 + $0xd8] sm:$0xff]
      %v5947 = vld [vmem:[#allocation11 + $0xe0] sm:$0xff]
      %v5948 = vld [vmem:[#allocation11 + $0xe8] sm:$0xff]
      %v5949 = vld [vmem:[#allocation11 + $0xf0] sm:$0xff]
      %v5950 = vld [vmem:[#allocation11 + $0xf8] sm:$0xff]
      %v5951 = vld [vmem:[#allocation11 + $0x100] sm:$0xff]
      %v5952 = vld [vmem:[#allocation11 + $0x108] sm:$0xff]
      %v5953 = vld [vmem:[#allocation11 + $0x110] sm:$0xff]
      %v5954 = vld [vmem:[#allocation11 + $0x118] sm:$0xff]
      %v5955 = vld [vmem:[#allocation11 + $0x120] sm:$0xff]
      %v5956 = vld [vmem:[#allocation11 + $0x128] sm:$0xff]
      %v5957 = vld [vmem:[#allocation11 + $0x130] sm:$0xff]
      %v5958 = vld [vmem:[#allocation11 + $0x138] sm:$0xff]
      %v5959 = vld [vmem:[#allocation11 + $0x140] sm:$0xff]
      %v5960 = vld [vmem:[#allocation11 + $0x148] sm:$0xff]
      %v5961 = vld [vmem:[#allocation11 + $0x150] sm:$0xff]
      %v5962 = vld [vmem:[#allocation11 + $0x158] sm:$0xff]
      %v5963 = vld [vmem:[#allocation11 + $0x160] sm:$0xff]
      %v5964 = vld [vmem:[#allocation11 + $0x168] sm:$0xff]
      %v5965 = vld [vmem:[#allocation11 + $0x170] sm:$0xff]
      %v5966 = vld [vmem:[#allocation11 + $0x178] sm:$0xff]
      %v5967 = vld [vmem:[#allocation11 + $0x180] sm:$0xff]
      %v5968 = vld [vmem:[#allocation11 + $0x188] sm:$0xff]
      %v5969 = vld [vmem:[#allocation11 + $0x190] sm:$0xff]
      %v5970 = vld [vmem:[#allocation11 + $0x198] sm:$0xff]
      %v5971 = vld [vmem:[#allocation11 + $0x1a0] sm:$0xff]
      %v5972 = vld [vmem:[#allocation11 + $0x1a8] sm:$0xff]
      %v5973 = vld [vmem:[#allocation11 + $0x1b0] sm:$0xff]
      %v5974 = vld [vmem:[#allocation11 + $0x1b8] sm:$0xff]
      %v5975 = vld [vmem:[#allocation11 + $0x1c0] sm:$0xff]
      %v5976 = vld [vmem:[#allocation11 + $0x1c8] sm:$0xff]
      %v5977 = vld [vmem:[#allocation11 + $0x1d0] sm:$0xff]
      %v5978 = vld [vmem:[#allocation11 + $0x1d8] sm:$0xff]
      %v5979 = vld [vmem:[#allocation11 + $0x1e0] sm:$0xff]
      %v5980 = vld [vmem:[#allocation11 + $0x1e8] sm:$0xff]
      %v5981 = vld [vmem:[#allocation11 + $0x1f0] sm:$0xff]
      %v5982 = vld [vmem:[#allocation11 + $0x1f8] sm:$0xff]
      %v5983 = vld [vmem:[%s7] sm:$0xf]
      %v5985 = vlaneseq
      %v5986 = vshrl.u32 %v5985, 7
      %v5987 = vsub.s32 0, %v5986
      %v5988 = vrot.slane %v5983, %v5987
      %v5989 = vlaneseq
      %v5990 = vshrl.u32 %v5989, 7
      %v5991 = vsub.s32 1, %v5990
      %v5992 = vrot.slane %v5983, %v5991
      %v5993 = vlaneseq
      %v5994 = vshrl.u32 %v5993, 7
      %v5995 = vsub.s32 2, %v5994
      %v5996 = vrot.slane %v5983, %v5995
      %v5997 = vlaneseq
      %v5998 = vshrl.u32 %v5997, 7
      %v5999 = vsub.s32 3, %v5998
      %v6000 = vrot.slane %v5983, %v5999
      %v6006 = vunpack.c.l.b16 %v5918
      %v6007 = vunpack.c.h.b16 %v5918
      %v6008 = vpack.c.b16 %v6006, %v6006
      %v6009 = vpack.c.b16 %v6007, %v6007
      %v6076 = vunpack.c.l.b16 %v5919
      %v6077 = vunpack.c.h.b16 %v5919
      %v6078 = vunpack.c.l.b16 %v5920
      %v6079 = vunpack.c.h.b16 %v5920
      %v6080 = vunpack.c.l.b16 %v5921
      %v6081 = vunpack.c.h.b16 %v5921
      %v6082 = vunpack.c.l.b16 %v5922
      %v6083 = vunpack.c.h.b16 %v5922
      %v6084 = vunpack.c.l.b16 %v5923
      %v6085 = vunpack.c.h.b16 %v5923
      %v6086 = vunpack.c.l.b16 %v5924
      %v6087 = vunpack.c.h.b16 %v5924
      %v6088 = vunpack.c.l.b16 %v5925
      %v6089 = vunpack.c.h.b16 %v5925
      %v6090 = vunpack.c.l.b16 %v5926
      %v6091 = vunpack.c.h.b16 %v5926
      %v6092 = vunpack.c.l.b16 %v5927
      %v6093 = vunpack.c.h.b16 %v5927
      %v6094 = vunpack.c.l.b16 %v5928
      %v6095 = vunpack.c.h.b16 %v5928
      %v6096 = vunpack.c.l.b16 %v5929
      %v6097 = vunpack.c.h.b16 %v5929
      %v6098 = vunpack.c.l.b16 %v5930
      %v6099 = vunpack.c.h.b16 %v5930
      %v6100 = vunpack.c.l.b16 %v5931
      %v6101 = vunpack.c.h.b16 %v5931
      %v6102 = vunpack.c.l.b16 %v5932
      %v6103 = vunpack.c.h.b16 %v5932
      %v6104 = vunpack.c.l.b16 %v5933
      %v6105 = vunpack.c.h.b16 %v5933
      %v6106 = vunpack.c.l.b16 %v5934
      %v6107 = vunpack.c.h.b16 %v5934
      %v6108 = vunpack.c.l.b16 %v5935
      %v6109 = vunpack.c.h.b16 %v5935
      %v6110 = vunpack.c.l.b16 %v5936
      %v6111 = vunpack.c.h.b16 %v5936
      %v6112 = vunpack.c.l.b16 %v5937
      %v6113 = vunpack.c.h.b16 %v5937
      %v6114 = vunpack.c.l.b16 %v5938
      %v6115 = vunpack.c.h.b16 %v5938
      %v6116 = vunpack.c.l.b16 %v5939
      %v6117 = vunpack.c.h.b16 %v5939
      %v6118 = vunpack.c.l.b16 %v5940
      %v6119 = vunpack.c.h.b16 %v5940
      %v6120 = vunpack.c.l.b16 %v5941
      %v6121 = vunpack.c.h.b16 %v5941
      %v6122 = vunpack.c.l.b16 %v5942
      %v6123 = vunpack.c.h.b16 %v5942
      %v6124 = vunpack.c.l.b16 %v5943
      %v6125 = vunpack.c.h.b16 %v5943
      %v6126 = vunpack.c.l.b16 %v5944
      %v6127 = vunpack.c.h.b16 %v5944
      %v6128 = vunpack.c.l.b16 %v5945
      %v6129 = vunpack.c.h.b16 %v5945
      %v6130 = vunpack.c.l.b16 %v5946
      %v6131 = vunpack.c.h.b16 %v5946
      %v6132 = vunpack.c.l.b16 %v5947
      %v6133 = vunpack.c.h.b16 %v5947
      %v6134 = vunpack.c.l.b16 %v5948
      %v6135 = vunpack.c.h.b16 %v5948
      %v6136 = vunpack.c.l.b16 %v5949
      %v6137 = vunpack.c.h.b16 %v5949
      %v6138 = vunpack.c.l.b16 %v5950
      %v6139 = vunpack.c.h.b16 %v5950
      %v6140 = vunpack.c.l.b16 %v5951
      %v6141 = vunpack.c.h.b16 %v5951
      %v6142 = vunpack.c.l.b16 %v5952
      %v6143 = vunpack.c.h.b16 %v5952
      %v6144 = vunpack.c.l.b16 %v5953
      %v6145 = vunpack.c.h.b16 %v5953
      %v6146 = vunpack.c.l.b16 %v5954
      %v6147 = vunpack.c.h.b16 %v5954
      %v6148 = vunpack.c.l.b16 %v5955
      %v6149 = vunpack.c.h.b16 %v5955
      %v6150 = vunpack.c.l.b16 %v5956
      %v6151 = vunpack.c.h.b16 %v5956
      %v6152 = vunpack.c.l.b16 %v5957
      %v6153 = vunpack.c.h.b16 %v5957
      %v6154 = vunpack.c.l.b16 %v5958
      %v6155 = vunpack.c.h.b16 %v5958
      %v6156 = vunpack.c.l.b16 %v5959
      %v6157 = vunpack.c.h.b16 %v5959
      %v6158 = vunpack.c.l.b16 %v5960
      %v6159 = vunpack.c.h.b16 %v5960
      %v6160 = vunpack.c.l.b16 %v5961
      %v6161 = vunpack.c.h.b16 %v5961
      %v6162 = vunpack.c.l.b16 %v5962
      %v6163 = vunpack.c.h.b16 %v5962
      %v6164 = vunpack.c.l.b16 %v5963
      %v6165 = vunpack.c.h.b16 %v5963
      %v6166 = vunpack.c.l.b16 %v5964
      %v6167 = vunpack.c.h.b16 %v5964
      %v6168 = vunpack.c.l.b16 %v5965
      %v6169 = vunpack.c.h.b16 %v5965
      %v6170 = vunpack.c.l.b16 %v5966
      %v6171 = vunpack.c.h.b16 %v5966
      %v6172 = vunpack.c.l.b16 %v5967
      %v6173 = vunpack.c.h.b16 %v5967
      %v6174 = vunpack.c.l.b16 %v5968
      %v6175 = vunpack.c.h.b16 %v5968
      %v6176 = vunpack.c.l.b16 %v5969
      %v6177 = vunpack.c.h.b16 %v5969
      %v6178 = vunpack.c.l.b16 %v5970
      %v6179 = vunpack.c.h.b16 %v5970
      %v6180 = vunpack.c.l.b16 %v5971
      %v6181 = vunpack.c.h.b16 %v5971
      %v6182 = vunpack.c.l.b16 %v5972
      %v6183 = vunpack.c.h.b16 %v5972
      %v6184 = vunpack.c.l.b16 %v5973
      %v6185 = vunpack.c.h.b16 %v5973
      %v6186 = vunpack.c.l.b16 %v5974
      %v6187 = vunpack.c.h.b16 %v5974
      %v6188 = vunpack.c.l.b16 %v5975
      %v6189 = vunpack.c.h.b16 %v5975
      %v6190 = vunpack.c.l.b16 %v5976
      %v6191 = vunpack.c.h.b16 %v5976
      %v6192 = vunpack.c.l.b16 %v5977
      %v6193 = vunpack.c.h.b16 %v5977
      %v6194 = vunpack.c.l.b16 %v5978
      %v6195 = vunpack.c.h.b16 %v5978
      %v6196 = vunpack.c.l.b16 %v5979
      %v6197 = vunpack.c.h.b16 %v5979
      %v6198 = vunpack.c.l.b16 %v5980
      %v6199 = vunpack.c.h.b16 %v5980
      %v6200 = vunpack.c.l.b16 %v5981
      %v6201 = vunpack.c.h.b16 %v5981
      %v6202 = vunpack.c.l.b16 %v5982
      %v6203 = vunpack.c.h.b16 %v5982
      %v6204 = vpack.c.b16 %v6080, %v6076
      %v6205 = vpack.c.b16 %v6081, %v6077
      %v6206 = vpack.c.b16 %v6082, %v6078
      %v6207 = vpack.c.b16 %v6083, %v6079
      %v6208 = vpack.c.b16 %v6088, %v6084
      %v6209 = vpack.c.b16 %v6089, %v6085
      %v6210 = vpack.c.b16 %v6090, %v6086
      %v6211 = vpack.c.b16 %v6091, %v6087
      %v6212 = vpack.c.b16 %v6096, %v6092
      %v6213 = vpack.c.b16 %v6097, %v6093
      %v6214 = vpack.c.b16 %v6098, %v6094
      %v6215 = vpack.c.b16 %v6099, %v6095
      %v6216 = vpack.c.b16 %v6104, %v6100
      %v6217 = vpack.c.b16 %v6105, %v6101
      %v6218 = vpack.c.b16 %v6106, %v6102
      %v6219 = vpack.c.b16 %v6107, %v6103
      %v6220 = vpack.c.b16 %v6112, %v6108
      %v6221 = vpack.c.b16 %v6113, %v6109
      %v6222 = vpack.c.b16 %v6114, %v6110
      %v6223 = vpack.c.b16 %v6115, %v6111
      %v6224 = vpack.c.b16 %v6120, %v6116
      %v6225 = vpack.c.b16 %v6121, %v6117
      %v6226 = vpack.c.b16 %v6122, %v6118
      %v6227 = vpack.c.b16 %v6123, %v6119
      %v6228 = vpack.c.b16 %v6128, %v6124
      %v6229 = vpack.c.b16 %v6129, %v6125
      %v6230 = vpack.c.b16 %v6130, %v6126
      %v6231 = vpack.c.b16 %v6131, %v6127
      %v6232 = vpack.c.b16 %v6136, %v6132
      %v6233 = vpack.c.b16 %v6137, %v6133
      %v6234 = vpack.c.b16 %v6138, %v6134
      %v6235 = vpack.c.b16 %v6139, %v6135
      %v6236 = vpack.c.b16 %v6144, %v6140
      %v6237 = vpack.c.b16 %v6145, %v6141
      %v6238 = vpack.c.b16 %v6146, %v6142
      %v6239 = vpack.c.b16 %v6147, %v6143
      %v6240 = vpack.c.b16 %v6152, %v6148
      %v6241 = vpack.c.b16 %v6153, %v6149
      %v6242 = vpack.c.b16 %v6154, %v6150
      %v6243 = vpack.c.b16 %v6155, %v6151
      %v6244 = vpack.c.b16 %v6160, %v6156
      %v6245 = vpack.c.b16 %v6161, %v6157
      %v6246 = vpack.c.b16 %v6162, %v6158
      %v6247 = vpack.c.b16 %v6163, %v6159
      %v6248 = vpack.c.b16 %v6168, %v6164
      %v6249 = vpack.c.b16 %v6169, %v6165
      %v6250 = vpack.c.b16 %v6170, %v6166
      %v6251 = vpack.c.b16 %v6171, %v6167
      %v6252 = vpack.c.b16 %v6176, %v6172
      %v6253 = vpack.c.b16 %v6177, %v6173
      %v6254 = vpack.c.b16 %v6178, %v6174
      %v6255 = vpack.c.b16 %v6179, %v6175
      %v6256 = vpack.c.b16 %v6184, %v6180
      %v6257 = vpack.c.b16 %v6185, %v6181
      %v6258 = vpack.c.b16 %v6186, %v6182
      %v6259 = vpack.c.b16 %v6187, %v6183
      %v6260 = vpack.c.b16 %v6192, %v6188
      %v6261 = vpack.c.b16 %v6193, %v6189
      %v6262 = vpack.c.b16 %v6194, %v6190
      %v6263 = vpack.c.b16 %v6195, %v6191
      %v6264 = vpack.c.b16 %v6200, %v6196
      %v6265 = vpack.c.b16 %v6201, %v6197
      %v6266 = vpack.c.b16 %v6202, %v6198
      %v6267 = vpack.c.b16 %v6203, %v6199
      %6332 = vmatprep.subr.bf16.mxu0 %v6205
      %6333 = vmatpush1.bf16.msra.mxu0 %v6204
      %6334 = vmatprep.subr.bf16.mxu0 %v6209
      %6335 = vmatpush1.bf16.msra.mxu0 %v6208
      %6336 = vmatprep.subr.bf16.mxu0 %v6213
      %6337 = vmatpush1.bf16.msra.mxu0 %v6212
      %6338 = vmatprep.subr.bf16.mxu0 %v6217
      %6339 = vmatpush1.bf16.msra.mxu0 %v6216
      %6340 = vmatprep.subr.bf16.mxu0 %v6221
      %6341 = vmatpush1.bf16.msra.mxu0 %v6220
      %6342 = vmatprep.subr.bf16.mxu0 %v6225
      %6343 = vmatpush1.bf16.msra.mxu0 %v6224
      %6344 = vmatprep.subr.bf16.mxu0 %v6229
      %6345 = vmatpush1.bf16.msra.mxu0 %v6228
      %6346 = vmatprep.subr.bf16.mxu0 %v6233
      %6347 = vmatpush1.bf16.msra.mxu0 %v6232
      %6348 = vmatprep.subr.bf16.mxu0 %v6237
      %6349 = vmatpush1.bf16.msra.mxu0 %v6236
      %6350 = vmatprep.subr.bf16.mxu0 %v6241
      %6351 = vmatpush1.bf16.msra.mxu0 %v6240
      %6352 = vmatprep.subr.bf16.mxu0 %v6245
      %6353 = vmatpush1.bf16.msra.mxu0 %v6244
      %6354 = vmatprep.subr.bf16.mxu0 %v6249
      %6355 = vmatpush1.bf16.msra.mxu0 %v6248
      %6356 = vmatprep.subr.bf16.mxu0 %v6253
      %6357 = vmatpush1.bf16.msra.mxu0 %v6252
      %6358 = vmatprep.subr.bf16.mxu0 %v6257
      %6359 = vmatpush1.bf16.msra.mxu0 %v6256
      %6360 = vmatprep.subr.bf16.mxu0 %v6261
      %6361 = vmatpush1.bf16.msra.mxu0 %v6260
      %6362 = vmatprep.subr.bf16.mxu0 %v6265
      %6363 = vmatpush1.bf16.msra.mxu0 %v6264
      %6364 = vmatprep.mubr.bf16.mxu0 %v6009
      %6365 = vmatmul.mubr.bf16.gmra.mrb[0].mxu0 %v6008
      %v6366 = vpop.f32.mrb[0].mxu0
      %v6367 = vadd.f32 %v5988, %v6366
      %v6368 = vpop.f32.mrb[0].mxu0
      %v6369 = vadd.f32 %v5992, %v6368
      %v6370 = vpop.f32.mrb[0].mxu0
      %v6371 = vpop.f32.mrb[0].mxu0
      %6372 = vdwg.mxu0
      %6373 = vmatprep.subr.bf16.mxu0 %v6207
      %6374 = vmatpush1.bf16.msra.mxu0 %v6206
      %6375 = vmatprep.subr.bf16.mxu0 %v6211
      %6376 = vmatpush1.bf16.msra.mxu0 %v6210
      %6377 = vmatprep.subr.bf16.mxu0 %v6215
      %6378 = vmatpush1.bf16.msra.mxu0 %v6214
      %6379 = vmatprep.subr.bf16.mxu0 %v6219
      %6380 = vmatpush1.bf16.msra.mxu0 %v6218
      %6381 = vmatprep.subr.bf16.mxu0 %v6223
      %6382 = vmatpush1.bf16.msra.mxu0 %v6222
      %6383 = vmatprep.subr.bf16.mxu0 %v6227
      %6384 = vmatpush1.bf16.msra.mxu0 %v6226
      %6385 = vmatprep.subr.bf16.mxu0 %v6231
      %6386 = vmatpush1.bf16.msra.mxu0 %v6230
      %6387 = vmatprep.subr.bf16.mxu0 %v6235
      %6388 = vmatpush1.bf16.msra.mxu0 %v6234
      %6389 = vmatprep.subr.bf16.mxu0 %v6239
      %6390 = vmatpush1.bf16.msra.mxu0 %v6238
      %6391 = vmatprep.subr.bf16.mxu0 %v6243
      %6392 = vmatpush1.bf16.msra.mxu0 %v6242
      %6393 = vmatprep.subr.bf16.mxu0 %v6247
      %6394 = vmatpush1.bf16.msra.mxu0 %v6246
      %6395 = vmatprep.subr.bf16.mxu0 %v6251
      %6396 = vmatpush1.bf16.msra.mxu0 %v6250
      %6397 = vmatprep.subr.bf16.mxu0 %v6255
      %6398 = vmatpush1.bf16.msra.mxu0 %v6254
      %6399 = vmatprep.subr.bf16.mxu0 %v6259
      %6400 = vmatpush1.bf16.msra.mxu0 %v6258
      %6401 = vmatprep.subr.bf16.mxu0 %v6263
      %6402 = vmatpush1.bf16.msra.mxu0 %v6262
      %6403 = vmatprep.subr.bf16.mxu0 %v6267
      %6404 = vmatpush1.bf16.msra.mxu0 %v6266
      %6405 = vmatprep.mubr.bf16.mxu0 %v6009
      %6406 = vmatmul.mubr.bf16.gmra.mrb[0].mxu0 %v6008
      %v6407 = vpop.f32.mrb[0].mxu0
      %v6408 = vadd.f32 %v5996, %v6407
      %v6409 = vpop.f32.mrb[0].mxu0
      %v6410 = vadd.f32 %v6000, %v6409
      %v6411 = vpop.f32.mrb[0].mxu0
      %v6412 = vpop.f32.mrb[0].mxu0
      %6413 = vdwg.mxu0
      %v6414 = vld [vmem:[%s1319] sm:$0xff]
      %v6415 = vxor.u32 %v6367, 2147483648
      %v6416 = vmul.f32 %v6415, 1.442695
      %v6417 = vpow.pop %v6416
      %v6418 = vadd.f32 %v6417, 1.0
      %v6419 = vrcp.pop %v6418
      %v6420 = vmul.f32 1.0, %v6419
      %v6421 = vxor.u32 %v6369, 2147483648
      %v6422 = vmul.f32 %v6421, 1.442695
      %v6423 = vpow.pop %v6422
      %v6424 = vadd.f32 %v6423, 1.0
      %v6425 = vrcp.pop %v6424
      %v6426 = vmul.f32 1.0, %v6425
      %v6427 = vtanh.pop %v6408
      %v6428 = vxor.u32 %v6410, 2147483648
      %v6429 = vmul.f32 %v6428, 1.442695
      %v6430 = vpow.pop %v6429
      %v6431 = vadd.f32 %v6430, 1.0
      %v6432 = vrcp.pop %v6431
      %v6433 = vmul.f32 1.0, %v6432
      %v6434 = vmul.f32 %v6426, %v6414
      %v6435 = vmul.f32 %v6420, %v6427
      %v6436 = vadd.f32 %v6434, %v6435
      %v6437 = vtanh.pop %v6436
      %v6438 = vmul.f32 %v6433, %v6437
      %6439 = vst [vmem:[%s1319] sm:$0xff] %v6436
      %v6440 = vpack.c.bf16 %v6438, %v6438
      %6441 = vst [vmem:[#allocation2 + $0x4] sm:$0xf] %v6440
      %s6442 = sadd.s32 %s78, 7
      %v6443 = vstv %s6442
      %vm6444 = vcmp.eq.s32.totalorder %v508, %v6443
      %v6445 = vld [vmem:[%s8] sm:$0xff]
      %v6446 = vsel %vm6444, 1, 0
      %6447 = vset.pattern.permute.xlu0 0
      %6448 = vperm.xlu0 %6447, %v6446
      %v6449 = vpop.permute.xlu0 %6448
      %vm6450 = vcmp.eq.s32.totalorder %v6449, 1
      %v6451 = vsel %vm6450, %v6438, %v6445
      %6452 = vst [vmem:[%s8] sm:$0xff] %v6451
      %v6453 = vld [vmem:[#allocation2] sm:$0xf]
      %s6454 = smul.u32 7, 4
      %s6455 = smul.addr %s6454, 8
      %s6456 = scalar_lea.vmem [#allocation4], %s6455
      %v6457 = vld [vmem:[%s6456] sm:$0xff]
      %v6458 = vld [vmem:[%s6456 + $0x8] sm:$0xff]
      %v6459 = vld [vmem:[%s6456 + $0x10] sm:$0xff]
      %v6460 = vld [vmem:[%s6456 + $0x18] sm:$0xff]
      %v6461 = vld [vmem:[#allocation9] sm:$0xff]
      %v6462 = vld [vmem:[#allocation9 + $0x8] sm:$0xff]
      %v6463 = vld [vmem:[#allocation9 + $0x10] sm:$0xff]
      %v6464 = vld [vmem:[#allocation9 + $0x18] sm:$0xff]
      %v6465 = vld [vmem:[#allocation9 + $0x20] sm:$0xff]
      %v6466 = vld [vmem:[#allocation9 + $0x28] sm:$0xff]
      %v6467 = vld [vmem:[#allocation9 + $0x30] sm:$0xff]
      %v6468 = vld [vmem:[#allocation9 + $0x38] sm:$0xff]
      %v6469 = vld [vmem:[#allocation9 + $0x40] sm:$0xff]
      %v6470 = vld [vmem:[#allocation9 + $0x48] sm:$0xff]
      %v6471 = vld [vmem:[#allocation9 + $0x50] sm:$0xff]
      %v6472 = vld [vmem:[#allocation9 + $0x58] sm:$0xff]
      %v6473 = vld [vmem:[#allocation9 + $0x60] sm:$0xff]
      %v6474 = vld [vmem:[#allocation9 + $0x68] sm:$0xff]
      %v6475 = vld [vmem:[#allocation9 + $0x70] sm:$0xff]
      %v6476 = vld [vmem:[#allocation9 + $0x78] sm:$0xff]
      %v6477 = vld [vmem:[#allocation9 + $0x80] sm:$0xff]
      %v6478 = vld [vmem:[#allocation9 + $0x88] sm:$0xff]
      %v6479 = vld [vmem:[#allocation9 + $0x90] sm:$0xff]
      %v6480 = vld [vmem:[#allocation9 + $0x98] sm:$0xff]
      %v6481 = vld [vmem:[#allocation9 + $0xa0] sm:$0xff]
      %v6482 = vld [vmem:[#allocation9 + $0xa8] sm:$0xff]
      %v6483 = vld [vmem:[#allocation9 + $0xb0] sm:$0xff]
      %v6484 = vld [vmem:[#allocation9 + $0xb8] sm:$0xff]
      %v6485 = vld [vmem:[#allocation9 + $0xc0] sm:$0xff]
      %v6486 = vld [vmem:[#allocation9 + $0xc8] sm:$0xff]
      %v6487 = vld [vmem:[#allocation9 + $0xd0] sm:$0xff]
      %v6488 = vld [vmem:[#allocation9 + $0xd8] sm:$0xff]
      %v6489 = vld [vmem:[#allocation9 + $0xe0] sm:$0xff]
      %v6490 = vld [vmem:[#allocation9 + $0xe8] sm:$0xff]
      %v6491 = vld [vmem:[#allocation9 + $0xf0] sm:$0xff]
      %v6492 = vld [vmem:[#allocation9 + $0xf8] sm:$0xff]
      %v6525 = vunpack.c.l.b16 %v6461
      %v6526 = vunpack.c.h.b16 %v6461
      %v6527 = vunpack.c.l.b16 %v6462
      %v6528 = vunpack.c.h.b16 %v6462
      %v6529 = vunpack.c.l.b16 %v6463
      %v6530 = vunpack.c.h.b16 %v6463
      %v6531 = vunpack.c.l.b16 %v6464
      %v6532 = vunpack.c.h.b16 %v6464
      %v6533 = vunpack.c.l.b16 %v6465
      %v6534 = vunpack.c.h.b16 %v6465
      %v6535 = vunpack.c.l.b16 %v6466
      %v6536 = vunpack.c.h.b16 %v6466
      %v6537 = vunpack.c.l.b16 %v6467
      %v6538 = vunpack.c.h.b16 %v6467
      %v6539 = vunpack.c.l.b16 %v6468
      %v6540 = vunpack.c.h.b16 %v6468
      %v6541 = vunpack.c.l.b16 %v6469
      %v6542 = vunpack.c.h.b16 %v6469
      %v6543 = vunpack.c.l.b16 %v6470
      %v6544 = vunpack.c.h.b16 %v6470
      %v6545 = vunpack.c.l.b16 %v6471
      %v6546 = vunpack.c.h.b16 %v6471
      %v6547 = vunpack.c.l.b16 %v6472
      %v6548 = vunpack.c.h.b16 %v6472
      %v6549 = vunpack.c.l.b16 %v6473
      %v6550 = vunpack.c.h.b16 %v6473
      %v6551 = vunpack.c.l.b16 %v6474
      %v6552 = vunpack.c.h.b16 %v6474
      %v6553 = vunpack.c.l.b16 %v6475
      %v6554 = vunpack.c.h.b16 %v6475
      %v6555 = vunpack.c.l.b16 %v6476
      %v6556 = vunpack.c.h.b16 %v6476
      %v6557 = vunpack.c.l.b16 %v6477
      %v6558 = vunpack.c.h.b16 %v6477
      %v6559 = vunpack.c.l.b16 %v6478
      %v6560 = vunpack.c.h.b16 %v6478
      %v6561 = vunpack.c.l.b16 %v6479
      %v6562 = vunpack.c.h.b16 %v6479
      %v6563 = vunpack.c.l.b16 %v6480
      %v6564 = vunpack.c.h.b16 %v6480
      %v6565 = vunpack.c.l.b16 %v6481
      %v6566 = vunpack.c.h.b16 %v6481
      %v6567 = vunpack.c.l.b16 %v6482
      %v6568 = vunpack.c.h.b16 %v6482
      %v6569 = vunpack.c.l.b16 %v6483
      %v6570 = vunpack.c.h.b16 %v6483
      %v6571 = vunpack.c.l.b16 %v6484
      %v6572 = vunpack.c.h.b16 %v6484
      %v6573 = vunpack.c.l.b16 %v6485
      %v6574 = vunpack.c.h.b16 %v6485
      %v6575 = vunpack.c.l.b16 %v6486
      %v6576 = vunpack.c.h.b16 %v6486
      %v6577 = vunpack.c.l.b16 %v6487
      %v6578 = vunpack.c.h.b16 %v6487
      %v6579 = vunpack.c.l.b16 %v6488
      %v6580 = vunpack.c.h.b16 %v6488
      %v6581 = vunpack.c.l.b16 %v6489
      %v6582 = vunpack.c.h.b16 %v6489
      %v6583 = vunpack.c.l.b16 %v6490
      %v6584 = vunpack.c.h.b16 %v6490
      %v6585 = vunpack.c.l.b16 %v6491
      %v6586 = vunpack.c.h.b16 %v6491
      %v6587 = vunpack.c.l.b16 %v6492
      %v6588 = vunpack.c.h.b16 %v6492
      %v6589 = vpack.c.b16 %v6529, %v6525
      %v6590 = vpack.c.b16 %v6530, %v6526
      %v6591 = vpack.c.b16 %v6531, %v6527
      %v6592 = vpack.c.b16 %v6532, %v6528
      %v6593 = vpack.c.b16 %v6537, %v6533
      %v6594 = vpack.c.b16 %v6538, %v6534
      %v6595 = vpack.c.b16 %v6539, %v6535
      %v6596 = vpack.c.b16 %v6540, %v6536
      %v6597 = vpack.c.b16 %v6545, %v6541
      %v6598 = vpack.c.b16 %v6546, %v6542
      %v6599 = vpack.c.b16 %v6547, %v6543
      %v6600 = vpack.c.b16 %v6548, %v6544
      %v6601 = vpack.c.b16 %v6553, %v6549
      %v6602 = vpack.c.b16 %v6554, %v6550
      %v6603 = vpack.c.b16 %v6555, %v6551
      %v6604 = vpack.c.b16 %v6556, %v6552
      %v6605 = vpack.c.b16 %v6561, %v6557
      %v6606 = vpack.c.b16 %v6562, %v6558
      %v6607 = vpack.c.b16 %v6563, %v6559
      %v6608 = vpack.c.b16 %v6564, %v6560
      %v6609 = vpack.c.b16 %v6569, %v6565
      %v6610 = vpack.c.b16 %v6570, %v6566
      %v6611 = vpack.c.b16 %v6571, %v6567
      %v6612 = vpack.c.b16 %v6572, %v6568
      %v6613 = vpack.c.b16 %v6577, %v6573
      %v6614 = vpack.c.b16 %v6578, %v6574
      %v6615 = vpack.c.b16 %v6579, %v6575
      %v6616 = vpack.c.b16 %v6580, %v6576
      %v6617 = vpack.c.b16 %v6585, %v6581
      %v6618 = vpack.c.b16 %v6586, %v6582
      %v6619 = vpack.c.b16 %v6587, %v6583
      %v6620 = vpack.c.b16 %v6588, %v6584
      %6653 = vmatprep.subr.bf16.mxu0 %v6590
      %6654 = vmatpush1.bf16.msra.mxu0 %v6589
      %6655 = vmatprep.subr.bf16.mxu0 %v6594
      %6656 = vmatpush1.bf16.msra.mxu0 %v6593
      %6657 = vmatprep.subr.bf16.mxu0 %v6598
      %6658 = vmatpush1.bf16.msra.mxu0 %v6597
      %6659 = vmatprep.subr.bf16.mxu0 %v6602
      %6660 = vmatpush1.bf16.msra.mxu0 %v6601
      %6661 = vmatprep.subr.bf16.mxu0 %v6606
      %6662 = vmatpush1.bf16.msra.mxu0 %v6605
      %6663 = vmatprep.subr.bf16.mxu0 %v6610
      %6664 = vmatpush1.bf16.msra.mxu0 %v6609
      %6665 = vmatprep.subr.bf16.mxu0 %v6614
      %6666 = vmatpush1.bf16.msra.mxu0 %v6613
      %6667 = vmatprep.subr.bf16.mxu0 %v6618
      %6668 = vmatpush1.bf16.msra.mxu0 %v6617
      %6669 = vmatprep.subr.bf16.mxu0 0
      %6670 = vmatpush1.bf16.msra.mxu0 0
      %6671 = vmatprep.subr.bf16.mxu0 0
      %6672 = vmatpush1.bf16.msra.mxu0 0
      %6673 = vmatprep.subr.bf16.mxu0 0
      %6674 = vmatpush1.bf16.msra.mxu0 0
      %6675 = vmatprep.subr.bf16.mxu0 0
      %6676 = vmatpush1.bf16.msra.mxu0 0
      %6677 = vmatprep.subr.bf16.mxu0 0
      %6678 = vmatpush1.bf16.msra.mxu0 0
      %6679 = vmatprep.subr.bf16.mxu0 0
      %6680 = vmatpush1.bf16.msra.mxu0 0
      %6681 = vmatprep.subr.bf16.mxu0 0
      %6682 = vmatpush1.bf16.msra.mxu0 0
      %6683 = vmatprep.subr.bf16.mxu0 0
      %6684 = vmatpush1.bf16.msra.mxu0 0
      %6685 = vmatprep.mubr.bf16.mxu0 0
      %6686 = vmatmul.mubr.bf16.gmra.mrb[0].mxu0 %v6453
      %v6687 = vpop.f32.mrb[0].mxu0
      %v6688 = vadd.f32 0.0, %v6687
      %v6689 = vpop.f32.mrb[0].mxu0
      %v6690 = vadd.f32 0.0, %v6689
      %v6691 = vpop.f32.mrb[0].mxu0
      %v6692 = vpop.f32.mrb[0].mxu0
      %6693 = vdwg.mxu0
      %6694 = vmatprep.subr.bf16.mxu0 %v6592
      %6695 = vmatpush1.bf16.msra.mxu0 %v6591
      %6696 = vmatprep.subr.bf16.mxu0 %v6596
      %6697 = vmatpush1.bf16.msra.mxu0 %v6595
      %6698 = vmatprep.subr.bf16.mxu0 %v6600
      %6699 = vmatpush1.bf16.msra.mxu0 %v6599
      %6700 = vmatprep.subr.bf16.mxu0 %v6604
      %6701 = vmatpush1.bf16.msra.mxu0 %v6603
      %6702 = vmatprep.subr.bf16.mxu0 %v6608
      %6703 = vmatpush1.bf16.msra.mxu0 %v6607
      %6704 = vmatprep.subr.bf16.mxu0 %v6612
      %6705 = vmatpush1.bf16.msra.mxu0 %v6611
      %6706 = vmatprep.subr.bf16.mxu0 %v6616
      %6707 = vmatpush1.bf16.msra.mxu0 %v6615
      %6708 = vmatprep.subr.bf16.mxu0 %v6620
      %6709 = vmatpush1.bf16.msra.mxu0 %v6619
      %6710 = vmatprep.subr.bf16.mxu0 0
      %6711 = vmatpush1.bf16.msra.mxu0 0
      %6712 = vmatprep.subr.bf16.mxu0 0
      %6713 = vmatpush1.bf16.msra.mxu0 0
      %6714 = vmatprep.subr.bf16.mxu0 0
      %6715 = vmatpush1.bf16.msra.mxu0 0
      %6716 = vmatprep.subr.bf16.mxu0 0
      %6717 = vmatpush1.bf16.msra.mxu0 0
      %6718 = vmatprep.subr.bf16.mxu0 0
      %6719 = vmatpush1.bf16.msra.mxu0 0
      %6720 = vmatprep.subr.bf16.mxu0 0
      %6721 = vmatpush1.bf16.msra.mxu0 0
      %6722 = vmatprep.subr.bf16.mxu0 0
      %6723 = vmatpush1.bf16.msra.mxu0 0
      %6724 = vmatprep.subr.bf16.mxu0 0
      %6725 = vmatpush1.bf16.msra.mxu0 0
      %6726 = vmatprep.mubr.bf16.mxu0 0
      %6727 = vmatmul.mubr.bf16.gmra.mrb[0].mxu0 %v6453
      %v6728 = vpop.f32.mrb[0].mxu0
      %v6729 = vadd.f32 0.0, %v6728
      %v6730 = vpop.f32.mrb[0].mxu0
      %v6731 = vadd.f32 0.0, %v6730
      %v6732 = vpop.f32.mrb[0].mxu0
      %v6733 = vpop.f32.mrb[0].mxu0
      %6734 = vdwg.mxu0
      %v6735 = vadd.f32 %v6457, %v6688
      %v6736 = vadd.f32 %v6458, %v6690
      %v6737 = vadd.f32 %v6459, %v6729
      %v6738 = vadd.f32 %v6460, %v6731
      %v6739 = vld [vmem:[#allocation3] sm:$0xff]
      %v6740 = vxor.u32 %v6735, 2147483648
      %v6741 = vmul.f32 %v6740, 1.442695
      %v6742 = vpow.pop %v6741
      %v6743 = vadd.f32 %v6742, 1.0
      %v6744 = vrcp.pop %v6743
      %v6745 = vmul.f32 1.0, %v6744
      %v6746 = vxor.u32 %v6736, 2147483648
      %v6747 = vmul.f32 %v6746, 1.442695
      %v6748 = vpow.pop %v6747
      %v6749 = vadd.f32 %v6748, 1.0
      %v6750 = vrcp.pop %v6749
      %v6751 = vmul.f32 1.0, %v6750
      %v6752 = vtanh.pop %v6737
      %v6753 = vxor.u32 %v6738, 2147483648
      %v6754 = vmul.f32 %v6753, 1.442695
      %v6755 = vpow.pop %v6754
      %v6756 = vadd.f32 %v6755, 1.0
      %v6757 = vrcp.pop %v6756
      %v6758 = vmul.f32 1.0, %v6757
      %v6759 = vmul.f32 %v6751, %v6739
      %v6760 = vmul.f32 %v6745, %v6752
      %v6761 = vadd.f32 %v6759, %v6760
      %v6762 = vtanh.pop %v6761
      %v6763 = vmul.f32 %v6758, %v6762
      %6764 = vst [vmem:[#allocation3] sm:$0xff] %v6761
      %v6765 = vpack.c.bf16 %v6763, %v6763
      %6766 = vst [vmem:[#allocation2] sm:$0xf] %v6765
      %v6767 = vld [vmem:[#allocation2] sm:$0xff]
      %v6768 = vld [vmem:[#allocation11] sm:$0xff]
      %v6769 = vld [vmem:[#allocation11 + $0x8] sm:$0xff]
      %v6770 = vld [vmem:[#allocation11 + $0x10] sm:$0xff]
      %v6771 = vld [vmem:[#allocation11 + $0x18] sm:$0xff]
      %v6772 = vld [vmem:[#allocation11 + $0x20] sm:$0xff]
      %v6773 = vld [vmem:[#allocation11 + $0x28] sm:$0xff]
      %v6774 = vld [vmem:[#allocation11 + $0x30] sm:$0xff]
      %v6775 = vld [vmem:[#allocation11 + $0x38] sm:$0xff]
      %v6776 = vld [vmem:[#allocation11 + $0x40] sm:$0xff]
      %v6777 = vld [vmem:[#allocation11 + $0x48] sm:$0xff]
      %v6778 = vld [vmem:[#allocation11 + $0x50] sm:$0xff]
      %v6779 = vld [vmem:[#allocation11 + $0x58] sm:$0xff]
      %v6780 = vld [vmem:[#allocation11 + $0x60] sm:$0xff]
      %v6781 = vld [vmem:[#allocation11 + $0x68] sm:$0xff]
      %v6782 = vld [vmem:[#allocation11 + $0x70] sm:$0xff]
      %v6783 = vld [vmem:[#allocation11 + $0x78] sm:$0xff]
      %v6784 = vld [vmem:[#allocation11 + $0x80] sm:$0xff]
      %v6785 = vld [vmem:[#allocation11 + $0x88] sm:$0xff]
      %v6786 = vld [vmem:[#allocation11 + $0x90] sm:$0xff]
      %v6787 = vld [vmem:[#allocation11 + $0x98] sm:$0xff]
      %v6788 = vld [vmem:[#allocation11 + $0xa0] sm:$0xff]
      %v6789 = vld [vmem:[#allocation11 + $0xa8] sm:$0xff]
      %v6790 = vld [vmem:[#allocation11 + $0xb0] sm:$0xff]
      %v6791 = vld [vmem:[#allocation11 + $0xb8] sm:$0xff]
      %v6792 = vld [vmem:[#allocation11 + $0xc0] sm:$0xff]
      %v6793 = vld [vmem:[#allocation11 + $0xc8] sm:$0xff]
      %v6794 = vld [vmem:[#allocation11 + $0xd0] sm:$0xff]
      %v6795 = vld [vmem:[#allocation11 + $0xd8] sm:$0xff]
      %v6796 = vld [vmem:[#allocation11 + $0xe0] sm:$0xff]
      %v6797 = vld [vmem:[#allocation11 + $0xe8] sm:$0xff]
      %v6798 = vld [vmem:[#allocation11 + $0xf0] sm:$0xff]
      %v6799 = vld [vmem:[#allocation11 + $0xf8] sm:$0xff]
      %v6800 = vld [vmem:[#allocation11 + $0x100] sm:$0xff]
      %v6801 = vld [vmem:[#allocation11 + $0x108] sm:$0xff]
      %v6802 = vld [vmem:[#allocation11 + $0x110] sm:$0xff]
      %v6803 = vld [vmem:[#allocation11 + $0x118] sm:$0xff]
      %v6804 = vld [vmem:[#allocation11 + $0x120] sm:$0xff]
      %v6805 = vld [vmem:[#allocation11 + $0x128] sm:$0xff]
      %v6806 = vld [vmem:[#allocation11 + $0x130] sm:$0xff]
      %v6807 = vld [vmem:[#allocation11 + $0x138] sm:$0xff]
      %v6808 = vld [vmem:[#allocation11 + $0x140] sm:$0xff]
      %v6809 = vld [vmem:[#allocation11 + $0x148] sm:$0xff]
      %v6810 = vld [vmem:[#allocation11 + $0x150] sm:$0xff]
      %v6811 = vld [vmem:[#allocation11 + $0x158] sm:$0xff]
      %v6812 = vld [vmem:[#allocation11 + $0x160] sm:$0xff]
      %v6813 = vld [vmem:[#allocation11 + $0x168] sm:$0xff]
      %v6814 = vld [vmem:[#allocation11 + $0x170] sm:$0xff]
      %v6815 = vld [vmem:[#allocation11 + $0x178] sm:$0xff]
      %v6816 = vld [vmem:[#allocation11 + $0x180] sm:$0xff]
      %v6817 = vld [vmem:[#allocation11 + $0x188] sm:$0xff]
      %v6818 = vld [vmem:[#allocation11 + $0x190] sm:$0xff]
      %v6819 = vld [vmem:[#allocation11 + $0x198] sm:$0xff]
      %v6820 = vld [vmem:[#allocation11 + $0x1a0] sm:$0xff]
      %v6821 = vld [vmem:[#allocation11 + $0x1a8] sm:$0xff]
      %v6822 = vld [vmem:[#allocation11 + $0x1b0] sm:$0xff]
      %v6823 = vld [vmem:[#allocation11 + $0x1b8] sm:$0xff]
      %v6824 = vld [vmem:[#allocation11 + $0x1c0] sm:$0xff]
      %v6825 = vld [vmem:[#allocation11 + $0x1c8] sm:$0xff]
      %v6826 = vld [vmem:[#allocation11 + $0x1d0] sm:$0xff]
      %v6827 = vld [vmem:[#allocation11 + $0x1d8] sm:$0xff]
      %v6828 = vld [vmem:[#allocation11 + $0x1e0] sm:$0xff]
      %v6829 = vld [vmem:[#allocation11 + $0x1e8] sm:$0xff]
      %v6830 = vld [vmem:[#allocation11 + $0x1f0] sm:$0xff]
      %v6831 = vld [vmem:[#allocation11 + $0x1f8] sm:$0xff]
      %v6832 = vld [vmem:[%s7] sm:$0xf]
      %v6834 = vlaneseq
      %v6835 = vshrl.u32 %v6834, 7
      %v6836 = vsub.s32 0, %v6835
      %v6837 = vrot.slane %v6832, %v6836
      %v6838 = vlaneseq
      %v6839 = vshrl.u32 %v6838, 7
      %v6840 = vsub.s32 1, %v6839
      %v6841 = vrot.slane %v6832, %v6840
      %v6842 = vlaneseq
      %v6843 = vshrl.u32 %v6842, 7
      %v6844 = vsub.s32 2, %v6843
      %v6845 = vrot.slane %v6832, %v6844
      %v6846 = vlaneseq
      %v6847 = vshrl.u32 %v6846, 7
      %v6848 = vsub.s32 3, %v6847
      %v6849 = vrot.slane %v6832, %v6848
      %v6855 = vunpack.c.l.b16 %v6767
      %v6856 = vunpack.c.h.b16 %v6767
      %v6857 = vpack.c.b16 %v6855, %v6855
      %v6858 = vpack.c.b16 %v6856, %v6856
      %v6925 = vunpack.c.l.b16 %v6768
      %v6926 = vunpack.c.h.b16 %v6768
      %v6927 = vunpack.c.l.b16 %v6769
      %v6928 = vunpack.c.h.b16 %v6769
      %v6929 = vunpack.c.l.b16 %v6770
      %v6930 = vunpack.c.h.b16 %v6770
      %v6931 = vunpack.c.l.b16 %v6771
      %v6932 = vunpack.c.h.b16 %v6771
      %v6933 = vunpack.c.l.b16 %v6772
      %v6934 = vunpack.c.h.b16 %v6772
      %v6935 = vunpack.c.l.b16 %v6773
      %v6936 = vunpack.c.h.b16 %v6773
      %v6937 = vunpack.c.l.b16 %v6774
      %v6938 = vunpack.c.h.b16 %v6774
      %v6939 = vunpack.c.l.b16 %v6775
      %v6940 = vunpack.c.h.b16 %v6775
      %v6941 = vunpack.c.l.b16 %v6776
      %v6942 = vunpack.c.h.b16 %v6776
      %v6943 = vunpack.c.l.b16 %v6777
      %v6944 = vunpack.c.h.b16 %v6777
      %v6945 = vunpack.c.l.b16 %v6778
      %v6946 = vunpack.c.h.b16 %v6778
      %v6947 = vunpack.c.l.b16 %v6779
      %v6948 = vunpack.c.h.b16 %v6779
      %v6949 = vunpack.c.l.b16 %v6780
      %v6950 = vunpack.c.h.b16 %v6780
      %v6951 = vunpack.c.l.b16 %v6781
      %v6952 = vunpack.c.h.b16 %v6781
      %v6953 = vunpack.c.l.b16 %v6782
      %v6954 = vunpack.c.h.b16 %v6782
      %v6955 = vunpack.c.l.b16 %v6783
      %v6956 = vunpack.c.h.b16 %v6783
      %v6957 = vunpack.c.l.b16 %v6784
      %v6958 = vunpack.c.h.b16 %v6784
      %v6959 = vunpack.c.l.b16 %v6785
      %v6960 = vunpack.c.h.b16 %v6785
      %v6961 = vunpack.c.l.b16 %v6786
      %v6962 = vunpack.c.h.b16 %v6786
      %v6963 = vunpack.c.l.b16 %v6787
      %v6964 = vunpack.c.h.b16 %v6787
      %v6965 = vunpack.c.l.b16 %v6788
      %v6966 = vunpack.c.h.b16 %v6788
      %v6967 = vunpack.c.l.b16 %v6789
      %v6968 = vunpack.c.h.b16 %v6789
      %v6969 = vunpack.c.l.b16 %v6790
      %v6970 = vunpack.c.h.b16 %v6790
      %v6971 = vunpack.c.l.b16 %v6791
      %v6972 = vunpack.c.h.b16 %v6791
      %v6973 = vunpack.c.l.b16 %v6792
      %v6974 = vunpack.c.h.b16 %v6792
      %v6975 = vunpack.c.l.b16 %v6793
      %v6976 = vunpack.c.h.b16 %v6793
      %v6977 = vunpack.c.l.b16 %v6794
      %v6978 = vunpack.c.h.b16 %v6794
      %v6979 = vunpack.c.l.b16 %v6795
      %v6980 = vunpack.c.h.b16 %v6795
      %v6981 = vunpack.c.l.b16 %v6796
      %v6982 = vunpack.c.h.b16 %v6796
      %v6983 = vunpack.c.l.b16 %v6797
      %v6984 = vunpack.c.h.b16 %v6797
      %v6985 = vunpack.c.l.b16 %v6798
      %v6986 = vunpack.c.h.b16 %v6798
      %v6987 = vunpack.c.l.b16 %v6799
      %v6988 = vunpack.c.h.b16 %v6799
      %v6989 = vunpack.c.l.b16 %v6800
      %v6990 = vunpack.c.h.b16 %v6800
      %v6991 = vunpack.c.l.b16 %v6801
      %v6992 = vunpack.c.h.b16 %v6801
      %v6993 = vunpack.c.l.b16 %v6802
      %v6994 = vunpack.c.h.b16 %v6802
      %v6995 = vunpack.c.l.b16 %v6803
      %v6996 = vunpack.c.h.b16 %v6803
      %v6997 = vunpack.c.l.b16 %v6804
      %v6998 = vunpack.c.h.b16 %v6804
      %v6999 = vunpack.c.l.b16 %v6805
      %v7000 = vunpack.c.h.b16 %v6805
      %v7001 = vunpack.c.l.b16 %v6806
      %v7002 = vunpack.c.h.b16 %v6806
      %v7003 = vunpack.c.l.b16 %v6807
      %v7004 = vunpack.c.h.b16 %v6807
      %v7005 = vunpack.c.l.b16 %v6808
      %v7006 = vunpack.c.h.b16 %v6808
      %v7007 = vunpack.c.l.b16 %v6809
      %v7008 = vunpack.c.h.b16 %v6809
      %v7009 = vunpack.c.l.b16 %v6810
      %v7010 = vunpack.c.h.b16 %v6810
      %v7011 = vunpack.c.l.b16 %v6811
      %v7012 = vunpack.c.h.b16 %v6811
      %v7013 = vunpack.c.l.b16 %v6812
      %v7014 = vunpack.c.h.b16 %v6812
      %v7015 = vunpack.c.l.b16 %v6813
      %v7016 = vunpack.c.h.b16 %v6813
      %v7017 = vunpack.c.l.b16 %v6814
      %v7018 = vunpack.c.h.b16 %v6814
      %v7019 = vunpack.c.l.b16 %v6815
      %v7020 = vunpack.c.h.b16 %v6815
      %v7021 = vunpack.c.l.b16 %v6816
      %v7022 = vunpack.c.h.b16 %v6816
      %v7023 = vunpack.c.l.b16 %v6817
      %v7024 = vunpack.c.h.b16 %v6817
      %v7025 = vunpack.c.l.b16 %v6818
      %v7026 = vunpack.c.h.b16 %v6818
      %v7027 = vunpack.c.l.b16 %v6819
      %v7028 = vunpack.c.h.b16 %v6819
      %v7029 = vunpack.c.l.b16 %v6820
      %v7030 = vunpack.c.h.b16 %v6820
      %v7031 = vunpack.c.l.b16 %v6821
      %v7032 = vunpack.c.h.b16 %v6821
      %v7033 = vunpack.c.l.b16 %v6822
      %v7034 = vunpack.c.h.b16 %v6822
      %v7035 = vunpack.c.l.b16 %v6823
      %v7036 = vunpack.c.h.b16 %v6823
      %v7037 = vunpack.c.l.b16 %v6824
      %v7038 = vunpack.c.h.b16 %v6824
      %v7039 = vunpack.c.l.b16 %v6825
      %v7040 = vunpack.c.h.b16 %v6825
      %v7041 = vunpack.c.l.b16 %v6826
      %v7042 = vunpack.c.h.b16 %v6826
      %v7043 = vunpack.c.l.b16 %v6827
      %v7044 = vunpack.c.h.b16 %v6827
      %v7045 = vunpack.c.l.b16 %v6828
      %v7046 = vunpack.c.h.b16 %v6828
      %v7047 = vunpack.c.l.b16 %v6829
      %v7048 = vunpack.c.h.b16 %v6829
      %v7049 = vunpack.c.l.b16 %v6830
      %v7050 = vunpack.c.h.b16 %v6830
      %v7051 = vunpack.c.l.b16 %v6831
      %v7052 = vunpack.c.h.b16 %v6831
      %v7053 = vpack.c.b16 %v6929, %v6925
      %v7054 = vpack.c.b16 %v6930, %v6926
      %v7055 = vpack.c.b16 %v6931, %v6927
      %v7056 = vpack.c.b16 %v6932, %v6928
      %v7057 = vpack.c.b16 %v6937, %v6933
      %v7058 = vpack.c.b16 %v6938, %v6934
      %v7059 = vpack.c.b16 %v6939, %v6935
      %v7060 = vpack.c.b16 %v6940, %v6936
      %v7061 = vpack.c.b16 %v6945, %v6941
      %v7062 = vpack.c.b16 %v6946, %v6942
      %v7063 = vpack.c.b16 %v6947, %v6943
      %v7064 = vpack.c.b16 %v6948, %v6944
      %v7065 = vpack.c.b16 %v6953, %v6949
      %v7066 = vpack.c.b16 %v6954, %v6950
      %v7067 = vpack.c.b16 %v6955, %v6951
      %v7068 = vpack.c.b16 %v6956, %v6952
      %v7069 = vpack.c.b16 %v6961, %v6957
      %v7070 = vpack.c.b16 %v6962, %v6958
      %v7071 = vpack.c.b16 %v6963, %v6959
      %v7072 = vpack.c.b16 %v6964, %v6960
      %v7073 = vpack.c.b16 %v6969, %v6965
      %v7074 = vpack.c.b16 %v6970, %v6966
      %v7075 = vpack.c.b16 %v6971, %v6967
      %v7076 = vpack.c.b16 %v6972, %v6968
      %v7077 = vpack.c.b16 %v6977, %v6973
      %v7078 = vpack.c.b16 %v6978, %v6974
      %v7079 = vpack.c.b16 %v6979, %v6975
      %v7080 = vpack.c.b16 %v6980, %v6976
      %v7081 = vpack.c.b16 %v6985, %v6981
      %v7082 = vpack.c.b16 %v6986, %v6982
      %v7083 = vpack.c.b16 %v6987, %v6983
      %v7084 = vpack.c.b16 %v6988, %v6984
      %v7085 = vpack.c.b16 %v6993, %v6989
      %v7086 = vpack.c.b16 %v6994, %v6990
      %v7087 = vpack.c.b16 %v6995, %v6991
      %v7088 = vpack.c.b16 %v6996, %v6992
      %v7089 = vpack.c.b16 %v7001, %v6997
      %v7090 = vpack.c.b16 %v7002, %v6998
      %v7091 = vpack.c.b16 %v7003, %v6999
      %v7092 = vpack.c.b16 %v7004, %v7000
      %v7093 = vpack.c.b16 %v7009, %v7005
      %v7094 = vpack.c.b16 %v7010, %v7006
      %v7095 = vpack.c.b16 %v7011, %v7007
      %v7096 = vpack.c.b16 %v7012, %v7008
      %v7097 = vpack.c.b16 %v7017, %v7013
      %v7098 = vpack.c.b16 %v7018, %v7014
      %v7099 = vpack.c.b16 %v7019, %v7015
      %v7100 = vpack.c.b16 %v7020, %v7016
      %v7101 = vpack.c.b16 %v7025, %v7021
      %v7102 = vpack.c.b16 %v7026, %v7022
      %v7103 = vpack.c.b16 %v7027, %v7023
      %v7104 = vpack.c.b16 %v7028, %v7024
      %v7105 = vpack.c.b16 %v7033, %v7029
      %v7106 = vpack.c.b16 %v7034, %v7030
      %v7107 = vpack.c.b16 %v7035, %v7031
      %v7108 = vpack.c.b16 %v7036, %v7032
      %v7109 = vpack.c.b16 %v7041, %v7037
      %v7110 = vpack.c.b16 %v7042, %v7038
      %v7111 = vpack.c.b16 %v7043, %v7039
      %v7112 = vpack.c.b16 %v7044, %v7040
      %v7113 = vpack.c.b16 %v7049, %v7045
      %v7114 = vpack.c.b16 %v7050, %v7046
      %v7115 = vpack.c.b16 %v7051, %v7047
      %v7116 = vpack.c.b16 %v7052, %v7048
      %7181 = vmatprep.subr.bf16.mxu0 %v7054
      %7182 = vmatpush1.bf16.msra.mxu0 %v7053
      %7183 = vmatprep.subr.bf16.mxu0 %v7058
      %7184 = vmatpush1.bf16.msra.mxu0 %v7057
      %7185 = vmatprep.subr.bf16.mxu0 %v7062
      %7186 = vmatpush1.bf16.msra.mxu0 %v7061
      %7187 = vmatprep.subr.bf16.mxu0 %v7066
      %7188 = vmatpush1.bf16.msra.mxu0 %v7065
      %7189 = vmatprep.subr.bf16.mxu0 %v7070
      %7190 = vmatpush1.bf16.msra.mxu0 %v7069
      %7191 = vmatprep.subr.bf16.mxu0 %v7074
      %7192 = vmatpush1.bf16.msra.mxu0 %v7073
      %7193 = vmatprep.subr.bf16.mxu0 %v7078
      %7194 = vmatpush1.bf16.msra.mxu0 %v7077
      %7195 = vmatprep.subr.bf16.mxu0 %v7082
      %7196 = vmatpush1.bf16.msra.mxu0 %v7081
      %7197 = vmatprep.subr.bf16.mxu0 %v7086
      %7198 = vmatpush1.bf16.msra.mxu0 %v7085
      %7199 = vmatprep.subr.bf16.mxu0 %v7090
      %7200 = vmatpush1.bf16.msra.mxu0 %v7089
      %7201 = vmatprep.subr.bf16.mxu0 %v7094
      %7202 = vmatpush1.bf16.msra.mxu0 %v7093
      %7203 = vmatprep.subr.bf16.mxu0 %v7098
      %7204 = vmatpush1.bf16.msra.mxu0 %v7097
      %7205 = vmatprep.subr.bf16.mxu0 %v7102
      %7206 = vmatpush1.bf16.msra.mxu0 %v7101
      %7207 = vmatprep.subr.bf16.mxu0 %v7106
      %7208 = vmatpush1.bf16.msra.mxu0 %v7105
      %7209 = vmatprep.subr.bf16.mxu0 %v7110
      %7210 = vmatpush1.bf16.msra.mxu0 %v7109
      %7211 = vmatprep.subr.bf16.mxu0 %v7114
      %7212 = vmatpush1.bf16.msra.mxu0 %v7113
      %7213 = vmatprep.mubr.bf16.mxu0 %v6858
      %7214 = vmatmul.mubr.bf16.gmra.mrb[0].mxu0 %v6857
      %v7215 = vpop.f32.mrb[0].mxu0
      %v7216 = vadd.f32 %v6837, %v7215
      %v7217 = vpop.f32.mrb[0].mxu0
      %v7218 = vadd.f32 %v6841, %v7217
      %v7219 = vpop.f32.mrb[0].mxu0
      %v7220 = vpop.f32.mrb[0].mxu0
      %7221 = vdwg.mxu0
      %7222 = vmatprep.subr.bf16.mxu0 %v7056
      %7223 = vmatpush1.bf16.msra.mxu0 %v7055
      %7224 = vmatprep.subr.bf16.mxu0 %v7060
      %7225 = vmatpush1.bf16.msra.mxu0 %v7059
      %7226 = vmatprep.subr.bf16.mxu0 %v7064
      %7227 = vmatpush1.bf16.msra.mxu0 %v7063
      %7228 = vmatprep.subr.bf16.mxu0 %v7068
      %7229 = vmatpush1.bf16.msra.mxu0 %v7067
      %7230 = vmatprep.subr.bf16.mxu0 %v7072
      %7231 = vmatpush1.bf16.msra.mxu0 %v7071
      %7232 = vmatprep.subr.bf16.mxu0 %v7076
      %7233 = vmatpush1.bf16.msra.mxu0 %v7075
      %7234 = vmatprep.subr.bf16.mxu0 %v7080
      %7235 = vmatpush1.bf16.msra.mxu0 %v7079
      %7236 = vmatprep.subr.bf16.mxu0 %v7084
      %7237 = vmatpush1.bf16.msra.mxu0 %v7083
      %7238 = vmatprep.subr.bf16.mxu0 %v7088
      %7239 = vmatpush1.bf16.msra.mxu0 %v7087
      %7240 = vmatprep.subr.bf16.mxu0 %v7092
      %7241 = vmatpush1.bf16.msra.mxu0 %v7091
      %7242 = vmatprep.subr.bf16.mxu0 %v7096
      %7243 = vmatpush1.bf16.msra.mxu0 %v7095
      %7244 = vmatprep.subr.bf16.mxu0 %v7100
      %7245 = vmatpush1.bf16.msra.mxu0 %v7099
      %7246 = vmatprep.subr.bf16.mxu0 %v7104
      %7247 = vmatpush1.bf16.msra.mxu0 %v7103
      %7248 = vmatprep.subr.bf16.mxu0 %v7108
      %7249 = vmatpush1.bf16.msra.mxu0 %v7107
      %7250 = vmatprep.subr.bf16.mxu0 %v7112
      %7251 = vmatpush1.bf16.msra.mxu0 %v7111
      %7252 = vmatprep.subr.bf16.mxu0 %v7116
      %7253 = vmatpush1.bf16.msra.mxu0 %v7115
      %7254 = vmatprep.mubr.bf16.mxu0 %v6858
      %7255 = vmatmul.mubr.bf16.gmra.mrb[0].mxu0 %v6857
      %v7256 = vpop.f32.mrb[0].mxu0
      %v7257 = vadd.f32 %v6845, %v7256
      %v7258 = vpop.f32.mrb[0].mxu0
      %v7259 = vadd.f32 %v6849, %v7258
      %v7260 = vpop.f32.mrb[0].mxu0
      %v7261 = vpop.f32.mrb[0].mxu0
      %7262 = vdwg.mxu0
      %v7263 = vld [vmem:[%s1319] sm:$0xff]
      %v7264 = vxor.u32 %v7216, 2147483648
      %v7265 = vmul.f32 %v7264, 1.442695
      %v7266 = vpow.pop %v7265
      %v7267 = vadd.f32 %v7266, 1.0
      %v7268 = vrcp.pop %v7267
      %v7269 = vmul.f32 1.0, %v7268
      %v7270 = vxor.u32 %v7218, 2147483648
      %v7271 = vmul.f32 %v7270, 1.442695
      %v7272 = vpow.pop %v7271
      %v7273 = vadd.f32 %v7272, 1.0
      %v7274 = vrcp.pop %v7273
      %v7275 = vmul.f32 1.0, %v7274
      %v7276 = vtanh.pop %v7257
      %v7277 = vxor.u32 %v7259, 2147483648
      %v7278 = vmul.f32 %v7277, 1.442695
      %v7279 = vpow.pop %v7278
      %v7280 = vadd.f32 %v7279, 1.0
      %v7281 = vrcp.pop %v7280
      %v7282 = vmul.f32 1.0, %v7281
      %v7283 = vmul.f32 %v7275, %v7263
      %v7284 = vmul.f32 %v7269, %v7276
      %v7285 = vadd.f32 %v7283, %v7284
      %v7286 = vtanh.pop %v7285
      %v7287 = vmul.f32 %v7282, %v7286
      %7288 = vst [vmem:[%s1319] sm:$0xff] %v7285
      %v7289 = vpack.c.bf16 %v7287, %v7287
      %7290 = vst [vmem:[#allocation2 + $0x4] sm:$0xf] %v7289
      %s7291 = sadd.s32 %s78, 8
      %v7292 = vstv %s7291
      %vm7293 = vcmp.eq.s32.totalorder %v508, %v7292
      %v7294 = vld [vmem:[%s8] sm:$0xff]
      %v7295 = vsel %vm7293, 1, 0
      %7296 = vset.pattern.permute.xlu0 0
      %7297 = vperm.xlu0 %7296, %v7295
      %v7298 = vpop.permute.xlu0 %7297
      %vm7299 = vcmp.eq.s32.totalorder %v7298, 1
      %v7300 = vsel %vm7299, %v7287, %v7294
      %7301 = vst [vmem:[%s8] sm:$0xff] %v7300
    $region49: #{_encoder1_forward.1} parent=1 // pred_fallthru
      _
    // Predicated region
    $region50: #{_encoder1_forward.1} parent=1 // pred_check
      _
    $region51: #{_encoder1_forward.1} parent=1 // pred_check_branch
      %7303 = sbr.rel (0) target = $region53
    $region52: #{_encoder1_forward.1} parent=1 // pred_region
      _
    $region53: #{_encoder1_forward.1} parent=1 // pred_fallthru
      _
    // Predicated region
    $region54: #{_encoder1_forward.1} parent=1 // pred_check
      _
    $region55: #{_encoder1_forward.1} parent=1 // pred_check_branch
      %7305 = sbr.rel (0) target = $region57
    $region56: #{_encoder1_forward.1} parent=1 // pred_region
      _
    $region57: #{_encoder1_forward.1} parent=1 // pred_fallthru
      _
    %7306 = vsyncpa [#allocation8], 1
    %7307 = vsyncpa [#allocation10], 1

</llo_original>
